<compile_context>
chip_gen: v5e
topology: v5e:2x2
jax: 0.10.0
libtpu: 0.0.40
codegen_flags: <defaults>
</compile_context>

<pallas_src>
import functools

import jax
import jax.numpy as jnp
from jax import lax
from jax.experimental import pallas as pl
from jax.experimental.pallas import tpu as pltpu

HIDDEN = 256   # LSTM hidden size (fixed by the module)
T1 = 128       # tower first linear
T2 = 64        # tower second linear


# ----------------------------------------------------------------------------
# Fused kernel.
# Row layout for all stacked activations: r = branch*B + b, branch 0 = query.
# gx scratch layout: (T, 2B, 4H), time-major, so the recurrence reads gx_sc[t].
# ----------------------------------------------------------------------------
def fused_kernel(onehot_ref, wx_ref, whh_hbm, tw1_ref, tb1_ref, tw2_ref, tb2_ref,
                 fcw_ref, fcb_ref, out_ref, gx_sc, whh_vmem, dma_sem,
                 *, B, T_q, T_p):
    T = max(T_q, T_p)
    R = 2 * B
    H = whh_vmem.shape[0]
    G = 4 * H
    T1_ = tw1_ref.shape[1] // 2

    # ---- kick off the 2 MB whh HBM->VMEM DMA so it overlaps the prologue ----
    whh_cp = pltpu.make_async_copy(whh_hbm, whh_vmem, dma_sem)
    whh_cp.start()

    # rows [0:B) are the query branch, rows [B:2B) the passage branch
    is_q = lax.broadcasted_iota(jnp.int32, (R, 1), 0) < B
    is_q_g = jnp.broadcast_to(is_q, (R, G))        # hoisted: reused every recurrence step
    is_q_h = jnp.broadcast_to(is_q, (R, H))        # hoisted: uneven-length masked update
    not_q_h = jnp.logical_not(is_q_h)

    # ---- prologue: branch-correct input gates for ALL timesteps, chunked so at most
    # ---- ~16 vregs of matmul output are live at a time (no spill churn) ----
    CH = 4
    for c0 in range(0, T, CH):
        c1 = min(c0 + CH, T)
        gx_chunk = jnp.dot(onehot_ref[c0 * R:c1 * R, :], wx_ref[...],
                           preferred_element_type=jnp.float32)          # (<=CH*R, G)
        for t in range(c0, c1):
            gx_sc[t] = gx_chunk[(t - c0) * R:(t - c0 + 1) * R, :]       # (R, G)

    # ---- merged LSTM recurrence (both branches in one matmul per step), unrolled ----
    whh_cp.wait()
    h = jnp.zeros((R, H), jnp.float32)
    c = jnp.zeros((R, H), jnp.float32)
    for t in range(T):
        gh_all = jnp.dot(h, whh_vmem[...], preferred_element_type=jnp.float32)  # (R, 2G)
        gates = jnp.where(is_q_g, gh_all[:, :G], gh_all[:, G:]) + gx_sc[t]       # (R, G)
        # sigmoid(x) = 0.5*(tanh(x/2)+1): one EUP op per gate instead of two.
        i_g = 0.5 * (jnp.tanh(0.5 * gates[:, 0 * H:1 * H]) + 1.0)
        f_g = 0.5 * (jnp.tanh(0.5 * gates[:, 1 * H:2 * H]) + 1.0)
        g_g = jnp.tanh(gates[:, 2 * H:3 * H])
        o_g = 0.5 * (jnp.tanh(0.5 * gates[:, 3 * H:4 * H]) + 1.0)
        c_new = f_g * c + i_g * g_g
        h_new = o_g * jnp.tanh(c_new)
        if t < T_q and t < T_p:
            h, c = h_new, c_new
        else:  # only one branch is still within its sequence length
            upd = is_q_h if t < T_q else not_q_h
            h = jnp.where(upd, h_new, h)
            c = jnp.where(upd, c_new, c)

    # ---- towers (merged across branches) + fc as VPU multiply + lane reduce ----
    a1_all = (jnp.dot(h, tw1_ref[...], preferred_element_type=jnp.float32)
              + tb1_ref[...])                                            # (R, 2*T1)
    a1 = jnp.maximum(jnp.where(jnp.broadcast_to(is_q, (R, T1_)),
                               a1_all[:, :T1_], a1_all[:, T1_:]), 0.0)   # (R, T1)
    a2_all = (jnp.dot(a1, tw2_ref[...], preferred_element_type=jnp.float32)
              + tb2_ref[...])                                            # (R, 2*T2)
    # fcw_ref is zero-masked per row, so the "wrong" branch half contributes exactly 0.
    contrib = jnp.sum(a2_all * fcw_ref[...], axis=-1, keepdims=True)     # (R, 1)
    score = contrib[:B, :] + contrib[B:, :] + fcb_ref[...]               # (B, 1)
    out_ref[...] = jnp.broadcast_to(score, out_ref.shape)                # lane-dense slab


# ----------------------------------------------------------------------------
# Wrapper: parameter repacking (concats / folding / masking) is cheap one-off XLA glue.
# ----------------------------------------------------------------------------
@jax.jit
def two_tower_forward(params, query_ids, passage_ids):
    B, Tq = query_ids.shape
    Bp, Tp = passage_ids.shape
    assert B == Bp
    T = max(Tq, Tp)
    R = 2 * B
    V = params["embedding"].shape[0]

    q_ids = jnp.pad(query_ids, ((0, 0), (0, T - Tq))) if Tq < T else query_ids
    p_ids = jnp.pad(passage_ids, ((0, 0), (0, T - Tp))) if Tp < T else passage_ids

    # time-major stacked ids: row r = t*R + branch*B + b
    ids = jnp.stack([q_ids.T, p_ids.T], axis=1).reshape(T * R).astype(jnp.int32)
    br = jnp.tile(jnp.repeat(jnp.arange(2, dtype=jnp.int32), B), T)       # (T*R,)
    tok_col = br * V + ids                                                # branch-offset
    bias_col = 2 * V + br                                                 # per-branch bias
    cols = jnp.arange(2 * V + 2, dtype=jnp.int32)[None, :]
    onehot = ((cols == tok_col[:, None]) |
              (cols == bias_col[:, None])).astype(jnp.float32)            # (T*R, 2V+2)

    emb = params["embedding"]
    # Folded input projection (embedding @ w_ih) + per-branch bias rows.
    wx = jnp.concatenate([emb @ params["q_w_ih"],
                          emb @ params["p_w_ih"],
                          params["q_b"],
                          params["p_b"]], axis=0)                         # (2V+2, 4H)

    whh = jnp.concatenate([params["q_w_hh"], params["p_w_hh"]], axis=1)   # (H, 8H)
    tw1 = jnp.concatenate([params["q_w1"], params["p_w1"]], axis=1)       # (H, 2*T1)
    tb1 = jnp.concatenate([params["q_b1"], params["p_b1"]], axis=1)       # (1, 2*T1)
    tw2 = jnp.concatenate([params["q_w2"], params["p_w2"]], axis=1)       # (T1, 2*T2)
    tb2 = jnp.concatenate([params["q_b2"], params["p_b2"]], axis=1)       # (1, 2*T2)

    fcw_q = params["fc_w"][:T2, 0]
    fcw_p = params["fc_w"][T2:, 0]
    zeros = jnp.zeros((T2,), jnp.float32)
    fcw_rows = jnp.concatenate([
        jnp.broadcast_to(jnp.concatenate([fcw_q, zeros])[None, :], (B, 2 * T2)),
        jnp.broadcast_to(jnp.concatenate([zeros, fcw_p])[None, :], (B, 2 * T2)),
    ], axis=0)                                                            # (R, 2*T2)
    fcb = params["fc_b"]                                                  # (1, 1)

    kernel = functools.partial(fused_kernel, B=B, T_q=Tq, T_p=Tp)
    vspec = pl.BlockSpec(memory_space=pltpu.MemorySpace.VMEM)
    anyspec = pl.BlockSpec(memory_space=pl.ANY)                           # whh stays in HBM
    out = pl.pallas_call(
        kernel,
        out_shape=jax.ShapeDtypeStruct((B, 128), jnp.float32),
        in_specs=[vspec, vspec, anyspec, vspec, vspec, vspec, vspec, vspec, vspec],
        out_specs=vspec,
        scratch_shapes=[
            pltpu.VMEM((T, R, 4 * HIDDEN), jnp.float32),   # gx per timestep
            pltpu.VMEM((HIDDEN, 8 * HIDDEN), jnp.float32), # whh landing buffer
            pltpu.SemaphoreType.DMA,                       # whh DMA completion
        ],
    )(onehot, wx, whh, tw1, tb1, tw2, tb2, fcw_rows, fcb)

    return out[:, 0]            # (B,) — matches .squeeze()


# ----------------------------------------------------------------------------
# Parameter construction (deterministic, synthetic).
# Weights are stored pre-transposed for right-multiplication: x @ W.
# ----------------------------------------------------------------------------
def make_params(key, vocab_size, embed_dim):
    ks = jax.random.split(key, 16)
    s = 0.1

    def rnd(k, shape):
        return (s * jax.random.normal(k, shape)).astype(jnp.float32)

    return dict(
        embedding=rnd(ks[0], (vocab_size, embed_dim)),
        # query LSTM (gate order i, f, g, o; b = b_ih + b_hh combined)
        q_w_ih=rnd(ks[1], (embed_dim, 4 * HIDDEN)),
        q_w_hh=rnd(ks[2], (HIDDEN, 4 * HIDDEN)),
        q_b=rnd(ks[3], (1, 4 * HIDDEN)),
        # passage LSTM
        p_w_ih=rnd(ks[4], (embed_dim, 4 * HIDDEN)),
        p_w_hh=rnd(ks[5], (HIDDEN, 4 * HIDDEN)),
        p_b=rnd(ks[6], (1, 4 * HIDDEN)),
        # query tower
        q_w1=rnd(ks[7], (HIDDEN, T1)), q_b1=rnd(ks[8], (1, T1)),
        q_w2=rnd(ks[9], (T1, T2)),     q_b2=rnd(ks[10], (1, T2)),
        # passage tower
        p_w1=rnd(ks[11], (HIDDEN, T1)), p_b1=rnd(ks[12], (1, T1)),
        p_w2=rnd(ks[13], (T1, T2)),     p_b2=rnd(ks[14], (1, T2)),
        # final fc on concat(64+64) -> 1
        fc_w=rnd(ks[15], (2 * T2, 1)),
        fc_b=jnp.zeros((1, 1), jnp.float32),
    )


# ----------------------------------------------------------------------------
# Pure-JAX reference for validation.
# ----------------------------------------------------------------------------
def ref_lstm(x_bte, w_ih, w_hh, b):
    B = x_bte.shape[0]

    def step(carry, x_t):
        h, c = carry
        gates = x_t @ w_ih + h @ w_hh + b
        i = jax.nn.sigmoid(gates[:, 0 * HIDDEN:1 * HIDDEN])
        f = jax.nn.sigmoid(gates[:, 1 * HIDDEN:2 * HIDDEN])
        g = jnp.tanh(gates[:, 2 * HIDDEN:3 * HIDDEN])
        o = jax.nn.sigmoid(gates[:, 3 * HIDDEN:4 * HIDDEN])
        c = f * c + i * g
        h = o * jnp.tanh(c)
        return (h, c), None

    init = (jnp.zeros((B, HIDDEN), jnp.float32), jnp.zeros((B, HIDDEN), jnp.float32))
    (h, _), _ = lax.scan(step, init, jnp.transpose(x_bte, (1, 0, 2)))
    return h


def ref_forward(params, query_ids, passage_ids):
    q_emb = jnp.take(params["embedding"], query_ids, axis=0)
    p_emb = jnp.take(params["embedding"], passage_ids, axis=0)
    hq = ref_lstm(q_emb, params["q_w_ih"], params["q_w_hh"], params["q_b"])
    hp = ref_lstm(p_emb, params["p_w_ih"], params["p_w_hh"], params["p_b"])
    q = jnp.maximum(hq @ params["q_w1"] + params["q_b1"], 0.0) @ params["q_w2"] + params["q_b2"]
    p = jnp.maximum(hp @ params["p_w1"] + params["p_b1"], 0.0) @ params["p_w2"] + params["p_b2"]
    comb = jnp.concatenate([q, p], axis=1)
    return jnp.squeeze(comb @ params["fc_w"] + params["fc_b"])


if __name__ == "__main__":
    VOCAB, EMBED = 50, 32
    B, T_Q, T_P = 2, 8, 8

    key = jax.random.PRNGKey(0)
    k_par, k_q, k_p = jax.random.split(key, 3)

    params = make_params(k_par, VOCAB, EMBED)
    query_ids = jax.random.randint(k_q, (B, T_Q), 0, VOCAB, dtype=jnp.int32)
    passage_ids = jax.random.randint(k_p, (B, T_P), 0, VOCAB, dtype=jnp.int32)

    score = jax.block_until_ready(two_tower_forward(params, query_ids, passage_ids))
    ref = jax.block_until_ready(ref_forward(params, query_ids, passage_ids))
    assert score.shape == (B,), score.shape
    assert jnp.allclose(score, ref, atol=2e-4, rtol=2e-4), (score, ref)

    # unequal-length sequences exercise the per-branch masked-update path
    q_short = query_ids[:, :5]
    score2 = jax.block_until_ready(two_tower_forward(params, q_short, passage_ids))
    ref2 = jax.block_until_ready(ref_forward(params, q_short, passage_ids))
    assert jnp.allclose(score2, ref2, atol=2e-4, rtol=2e-4), (score2, ref2)

    print("KERNEL_OK")
</pallas_src>

<mosaic_0001>
module attributes {stable_mosaic.version = 11 : i64} {
  func.func @fused_kernel(%arg0: memref<32x102xf32, #tpu.memory_space<vmem>>, %arg1: memref<102x1024xf32, #tpu.memory_space<vmem>>, %arg2: memref<256x2048xf32, #tpu.memory_space<any>>, %arg3: memref<256x256xf32, #tpu.memory_space<vmem>>, %arg4: memref<1x256xf32, #tpu.memory_space<vmem>>, %arg5: memref<128x128xf32, #tpu.memory_space<vmem>>, %arg6: memref<1x128xf32, #tpu.memory_space<vmem>>, %arg7: memref<4x128xf32, #tpu.memory_space<vmem>>, %arg8: memref<1x1xf32, #tpu.memory_space<vmem>>, %arg9: memref<2x128xf32, #tpu.memory_space<vmem>>, %arg10: memref<8x4x1024xf32, #tpu.memory_space<vmem>>, %arg11: memref<256x2048xf32, #tpu.memory_space<vmem>>, %arg12: memref<!tpu.dma_semaphore, #tpu.memory_space<semaphore_mem>>) attributes {dimension_semantics = [], scalar_prefetch = 0 : i64, scratch_operands = 3 : i64, tpu.core_type = #tpu.core_type<tc>} {
    tpu.enqueue_dma source(%arg2 : memref<256x2048xf32, #tpu.memory_space<any>>) target(%arg11 : memref<256x2048xf32, #tpu.memory_space<vmem>>) target_semaphore(%arg12 : memref<!tpu.dma_semaphore, #tpu.memory_space<semaphore_mem>>)
    %0 = tpu.iota {dimensions = array<i32: 0>} : vector<4x1xi32>
    %c2_i32 = arith.constant 2 : i32
    %1 = vector.broadcast %c2_i32 : i32 to vector<4x1xi32>
    %2 = arith.cmpi slt, %0, %1 : vector<4x1xi32>
    %3 = vector.shape_cast %2 : vector<4x1xi1> to vector<4x1xi1>
    %4 = vector.broadcast %3 : vector<4x1xi1> to vector<4x1024xi1>
    %c0 = arith.constant 0 : index
    %c0_0 = arith.constant 0 : index
    %5 = vector.load %arg0[%c0, %c0_0] : memref<32x102xf32, #tpu.memory_space<vmem>>, vector<16x102xf32>
    %c0_1 = arith.constant 0 : index
    %c0_2 = arith.constant 0 : index
    %6 = vector.load %arg1[%c0_1, %c0_2] : memref<102x1024xf32, #tpu.memory_space<vmem>>, vector<102x1024xf32>
    %cst = arith.constant dense<0.000000e+00> : vector<16x1024xf32>
    %7 = tpu.matmul %5, %6, %cst {dimension_numbers = #tpu.dot_dimension_numbers<[1], [0], [0], [1], [0, 0, 1, 1], [], []>} : vector<16x102xf32>, vector<102x1024xf32>, vector<16x1024xf32> -> vector<16x1024xf32>
    %8 = vector.extract_strided_slice %7 {offsets = [0, 0], sizes = [4, 1024], strides = [1, 1]} : vector<16x1024xf32> to vector<4x1024xf32>
    %c0_3 = arith.constant 0 : index
    %c0_4 = arith.constant 0 : index
    %c0_5 = arith.constant 0 : index
    %9 = vector.load %arg10[%c0_3, %c0_4, %c0_5] : memref<8x4x1024xf32, #tpu.memory_space<vmem>>, vector<1x4x1024xf32>
    %10 = vector.shape_cast %9 : vector<1x4x1024xf32> to vector<4x1024xf32>
    %11 = vector.shape_cast %8 : vector<4x1024xf32> to vector<1x4x1024xf32>
    tpu.vector_store %arg10[%c0_3, %c0_4, %c0_5], %11 {strides = array<i32>} : memref<8x4x1024xf32, #tpu.memory_space<vmem>>, vector<1x4x1024xf32>,
    %12 = vector.extract_strided_slice %7 {offsets = [4, 0], sizes = [4, 1024], strides = [1, 1]} : vector<16x1024xf32> to vector<4x1024xf32>
    %c1 = arith.constant 1 : index
    %c0_6 = arith.constant 0 : index
    %c0_7 = arith.constant 0 : index
    %13 = vector.load %arg10[%c1, %c0_6, %c0_7] : memref<8x4x1024xf32, #tpu.memory_space<vmem>>, vector<1x4x1024xf32>
    %14 = vector.shape_cast %13 : vector<1x4x1024xf32> to vector<4x1024xf32>
    %15 = vector.shape_cast %12 : vector<4x1024xf32> to vector<1x4x1024xf32>
    tpu.vector_store %arg10[%c1, %c0_6, %c0_7], %15 {strides = array<i32>} : memref<8x4x1024xf32, #tpu.memory_space<vmem>>, vector<1x4x1024xf32>,
    %16 = vector.extract_strided_slice %7 {offsets = [8, 0], sizes = [4, 1024], strides = [1, 1]} : vector<16x1024xf32> to vector<4x1024xf32>
    %c2 = arith.constant 2 : index
    %c0_8 = arith.constant 0 : index
    %c0_9 = arith.constant 0 : index
    %17 = vector.load %arg10[%c2, %c0_8, %c0_9] : memref<8x4x1024xf32, #tpu.memory_space<vmem>>, vector<1x4x1024xf32>
    %18 = vector.shape_cast %17 : vector<1x4x1024xf32> to vector<4x1024xf32>
    %19 = vector.shape_cast %16 : vector<4x1024xf32> to vector<1x4x1024xf32>
    tpu.vector_store %arg10[%c2, %c0_8, %c0_9], %19 {strides = array<i32>} : memref<8x4x1024xf32, #tpu.memory_space<vmem>>, vector<1x4x1024xf32>,
    %20 = vector.extract_strided_slice %7 {offsets = [12, 0], sizes = [4, 1024], strides = [1, 1]} : vector<16x1024xf32> to vector<4x1024xf32>
    %c3 = arith.constant 3 : index
    %c0_10 = arith.constant 0 : index
    %c0_11 = arith.constant 0 : index
    %21 = vector.load %arg10[%c3, %c0_10, %c0_11] : memref<8x4x1024xf32, #tpu.memory_space<vmem>>, vector<1x4x1024xf32>
    %22 = vector.shape_cast %21 : vector<1x4x1024xf32> to vector<4x1024xf32>
    %23 = vector.shape_cast %20 : vector<4x1024xf32> to vector<1x4x1024xf32>
    tpu.vector_store %arg10[%c3, %c0_10, %c0_11], %23 {strides = array<i32>} : memref<8x4x1024xf32, #tpu.memory_space<vmem>>, vector<1x4x1024xf32>,
    %c16 = arith.constant 16 : index
    %c0_12 = arith.constant 0 : index
    %24 = vector.load %arg0[%c16, %c0_12] : memref<32x102xf32, #tpu.memory_space<vmem>>, vector<16x102xf32>
    %c0_13 = arith.constant 0 : index
    %c0_14 = arith.constant 0 : index
    %25 = vector.load %arg1[%c0_13, %c0_14] : memref<102x1024xf32, #tpu.memory_space<vmem>>, vector<102x1024xf32>
    %cst_15 = arith.constant dense<0.000000e+00> : vector<16x1024xf32>
    %26 = tpu.matmul %24, %25, %cst_15 {dimension_numbers = #tpu.dot_dimension_numbers<[1], [0], [0], [1], [0, 0, 1, 1], [], []>} : vector<16x102xf32>, vector<102x1024xf32>, vector<16x1024xf32> -> vector<16x1024xf32>
    %27 = vector.extract_strided_slice %26 {offsets = [0, 0], sizes = [4, 1024], strides = [1, 1]} : vector<16x1024xf32> to vector<4x1024xf32>
    %c4 = arith.constant 4 : index
    %c0_16 = arith.constant 0 : index
    %c0_17 = arith.constant 0 : index
    %28 = vector.load %arg10[%c4, %c0_16, %c0_17] : memref<8x4x1024xf32, #tpu.memory_space<vmem>>, vector<1x4x1024xf32>
    %29 = vector.shape_cast %28 : vector<1x4x1024xf32> to vector<4x1024xf32>
    %30 = vector.shape_cast %27 : vector<4x1024xf32> to vector<1x4x1024xf32>
    tpu.vector_store %arg10[%c4, %c0_16, %c0_17], %30 {strides = array<i32>} : memref<8x4x1024xf32, #tpu.memory_space<vmem>>, vector<1x4x1024xf32>,
    %31 = vector.extract_strided_slice %26 {offsets = [4, 0], sizes = [4, 1024], strides = [1, 1]} : vector<16x1024xf32> to vector<4x1024xf32>
    %c5 = arith.constant 5 : index
    %c0_18 = arith.constant 0 : index
    %c0_19 = arith.constant 0 : index
    %32 = vector.load %arg10[%c5, %c0_18, %c0_19] : memref<8x4x1024xf32, #tpu.memory_space<vmem>>, vector<1x4x1024xf32>
    %33 = vector.shape_cast %32 : vector<1x4x1024xf32> to vector<4x1024xf32>
    %34 = vector.shape_cast %31 : vector<4x1024xf32> to vector<1x4x1024xf32>
    tpu.vector_store %arg10[%c5, %c0_18, %c0_19], %34 {strides = array<i32>} : memref<8x4x1024xf32, #tpu.memory_space<vmem>>, vector<1x4x1024xf32>,
    %35 = vector.extract_strided_slice %26 {offsets = [8, 0], sizes = [4, 1024], strides = [1, 1]} : vector<16x1024xf32> to vector<4x1024xf32>
    %c6 = arith.constant 6 : index
    %c0_20 = arith.constant 0 : index
    %c0_21 = arith.constant 0 : index
    %36 = vector.load %arg10[%c6, %c0_20, %c0_21] : memref<8x4x1024xf32, #tpu.memory_space<vmem>>, vector<1x4x1024xf32>
    %37 = vector.shape_cast %36 : vector<1x4x1024xf32> to vector<4x1024xf32>
    %38 = vector.shape_cast %35 : vector<4x1024xf32> to vector<1x4x1024xf32>
    tpu.vector_store %arg10[%c6, %c0_20, %c0_21], %38 {strides = array<i32>} : memref<8x4x1024xf32, #tpu.memory_space<vmem>>, vector<1x4x1024xf32>,
    %39 = vector.extract_strided_slice %26 {offsets = [12, 0], sizes = [4, 1024], strides = [1, 1]} : vector<16x1024xf32> to vector<4x1024xf32>
    %c7 = arith.constant 7 : index
    %c0_22 = arith.constant 0 : index
    %c0_23 = arith.constant 0 : index
    %40 = vector.load %arg10[%c7, %c0_22, %c0_23] : memref<8x4x1024xf32, #tpu.memory_space<vmem>>, vector<1x4x1024xf32>
    %41 = vector.shape_cast %40 : vector<1x4x1024xf32> to vector<4x1024xf32>
    %42 = vector.shape_cast %39 : vector<4x1024xf32> to vector<1x4x1024xf32>
    tpu.vector_store %arg10[%c7, %c0_22, %c0_23], %42 {strides = array<i32>} : memref<8x4x1024xf32, #tpu.memory_space<vmem>>, vector<1x4x1024xf32>,
    tpu.wait_dma2 semaphore(%arg12 : memref<!tpu.dma_semaphore, #tpu.memory_space<semaphore_mem>>) src(%arg2 : memref<256x2048xf32, #tpu.memory_space<any>>) dst(%arg11 : memref<256x2048xf32, #tpu.memory_space<vmem>>)
    %cst_24 = arith.constant 0.000000e+00 : f32
    %43 = vector.broadcast %cst_24 : f32 to vector<4x256xf32>
    %cst_25 = arith.constant 0.000000e+00 : f32
    %44 = vector.broadcast %cst_25 : f32 to vector<4x256xf32>
    %c0_26 = arith.constant 0 : index
    %c0_27 = arith.constant 0 : index
    %45 = vector.load %arg11[%c0_26, %c0_27] : memref<256x2048xf32, #tpu.memory_space<vmem>>, vector<256x2048xf32>
    %cst_28 = arith.constant dense<0.000000e+00> : vector<4x2048xf32>
    %46 = tpu.matmul %43, %45, %cst_28 {dimension_numbers = #tpu.dot_dimension_numbers<[1], [0], [0], [1], [0, 0, 1, 1], [], []>} : vector<4x256xf32>, vector<256x2048xf32>, vector<4x2048xf32> -> vector<4x2048xf32>
    %47 = vector.extract_strided_slice %46 {offsets = [0, 0], sizes = [4, 1024], strides = [1, 1]} : vector<4x2048xf32> to vector<4x1024xf32>
    %48 = vector.extract_strided_slice %46 {offsets = [0, 1024], sizes = [4, 1024], strides = [1, 1]} : vector<4x2048xf32> to vector<4x1024xf32>
    %49 = arith.select %4, %47, %48 : vector<4x1024xi1>, vector<4x1024xf32>
    %c0_29 = arith.constant 0 : index
    %c0_30 = arith.constant 0 : index
    %c0_31 = arith.constant 0 : index
    %50 = vector.load %arg10[%c0_29, %c0_30, %c0_31] : memref<8x4x1024xf32, #tpu.memory_space<vmem>>, vector<1x4x1024xf32>
    %51 = vector.shape_cast %50 : vector<1x4x1024xf32> to vector<4x1024xf32>
    %52 = arith.addf %49, %51 : vector<4x1024xf32>
    %53 = vector.extract_strided_slice %52 {offsets = [0, 0], sizes = [4, 256], strides = [1, 1]} : vector<4x1024xf32> to vector<4x256xf32>
    %cst_32 = arith.constant 5.000000e-01 : f32
    %54 = vector.broadcast %cst_32 : f32 to vector<4x256xf32>
    %55 = arith.mulf %54, %53 : vector<4x256xf32>
    %56 = math.tanh %55 : vector<4x256xf32>
    %cst_33 = arith.constant 1.000000e+00 : f32
    %57 = vector.broadcast %cst_33 : f32 to vector<4x256xf32>
    %58 = arith.addf %56, %57 : vector<4x256xf32>
    %cst_34 = arith.constant 5.000000e-01 : f32
    %59 = vector.broadcast %cst_34 : f32 to vector<4x256xf32>
    %60 = arith.mulf %59, %58 : vector<4x256xf32>
    %61 = vector.extract_strided_slice %52 {offsets = [0, 256], sizes = [4, 256], strides = [1, 1]} : vector<4x1024xf32> to vector<4x256xf32>
    %cst_35 = arith.constant 5.000000e-01 : f32
    %62 = vector.broadcast %cst_35 : f32 to vector<4x256xf32>
    %63 = arith.mulf %62, %61 : vector<4x256xf32>
    %64 = math.tanh %63 : vector<4x256xf32>
    %cst_36 = arith.constant 1.000000e+00 : f32
    %65 = vector.broadcast %cst_36 : f32 to vector<4x256xf32>
    %66 = arith.addf %64, %65 : vector<4x256xf32>
    %cst_37 = arith.constant 5.000000e-01 : f32
    %67 = vector.broadcast %cst_37 : f32 to vector<4x256xf32>
    %68 = arith.mulf %67, %66 : vector<4x256xf32>
    %69 = vector.extract_strided_slice %52 {offsets = [0, 512], sizes = [4, 256], strides = [1, 1]} : vector<4x1024xf32> to vector<4x256xf32>
    %70 = math.tanh %69 : vector<4x256xf32>
    %71 = vector.extract_strided_slice %52 {offsets = [0, 768], sizes = [4, 256], strides = [1, 1]} : vector<4x1024xf32> to vector<4x256xf32>
    %cst_38 = arith.constant 5.000000e-01 : f32
    %72 = vector.broadcast %cst_38 : f32 to vector<4x256xf32>
    %73 = arith.mulf %72, %71 : vector<4x256xf32>
    %74 = math.tanh %73 : vector<4x256xf32>
    %cst_39 = arith.constant 1.000000e+00 : f32
    %75 = vector.broadcast %cst_39 : f32 to vector<4x256xf32>
    %76 = arith.addf %74, %75 : vector<4x256xf32>
    %cst_40 = arith.constant 5.000000e-01 : f32
    %77 = vector.broadcast %cst_40 : f32 to vector<4x256xf32>
    %78 = arith.mulf %77, %76 : vector<4x256xf32>
    %79 = arith.mulf %68, %44 : vector<4x256xf32>
    %80 = arith.mulf %60, %70 : vector<4x256xf32>
    %81 = arith.addf %79, %80 : vector<4x256xf32>
    %82 = math.tanh %81 : vector<4x256xf32>
    %83 = arith.mulf %78, %82 : vector<4x256xf32>
    %c0_41 = arith.constant 0 : index
    %c0_42 = arith.constant 0 : index
    %84 = vector.load %arg11[%c0_41, %c0_42] : memref<256x2048xf32, #tpu.memory_space<vmem>>, vector<256x2048xf32>
    %cst_43 = arith.constant dense<0.000000e+00> : vector<4x2048xf32>
    %85 = tpu.matmul %83, %84, %cst_43 {dimension_numbers = #tpu.dot_dimension_numbers<[1], [0], [0], [1], [0, 0, 1, 1], [], []>} : vector<4x256xf32>, vector<256x2048xf32>, vector<4x2048xf32> -> vector<4x2048xf32>
    %86 = vector.extract_strided_slice %85 {offsets = [0, 0], sizes = [4, 1024], strides = [1, 1]} : vector<4x2048xf32> to vector<4x1024xf32>
    %87 = vector.extract_strided_slice %85 {offsets = [0, 1024], sizes = [4, 1024], strides = [1, 1]} : vector<4x2048xf32> to vector<4x1024xf32>
    %88 = arith.select %4, %86, %87 : vector<4x1024xi1>, vector<4x1024xf32>
    %c1_44 = arith.constant 1 : index
    %c0_45 = arith.constant 0 : index
    %c0_46 = arith.constant 0 : index
    %89 = vector.load %arg10[%c1_44, %c0_45, %c0_46] : memref<8x4x1024xf32, #tpu.memory_space<vmem>>, vector<1x4x1024xf32>
    %90 = vector.shape_cast %89 : vector<1x4x1024xf32> to vector<4x1024xf32>
    %91 = arith.addf %88, %90 : vector<4x1024xf32>
    %92 = vector.extract_strided_slice %91 {offsets = [0, 0], sizes = [4, 256], strides = [1, 1]} : vector<4x1024xf32> to vector<4x256xf32>
    %cst_47 = arith.constant 5.000000e-01 : f32
    %93 = vector.broadcast %cst_47 : f32 to vector<4x256xf32>
    %94 = arith.mulf %93, %92 : vector<4x256xf32>
    %95 = math.tanh %94 : vector<4x256xf32>
    %cst_48 = arith.constant 1.000000e+00 : f32
    %96 = vector.broadcast %cst_48 : f32 to vector<4x256xf32>
    %97 = arith.addf %95, %96 : vector<4x256xf32>
    %cst_49 = arith.constant 5.000000e-01 : f32
    %98 = vector.broadcast %cst_49 : f32 to vector<4x256xf32>
    %99 = arith.mulf %98, %97 : vector<4x256xf32>
    %100 = vector.extract_strided_slice %91 {offsets = [0, 256], sizes = [4, 256], strides = [1, 1]} : vector<4x1024xf32> to vector<4x256xf32>
    %cst_50 = arith.constant 5.000000e-01 : f32
    %101 = vector.broadcast %cst_50 : f32 to vector<4x256xf32>
    %102 = arith.mulf %101, %100 : vector<4x256xf32>
    %103 = math.tanh %102 : vector<4x256xf32>
    %cst_51 = arith.constant 1.000000e+00 : f32
    %104 = vector.broadcast %cst_51 : f32 to vector<4x256xf32>
    %105 = arith.addf %103, %104 : vector<4x256xf32>
    %cst_52 = arith.constant 5.000000e-01 : f32
    %106 = vector.broadcast %cst_52 : f32 to vector<4x256xf32>
    %107 = arith.mulf %106, %105 : vector<4x256xf32>
    %108 = vector.extract_strided_slice %91 {offsets = [0, 512], sizes = [4, 256], strides = [1, 1]} : vector<4x1024xf32> to vector<4x256xf32>
    %109 = math.tanh %108 : vector<4x256xf32>
    %110 = vector.extract_strided_slice %91 {offsets = [0, 768], sizes = [4, 256], strides = [1, 1]} : vector<4x1024xf32> to vector<4x256xf32>
    %cst_53 = arith.constant 5.000000e-01 : f32
    %111 = vector.broadcast %cst_53 : f32 to vector<4x256xf32>
    %112 = arith.mulf %111, %110 : vector<4x256xf32>
    %113 = math.tanh %112 : vector<4x256xf32>
    %cst_54 = arith.constant 1.000000e+00 : f32
    %114 = vector.broadcast %cst_54 : f32 to vector<4x256xf32>
    %115 = arith.addf %113, %114 : vector<4x256xf32>
    %cst_55 = arith.constant 5.000000e-01 : f32
    %116 = vector.broadcast %cst_55 : f32 to vector<4x256xf32>
    %117 = arith.mulf %116, %115 : vector<4x256xf32>
    %118 = arith.mulf %107, %81 : vector<4x256xf32>
    %119 = arith.mulf %99, %109 : vector<4x256xf32>
    %120 = arith.addf %118, %119 : vector<4x256xf32>
    %121 = math.tanh %120 : vector<4x256xf32>
    %122 = arith.mulf %117, %121 : vector<4x256xf32>
    %c0_56 = arith.constant 0 : index
    %c0_57 = arith.constant 0 : index
    %123 = vector.load %arg11[%c0_56, %c0_57] : memref<256x2048xf32, #tpu.memory_space<vmem>>, vector<256x2048xf32>
    %cst_58 = arith.constant dense<0.000000e+00> : vector<4x2048xf32>
    %124 = tpu.matmul %122, %123, %cst_58 {dimension_numbers = #tpu.dot_dimension_numbers<[1], [0], [0], [1], [0, 0, 1, 1], [], []>} : vector<4x256xf32>, vector<256x2048xf32>, vector<4x2048xf32> -> vector<4x2048xf32>
    %125 = vector.extract_strided_slice %124 {offsets = [0, 0], sizes = [4, 1024], strides = [1, 1]} : vector<4x2048xf32> to vector<4x1024xf32>
    %126 = vector.extract_strided_slice %124 {offsets = [0, 1024], sizes = [4, 1024], strides = [1, 1]} : vector<4x2048xf32> to vector<4x1024xf32>
    %127 = arith.select %4, %125, %126 : vector<4x1024xi1>, vector<4x1024xf32>
    %c2_59 = arith.constant 2 : index
    %c0_60 = arith.constant 0 : index
    %c0_61 = arith.constant 0 : index
    %128 = vector.load %arg10[%c2_59, %c0_60, %c0_61] : memref<8x4x1024xf32, #tpu.memory_space<vmem>>, vector<1x4x1024xf32>
    %129 = vector.shape_cast %128 : vector<1x4x1024xf32> to vector<4x1024xf32>
    %130 = arith.addf %127, %129 : vector<4x1024xf32>
    %131 = vector.extract_strided_slice %130 {offsets = [0, 0], sizes = [4, 256], strides = [1, 1]} : vector<4x1024xf32> to vector<4x256xf32>
    %cst_62 = arith.constant 5.000000e-01 : f32
    %132 = vector.broadcast %cst_62 : f32 to vector<4x256xf32>
    %133 = arith.mulf %132, %131 : vector<4x256xf32>
    %134 = math.tanh %133 : vector<4x256xf32>
    %cst_63 = arith.constant 1.000000e+00 : f32
    %135 = vector.broadcast %cst_63 : f32 to vector<4x256xf32>
    %136 = arith.addf %134, %135 : vector<4x256xf32>
    %cst_64 = arith.constant 5.000000e-01 : f32
    %137 = vector.broadcast %cst_64 : f32 to vector<4x256xf32>
    %138 = arith.mulf %137, %136 : vector<4x256xf32>
    %139 = vector.extract_strided_slice %130 {offsets = [0, 256], sizes = [4, 256], strides = [1, 1]} : vector<4x1024xf32> to vector<4x256xf32>
    %cst_65 = arith.constant 5.000000e-01 : f32
    %140 = vector.broadcast %cst_65 : f32 to vector<4x256xf32>
    %141 = arith.mulf %140, %139 : vector<4x256xf32>
    %142 = math.tanh %141 : vector<4x256xf32>
    %cst_66 = arith.constant 1.000000e+00 : f32
    %143 = vector.broadcast %cst_66 : f32 to vector<4x256xf32>
    %144 = arith.addf %142, %143 : vector<4x256xf32>
    %cst_67 = arith.constant 5.000000e-01 : f32
    %145 = vector.broadcast %cst_67 : f32 to vector<4x256xf32>
    %146 = arith.mulf %145, %144 : vector<4x256xf32>
    %147 = vector.extract_strided_slice %130 {offsets = [0, 512], sizes = [4, 256], strides = [1, 1]} : vector<4x1024xf32> to vector<4x256xf32>
    %148 = math.tanh %147 : vector<4x256xf32>
    %149 = vector.extract_strided_slice %130 {offsets = [0, 768], sizes = [4, 256], strides = [1, 1]} : vector<4x1024xf32> to vector<4x256xf32>
    %cst_68 = arith.constant 5.000000e-01 : f32
    %150 = vector.broadcast %cst_68 : f32 to vector<4x256xf32>
    %151 = arith.mulf %150, %149 : vector<4x256xf32>
    %152 = math.tanh %151 : vector<4x256xf32>
    %cst_69 = arith.constant 1.000000e+00 : f32
    %153 = vector.broadcast %cst_69 : f32 to vector<4x256xf32>
    %154 = arith.addf %152, %153 : vector<4x256xf32>
    %cst_70 = arith.constant 5.000000e-01 : f32
    %155 = vector.broadcast %cst_70 : f32 to vector<4x256xf32>
    %156 = arith.mulf %155, %154 : vector<4x256xf32>
    %157 = arith.mulf %146, %120 : vector<4x256xf32>
    %158 = arith.mulf %138, %148 : vector<4x256xf32>
    %159 = arith.addf %157, %158 : vector<4x256xf32>
    %160 = math.tanh %159 : vector<4x256xf32>
    %161 = arith.mulf %156, %160 : vector<4x256xf32>
    %c0_71 = arith.constant 0 : index
    %c0_72 = arith.constant 0 : index
    %162 = vector.load %arg11[%c0_71, %c0_72] : memref<256x2048xf32, #tpu.memory_space<vmem>>, vector<256x2048xf32>
    %cst_73 = arith.constant dense<0.000000e+00> : vector<4x2048xf32>
    %163 = tpu.matmul %161, %162, %cst_73 {dimension_numbers = #tpu.dot_dimension_numbers<[1], [0], [0], [1], [0, 0, 1, 1], [], []>} : vector<4x256xf32>, vector<256x2048xf32>, vector<4x2048xf32> -> vector<4x2048xf32>
    %164 = vector.extract_strided_slice %163 {offsets = [0, 0], sizes = [4, 1024], strides = [1, 1]} : vector<4x2048xf32> to vector<4x1024xf32>
    %165 = vector.extract_strided_slice %163 {offsets = [0, 1024], sizes = [4, 1024], strides = [1, 1]} : vector<4x2048xf32> to vector<4x1024xf32>
    %166 = arith.select %4, %164, %165 : vector<4x1024xi1>, vector<4x1024xf32>
    %c3_74 = arith.constant 3 : index
    %c0_75 = arith.constant 0 : index
    %c0_76 = arith.constant 0 : index
    %167 = vector.load %arg10[%c3_74, %c0_75, %c0_76] : memref<8x4x1024xf32, #tpu.memory_space<vmem>>, vector<1x4x1024xf32>
    %168 = vector.shape_cast %167 : vector<1x4x1024xf32> to vector<4x1024xf32>
    %169 = arith.addf %166, %168 : vector<4x1024xf32>
    %170 = vector.extract_strided_slice %169 {offsets = [0, 0], sizes = [4, 256], strides = [1, 1]} : vector<4x1024xf32> to vector<4x256xf32>
    %cst_77 = arith.constant 5.000000e-01 : f32
    %171 = vector.broadcast %cst_77 : f32 to vector<4x256xf32>
    %172 = arith.mulf %171, %170 : vector<4x256xf32>
    %173 = math.tanh %172 : vector<4x256xf32>
    %cst_78 = arith.constant 1.000000e+00 : f32
    %174 = vector.broadcast %cst_78 : f32 to vector<4x256xf32>
    %175 = arith.addf %173, %174 : vector<4x256xf32>
    %cst_79 = arith.constant 5.000000e-01 : f32
    %176 = vector.broadcast %cst_79 : f32 to vector<4x256xf32>
    %177 = arith.mulf %176, %175 : vector<4x256xf32>
    %178 = vector.extract_strided_slice %169 {offsets = [0, 256], sizes = [4, 256], strides = [1, 1]} : vector<4x1024xf32> to vector<4x256xf32>
    %cst_80 = arith.constant 5.000000e-01 : f32
    %179 = vector.broadcast %cst_80 : f32 to vector<4x256xf32>
    %180 = arith.mulf %179, %178 : vector<4x256xf32>
    %181 = math.tanh %180 : vector<4x256xf32>
    %cst_81 = arith.constant 1.000000e+00 : f32
    %182 = vector.broadcast %cst_81 : f32 to vector<4x256xf32>
    %183 = arith.addf %181, %182 : vector<4x256xf32>
    %cst_82 = arith.constant 5.000000e-01 : f32
    %184 = vector.broadcast %cst_82 : f32 to vector<4x256xf32>
    %185 = arith.mulf %184, %183 : vector<4x256xf32>
    %186 = vector.extract_strided_slice %169 {offsets = [0, 512], sizes = [4, 256], strides = [1, 1]} : vector<4x1024xf32> to vector<4x256xf32>
    %187 = math.tanh %186 : vector<4x256xf32>
    %188 = vector.extract_strided_slice %169 {offsets = [0, 768], sizes = [4, 256], strides = [1, 1]} : vector<4x1024xf32> to vector<4x256xf32>
    %cst_83 = arith.constant 5.000000e-01 : f32
    %189 = vector.broadcast %cst_83 : f32 to vector<4x256xf32>
    %190 = arith.mulf %189, %188 : vector<4x256xf32>
    %191 = math.tanh %190 : vector<4x256xf32>
    %cst_84 = arith.constant 1.000000e+00 : f32
    %192 = vector.broadcast %cst_84 : f32 to vector<4x256xf32>
    %193 = arith.addf %191, %192 : vector<4x256xf32>
    %cst_85 = arith.constant 5.000000e-01 : f32
    %194 = vector.broadcast %cst_85 : f32 to vector<4x256xf32>
    %195 = arith.mulf %194, %193 : vector<4x256xf32>
    %196 = arith.mulf %185, %159 : vector<4x256xf32>
    %197 = arith.mulf %177, %187 : vector<4x256xf32>
    %198 = arith.addf %196, %197 : vector<4x256xf32>
    %199 = math.tanh %198 : vector<4x256xf32>
    %200 = arith.mulf %195, %199 : vector<4x256xf32>
    %c0_86 = arith.constant 0 : index
    %c0_87 = arith.constant 0 : index
    %201 = vector.load %arg11[%c0_86, %c0_87] : memref<256x2048xf32, #tpu.memory_space<vmem>>, vector<256x2048xf32>
    %cst_88 = arith.constant dense<0.000000e+00> : vector<4x2048xf32>
    %202 = tpu.matmul %200, %201, %cst_88 {dimension_numbers = #tpu.dot_dimension_numbers<[1], [0], [0], [1], [0, 0, 1, 1], [], []>} : vector<4x256xf32>, vector<256x2048xf32>, vector<4x2048xf32> -> vector<4x2048xf32>
    %203 = vector.extract_strided_slice %202 {offsets = [0, 0], sizes = [4, 1024], strides = [1, 1]} : vector<4x2048xf32> to vector<4x1024xf32>
    %204 = vector.extract_strided_slice %202 {offsets = [0, 1024], sizes = [4, 1024], strides = [1, 1]} : vector<4x2048xf32> to vector<4x1024xf32>
    %205 = arith.select %4, %203, %204 : vector<4x1024xi1>, vector<4x1024xf32>
    %c4_89 = arith.constant 4 : index
    %c0_90 = arith.constant 0 : index
    %c0_91 = arith.constant 0 : index
    %206 = vector.load %arg10[%c4_89, %c0_90, %c0_91] : memref<8x4x1024xf32, #tpu.memory_space<vmem>>, vector<1x4x1024xf32>
    %207 = vector.shape_cast %206 : vector<1x4x1024xf32> to vector<4x1024xf32>
    %208 = arith.addf %205, %207 : vector<4x1024xf32>
    %209 = vector.extract_strided_slice %208 {offsets = [0, 0], sizes = [4, 256], strides = [1, 1]} : vector<4x1024xf32> to vector<4x256xf32>
    %cst_92 = arith.constant 5.000000e-01 : f32
    %210 = vector.broadcast %cst_92 : f32 to vector<4x256xf32>
    %211 = arith.mulf %210, %209 : vector<4x256xf32>
    %212 = math.tanh %211 : vector<4x256xf32>
    %cst_93 = arith.constant 1.000000e+00 : f32
    %213 = vector.broadcast %cst_93 : f32 to vector<4x256xf32>
    %214 = arith.addf %212, %213 : vector<4x256xf32>
    %cst_94 = arith.constant 5.000000e-01 : f32
    %215 = vector.broadcast %cst_94 : f32 to vector<4x256xf32>
    %216 = arith.mulf %215, %214 : vector<4x256xf32>
    %217 = vector.extract_strided_slice %208 {offsets = [0, 256], sizes = [4, 256], strides = [1, 1]} : vector<4x1024xf32> to vector<4x256xf32>
    %cst_95 = arith.constant 5.000000e-01 : f32
    %218 = vector.broadcast %cst_95 : f32 to vector<4x256xf32>
    %219 = arith.mulf %218, %217 : vector<4x256xf32>
    %220 = math.tanh %219 : vector<4x256xf32>
    %cst_96 = arith.constant 1.000000e+00 : f32
    %221 = vector.broadcast %cst_96 : f32 to vector<4x256xf32>
    %222 = arith.addf %220, %221 : vector<4x256xf32>
    %cst_97 = arith.constant 5.000000e-01 : f32
    %223 = vector.broadcast %cst_97 : f32 to vector<4x256xf32>
    %224 = arith.mulf %223, %222 : vector<4x256xf32>
    %225 = vector.extract_strided_slice %208 {offsets = [0, 512], sizes = [4, 256], strides = [1, 1]} : vector<4x1024xf32> to vector<4x256xf32>
    %226 = math.tanh %225 : vector<4x256xf32>
    %227 = vector.extract_strided_slice %208 {offsets = [0, 768], sizes = [4, 256], strides = [1, 1]} : vector<4x1024xf32> to vector<4x256xf32>
    %cst_98 = arith.constant 5.000000e-01 : f32
    %228 = vector.broadcast %cst_98 : f32 to vector<4x256xf32>
    %229 = arith.mulf %228, %227 : vector<4x256xf32>
    %230 = math.tanh %229 : vector<4x256xf32>
    %cst_99 = arith.constant 1.000000e+00 : f32
    %231 = vector.broadcast %cst_99 : f32 to vector<4x256xf32>
    %232 = arith.addf %230, %231 : vector<4x256xf32>
    %cst_100 = arith.constant 5.000000e-01 : f32
    %233 = vector.broadcast %cst_100 : f32 to vector<4x256xf32>
    %234 = arith.mulf %233, %232 : vector<4x256xf32>
    %235 = arith.mulf %224, %198 : vector<4x256xf32>
    %236 = arith.mulf %216, %226 : vector<4x256xf32>
    %237 = arith.addf %235, %236 : vector<4x256xf32>
    %238 = math.tanh %237 : vector<4x256xf32>
    %239 = arith.mulf %234, %238 : vector<4x256xf32>
    %c0_101 = arith.constant 0 : index
    %c0_102 = arith.constant 0 : index
    %240 = vector.load %arg11[%c0_101, %c0_102] : memref<256x2048xf32, #tpu.memory_space<vmem>>, vector<256x2048xf32>
    %cst_103 = arith.constant dense<0.000000e+00> : vector<4x2048xf32>
    %241 = tpu.matmul %239, %240, %cst_103 {dimension_numbers = #tpu.dot_dimension_numbers<[1], [0], [0], [1], [0, 0, 1, 1], [], []>} : vector<4x256xf32>, vector<256x2048xf32>, vector<4x2048xf32> -> vector<4x2048xf32>
    %242 = vector.extract_strided_slice %241 {offsets = [0, 0], sizes = [4, 1024], strides = [1, 1]} : vector<4x2048xf32> to vector<4x1024xf32>
    %243 = vector.extract_strided_slice %241 {offsets = [0, 1024], sizes = [4, 1024], strides = [1, 1]} : vector<4x2048xf32> to vector<4x1024xf32>
    %244 = arith.select %4, %242, %243 : vector<4x1024xi1>, vector<4x1024xf32>
    %c5_104 = arith.constant 5 : index
    %c0_105 = arith.constant 0 : index
    %c0_106 = arith.constant 0 : index
    %245 = vector.load %arg10[%c5_104, %c0_105, %c0_106] : memref<8x4x1024xf32, #tpu.memory_space<vmem>>, vector<1x4x1024xf32>
    %246 = vector.shape_cast %245 : vector<1x4x1024xf32> to vector<4x1024xf32>
    %247 = arith.addf %244, %246 : vector<4x1024xf32>
    %248 = vector.extract_strided_slice %247 {offsets = [0, 0], sizes = [4, 256], strides = [1, 1]} : vector<4x1024xf32> to vector<4x256xf32>
    %cst_107 = arith.constant 5.000000e-01 : f32
    %249 = vector.broadcast %cst_107 : f32 to vector<4x256xf32>
    %250 = arith.mulf %249, %248 : vector<4x256xf32>
    %251 = math.tanh %250 : vector<4x256xf32>
    %cst_108 = arith.constant 1.000000e+00 : f32
    %252 = vector.broadcast %cst_108 : f32 to vector<4x256xf32>
    %253 = arith.addf %251, %252 : vector<4x256xf32>
    %cst_109 = arith.constant 5.000000e-01 : f32
    %254 = vector.broadcast %cst_109 : f32 to vector<4x256xf32>
    %255 = arith.mulf %254, %253 : vector<4x256xf32>
    %256 = vector.extract_strided_slice %247 {offsets = [0, 256], sizes = [4, 256], strides = [1, 1]} : vector<4x1024xf32> to vector<4x256xf32>
    %cst_110 = arith.constant 5.000000e-01 : f32
    %257 = vector.broadcast %cst_110 : f32 to vector<4x256xf32>
    %258 = arith.mulf %257, %256 : vector<4x256xf32>
    %259 = math.tanh %258 : vector<4x256xf32>
    %cst_111 = arith.constant 1.000000e+00 : f32
    %260 = vector.broadcast %cst_111 : f32 to vector<4x256xf32>
    %261 = arith.addf %259, %260 : vector<4x256xf32>
    %cst_112 = arith.constant 5.000000e-01 : f32
    %262 = vector.broadcast %cst_112 : f32 to vector<4x256xf32>
    %263 = arith.mulf %262, %261 : vector<4x256xf32>
    %264 = vector.extract_strided_slice %247 {offsets = [0, 512], sizes = [4, 256], strides = [1, 1]} : vector<4x1024xf32> to vector<4x256xf32>
    %265 = math.tanh %264 : vector<4x256xf32>
    %266 = vector.extract_strided_slice %247 {offsets = [0, 768], sizes = [4, 256], strides = [1, 1]} : vector<4x1024xf32> to vector<4x256xf32>
    %cst_113 = arith.constant 5.000000e-01 : f32
    %267 = vector.broadcast %cst_113 : f32 to vector<4x256xf32>
    %268 = arith.mulf %267, %266 : vector<4x256xf32>
    %269 = math.tanh %268 : vector<4x256xf32>
    %cst_114 = arith.constant 1.000000e+00 : f32
    %270 = vector.broadcast %cst_114 : f32 to vector<4x256xf32>
    %271 = arith.addf %269, %270 : vector<4x256xf32>
    %cst_115 = arith.constant 5.000000e-01 : f32
    %272 = vector.broadcast %cst_115 : f32 to vector<4x256xf32>
    %273 = arith.mulf %272, %271 : vector<4x256xf32>
    %274 = arith.mulf %263, %237 : vector<4x256xf32>
    %275 = arith.mulf %255, %265 : vector<4x256xf32>
    %276 = arith.addf %274, %275 : vector<4x256xf32>
    %277 = math.tanh %276 : vector<4x256xf32>
    %278 = arith.mulf %273, %277 : vector<4x256xf32>
    %c0_116 = arith.constant 0 : index
    %c0_117 = arith.constant 0 : index
    %279 = vector.load %arg11[%c0_116, %c0_117] : memref<256x2048xf32, #tpu.memory_space<vmem>>, vector<256x2048xf32>
    %cst_118 = arith.constant dense<0.000000e+00> : vector<4x2048xf32>
    %280 = tpu.matmul %278, %279, %cst_118 {dimension_numbers = #tpu.dot_dimension_numbers<[1], [0], [0], [1], [0, 0, 1, 1], [], []>} : vector<4x256xf32>, vector<256x2048xf32>, vector<4x2048xf32> -> vector<4x2048xf32>
    %281 = vector.extract_strided_slice %280 {offsets = [0, 0], sizes = [4, 1024], strides = [1, 1]} : vector<4x2048xf32> to vector<4x1024xf32>
    %282 = vector.extract_strided_slice %280 {offsets = [0, 1024], sizes = [4, 1024], strides = [1, 1]} : vector<4x2048xf32> to vector<4x1024xf32>
    %283 = arith.select %4, %281, %282 : vector<4x1024xi1>, vector<4x1024xf32>
    %c6_119 = arith.constant 6 : index
    %c0_120 = arith.constant 0 : index
    %c0_121 = arith.constant 0 : index
    %284 = vector.load %arg10[%c6_119, %c0_120, %c0_121] : memref<8x4x1024xf32, #tpu.memory_space<vmem>>, vector<1x4x1024xf32>
    %285 = vector.shape_cast %284 : vector<1x4x1024xf32> to vector<4x1024xf32>
    %286 = arith.addf %283, %285 : vector<4x1024xf32>
    %287 = vector.extract_strided_slice %286 {offsets = [0, 0], sizes = [4, 256], strides = [1, 1]} : vector<4x1024xf32> to vector<4x256xf32>
    %cst_122 = arith.constant 5.000000e-01 : f32
    %288 = vector.broadcast %cst_122 : f32 to vector<4x256xf32>
    %289 = arith.mulf %288, %287 : vector<4x256xf32>
    %290 = math.tanh %289 : vector<4x256xf32>
    %cst_123 = arith.constant 1.000000e+00 : f32
    %291 = vector.broadcast %cst_123 : f32 to vector<4x256xf32>
    %292 = arith.addf %290, %291 : vector<4x256xf32>
    %cst_124 = arith.constant 5.000000e-01 : f32
    %293 = vector.broadcast %cst_124 : f32 to vector<4x256xf32>
    %294 = arith.mulf %293, %292 : vector<4x256xf32>
    %295 = vector.extract_strided_slice %286 {offsets = [0, 256], sizes = [4, 256], strides = [1, 1]} : vector<4x1024xf32> to vector<4x256xf32>
    %cst_125 = arith.constant 5.000000e-01 : f32
    %296 = vector.broadcast %cst_125 : f32 to vector<4x256xf32>
    %297 = arith.mulf %296, %295 : vector<4x256xf32>
    %298 = math.tanh %297 : vector<4x256xf32>
    %cst_126 = arith.constant 1.000000e+00 : f32
    %299 = vector.broadcast %cst_126 : f32 to vector<4x256xf32>
    %300 = arith.addf %298, %299 : vector<4x256xf32>
    %cst_127 = arith.constant 5.000000e-01 : f32
    %301 = vector.broadcast %cst_127 : f32 to vector<4x256xf32>
    %302 = arith.mulf %301, %300 : vector<4x256xf32>
    %303 = vector.extract_strided_slice %286 {offsets = [0, 512], sizes = [4, 256], strides = [1, 1]} : vector<4x1024xf32> to vector<4x256xf32>
    %304 = math.tanh %303 : vector<4x256xf32>
    %305 = vector.extract_strided_slice %286 {offsets = [0, 768], sizes = [4, 256], strides = [1, 1]} : vector<4x1024xf32> to vector<4x256xf32>
    %cst_128 = arith.constant 5.000000e-01 : f32
    %306 = vector.broadcast %cst_128 : f32 to vector<4x256xf32>
    %307 = arith.mulf %306, %305 : vector<4x256xf32>
    %308 = math.tanh %307 : vector<4x256xf32>
    %cst_129 = arith.constant 1.000000e+00 : f32
    %309 = vector.broadcast %cst_129 : f32 to vector<4x256xf32>
    %310 = arith.addf %308, %309 : vector<4x256xf32>
    %cst_130 = arith.constant 5.000000e-01 : f32
    %311 = vector.broadcast %cst_130 : f32 to vector<4x256xf32>
    %312 = arith.mulf %311, %310 : vector<4x256xf32>
    %313 = arith.mulf %302, %276 : vector<4x256xf32>
    %314 = arith.mulf %294, %304 : vector<4x256xf32>
    %315 = arith.addf %313, %314 : vector<4x256xf32>
    %316 = math.tanh %315 : vector<4x256xf32>
    %317 = arith.mulf %312, %316 : vector<4x256xf32>
    %c0_131 = arith.constant 0 : index
    %c0_132 = arith.constant 0 : index
    %318 = vector.load %arg11[%c0_131, %c0_132] : memref<256x2048xf32, #tpu.memory_space<vmem>>, vector<256x2048xf32>
    %cst_133 = arith.constant dense<0.000000e+00> : vector<4x2048xf32>
    %319 = tpu.matmul %317, %318, %cst_133 {dimension_numbers = #tpu.dot_dimension_numbers<[1], [0], [0], [1], [0, 0, 1, 1], [], []>} : vector<4x256xf32>, vector<256x2048xf32>, vector<4x2048xf32> -> vector<4x2048xf32>
    %320 = vector.extract_strided_slice %319 {offsets = [0, 0], sizes = [4, 1024], strides = [1, 1]} : vector<4x2048xf32> to vector<4x1024xf32>
    %321 = vector.extract_strided_slice %319 {offsets = [0, 1024], sizes = [4, 1024], strides = [1, 1]} : vector<4x2048xf32> to vector<4x1024xf32>
    %322 = arith.select %4, %320, %321 : vector<4x1024xi1>, vector<4x1024xf32>
    %c7_134 = arith.constant 7 : index
    %c0_135 = arith.constant 0 : index
    %c0_136 = arith.constant 0 : index
    %323 = vector.load %arg10[%c7_134, %c0_135, %c0_136] : memref<8x4x1024xf32, #tpu.memory_space<vmem>>, vector<1x4x1024xf32>
    %324 = vector.shape_cast %323 : vector<1x4x1024xf32> to vector<4x1024xf32>
    %325 = arith.addf %322, %324 : vector<4x1024xf32>
    %326 = vector.extract_strided_slice %325 {offsets = [0, 0], sizes = [4, 256], strides = [1, 1]} : vector<4x1024xf32> to vector<4x256xf32>
    %cst_137 = arith.constant 5.000000e-01 : f32
    %327 = vector.broadcast %cst_137 : f32 to vector<4x256xf32>
    %328 = arith.mulf %327, %326 : vector<4x256xf32>
    %329 = math.tanh %328 : vector<4x256xf32>
    %cst_138 = arith.constant 1.000000e+00 : f32
    %330 = vector.broadcast %cst_138 : f32 to vector<4x256xf32>
    %331 = arith.addf %329, %330 : vector<4x256xf32>
    %cst_139 = arith.constant 5.000000e-01 : f32
    %332 = vector.broadcast %cst_139 : f32 to vector<4x256xf32>
    %333 = arith.mulf %332, %331 : vector<4x256xf32>
    %334 = vector.extract_strided_slice %325 {offsets = [0, 256], sizes = [4, 256], strides = [1, 1]} : vector<4x1024xf32> to vector<4x256xf32>
    %cst_140 = arith.constant 5.000000e-01 : f32
    %335 = vector.broadcast %cst_140 : f32 to vector<4x256xf32>
    %336 = arith.mulf %335, %334 : vector<4x256xf32>
    %337 = math.tanh %336 : vector<4x256xf32>
    %cst_141 = arith.constant 1.000000e+00 : f32
    %338 = vector.broadcast %cst_141 : f32 to vector<4x256xf32>
    %339 = arith.addf %337, %338 : vector<4x256xf32>
    %cst_142 = arith.constant 5.000000e-01 : f32
    %340 = vector.broadcast %cst_142 : f32 to vector<4x256xf32>
    %341 = arith.mulf %340, %339 : vector<4x256xf32>
    %342 = vector.extract_strided_slice %325 {offsets = [0, 512], sizes = [4, 256], strides = [1, 1]} : vector<4x1024xf32> to vector<4x256xf32>
    %343 = math.tanh %342 : vector<4x256xf32>
    %344 = vector.extract_strided_slice %325 {offsets = [0, 768], sizes = [4, 256], strides = [1, 1]} : vector<4x1024xf32> to vector<4x256xf32>
    %cst_143 = arith.constant 5.000000e-01 : f32
    %345 = vector.broadcast %cst_143 : f32 to vector<4x256xf32>
    %346 = arith.mulf %345, %344 : vector<4x256xf32>
    %347 = math.tanh %346 : vector<4x256xf32>
    %cst_144 = arith.constant 1.000000e+00 : f32
    %348 = vector.broadcast %cst_144 : f32 to vector<4x256xf32>
    %349 = arith.addf %347, %348 : vector<4x256xf32>
    %cst_145 = arith.constant 5.000000e-01 : f32
    %350 = vector.broadcast %cst_145 : f32 to vector<4x256xf32>
    %351 = arith.mulf %350, %349 : vector<4x256xf32>
    %352 = arith.mulf %341, %315 : vector<4x256xf32>
    %353 = arith.mulf %333, %343 : vector<4x256xf32>
    %354 = arith.addf %352, %353 : vector<4x256xf32>
    %355 = math.tanh %354 : vector<4x256xf32>
    %356 = arith.mulf %351, %355 : vector<4x256xf32>
    %c0_146 = arith.constant 0 : index
    %c0_147 = arith.constant 0 : index
    %357 = vector.load %arg3[%c0_146, %c0_147] : memref<256x256xf32, #tpu.memory_space<vmem>>, vector<256x256xf32>
    %cst_148 = arith.constant dense<0.000000e+00> : vector<4x256xf32>
    %358 = tpu.matmul %356, %357, %cst_148 {dimension_numbers = #tpu.dot_dimension_numbers<[1], [0], [0], [1], [0, 0, 1, 1], [], []>} : vector<4x256xf32>, vector<256x256xf32>, vector<4x256xf32> -> vector<4x256xf32>
    %c0_149 = arith.constant 0 : index
    %c0_150 = arith.constant 0 : index
    %359 = vector.load %arg4[%c0_149, %c0_150] : memref<1x256xf32, #tpu.memory_space<vmem>>, vector<1x256xf32>
    %360 = vector.broadcast %359 : vector<1x256xf32> to vector<4x256xf32>
    %361 = arith.addf %358, %360 : vector<4x256xf32>
    %362 = vector.shape_cast %2 : vector<4x1xi1> to vector<4x1xi1>
    %363 = vector.broadcast %362 : vector<4x1xi1> to vector<4x128xi1>
    %364 = vector.extract_strided_slice %361 {offsets = [0, 0], sizes = [4, 128], strides = [1, 1]} : vector<4x256xf32> to vector<4x128xf32>
    %365 = vector.extract_strided_slice %361 {offsets = [0, 128], sizes = [4, 128], strides = [1, 1]} : vector<4x256xf32> to vector<4x128xf32>
    %366 = arith.select %363, %364, %365 : vector<4x128xi1>, vector<4x128xf32>
    %cst_151 = arith.constant 0.000000e+00 : f32
    %367 = vector.broadcast %cst_151 : f32 to vector<4x128xf32>
    %368 = arith.maximumf %366, %367 : vector<4x128xf32>
    %c0_152 = arith.constant 0 : index
    %c0_153 = arith.constant 0 : index
    %369 = vector.load %arg5[%c0_152, %c0_153] : memref<128x128xf32, #tpu.memory_space<vmem>>, vector<128x128xf32>
    %cst_154 = arith.constant dense<0.000000e+00> : vector<4x128xf32>
    %370 = tpu.matmul %368, %369, %cst_154 {dimension_numbers = #tpu.dot_dimension_numbers<[1], [0], [0], [1], [0, 0, 1, 1], [], []>} : vector<4x128xf32>, vector<128x128xf32>, vector<4x128xf32> -> vector<4x128xf32>
    %c0_155 = arith.constant 0 : index
    %c0_156 = arith.constant 0 : index
    %371 = vector.load %arg6[%c0_155, %c0_156] : memref<1x128xf32, #tpu.memory_space<vmem>>, vector<1x128xf32>
    %372 = vector.broadcast %371 : vector<1x128xf32> to vector<4x128xf32>
    %373 = arith.addf %370, %372 : vector<4x128xf32>
    %c0_157 = arith.constant 0 : index
    %c0_158 = arith.constant 0 : index
    %374 = vector.load %arg7[%c0_157, %c0_158] : memref<4x128xf32, #tpu.memory_space<vmem>>, vector<4x128xf32>
    %375 = arith.mulf %373, %374 : vector<4x128xf32>
    %cst_159 = arith.constant dense<0.000000e+00> : vector<4xf32>
    %376 = vector.multi_reduction <add>, %375, %cst_159 [1] : vector<4x128xf32> to vector<4xf32>
    %377 = vector.shape_cast %376 : vector<4xf32> to vector<4x1xf32>
    %378 = vector.extract_strided_slice %377 {offsets = [0, 0], sizes = [2, 1], strides = [1, 1]} : vector<4x1xf32> to vector<2x1xf32>
    %379 = vector.extract_strided_slice %377 {offsets = [2, 0], sizes = [2, 1], strides = [1, 1]} : vector<4x1xf32> to vector<2x1xf32>
    %380 = arith.addf %378, %379 : vector<2x1xf32>
    %c0_160 = arith.constant 0 : index
    %c0_161 = arith.constant 0 : index
    %381 = vector.load %arg8[%c0_160, %c0_161] : memref<1x1xf32, #tpu.memory_space<vmem>>, vector<1x1xf32>
    %382 = vector.broadcast %381 : vector<1x1xf32> to vector<2x1xf32>
    %383 = arith.addf %380, %382 : vector<2x1xf32>
    %384 = vector.shape_cast %383 : vector<2x1xf32> to vector<2x1xf32>
    %385 = vector.broadcast %384 : vector<2x1xf32> to vector<2x128xf32>
    %c0_162 = arith.constant 0 : index
    %c0_163 = arith.constant 0 : index
    %386 = vector.load %arg9[%c0_162, %c0_163] : memref<2x128xf32, #tpu.memory_space<vmem>>, vector<2x128xf32>
    tpu.vector_store %arg9[%c0_162, %c0_163], %385 {strides = array<i32>} : memref<2x128xf32, #tpu.memory_space<vmem>>, vector<2x128xf32>,
    return
  }
}

</mosaic_0001>

<llo_original>
// kernel: two_tower_forward.1
$region0: #{two_tower_forward.1}
  #allocation0 [shape = 'u32[]', space=smem, size = 0x4, offset = 0x4, fixed_abs, tag = 'smem constant byte address 0x4 - core index']
  #allocation1 [shape = 'u32[72,128]{1,0:T(1,128)}', space=vmem, size = 0x9000, scoped, tag = 'internal scratch']
  #allocation2 [shape = 'f32[8,4,1024]{2,1,0:T(4,128)}', space=vmem, size = 0x20000, scoped, tag = 'scratch operand']
  #allocation3 [shape = 'f32[256,2048]{1,0:T(8,128)}', space=vmem, size = 0x200000, scoped, tag = 'scratch operand']
  #allocation4 [shape = 's32[1]{0}', space=sflag, size = 0x4, scoped, tag = 'scratch operand']
  #allocation5 [shape = 'f32[1,1]{1,0:T(1,128)S(1)}', space=vmem, size = 0x200, scoped, tag = 'scoped memory for two_tower_forward.1']
  #allocation6 [shape = 's32[]', space=sflag, size = 0x4, offset = 0, fixed_abs, tag = 'sflag constant byte address 0x0 - dummy sync flag']
  %s0 = inlined_call_operand.vmem [shape: f32[32,102], index: 0, kind: input, shape index: {}]
  %s1 = inlined_call_operand.vmem [shape: f32[102,1024], index: 1, kind: input, shape index: {}]
  %s2 = inlined_call_operand.vmem [shape: f32[256,2048], index: 2, kind: input, shape index: {}]
  %s3 = inlined_call_operand.vmem [shape: f32[256,256], index: 3, kind: input, shape index: {}]
  %s4 = inlined_call_operand.vmem [shape: f32[1,256], index: 4, kind: input, shape index: {}]
  %s5 = inlined_call_operand.vmem [shape: f32[128,128], index: 5, kind: input, shape index: {}]
  %s6 = inlined_call_operand.vmem [shape: f32[1,128], index: 6, kind: input, shape index: {}]
  %s7 = inlined_call_operand.vmem [shape: f32[4,128], index: 7, kind: input, shape index: {}]
  %s8 = inlined_call_operand.<no memory space> [shape: f32[1,1], index: 8, kind: input, shape index: {}]
  %s9 = inlined_call_operand.vmem [shape: f32[2,128], index: 9, kind: output, shape index: {}]
  %s10 = sld [smem:[#allocation0]]
  $region61: #{two_tower_forward.1} parent=0
    _
  %s12 = ssub.s32 1, %s10
  %s13 = scalar_select 0, %s12, %s10
  %v14 = vstv %s8
  %15 = vst [vmem:[#allocation5] sm:$0x1] %v14
  // Predicated region
  $region2: #{two_tower_forward.1} parent=0 // pred_check
    _
  $region3: #{two_tower_forward.1} parent=0 // pred_check_branch
    %17 = sbr.rel (0) target = $region5
  $region4: #{two_tower_forward.1} parent=0 // pred_region
    _
  $region5: #{two_tower_forward.1} parent=0 // pred_fallthru
    _
  // Predicated region
  $region6: #{two_tower_forward.1} parent=0 // pred_check
    _
  $region7: #{two_tower_forward.1} parent=0 // pred_check_branch
    %19 = sbr.rel (0) target = $region9
  $region8: #{two_tower_forward.1} parent=0 // pred_region
    _
  $region9: #{two_tower_forward.1} parent=0 // pred_fallthru
    _
  // Predicated region
  $region10: #{two_tower_forward.1} parent=0 // pred_check
    _
  $region11: #{two_tower_forward.1} parent=0 // pred_check_branch
    %21 = sbr.rel (0) target = $region13
  $region12: #{two_tower_forward.1} parent=0 // pred_region
    _
  $region13: #{two_tower_forward.1} parent=0 // pred_fallthru
    _
  // Predicated region
  $region14: #{two_tower_forward.1} parent=0 // pred_check
    _
  $region15: #{two_tower_forward.1} parent=0 // pred_check_branch
    %23 = sbr.rel (0) target = $region17
  $region16: #{two_tower_forward.1} parent=0 // pred_region
    _
  $region17: #{two_tower_forward.1} parent=0 // pred_fallthru
    _
  // Predicated region
  $region18: #{two_tower_forward.1} parent=0 // pred_check
    _
  $region19: #{two_tower_forward.1} parent=0 // pred_check_branch
    %25 = sbr.rel (0) target = $region21
  $region20: #{two_tower_forward.1} parent=0 // pred_region
    _
  $region21: #{two_tower_forward.1} parent=0 // pred_fallthru
    _
  // Predicated region
  $region22: #{two_tower_forward.1} parent=0 // pred_check
    _
  $region23: #{two_tower_forward.1} parent=0 // pred_check_branch
    %27 = sbr.rel (0) target = $region25
  $region24: #{two_tower_forward.1} parent=0 // pred_region
    _
  $region25: #{two_tower_forward.1} parent=0 // pred_fallthru
    _
  // Predicated region
  $region26: #{two_tower_forward.1} parent=0 // pred_check
    _
  $region27: #{two_tower_forward.1} parent=0 // pred_check_branch
    %29 = sbr.rel (0) target = $region29
  $region28: #{two_tower_forward.1} parent=0 // pred_region
    _
  $region29: #{two_tower_forward.1} parent=0 // pred_fallthru
    _
  // Predicated region
  $region30: #{two_tower_forward.1} parent=0 // pred_check
    _
  $region31: #{two_tower_forward.1} parent=0 // pred_check_branch
    %31 = sbr.rel (0) target = $region33
  $region32: #{two_tower_forward.1} parent=0 // pred_region
    _
  $region33: #{two_tower_forward.1} parent=0 // pred_fallthru
    _
  // Predicated region
  $region34: #{two_tower_forward.1} parent=0 // pred_check
    _
  $region35: #{two_tower_forward.1} parent=0 // pred_check_branch
    %33 = sbr.rel (0) target = $region37
  $region36: #{two_tower_forward.1} parent=0 // pred_region
    loop: start=0, step=1, limit=1
    $region38: #{two_tower_forward.1} parent=36 // loop_pre_header
      _
    $region39: #{two_tower_forward.1} parent=36 // loop_header
      %s35 = sphi 0, %s39
      %p36 = scmp.ge.s32.totalorder %s35, 1
      %s40 = sphi %s2, %s2
      %s41 = sphi [#allocation3], [#allocation3]
    $region40: #{two_tower_forward.1} parent=36 // loop_header_branch
      %38 = sbr.rel (%p36) target = $region44
    $region41: #{two_tower_forward.1} parent=36 // loop_body
      %v42 = vld [vmem:[%s40] sm:$0xff]
      %43 = vst [vmem:[%s41] sm:$0xff] %v42
      %v44 = vld [vmem:[%s40 + $0x8] sm:$0xff]
      %45 = vst [vmem:[%s41 + $0x8] sm:$0xff] %v44
      %v46 = vld [vmem:[%s40 + $0x10] sm:$0xff]
      %47 = vst [vmem:[%s41 + $0x10] sm:$0xff] %v46
      %v48 = vld [vmem:[%s40 + $0x18] sm:$0xff]
      %49 = vst [vmem:[%s41 + $0x18] sm:$0xff] %v48
      %v50 = vld [vmem:[%s40 + $0x20] sm:$0xff]
      %51 = vst [vmem:[%s41 + $0x20] sm:$0xff] %v50
      %v52 = vld [vmem:[%s40 + $0x28] sm:$0xff]
      %53 = vst [vmem:[%s41 + $0x28] sm:$0xff] %v52
      %v54 = vld [vmem:[%s40 + $0x30] sm:$0xff]
      %55 = vst [vmem:[%s41 + $0x30] sm:$0xff] %v54
      %v56 = vld [vmem:[%s40 + $0x38] sm:$0xff]
      %57 = vst [vmem:[%s41 + $0x38] sm:$0xff] %v56
      %v58 = vld [vmem:[%s40 + $0x40] sm:$0xff]
      %59 = vst [vmem:[%s41 + $0x40] sm:$0xff] %v58
      %v60 = vld [vmem:[%s40 + $0x48] sm:$0xff]
      %61 = vst [vmem:[%s41 + $0x48] sm:$0xff] %v60
      %v62 = vld [vmem:[%s40 + $0x50] sm:$0xff]
      %63 = vst [vmem:[%s41 + $0x50] sm:$0xff] %v62
      %v64 = vld [vmem:[%s40 + $0x58] sm:$0xff]
      %65 = vst [vmem:[%s41 + $0x58] sm:$0xff] %v64
      %v66 = vld [vmem:[%s40 + $0x60] sm:$0xff]
      %67 = vst [vmem:[%s41 + $0x60] sm:$0xff] %v66
      %v68 = vld [vmem:[%s40 + $0x68] sm:$0xff]
      %69 = vst [vmem:[%s41 + $0x68] sm:$0xff] %v68
      %v70 = vld [vmem:[%s40 + $0x70] sm:$0xff]
      %71 = vst [vmem:[%s41 + $0x70] sm:$0xff] %v70
      %v72 = vld [vmem:[%s40 + $0x78] sm:$0xff]
      %73 = vst [vmem:[%s41 + $0x78] sm:$0xff] %v72
      %v74 = vld [vmem:[%s40 + $0x80] sm:$0xff]
      %75 = vst [vmem:[%s41 + $0x80] sm:$0xff] %v74
      %v76 = vld [vmem:[%s40 + $0x88] sm:$0xff]
      %77 = vst [vmem:[%s41 + $0x88] sm:$0xff] %v76
      %v78 = vld [vmem:[%s40 + $0x90] sm:$0xff]
      %79 = vst [vmem:[%s41 + $0x90] sm:$0xff] %v78
      %v80 = vld [vmem:[%s40 + $0x98] sm:$0xff]
      %81 = vst [vmem:[%s41 + $0x98] sm:$0xff] %v80
      %v82 = vld [vmem:[%s40 + $0xa0] sm:$0xff]
      %83 = vst [vmem:[%s41 + $0xa0] sm:$0xff] %v82
      %v84 = vld [vmem:[%s40 + $0xa8] sm:$0xff]
      %85 = vst [vmem:[%s41 + $0xa8] sm:$0xff] %v84
      %v86 = vld [vmem:[%s40 + $0xb0] sm:$0xff]
      %87 = vst [vmem:[%s41 + $0xb0] sm:$0xff] %v86
      %v88 = vld [vmem:[%s40 + $0xb8] sm:$0xff]
      %89 = vst [vmem:[%s41 + $0xb8] sm:$0xff] %v88
      %v90 = vld [vmem:[%s40 + $0xc0] sm:$0xff]
      %91 = vst [vmem:[%s41 + $0xc0] sm:$0xff] %v90
      %v92 = vld [vmem:[%s40 + $0xc8] sm:$0xff]
      %93 = vst [vmem:[%s41 + $0xc8] sm:$0xff] %v92
      %v94 = vld [vmem:[%s40 + $0xd0] sm:$0xff]
      %95 = vst [vmem:[%s41 + $0xd0] sm:$0xff] %v94
      %v96 = vld [vmem:[%s40 + $0xd8] sm:$0xff]
      %97 = vst [vmem:[%s41 + $0xd8] sm:$0xff] %v96
      %v98 = vld [vmem:[%s40 + $0xe0] sm:$0xff]
      %99 = vst [vmem:[%s41 + $0xe0] sm:$0xff] %v98
      %v100 = vld [vmem:[%s40 + $0xe8] sm:$0xff]
      %101 = vst [vmem:[%s41 + $0xe8] sm:$0xff] %v100
      %v102 = vld [vmem:[%s40 + $0xf0] sm:$0xff]
      %103 = vst [vmem:[%s41 + $0xf0] sm:$0xff] %v102
      %v104 = vld [vmem:[%s40 + $0xf8] sm:$0xff]
      %105 = vst [vmem:[%s41 + $0xf8] sm:$0xff] %v104
      %v106 = vld [vmem:[%s40 + $0x100] sm:$0xff]
      %107 = vst [vmem:[%s41 + $0x100] sm:$0xff] %v106
      %v108 = vld [vmem:[%s40 + $0x108] sm:$0xff]
      %109 = vst [vmem:[%s41 + $0x108] sm:$0xff] %v108
      %v110 = vld [vmem:[%s40 + $0x110] sm:$0xff]
      %111 = vst [vmem:[%s41 + $0x110] sm:$0xff] %v110
      %v112 = vld [vmem:[%s40 + $0x118] sm:$0xff]
      %113 = vst [vmem:[%s41 + $0x118] sm:$0xff] %v112
      %v114 = vld [vmem:[%s40 + $0x120] sm:$0xff]
      %115 = vst [vmem:[%s41 + $0x120] sm:$0xff] %v114
      %v116 = vld [vmem:[%s40 + $0x128] sm:$0xff]
      %117 = vst [vmem:[%s41 + $0x128] sm:$0xff] %v116
      %v118 = vld [vmem:[%s40 + $0x130] sm:$0xff]
      %119 = vst [vmem:[%s41 + $0x130] sm:$0xff] %v118
      %v120 = vld [vmem:[%s40 + $0x138] sm:$0xff]
      %121 = vst [vmem:[%s41 + $0x138] sm:$0xff] %v120
      %v122 = vld [vmem:[%s40 + $0x140] sm:$0xff]
      %123 = vst [vmem:[%s41 + $0x140] sm:$0xff] %v122
      %v124 = vld [vmem:[%s40 + $0x148] sm:$0xff]
      %125 = vst [vmem:[%s41 + $0x148] sm:$0xff] %v124
      %v126 = vld [vmem:[%s40 + $0x150] sm:$0xff]
      %127 = vst [vmem:[%s41 + $0x150] sm:$0xff] %v126
      %v128 = vld [vmem:[%s40 + $0x158] sm:$0xff]
      %129 = vst [vmem:[%s41 + $0x158] sm:$0xff] %v128
      %v130 = vld [vmem:[%s40 + $0x160] sm:$0xff]
      %131 = vst [vmem:[%s41 + $0x160] sm:$0xff] %v130
      %v132 = vld [vmem:[%s40 + $0x168] sm:$0xff]
      %133 = vst [vmem:[%s41 + $0x168] sm:$0xff] %v132
      %v134 = vld [vmem:[%s40 + $0x170] sm:$0xff]
      %135 = vst [vmem:[%s41 + $0x170] sm:$0xff] %v134
      %v136 = vld [vmem:[%s40 + $0x178] sm:$0xff]
      %137 = vst [vmem:[%s41 + $0x178] sm:$0xff] %v136
      %v138 = vld [vmem:[%s40 + $0x180] sm:$0xff]
      %139 = vst [vmem:[%s41 + $0x180] sm:$0xff] %v138
      %v140 = vld [vmem:[%s40 + $0x188] sm:$0xff]
      %141 = vst [vmem:[%s41 + $0x188] sm:$0xff] %v140
      %v142 = vld [vmem:[%s40 + $0x190] sm:$0xff]
      %143 = vst [vmem:[%s41 + $0x190] sm:$0xff] %v142
      %v144 = vld [vmem:[%s40 + $0x198] sm:$0xff]
      %145 = vst [vmem:[%s41 + $0x198] sm:$0xff] %v144
      %v146 = vld [vmem:[%s40 + $0x1a0] sm:$0xff]
      %147 = vst [vmem:[%s41 + $0x1a0] sm:$0xff] %v146
      %v148 = vld [vmem:[%s40 + $0x1a8] sm:$0xff]
      %149 = vst [vmem:[%s41 + $0x1a8] sm:$0xff] %v148
      %v150 = vld [vmem:[%s40 + $0x1b0] sm:$0xff]
      %151 = vst [vmem:[%s41 + $0x1b0] sm:$0xff] %v150
      %v152 = vld [vmem:[%s40 + $0x1b8] sm:$0xff]
      %153 = vst [vmem:[%s41 + $0x1b8] sm:$0xff] %v152
      %v154 = vld [vmem:[%s40 + $0x1c0] sm:$0xff]
      %155 = vst [vmem:[%s41 + $0x1c0] sm:$0xff] %v154
      %v156 = vld [vmem:[%s40 + $0x1c8] sm:$0xff]
      %157 = vst [vmem:[%s41 + $0x1c8] sm:$0xff] %v156
      %v158 = vld [vmem:[%s40 + $0x1d0] sm:$0xff]
      %159 = vst [vmem:[%s41 + $0x1d0] sm:$0xff] %v158
      %v160 = vld [vmem:[%s40 + $0x1d8] sm:$0xff]
      %161 = vst [vmem:[%s41 + $0x1d8] sm:$0xff] %v160
      %v162 = vld [vmem:[%s40 + $0x1e0] sm:$0xff]
      %163 = vst [vmem:[%s41 + $0x1e0] sm:$0xff] %v162
      %v164 = vld [vmem:[%s40 + $0x1e8] sm:$0xff]
      %165 = vst [vmem:[%s41 + $0x1e8] sm:$0xff] %v164
      %v166 = vld [vmem:[%s40 + $0x1f0] sm:$0xff]
      %167 = vst [vmem:[%s41 + $0x1f0] sm:$0xff] %v166
      %v168 = vld [vmem:[%s40 + $0x1f8] sm:$0xff]
      %169 = vst [vmem:[%s41 + $0x1f8] sm:$0xff] %v168
      %v170 = vld [vmem:[%s40 + $0x200] sm:$0xff]
      %171 = vst [vmem:[%s41 + $0x200] sm:$0xff] %v170
      %v172 = vld [vmem:[%s40 + $0x208] sm:$0xff]
      %173 = vst [vmem:[%s41 + $0x208] sm:$0xff] %v172
      %v174 = vld [vmem:[%s40 + $0x210] sm:$0xff]
      %175 = vst [vmem:[%s41 + $0x210] sm:$0xff] %v174
      %v176 = vld [vmem:[%s40 + $0x218] sm:$0xff]
      %177 = vst [vmem:[%s41 + $0x218] sm:$0xff] %v176
      %v178 = vld [vmem:[%s40 + $0x220] sm:$0xff]
      %179 = vst [vmem:[%s41 + $0x220] sm:$0xff] %v178
      %v180 = vld [vmem:[%s40 + $0x228] sm:$0xff]
      %181 = vst [vmem:[%s41 + $0x228] sm:$0xff] %v180
      %v182 = vld [vmem:[%s40 + $0x230] sm:$0xff]
      %183 = vst [vmem:[%s41 + $0x230] sm:$0xff] %v182
      %v184 = vld [vmem:[%s40 + $0x238] sm:$0xff]
      %185 = vst [vmem:[%s41 + $0x238] sm:$0xff] %v184
      %v186 = vld [vmem:[%s40 + $0x240] sm:$0xff]
      %187 = vst [vmem:[%s41 + $0x240] sm:$0xff] %v186
      %v188 = vld [vmem:[%s40 + $0x248] sm:$0xff]
      %189 = vst [vmem:[%s41 + $0x248] sm:$0xff] %v188
      %v190 = vld [vmem:[%s40 + $0x250] sm:$0xff]
      %191 = vst [vmem:[%s41 + $0x250] sm:$0xff] %v190
      %v192 = vld [vmem:[%s40 + $0x258] sm:$0xff]
      %193 = vst [vmem:[%s41 + $0x258] sm:$0xff] %v192
      %v194 = vld [vmem:[%s40 + $0x260] sm:$0xff]
      %195 = vst [vmem:[%s41 + $0x260] sm:$0xff] %v194
      %v196 = vld [vmem:[%s40 + $0x268] sm:$0xff]
      %197 = vst [vmem:[%s41 + $0x268] sm:$0xff] %v196
      %v198 = vld [vmem:[%s40 + $0x270] sm:$0xff]
      %199 = vst [vmem:[%s41 + $0x270] sm:$0xff] %v198
      %v200 = vld [vmem:[%s40 + $0x278] sm:$0xff]
      %201 = vst [vmem:[%s41 + $0x278] sm:$0xff] %v200
      %v202 = vld [vmem:[%s40 + $0x280] sm:$0xff]
      %203 = vst [vmem:[%s41 + $0x280] sm:$0xff] %v202
      %v204 = vld [vmem:[%s40 + $0x288] sm:$0xff]
      %205 = vst [vmem:[%s41 + $0x288] sm:$0xff] %v204
      %v206 = vld [vmem:[%s40 + $0x290] sm:$0xff]
      %207 = vst [vmem:[%s41 + $0x290] sm:$0xff] %v206
      %v208 = vld [vmem:[%s40 + $0x298] sm:$0xff]
      %209 = vst [vmem:[%s41 + $0x298] sm:$0xff] %v208
      %v210 = vld [vmem:[%s40 + $0x2a0] sm:$0xff]
      %211 = vst [vmem:[%s41 + $0x2a0] sm:$0xff] %v210
      %v212 = vld [vmem:[%s40 + $0x2a8] sm:$0xff]
      %213 = vst [vmem:[%s41 + $0x2a8] sm:$0xff] %v212
      %v214 = vld [vmem:[%s40 + $0x2b0] sm:$0xff]
      %215 = vst [vmem:[%s41 + $0x2b0] sm:$0xff] %v214
      %v216 = vld [vmem:[%s40 + $0x2b8] sm:$0xff]
      %217 = vst [vmem:[%s41 + $0x2b8] sm:$0xff] %v216
      %v218 = vld [vmem:[%s40 + $0x2c0] sm:$0xff]
      %219 = vst [vmem:[%s41 + $0x2c0] sm:$0xff] %v218
      %v220 = vld [vmem:[%s40 + $0x2c8] sm:$0xff]
      %221 = vst [vmem:[%s41 + $0x2c8] sm:$0xff] %v220
      %v222 = vld [vmem:[%s40 + $0x2d0] sm:$0xff]
      %223 = vst [vmem:[%s41 + $0x2d0] sm:$0xff] %v222
      %v224 = vld [vmem:[%s40 + $0x2d8] sm:$0xff]
      %225 = vst [vmem:[%s41 + $0x2d8] sm:$0xff] %v224
      %v226 = vld [vmem:[%s40 + $0x2e0] sm:$0xff]
      %227 = vst [vmem:[%s41 + $0x2e0] sm:$0xff] %v226
      %v228 = vld [vmem:[%s40 + $0x2e8] sm:$0xff]
      %229 = vst [vmem:[%s41 + $0x2e8] sm:$0xff] %v228
      %v230 = vld [vmem:[%s40 + $0x2f0] sm:$0xff]
      %231 = vst [vmem:[%s41 + $0x2f0] sm:$0xff] %v230
      %v232 = vld [vmem:[%s40 + $0x2f8] sm:$0xff]
      %233 = vst [vmem:[%s41 + $0x2f8] sm:$0xff] %v232
      %v234 = vld [vmem:[%s40 + $0x300] sm:$0xff]
      %235 = vst [vmem:[%s41 + $0x300] sm:$0xff] %v234
      %v236 = vld [vmem:[%s40 + $0x308] sm:$0xff]
      %237 = vst [vmem:[%s41 + $0x308] sm:$0xff] %v236
      %v238 = vld [vmem:[%s40 + $0x310] sm:$0xff]
      %239 = vst [vmem:[%s41 + $0x310] sm:$0xff] %v238
      %v240 = vld [vmem:[%s40 + $0x318] sm:$0xff]
      %241 = vst [vmem:[%s41 + $0x318] sm:$0xff] %v240
      %v242 = vld [vmem:[%s40 + $0x320] sm:$0xff]
      %243 = vst [vmem:[%s41 + $0x320] sm:$0xff] %v242
      %v244 = vld [vmem:[%s40 + $0x328] sm:$0xff]
      %245 = vst [vmem:[%s41 + $0x328] sm:$0xff] %v244
      %v246 = vld [vmem:[%s40 + $0x330] sm:$0xff]
      %247 = vst [vmem:[%s41 + $0x330] sm:$0xff] %v246
      %v248 = vld [vmem:[%s40 + $0x338] sm:$0xff]
      %249 = vst [vmem:[%s41 + $0x338] sm:$0xff] %v248
      %v250 = vld [vmem:[%s40 + $0x340] sm:$0xff]
      %251 = vst [vmem:[%s41 + $0x340] sm:$0xff] %v250
      %v252 = vld [vmem:[%s40 + $0x348] sm:$0xff]
      %253 = vst [vmem:[%s41 + $0x348] sm:$0xff] %v252
      %v254 = vld [vmem:[%s40 + $0x350] sm:$0xff]
      %255 = vst [vmem:[%s41 + $0x350] sm:$0xff] %v254
      %v256 = vld [vmem:[%s40 + $0x358] sm:$0xff]
      %257 = vst [vmem:[%s41 + $0x358] sm:$0xff] %v256
      %v258 = vld [vmem:[%s40 + $0x360] sm:$0xff]
      %259 = vst [vmem:[%s41 + $0x360] sm:$0xff] %v258
      %v260 = vld [vmem:[%s40 + $0x368] sm:$0xff]
      %261 = vst [vmem:[%s41 + $0x368] sm:$0xff] %v260
      %v262 = vld [vmem:[%s40 + $0x370] sm:$0xff]
      %263 = vst [vmem:[%s41 + $0x370] sm:$0xff] %v262
      %v264 = vld [vmem:[%s40 + $0x378] sm:$0xff]
      %265 = vst [vmem:[%s41 + $0x378] sm:$0xff] %v264
      %v266 = vld [vmem:[%s40 + $0x380] sm:$0xff]
      %267 = vst [vmem:[%s41 + $0x380] sm:$0xff] %v266
      %v268 = vld [vmem:[%s40 + $0x388] sm:$0xff]
      %269 = vst [vmem:[%s41 + $0x388] sm:$0xff] %v268
      %v270 = vld [vmem:[%s40 + $0x390] sm:$0xff]
      %271 = vst [vmem:[%s41 + $0x390] sm:$0xff] %v270
      %v272 = vld [vmem:[%s40 + $0x398] sm:$0xff]
      %273 = vst [vmem:[%s41 + $0x398] sm:$0xff] %v272
      %v274 = vld [vmem:[%s40 + $0x3a0] sm:$0xff]
      %275 = vst [vmem:[%s41 + $0x3a0] sm:$0xff] %v274
      %v276 = vld [vmem:[%s40 + $0x3a8] sm:$0xff]
      %277 = vst [vmem:[%s41 + $0x3a8] sm:$0xff] %v276
      %v278 = vld [vmem:[%s40 + $0x3b0] sm:$0xff]
      %279 = vst [vmem:[%s41 + $0x3b0] sm:$0xff] %v278
      %v280 = vld [vmem:[%s40 + $0x3b8] sm:$0xff]
      %281 = vst [vmem:[%s41 + $0x3b8] sm:$0xff] %v280
      %v282 = vld [vmem:[%s40 + $0x3c0] sm:$0xff]
      %283 = vst [vmem:[%s41 + $0x3c0] sm:$0xff] %v282
      %v284 = vld [vmem:[%s40 + $0x3c8] sm:$0xff]
      %285 = vst [vmem:[%s41 + $0x3c8] sm:$0xff] %v284
      %v286 = vld [vmem:[%s40 + $0x3d0] sm:$0xff]
      %287 = vst [vmem:[%s41 + $0x3d0] sm:$0xff] %v286
      %v288 = vld [vmem:[%s40 + $0x3d8] sm:$0xff]
      %289 = vst [vmem:[%s41 + $0x3d8] sm:$0xff] %v288
      %v290 = vld [vmem:[%s40 + $0x3e0] sm:$0xff]
      %291 = vst [vmem:[%s41 + $0x3e0] sm:$0xff] %v290
      %v292 = vld [vmem:[%s40 + $0x3e8] sm:$0xff]
      %293 = vst [vmem:[%s41 + $0x3e8] sm:$0xff] %v292
      %v294 = vld [vmem:[%s40 + $0x3f0] sm:$0xff]
      %295 = vst [vmem:[%s41 + $0x3f0] sm:$0xff] %v294
      %v296 = vld [vmem:[%s40 + $0x3f8] sm:$0xff]
      %297 = vst [vmem:[%s41 + $0x3f8] sm:$0xff] %v296
      %v298 = vld [vmem:[%s40 + $0x400] sm:$0xff]
      %299 = vst [vmem:[%s41 + $0x400] sm:$0xff] %v298
      %v300 = vld [vmem:[%s40 + $0x408] sm:$0xff]
      %301 = vst [vmem:[%s41 + $0x408] sm:$0xff] %v300
      %v302 = vld [vmem:[%s40 + $0x410] sm:$0xff]
      %303 = vst [vmem:[%s41 + $0x410] sm:$0xff] %v302
      %v304 = vld [vmem:[%s40 + $0x418] sm:$0xff]
      %305 = vst [vmem:[%s41 + $0x418] sm:$0xff] %v304
      %v306 = vld [vmem:[%s40 + $0x420] sm:$0xff]
      %307 = vst [vmem:[%s41 + $0x420] sm:$0xff] %v306
      %v308 = vld [vmem:[%s40 + $0x428] sm:$0xff]
      %309 = vst [vmem:[%s41 + $0x428] sm:$0xff] %v308
      %v310 = vld [vmem:[%s40 + $0x430] sm:$0xff]
      %311 = vst [vmem:[%s41 + $0x430] sm:$0xff] %v310
      %v312 = vld [vmem:[%s40 + $0x438] sm:$0xff]
      %313 = vst [vmem:[%s41 + $0x438] sm:$0xff] %v312
      %v314 = vld [vmem:[%s40 + $0x440] sm:$0xff]
      %315 = vst [vmem:[%s41 + $0x440] sm:$0xff] %v314
      %v316 = vld [vmem:[%s40 + $0x448] sm:$0xff]
      %317 = vst [vmem:[%s41 + $0x448] sm:$0xff] %v316
      %v318 = vld [vmem:[%s40 + $0x450] sm:$0xff]
      %319 = vst [vmem:[%s41 + $0x450] sm:$0xff] %v318
      %v320 = vld [vmem:[%s40 + $0x458] sm:$0xff]
      %321 = vst [vmem:[%s41 + $0x458] sm:$0xff] %v320
      %v322 = vld [vmem:[%s40 + $0x460] sm:$0xff]
      %323 = vst [vmem:[%s41 + $0x460] sm:$0xff] %v322
      %v324 = vld [vmem:[%s40 + $0x468] sm:$0xff]
      %325 = vst [vmem:[%s41 + $0x468] sm:$0xff] %v324
      %v326 = vld [vmem:[%s40 + $0x470] sm:$0xff]
      %327 = vst [vmem:[%s41 + $0x470] sm:$0xff] %v326
      %v328 = vld [vmem:[%s40 + $0x478] sm:$0xff]
      %329 = vst [vmem:[%s41 + $0x478] sm:$0xff] %v328
      %v330 = vld [vmem:[%s40 + $0x480] sm:$0xff]
      %331 = vst [vmem:[%s41 + $0x480] sm:$0xff] %v330
      %v332 = vld [vmem:[%s40 + $0x488] sm:$0xff]
      %333 = vst [vmem:[%s41 + $0x488] sm:$0xff] %v332
      %v334 = vld [vmem:[%s40 + $0x490] sm:$0xff]
      %335 = vst [vmem:[%s41 + $0x490] sm:$0xff] %v334
      %v336 = vld [vmem:[%s40 + $0x498] sm:$0xff]
      %337 = vst [vmem:[%s41 + $0x498] sm:$0xff] %v336
      %v338 = vld [vmem:[%s40 + $0x4a0] sm:$0xff]
      %339 = vst [vmem:[%s41 + $0x4a0] sm:$0xff] %v338
      %v340 = vld [vmem:[%s40 + $0x4a8] sm:$0xff]
      %341 = vst [vmem:[%s41 + $0x4a8] sm:$0xff] %v340
      %v342 = vld [vmem:[%s40 + $0x4b0] sm:$0xff]
      %343 = vst [vmem:[%s41 + $0x4b0] sm:$0xff] %v342
      %v344 = vld [vmem:[%s40 + $0x4b8] sm:$0xff]
      %345 = vst [vmem:[%s41 + $0x4b8] sm:$0xff] %v344
      %v346 = vld [vmem:[%s40 + $0x4c0] sm:$0xff]
      %347 = vst [vmem:[%s41 + $0x4c0] sm:$0xff] %v346
      %v348 = vld [vmem:[%s40 + $0x4c8] sm:$0xff]
      %349 = vst [vmem:[%s41 + $0x4c8] sm:$0xff] %v348
      %v350 = vld [vmem:[%s40 + $0x4d0] sm:$0xff]
      %351 = vst [vmem:[%s41 + $0x4d0] sm:$0xff] %v350
      %v352 = vld [vmem:[%s40 + $0x4d8] sm:$0xff]
      %353 = vst [vmem:[%s41 + $0x4d8] sm:$0xff] %v352
      %v354 = vld [vmem:[%s40 + $0x4e0] sm:$0xff]
      %355 = vst [vmem:[%s41 + $0x4e0] sm:$0xff] %v354
      %v356 = vld [vmem:[%s40 + $0x4e8] sm:$0xff]
      %357 = vst [vmem:[%s41 + $0x4e8] sm:$0xff] %v356
      %v358 = vld [vmem:[%s40 + $0x4f0] sm:$0xff]
      %359 = vst [vmem:[%s41 + $0x4f0] sm:$0xff] %v358
      %v360 = vld [vmem:[%s40 + $0x4f8] sm:$0xff]
      %361 = vst [vmem:[%s41 + $0x4f8] sm:$0xff] %v360
      %v362 = vld [vmem:[%s40 + $0x500] sm:$0xff]
      %363 = vst [vmem:[%s41 + $0x500] sm:$0xff] %v362
      %v364 = vld [vmem:[%s40 + $0x508] sm:$0xff]
      %365 = vst [vmem:[%s41 + $0x508] sm:$0xff] %v364
      %v366 = vld [vmem:[%s40 + $0x510] sm:$0xff]
      %367 = vst [vmem:[%s41 + $0x510] sm:$0xff] %v366
      %v368 = vld [vmem:[%s40 + $0x518] sm:$0xff]
      %369 = vst [vmem:[%s41 + $0x518] sm:$0xff] %v368
      %v370 = vld [vmem:[%s40 + $0x520] sm:$0xff]
      %371 = vst [vmem:[%s41 + $0x520] sm:$0xff] %v370
      %v372 = vld [vmem:[%s40 + $0x528] sm:$0xff]
      %373 = vst [vmem:[%s41 + $0x528] sm:$0xff] %v372
      %v374 = vld [vmem:[%s40 + $0x530] sm:$0xff]
      %375 = vst [vmem:[%s41 + $0x530] sm:$0xff] %v374
      %v376 = vld [vmem:[%s40 + $0x538] sm:$0xff]
      %377 = vst [vmem:[%s41 + $0x538] sm:$0xff] %v376
      %v378 = vld [vmem:[%s40 + $0x540] sm:$0xff]
      %379 = vst [vmem:[%s41 + $0x540] sm:$0xff] %v378
      %v380 = vld [vmem:[%s40 + $0x548] sm:$0xff]
      %381 = vst [vmem:[%s41 + $0x548] sm:$0xff] %v380
      %v382 = vld [vmem:[%s40 + $0x550] sm:$0xff]
      %383 = vst [vmem:[%s41 + $0x550] sm:$0xff] %v382
      %v384 = vld [vmem:[%s40 + $0x558] sm:$0xff]
      %385 = vst [vmem:[%s41 + $0x558] sm:$0xff] %v384
      %v386 = vld [vmem:[%s40 + $0x560] sm:$0xff]
      %387 = vst [vmem:[%s41 + $0x560] sm:$0xff] %v386
      %v388 = vld [vmem:[%s40 + $0x568] sm:$0xff]
      %389 = vst [vmem:[%s41 + $0x568] sm:$0xff] %v388
      %v390 = vld [vmem:[%s40 + $0x570] sm:$0xff]
      %391 = vst [vmem:[%s41 + $0x570] sm:$0xff] %v390
      %v392 = vld [vmem:[%s40 + $0x578] sm:$0xff]
      %393 = vst [vmem:[%s41 + $0x578] sm:$0xff] %v392
      %v394 = vld [vmem:[%s40 + $0x580] sm:$0xff]
      %395 = vst [vmem:[%s41 + $0x580] sm:$0xff] %v394
      %v396 = vld [vmem:[%s40 + $0x588] sm:$0xff]
      %397 = vst [vmem:[%s41 + $0x588] sm:$0xff] %v396
      %v398 = vld [vmem:[%s40 + $0x590] sm:$0xff]
      %399 = vst [vmem:[%s41 + $0x590] sm:$0xff] %v398
      %v400 = vld [vmem:[%s40 + $0x598] sm:$0xff]
      %401 = vst [vmem:[%s41 + $0x598] sm:$0xff] %v400
      %v402 = vld [vmem:[%s40 + $0x5a0] sm:$0xff]
      %403 = vst [vmem:[%s41 + $0x5a0] sm:$0xff] %v402
      %v404 = vld [vmem:[%s40 + $0x5a8] sm:$0xff]
      %405 = vst [vmem:[%s41 + $0x5a8] sm:$0xff] %v404
      %v406 = vld [vmem:[%s40 + $0x5b0] sm:$0xff]
      %407 = vst [vmem:[%s41 + $0x5b0] sm:$0xff] %v406
      %v408 = vld [vmem:[%s40 + $0x5b8] sm:$0xff]
      %409 = vst [vmem:[%s41 + $0x5b8] sm:$0xff] %v408
      %v410 = vld [vmem:[%s40 + $0x5c0] sm:$0xff]
      %411 = vst [vmem:[%s41 + $0x5c0] sm:$0xff] %v410
      %v412 = vld [vmem:[%s40 + $0x5c8] sm:$0xff]
      %413 = vst [vmem:[%s41 + $0x5c8] sm:$0xff] %v412
      %v414 = vld [vmem:[%s40 + $0x5d0] sm:$0xff]
      %415 = vst [vmem:[%s41 + $0x5d0] sm:$0xff] %v414
      %v416 = vld [vmem:[%s40 + $0x5d8] sm:$0xff]
      %417 = vst [vmem:[%s41 + $0x5d8] sm:$0xff] %v416
      %v418 = vld [vmem:[%s40 + $0x5e0] sm:$0xff]
      %419 = vst [vmem:[%s41 + $0x5e0] sm:$0xff] %v418
      %v420 = vld [vmem:[%s40 + $0x5e8] sm:$0xff]
      %421 = vst [vmem:[%s41 + $0x5e8] sm:$0xff] %v420
      %v422 = vld [vmem:[%s40 + $0x5f0] sm:$0xff]
      %423 = vst [vmem:[%s41 + $0x5f0] sm:$0xff] %v422
      %v424 = vld [vmem:[%s40 + $0x5f8] sm:$0xff]
      %425 = vst [vmem:[%s41 + $0x5f8] sm:$0xff] %v424
      %v426 = vld [vmem:[%s40 + $0x600] sm:$0xff]
      %427 = vst [vmem:[%s41 + $0x600] sm:$0xff] %v426
      %v428 = vld [vmem:[%s40 + $0x608] sm:$0xff]
      %429 = vst [vmem:[%s41 + $0x608] sm:$0xff] %v428
      %v430 = vld [vmem:[%s40 + $0x610] sm:$0xff]
      %431 = vst [vmem:[%s41 + $0x610] sm:$0xff] %v430
      %v432 = vld [vmem:[%s40 + $0x618] sm:$0xff]
      %433 = vst [vmem:[%s41 + $0x618] sm:$0xff] %v432
      %v434 = vld [vmem:[%s40 + $0x620] sm:$0xff]
      %435 = vst [vmem:[%s41 + $0x620] sm:$0xff] %v434
      %v436 = vld [vmem:[%s40 + $0x628] sm:$0xff]
      %437 = vst [vmem:[%s41 + $0x628] sm:$0xff] %v436
      %v438 = vld [vmem:[%s40 + $0x630] sm:$0xff]
      %439 = vst [vmem:[%s41 + $0x630] sm:$0xff] %v438
      %v440 = vld [vmem:[%s40 + $0x638] sm:$0xff]
      %441 = vst [vmem:[%s41 + $0x638] sm:$0xff] %v440
      %v442 = vld [vmem:[%s40 + $0x640] sm:$0xff]
      %443 = vst [vmem:[%s41 + $0x640] sm:$0xff] %v442
      %v444 = vld [vmem:[%s40 + $0x648] sm:$0xff]
      %445 = vst [vmem:[%s41 + $0x648] sm:$0xff] %v444
      %v446 = vld [vmem:[%s40 + $0x650] sm:$0xff]
      %447 = vst [vmem:[%s41 + $0x650] sm:$0xff] %v446
      %v448 = vld [vmem:[%s40 + $0x658] sm:$0xff]
      %449 = vst [vmem:[%s41 + $0x658] sm:$0xff] %v448
      %v450 = vld [vmem:[%s40 + $0x660] sm:$0xff]
      %451 = vst [vmem:[%s41 + $0x660] sm:$0xff] %v450
      %v452 = vld [vmem:[%s40 + $0x668] sm:$0xff]
      %453 = vst [vmem:[%s41 + $0x668] sm:$0xff] %v452
      %v454 = vld [vmem:[%s40 + $0x670] sm:$0xff]
      %455 = vst [vmem:[%s41 + $0x670] sm:$0xff] %v454
      %v456 = vld [vmem:[%s40 + $0x678] sm:$0xff]
      %457 = vst [vmem:[%s41 + $0x678] sm:$0xff] %v456
      %v458 = vld [vmem:[%s40 + $0x680] sm:$0xff]
      %459 = vst [vmem:[%s41 + $0x680] sm:$0xff] %v458
      %v460 = vld [vmem:[%s40 + $0x688] sm:$0xff]
      %461 = vst [vmem:[%s41 + $0x688] sm:$0xff] %v460
      %v462 = vld [vmem:[%s40 + $0x690] sm:$0xff]
      %463 = vst [vmem:[%s41 + $0x690] sm:$0xff] %v462
      %v464 = vld [vmem:[%s40 + $0x698] sm:$0xff]
      %465 = vst [vmem:[%s41 + $0x698] sm:$0xff] %v464
      %v466 = vld [vmem:[%s40 + $0x6a0] sm:$0xff]
      %467 = vst [vmem:[%s41 + $0x6a0] sm:$0xff] %v466
      %v468 = vld [vmem:[%s40 + $0x6a8] sm:$0xff]
      %469 = vst [vmem:[%s41 + $0x6a8] sm:$0xff] %v468
      %v470 = vld [vmem:[%s40 + $0x6b0] sm:$0xff]
      %471 = vst [vmem:[%s41 + $0x6b0] sm:$0xff] %v470
      %v472 = vld [vmem:[%s40 + $0x6b8] sm:$0xff]
      %473 = vst [vmem:[%s41 + $0x6b8] sm:$0xff] %v472
      %v474 = vld [vmem:[%s40 + $0x6c0] sm:$0xff]
      %475 = vst [vmem:[%s41 + $0x6c0] sm:$0xff] %v474
      %v476 = vld [vmem:[%s40 + $0x6c8] sm:$0xff]
      %477 = vst [vmem:[%s41 + $0x6c8] sm:$0xff] %v476
      %v478 = vld [vmem:[%s40 + $0x6d0] sm:$0xff]
      %479 = vst [vmem:[%s41 + $0x6d0] sm:$0xff] %v478
      %v480 = vld [vmem:[%s40 + $0x6d8] sm:$0xff]
      %481 = vst [vmem:[%s41 + $0x6d8] sm:$0xff] %v480
      %v482 = vld [vmem:[%s40 + $0x6e0] sm:$0xff]
      %483 = vst [vmem:[%s41 + $0x6e0] sm:$0xff] %v482
      %v484 = vld [vmem:[%s40 + $0x6e8] sm:$0xff]
      %485 = vst [vmem:[%s41 + $0x6e8] sm:$0xff] %v484
      %v486 = vld [vmem:[%s40 + $0x6f0] sm:$0xff]
      %487 = vst [vmem:[%s41 + $0x6f0] sm:$0xff] %v486
      %v488 = vld [vmem:[%s40 + $0x6f8] sm:$0xff]
      %489 = vst [vmem:[%s41 + $0x6f8] sm:$0xff] %v488
      %v490 = vld [vmem:[%s40 + $0x700] sm:$0xff]
      %491 = vst [vmem:[%s41 + $0x700] sm:$0xff] %v490
      %v492 = vld [vmem:[%s40 + $0x708] sm:$0xff]
      %493 = vst [vmem:[%s41 + $0x708] sm:$0xff] %v492
      %v494 = vld [vmem:[%s40 + $0x710] sm:$0xff]
      %495 = vst [vmem:[%s41 + $0x710] sm:$0xff] %v494
      %v496 = vld [vmem:[%s40 + $0x718] sm:$0xff]
      %497 = vst [vmem:[%s41 + $0x718] sm:$0xff] %v496
      %v498 = vld [vmem:[%s40 + $0x720] sm:$0xff]
      %499 = vst [vmem:[%s41 + $0x720] sm:$0xff] %v498
      %v500 = vld [vmem:[%s40 + $0x728] sm:$0xff]
      %501 = vst [vmem:[%s41 + $0x728] sm:$0xff] %v500
      %v502 = vld [vmem:[%s40 + $0x730] sm:$0xff]
      %503 = vst [vmem:[%s41 + $0x730] sm:$0xff] %v502
      %v504 = vld [vmem:[%s40 + $0x738] sm:$0xff]
      %505 = vst [vmem:[%s41 + $0x738] sm:$0xff] %v504
      %v506 = vld [vmem:[%s40 + $0x740] sm:$0xff]
      %507 = vst [vmem:[%s41 + $0x740] sm:$0xff] %v506
      %v508 = vld [vmem:[%s40 + $0x748] sm:$0xff]
      %509 = vst [vmem:[%s41 + $0x748] sm:$0xff] %v508
      %v510 = vld [vmem:[%s40 + $0x750] sm:$0xff]
      %511 = vst [vmem:[%s41 + $0x750] sm:$0xff] %v510
      %v512 = vld [vmem:[%s40 + $0x758] sm:$0xff]
      %513 = vst [vmem:[%s41 + $0x758] sm:$0xff] %v512
      %v514 = vld [vmem:[%s40 + $0x760] sm:$0xff]
      %515 = vst [vmem:[%s41 + $0x760] sm:$0xff] %v514
      %v516 = vld [vmem:[%s40 + $0x768] sm:$0xff]
      %517 = vst [vmem:[%s41 + $0x768] sm:$0xff] %v516
      %v518 = vld [vmem:[%s40 + $0x770] sm:$0xff]
      %519 = vst [vmem:[%s41 + $0x770] sm:$0xff] %v518
      %v520 = vld [vmem:[%s40 + $0x778] sm:$0xff]
      %521 = vst [vmem:[%s41 + $0x778] sm:$0xff] %v520
      %v522 = vld [vmem:[%s40 + $0x780] sm:$0xff]
      %523 = vst [vmem:[%s41 + $0x780] sm:$0xff] %v522
      %v524 = vld [vmem:[%s40 + $0x788] sm:$0xff]
      %525 = vst [vmem:[%s41 + $0x788] sm:$0xff] %v524
      %v526 = vld [vmem:[%s40 + $0x790] sm:$0xff]
      %527 = vst [vmem:[%s41 + $0x790] sm:$0xff] %v526
      %v528 = vld [vmem:[%s40 + $0x798] sm:$0xff]
      %529 = vst [vmem:[%s41 + $0x798] sm:$0xff] %v528
      %v530 = vld [vmem:[%s40 + $0x7a0] sm:$0xff]
      %531 = vst [vmem:[%s41 + $0x7a0] sm:$0xff] %v530
      %v532 = vld [vmem:[%s40 + $0x7a8] sm:$0xff]
      %533 = vst [vmem:[%s41 + $0x7a8] sm:$0xff] %v532
      %v534 = vld [vmem:[%s40 + $0x7b0] sm:$0xff]
      %535 = vst [vmem:[%s41 + $0x7b0] sm:$0xff] %v534
      %v536 = vld [vmem:[%s40 + $0x7b8] sm:$0xff]
      %537 = vst [vmem:[%s41 + $0x7b8] sm:$0xff] %v536
      %v538 = vld [vmem:[%s40 + $0x7c0] sm:$0xff]
      %539 = vst [vmem:[%s41 + $0x7c0] sm:$0xff] %v538
      %v540 = vld [vmem:[%s40 + $0x7c8] sm:$0xff]
      %541 = vst [vmem:[%s41 + $0x7c8] sm:$0xff] %v540
      %v542 = vld [vmem:[%s40 + $0x7d0] sm:$0xff]
      %543 = vst [vmem:[%s41 + $0x7d0] sm:$0xff] %v542
      %v544 = vld [vmem:[%s40 + $0x7d8] sm:$0xff]
      %545 = vst [vmem:[%s41 + $0x7d8] sm:$0xff] %v544
      %v546 = vld [vmem:[%s40 + $0x7e0] sm:$0xff]
      %547 = vst [vmem:[%s41 + $0x7e0] sm:$0xff] %v546
      %v548 = vld [vmem:[%s40 + $0x7e8] sm:$0xff]
      %549 = vst [vmem:[%s41 + $0x7e8] sm:$0xff] %v548
      %v550 = vld [vmem:[%s40 + $0x7f0] sm:$0xff]
      %551 = vst [vmem:[%s41 + $0x7f0] sm:$0xff] %v550
      %v552 = vld [vmem:[%s40 + $0x7f8] sm:$0xff]
      %553 = vst [vmem:[%s41 + $0x7f8] sm:$0xff] %v552
      %v554 = vld [vmem:[%s40 + $0x800] sm:$0xff]
      %555 = vst [vmem:[%s41 + $0x800] sm:$0xff] %v554
      %v556 = vld [vmem:[%s40 + $0x808] sm:$0xff]
      %557 = vst [vmem:[%s41 + $0x808] sm:$0xff] %v556
      %v558 = vld [vmem:[%s40 + $0x810] sm:$0xff]
      %559 = vst [vmem:[%s41 + $0x810] sm:$0xff] %v558
      %v560 = vld [vmem:[%s40 + $0x818] sm:$0xff]
      %561 = vst [vmem:[%s41 + $0x818] sm:$0xff] %v560
      %v562 = vld [vmem:[%s40 + $0x820] sm:$0xff]
      %563 = vst [vmem:[%s41 + $0x820] sm:$0xff] %v562
      %v564 = vld [vmem:[%s40 + $0x828] sm:$0xff]
      %565 = vst [vmem:[%s41 + $0x828] sm:$0xff] %v564
      %v566 = vld [vmem:[%s40 + $0x830] sm:$0xff]
      %567 = vst [vmem:[%s41 + $0x830] sm:$0xff] %v566
      %v568 = vld [vmem:[%s40 + $0x838] sm:$0xff]
      %569 = vst [vmem:[%s41 + $0x838] sm:$0xff] %v568
      %v570 = vld [vmem:[%s40 + $0x840] sm:$0xff]
      %571 = vst [vmem:[%s41 + $0x840] sm:$0xff] %v570
      %v572 = vld [vmem:[%s40 + $0x848] sm:$0xff]
      %573 = vst [vmem:[%s41 + $0x848] sm:$0xff] %v572
      %v574 = vld [vmem:[%s40 + $0x850] sm:$0xff]
      %575 = vst [vmem:[%s41 + $0x850] sm:$0xff] %v574
      %v576 = vld [vmem:[%s40 + $0x858] sm:$0xff]
      %577 = vst [vmem:[%s41 + $0x858] sm:$0xff] %v576
      %v578 = vld [vmem:[%s40 + $0x860] sm:$0xff]
      %579 = vst [vmem:[%s41 + $0x860] sm:$0xff] %v578
      %v580 = vld [vmem:[%s40 + $0x868] sm:$0xff]
      %581 = vst [vmem:[%s41 + $0x868] sm:$0xff] %v580
      %v582 = vld [vmem:[%s40 + $0x870] sm:$0xff]
      %583 = vst [vmem:[%s41 + $0x870] sm:$0xff] %v582
      %v584 = vld [vmem:[%s40 + $0x878] sm:$0xff]
      %585 = vst [vmem:[%s41 + $0x878] sm:$0xff] %v584
      %v586 = vld [vmem:[%s40 + $0x880] sm:$0xff]
      %587 = vst [vmem:[%s41 + $0x880] sm:$0xff] %v586
      %v588 = vld [vmem:[%s40 + $0x888] sm:$0xff]
      %589 = vst [vmem:[%s41 + $0x888] sm:$0xff] %v588
      %v590 = vld [vmem:[%s40 + $0x890] sm:$0xff]
      %591 = vst [vmem:[%s41 + $0x890] sm:$0xff] %v590
      %v592 = vld [vmem:[%s40 + $0x898] sm:$0xff]
      %593 = vst [vmem:[%s41 + $0x898] sm:$0xff] %v592
      %v594 = vld [vmem:[%s40 + $0x8a0] sm:$0xff]
      %595 = vst [vmem:[%s41 + $0x8a0] sm:$0xff] %v594
      %v596 = vld [vmem:[%s40 + $0x8a8] sm:$0xff]
      %597 = vst [vmem:[%s41 + $0x8a8] sm:$0xff] %v596
      %v598 = vld [vmem:[%s40 + $0x8b0] sm:$0xff]
      %599 = vst [vmem:[%s41 + $0x8b0] sm:$0xff] %v598
      %v600 = vld [vmem:[%s40 + $0x8b8] sm:$0xff]
      %601 = vst [vmem:[%s41 + $0x8b8] sm:$0xff] %v600
      %v602 = vld [vmem:[%s40 + $0x8c0] sm:$0xff]
      %603 = vst [vmem:[%s41 + $0x8c0] sm:$0xff] %v602
      %v604 = vld [vmem:[%s40 + $0x8c8] sm:$0xff]
      %605 = vst [vmem:[%s41 + $0x8c8] sm:$0xff] %v604
      %v606 = vld [vmem:[%s40 + $0x8d0] sm:$0xff]
      %607 = vst [vmem:[%s41 + $0x8d0] sm:$0xff] %v606
      %v608 = vld [vmem:[%s40 + $0x8d8] sm:$0xff]
      %609 = vst [vmem:[%s41 + $0x8d8] sm:$0xff] %v608
      %v610 = vld [vmem:[%s40 + $0x8e0] sm:$0xff]
      %611 = vst [vmem:[%s41 + $0x8e0] sm:$0xff] %v610
      %v612 = vld [vmem:[%s40 + $0x8e8] sm:$0xff]
      %613 = vst [vmem:[%s41 + $0x8e8] sm:$0xff] %v612
      %v614 = vld [vmem:[%s40 + $0x8f0] sm:$0xff]
      %615 = vst [vmem:[%s41 + $0x8f0] sm:$0xff] %v614
      %v616 = vld [vmem:[%s40 + $0x8f8] sm:$0xff]
      %617 = vst [vmem:[%s41 + $0x8f8] sm:$0xff] %v616
      %v618 = vld [vmem:[%s40 + $0x900] sm:$0xff]
      %619 = vst [vmem:[%s41 + $0x900] sm:$0xff] %v618
      %v620 = vld [vmem:[%s40 + $0x908] sm:$0xff]
      %621 = vst [vmem:[%s41 + $0x908] sm:$0xff] %v620
      %v622 = vld [vmem:[%s40 + $0x910] sm:$0xff]
      %623 = vst [vmem:[%s41 + $0x910] sm:$0xff] %v622
      %v624 = vld [vmem:[%s40 + $0x918] sm:$0xff]
      %625 = vst [vmem:[%s41 + $0x918] sm:$0xff] %v624
      %v626 = vld [vmem:[%s40 + $0x920] sm:$0xff]
      %627 = vst [vmem:[%s41 + $0x920] sm:$0xff] %v626
      %v628 = vld [vmem:[%s40 + $0x928] sm:$0xff]
      %629 = vst [vmem:[%s41 + $0x928] sm:$0xff] %v628
      %v630 = vld [vmem:[%s40 + $0x930] sm:$0xff]
      %631 = vst [vmem:[%s41 + $0x930] sm:$0xff] %v630
      %v632 = vld [vmem:[%s40 + $0x938] sm:$0xff]
      %633 = vst [vmem:[%s41 + $0x938] sm:$0xff] %v632
      %v634 = vld [vmem:[%s40 + $0x940] sm:$0xff]
      %635 = vst [vmem:[%s41 + $0x940] sm:$0xff] %v634
      %v636 = vld [vmem:[%s40 + $0x948] sm:$0xff]
      %637 = vst [vmem:[%s41 + $0x948] sm:$0xff] %v636
      %v638 = vld [vmem:[%s40 + $0x950] sm:$0xff]
      %639 = vst [vmem:[%s41 + $0x950] sm:$0xff] %v638
      %v640 = vld [vmem:[%s40 + $0x958] sm:$0xff]
      %641 = vst [vmem:[%s41 + $0x958] sm:$0xff] %v640
      %v642 = vld [vmem:[%s40 + $0x960] sm:$0xff]
      %643 = vst [vmem:[%s41 + $0x960] sm:$0xff] %v642
      %v644 = vld [vmem:[%s40 + $0x968] sm:$0xff]
      %645 = vst [vmem:[%s41 + $0x968] sm:$0xff] %v644
      %v646 = vld [vmem:[%s40 + $0x970] sm:$0xff]
      %647 = vst [vmem:[%s41 + $0x970] sm:$0xff] %v646
      %v648 = vld [vmem:[%s40 + $0x978] sm:$0xff]
      %649 = vst [vmem:[%s41 + $0x978] sm:$0xff] %v648
      %v650 = vld [vmem:[%s40 + $0x980] sm:$0xff]
      %651 = vst [vmem:[%s41 + $0x980] sm:$0xff] %v650
      %v652 = vld [vmem:[%s40 + $0x988] sm:$0xff]
      %653 = vst [vmem:[%s41 + $0x988] sm:$0xff] %v652
      %v654 = vld [vmem:[%s40 + $0x990] sm:$0xff]
      %655 = vst [vmem:[%s41 + $0x990] sm:$0xff] %v654
      %v656 = vld [vmem:[%s40 + $0x998] sm:$0xff]
      %657 = vst [vmem:[%s41 + $0x998] sm:$0xff] %v656
      %v658 = vld [vmem:[%s40 + $0x9a0] sm:$0xff]
      %659 = vst [vmem:[%s41 + $0x9a0] sm:$0xff] %v658
      %v660 = vld [vmem:[%s40 + $0x9a8] sm:$0xff]
      %661 = vst [vmem:[%s41 + $0x9a8] sm:$0xff] %v660
      %v662 = vld [vmem:[%s40 + $0x9b0] sm:$0xff]
      %663 = vst [vmem:[%s41 + $0x9b0] sm:$0xff] %v662
      %v664 = vld [vmem:[%s40 + $0x9b8] sm:$0xff]
      %665 = vst [vmem:[%s41 + $0x9b8] sm:$0xff] %v664
      %v666 = vld [vmem:[%s40 + $0x9c0] sm:$0xff]
      %667 = vst [vmem:[%s41 + $0x9c0] sm:$0xff] %v666
      %v668 = vld [vmem:[%s40 + $0x9c8] sm:$0xff]
      %669 = vst [vmem:[%s41 + $0x9c8] sm:$0xff] %v668
      %v670 = vld [vmem:[%s40 + $0x9d0] sm:$0xff]
      %671 = vst [vmem:[%s41 + $0x9d0] sm:$0xff] %v670
      %v672 = vld [vmem:[%s40 + $0x9d8] sm:$0xff]
      %673 = vst [vmem:[%s41 + $0x9d8] sm:$0xff] %v672
      %v674 = vld [vmem:[%s40 + $0x9e0] sm:$0xff]
      %675 = vst [vmem:[%s41 + $0x9e0] sm:$0xff] %v674
      %v676 = vld [vmem:[%s40 + $0x9e8] sm:$0xff]
      %677 = vst [vmem:[%s41 + $0x9e8] sm:$0xff] %v676
      %v678 = vld [vmem:[%s40 + $0x9f0] sm:$0xff]
      %679 = vst [vmem:[%s41 + $0x9f0] sm:$0xff] %v678
      %v680 = vld [vmem:[%s40 + $0x9f8] sm:$0xff]
      %681 = vst [vmem:[%s41 + $0x9f8] sm:$0xff] %v680
      %v682 = vld [vmem:[%s40 + $0xa00] sm:$0xff]
      %683 = vst [vmem:[%s41 + $0xa00] sm:$0xff] %v682
      %v684 = vld [vmem:[%s40 + $0xa08] sm:$0xff]
      %685 = vst [vmem:[%s41 + $0xa08] sm:$0xff] %v684
      %v686 = vld [vmem:[%s40 + $0xa10] sm:$0xff]
      %687 = vst [vmem:[%s41 + $0xa10] sm:$0xff] %v686
      %v688 = vld [vmem:[%s40 + $0xa18] sm:$0xff]
      %689 = vst [vmem:[%s41 + $0xa18] sm:$0xff] %v688
      %v690 = vld [vmem:[%s40 + $0xa20] sm:$0xff]
      %691 = vst [vmem:[%s41 + $0xa20] sm:$0xff] %v690
      %v692 = vld [vmem:[%s40 + $0xa28] sm:$0xff]
      %693 = vst [vmem:[%s41 + $0xa28] sm:$0xff] %v692
      %v694 = vld [vmem:[%s40 + $0xa30] sm:$0xff]
      %695 = vst [vmem:[%s41 + $0xa30] sm:$0xff] %v694
      %v696 = vld [vmem:[%s40 + $0xa38] sm:$0xff]
      %697 = vst [vmem:[%s41 + $0xa38] sm:$0xff] %v696
      %v698 = vld [vmem:[%s40 + $0xa40] sm:$0xff]
      %699 = vst [vmem:[%s41 + $0xa40] sm:$0xff] %v698
      %v700 = vld [vmem:[%s40 + $0xa48] sm:$0xff]
      %701 = vst [vmem:[%s41 + $0xa48] sm:$0xff] %v700
      %v702 = vld [vmem:[%s40 + $0xa50] sm:$0xff]
      %703 = vst [vmem:[%s41 + $0xa50] sm:$0xff] %v702
      %v704 = vld [vmem:[%s40 + $0xa58] sm:$0xff]
      %705 = vst [vmem:[%s41 + $0xa58] sm:$0xff] %v704
      %v706 = vld [vmem:[%s40 + $0xa60] sm:$0xff]
      %707 = vst [vmem:[%s41 + $0xa60] sm:$0xff] %v706
      %v708 = vld [vmem:[%s40 + $0xa68] sm:$0xff]
      %709 = vst [vmem:[%s41 + $0xa68] sm:$0xff] %v708
      %v710 = vld [vmem:[%s40 + $0xa70] sm:$0xff]
      %711 = vst [vmem:[%s41 + $0xa70] sm:$0xff] %v710
      %v712 = vld [vmem:[%s40 + $0xa78] sm:$0xff]
      %713 = vst [vmem:[%s41 + $0xa78] sm:$0xff] %v712
      %v714 = vld [vmem:[%s40 + $0xa80] sm:$0xff]
      %715 = vst [vmem:[%s41 + $0xa80] sm:$0xff] %v714
      %v716 = vld [vmem:[%s40 + $0xa88] sm:$0xff]
      %717 = vst [vmem:[%s41 + $0xa88] sm:$0xff] %v716
      %v718 = vld [vmem:[%s40 + $0xa90] sm:$0xff]
      %719 = vst [vmem:[%s41 + $0xa90] sm:$0xff] %v718
      %v720 = vld [vmem:[%s40 + $0xa98] sm:$0xff]
      %721 = vst [vmem:[%s41 + $0xa98] sm:$0xff] %v720
      %v722 = vld [vmem:[%s40 + $0xaa0] sm:$0xff]
      %723 = vst [vmem:[%s41 + $0xaa0] sm:$0xff] %v722
      %v724 = vld [vmem:[%s40 + $0xaa8] sm:$0xff]
      %725 = vst [vmem:[%s41 + $0xaa8] sm:$0xff] %v724
      %v726 = vld [vmem:[%s40 + $0xab0] sm:$0xff]
      %727 = vst [vmem:[%s41 + $0xab0] sm:$0xff] %v726
      %v728 = vld [vmem:[%s40 + $0xab8] sm:$0xff]
      %729 = vst [vmem:[%s41 + $0xab8] sm:$0xff] %v728
      %v730 = vld [vmem:[%s40 + $0xac0] sm:$0xff]
      %731 = vst [vmem:[%s41 + $0xac0] sm:$0xff] %v730
      %v732 = vld [vmem:[%s40 + $0xac8] sm:$0xff]
      %733 = vst [vmem:[%s41 + $0xac8] sm:$0xff] %v732
      %v734 = vld [vmem:[%s40 + $0xad0] sm:$0xff]
      %735 = vst [vmem:[%s41 + $0xad0] sm:$0xff] %v734
      %v736 = vld [vmem:[%s40 + $0xad8] sm:$0xff]
      %737 = vst [vmem:[%s41 + $0xad8] sm:$0xff] %v736
      %v738 = vld [vmem:[%s40 + $0xae0] sm:$0xff]
      %739 = vst [vmem:[%s41 + $0xae0] sm:$0xff] %v738
      %v740 = vld [vmem:[%s40 + $0xae8] sm:$0xff]
      %741 = vst [vmem:[%s41 + $0xae8] sm:$0xff] %v740
      %v742 = vld [vmem:[%s40 + $0xaf0] sm:$0xff]
      %743 = vst [vmem:[%s41 + $0xaf0] sm:$0xff] %v742
      %v744 = vld [vmem:[%s40 + $0xaf8] sm:$0xff]
      %745 = vst [vmem:[%s41 + $0xaf8] sm:$0xff] %v744
      %v746 = vld [vmem:[%s40 + $0xb00] sm:$0xff]
      %747 = vst [vmem:[%s41 + $0xb00] sm:$0xff] %v746
      %v748 = vld [vmem:[%s40 + $0xb08] sm:$0xff]
      %749 = vst [vmem:[%s41 + $0xb08] sm:$0xff] %v748
      %v750 = vld [vmem:[%s40 + $0xb10] sm:$0xff]
      %751 = vst [vmem:[%s41 + $0xb10] sm:$0xff] %v750
      %v752 = vld [vmem:[%s40 + $0xb18] sm:$0xff]
      %753 = vst [vmem:[%s41 + $0xb18] sm:$0xff] %v752
      %v754 = vld [vmem:[%s40 + $0xb20] sm:$0xff]
      %755 = vst [vmem:[%s41 + $0xb20] sm:$0xff] %v754
      %v756 = vld [vmem:[%s40 + $0xb28] sm:$0xff]
      %757 = vst [vmem:[%s41 + $0xb28] sm:$0xff] %v756
      %v758 = vld [vmem:[%s40 + $0xb30] sm:$0xff]
      %759 = vst [vmem:[%s41 + $0xb30] sm:$0xff] %v758
      %v760 = vld [vmem:[%s40 + $0xb38] sm:$0xff]
      %761 = vst [vmem:[%s41 + $0xb38] sm:$0xff] %v760
      %v762 = vld [vmem:[%s40 + $0xb40] sm:$0xff]
      %763 = vst [vmem:[%s41 + $0xb40] sm:$0xff] %v762
      %v764 = vld [vmem:[%s40 + $0xb48] sm:$0xff]
      %765 = vst [vmem:[%s41 + $0xb48] sm:$0xff] %v764
      %v766 = vld [vmem:[%s40 + $0xb50] sm:$0xff]
      %767 = vst [vmem:[%s41 + $0xb50] sm:$0xff] %v766
      %v768 = vld [vmem:[%s40 + $0xb58] sm:$0xff]
      %769 = vst [vmem:[%s41 + $0xb58] sm:$0xff] %v768
      %v770 = vld [vmem:[%s40 + $0xb60] sm:$0xff]
      %771 = vst [vmem:[%s41 + $0xb60] sm:$0xff] %v770
      %v772 = vld [vmem:[%s40 + $0xb68] sm:$0xff]
      %773 = vst [vmem:[%s41 + $0xb68] sm:$0xff] %v772
      %v774 = vld [vmem:[%s40 + $0xb70] sm:$0xff]
      %775 = vst [vmem:[%s41 + $0xb70] sm:$0xff] %v774
      %v776 = vld [vmem:[%s40 + $0xb78] sm:$0xff]
      %777 = vst [vmem:[%s41 + $0xb78] sm:$0xff] %v776
      %v778 = vld [vmem:[%s40 + $0xb80] sm:$0xff]
      %779 = vst [vmem:[%s41 + $0xb80] sm:$0xff] %v778
      %v780 = vld [vmem:[%s40 + $0xb88] sm:$0xff]
      %781 = vst [vmem:[%s41 + $0xb88] sm:$0xff] %v780
      %v782 = vld [vmem:[%s40 + $0xb90] sm:$0xff]
      %783 = vst [vmem:[%s41 + $0xb90] sm:$0xff] %v782
      %v784 = vld [vmem:[%s40 + $0xb98] sm:$0xff]
      %785 = vst [vmem:[%s41 + $0xb98] sm:$0xff] %v784
      %v786 = vld [vmem:[%s40 + $0xba0] sm:$0xff]
      %787 = vst [vmem:[%s41 + $0xba0] sm:$0xff] %v786
      %v788 = vld [vmem:[%s40 + $0xba8] sm:$0xff]
      %789 = vst [vmem:[%s41 + $0xba8] sm:$0xff] %v788
      %v790 = vld [vmem:[%s40 + $0xbb0] sm:$0xff]
      %791 = vst [vmem:[%s41 + $0xbb0] sm:$0xff] %v790
      %v792 = vld [vmem:[%s40 + $0xbb8] sm:$0xff]
      %793 = vst [vmem:[%s41 + $0xbb8] sm:$0xff] %v792
      %v794 = vld [vmem:[%s40 + $0xbc0] sm:$0xff]
      %795 = vst [vmem:[%s41 + $0xbc0] sm:$0xff] %v794
      %v796 = vld [vmem:[%s40 + $0xbc8] sm:$0xff]
      %797 = vst [vmem:[%s41 + $0xbc8] sm:$0xff] %v796
      %v798 = vld [vmem:[%s40 + $0xbd0] sm:$0xff]
      %799 = vst [vmem:[%s41 + $0xbd0] sm:$0xff] %v798
      %v800 = vld [vmem:[%s40 + $0xbd8] sm:$0xff]
      %801 = vst [vmem:[%s41 + $0xbd8] sm:$0xff] %v800
      %v802 = vld [vmem:[%s40 + $0xbe0] sm:$0xff]
      %803 = vst [vmem:[%s41 + $0xbe0] sm:$0xff] %v802
      %v804 = vld [vmem:[%s40 + $0xbe8] sm:$0xff]
      %805 = vst [vmem:[%s41 + $0xbe8] sm:$0xff] %v804
      %v806 = vld [vmem:[%s40 + $0xbf0] sm:$0xff]
      %807 = vst [vmem:[%s41 + $0xbf0] sm:$0xff] %v806
      %v808 = vld [vmem:[%s40 + $0xbf8] sm:$0xff]
      %809 = vst [vmem:[%s41 + $0xbf8] sm:$0xff] %v808
      %v810 = vld [vmem:[%s40 + $0xc00] sm:$0xff]
      %811 = vst [vmem:[%s41 + $0xc00] sm:$0xff] %v810
      %v812 = vld [vmem:[%s40 + $0xc08] sm:$0xff]
      %813 = vst [vmem:[%s41 + $0xc08] sm:$0xff] %v812
      %v814 = vld [vmem:[%s40 + $0xc10] sm:$0xff]
      %815 = vst [vmem:[%s41 + $0xc10] sm:$0xff] %v814
      %v816 = vld [vmem:[%s40 + $0xc18] sm:$0xff]
      %817 = vst [vmem:[%s41 + $0xc18] sm:$0xff] %v816
      %v818 = vld [vmem:[%s40 + $0xc20] sm:$0xff]
      %819 = vst [vmem:[%s41 + $0xc20] sm:$0xff] %v818
      %v820 = vld [vmem:[%s40 + $0xc28] sm:$0xff]
      %821 = vst [vmem:[%s41 + $0xc28] sm:$0xff] %v820
      %v822 = vld [vmem:[%s40 + $0xc30] sm:$0xff]
      %823 = vst [vmem:[%s41 + $0xc30] sm:$0xff] %v822
      %v824 = vld [vmem:[%s40 + $0xc38] sm:$0xff]
      %825 = vst [vmem:[%s41 + $0xc38] sm:$0xff] %v824
      %v826 = vld [vmem:[%s40 + $0xc40] sm:$0xff]
      %827 = vst [vmem:[%s41 + $0xc40] sm:$0xff] %v826
      %v828 = vld [vmem:[%s40 + $0xc48] sm:$0xff]
      %829 = vst [vmem:[%s41 + $0xc48] sm:$0xff] %v828
      %v830 = vld [vmem:[%s40 + $0xc50] sm:$0xff]
      %831 = vst [vmem:[%s41 + $0xc50] sm:$0xff] %v830
      %v832 = vld [vmem:[%s40 + $0xc58] sm:$0xff]
      %833 = vst [vmem:[%s41 + $0xc58] sm:$0xff] %v832
      %v834 = vld [vmem:[%s40 + $0xc60] sm:$0xff]
      %835 = vst [vmem:[%s41 + $0xc60] sm:$0xff] %v834
      %v836 = vld [vmem:[%s40 + $0xc68] sm:$0xff]
      %837 = vst [vmem:[%s41 + $0xc68] sm:$0xff] %v836
      %v838 = vld [vmem:[%s40 + $0xc70] sm:$0xff]
      %839 = vst [vmem:[%s41 + $0xc70] sm:$0xff] %v838
      %v840 = vld [vmem:[%s40 + $0xc78] sm:$0xff]
      %841 = vst [vmem:[%s41 + $0xc78] sm:$0xff] %v840
      %v842 = vld [vmem:[%s40 + $0xc80] sm:$0xff]
      %843 = vst [vmem:[%s41 + $0xc80] sm:$0xff] %v842
      %v844 = vld [vmem:[%s40 + $0xc88] sm:$0xff]
      %845 = vst [vmem:[%s41 + $0xc88] sm:$0xff] %v844
      %v846 = vld [vmem:[%s40 + $0xc90] sm:$0xff]
      %847 = vst [vmem:[%s41 + $0xc90] sm:$0xff] %v846
      %v848 = vld [vmem:[%s40 + $0xc98] sm:$0xff]
      %849 = vst [vmem:[%s41 + $0xc98] sm:$0xff] %v848
      %v850 = vld [vmem:[%s40 + $0xca0] sm:$0xff]
      %851 = vst [vmem:[%s41 + $0xca0] sm:$0xff] %v850
      %v852 = vld [vmem:[%s40 + $0xca8] sm:$0xff]
      %853 = vst [vmem:[%s41 + $0xca8] sm:$0xff] %v852
      %v854 = vld [vmem:[%s40 + $0xcb0] sm:$0xff]
      %855 = vst [vmem:[%s41 + $0xcb0] sm:$0xff] %v854
      %v856 = vld [vmem:[%s40 + $0xcb8] sm:$0xff]
      %857 = vst [vmem:[%s41 + $0xcb8] sm:$0xff] %v856
      %v858 = vld [vmem:[%s40 + $0xcc0] sm:$0xff]
      %859 = vst [vmem:[%s41 + $0xcc0] sm:$0xff] %v858
      %v860 = vld [vmem:[%s40 + $0xcc8] sm:$0xff]
      %861 = vst [vmem:[%s41 + $0xcc8] sm:$0xff] %v860
      %v862 = vld [vmem:[%s40 + $0xcd0] sm:$0xff]
      %863 = vst [vmem:[%s41 + $0xcd0] sm:$0xff] %v862
      %v864 = vld [vmem:[%s40 + $0xcd8] sm:$0xff]
      %865 = vst [vmem:[%s41 + $0xcd8] sm:$0xff] %v864
      %v866 = vld [vmem:[%s40 + $0xce0] sm:$0xff]
      %867 = vst [vmem:[%s41 + $0xce0] sm:$0xff] %v866
      %v868 = vld [vmem:[%s40 + $0xce8] sm:$0xff]
      %869 = vst [vmem:[%s41 + $0xce8] sm:$0xff] %v868
      %v870 = vld [vmem:[%s40 + $0xcf0] sm:$0xff]
      %871 = vst [vmem:[%s41 + $0xcf0] sm:$0xff] %v870
      %v872 = vld [vmem:[%s40 + $0xcf8] sm:$0xff]
      %873 = vst [vmem:[%s41 + $0xcf8] sm:$0xff] %v872
      %v874 = vld [vmem:[%s40 + $0xd00] sm:$0xff]
      %875 = vst [vmem:[%s41 + $0xd00] sm:$0xff] %v874
      %v876 = vld [vmem:[%s40 + $0xd08] sm:$0xff]
      %877 = vst [vmem:[%s41 + $0xd08] sm:$0xff] %v876
      %v878 = vld [vmem:[%s40 + $0xd10] sm:$0xff]
      %879 = vst [vmem:[%s41 + $0xd10] sm:$0xff] %v878
      %v880 = vld [vmem:[%s40 + $0xd18] sm:$0xff]
      %881 = vst [vmem:[%s41 + $0xd18] sm:$0xff] %v880
      %v882 = vld [vmem:[%s40 + $0xd20] sm:$0xff]
      %883 = vst [vmem:[%s41 + $0xd20] sm:$0xff] %v882
      %v884 = vld [vmem:[%s40 + $0xd28] sm:$0xff]
      %885 = vst [vmem:[%s41 + $0xd28] sm:$0xff] %v884
      %v886 = vld [vmem:[%s40 + $0xd30] sm:$0xff]
      %887 = vst [vmem:[%s41 + $0xd30] sm:$0xff] %v886
      %v888 = vld [vmem:[%s40 + $0xd38] sm:$0xff]
      %889 = vst [vmem:[%s41 + $0xd38] sm:$0xff] %v888
      %v890 = vld [vmem:[%s40 + $0xd40] sm:$0xff]
      %891 = vst [vmem:[%s41 + $0xd40] sm:$0xff] %v890
      %v892 = vld [vmem:[%s40 + $0xd48] sm:$0xff]
      %893 = vst [vmem:[%s41 + $0xd48] sm:$0xff] %v892
      %v894 = vld [vmem:[%s40 + $0xd50] sm:$0xff]
      %895 = vst [vmem:[%s41 + $0xd50] sm:$0xff] %v894
      %v896 = vld [vmem:[%s40 + $0xd58] sm:$0xff]
      %897 = vst [vmem:[%s41 + $0xd58] sm:$0xff] %v896
      %v898 = vld [vmem:[%s40 + $0xd60] sm:$0xff]
      %899 = vst [vmem:[%s41 + $0xd60] sm:$0xff] %v898
      %v900 = vld [vmem:[%s40 + $0xd68] sm:$0xff]
      %901 = vst [vmem:[%s41 + $0xd68] sm:$0xff] %v900
      %v902 = vld [vmem:[%s40 + $0xd70] sm:$0xff]
      %903 = vst [vmem:[%s41 + $0xd70] sm:$0xff] %v902
      %v904 = vld [vmem:[%s40 + $0xd78] sm:$0xff]
      %905 = vst [vmem:[%s41 + $0xd78] sm:$0xff] %v904
      %v906 = vld [vmem:[%s40 + $0xd80] sm:$0xff]
      %907 = vst [vmem:[%s41 + $0xd80] sm:$0xff] %v906
      %v908 = vld [vmem:[%s40 + $0xd88] sm:$0xff]
      %909 = vst [vmem:[%s41 + $0xd88] sm:$0xff] %v908
      %v910 = vld [vmem:[%s40 + $0xd90] sm:$0xff]
      %911 = vst [vmem:[%s41 + $0xd90] sm:$0xff] %v910
      %v912 = vld [vmem:[%s40 + $0xd98] sm:$0xff]
      %913 = vst [vmem:[%s41 + $0xd98] sm:$0xff] %v912
      %v914 = vld [vmem:[%s40 + $0xda0] sm:$0xff]
      %915 = vst [vmem:[%s41 + $0xda0] sm:$0xff] %v914
      %v916 = vld [vmem:[%s40 + $0xda8] sm:$0xff]
      %917 = vst [vmem:[%s41 + $0xda8] sm:$0xff] %v916
      %v918 = vld [vmem:[%s40 + $0xdb0] sm:$0xff]
      %919 = vst [vmem:[%s41 + $0xdb0] sm:$0xff] %v918
      %v920 = vld [vmem:[%s40 + $0xdb8] sm:$0xff]
      %921 = vst [vmem:[%s41 + $0xdb8] sm:$0xff] %v920
      %v922 = vld [vmem:[%s40 + $0xdc0] sm:$0xff]
      %923 = vst [vmem:[%s41 + $0xdc0] sm:$0xff] %v922
      %v924 = vld [vmem:[%s40 + $0xdc8] sm:$0xff]
      %925 = vst [vmem:[%s41 + $0xdc8] sm:$0xff] %v924
      %v926 = vld [vmem:[%s40 + $0xdd0] sm:$0xff]
      %927 = vst [vmem:[%s41 + $0xdd0] sm:$0xff] %v926
      %v928 = vld [vmem:[%s40 + $0xdd8] sm:$0xff]
      %929 = vst [vmem:[%s41 + $0xdd8] sm:$0xff] %v928
      %v930 = vld [vmem:[%s40 + $0xde0] sm:$0xff]
      %931 = vst [vmem:[%s41 + $0xde0] sm:$0xff] %v930
      %v932 = vld [vmem:[%s40 + $0xde8] sm:$0xff]
      %933 = vst [vmem:[%s41 + $0xde8] sm:$0xff] %v932
      %v934 = vld [vmem:[%s40 + $0xdf0] sm:$0xff]
      %935 = vst [vmem:[%s41 + $0xdf0] sm:$0xff] %v934
      %v936 = vld [vmem:[%s40 + $0xdf8] sm:$0xff]
      %937 = vst [vmem:[%s41 + $0xdf8] sm:$0xff] %v936
      %v938 = vld [vmem:[%s40 + $0xe00] sm:$0xff]
      %939 = vst [vmem:[%s41 + $0xe00] sm:$0xff] %v938
      %v940 = vld [vmem:[%s40 + $0xe08] sm:$0xff]
      %941 = vst [vmem:[%s41 + $0xe08] sm:$0xff] %v940
      %v942 = vld [vmem:[%s40 + $0xe10] sm:$0xff]
      %943 = vst [vmem:[%s41 + $0xe10] sm:$0xff] %v942
      %v944 = vld [vmem:[%s40 + $0xe18] sm:$0xff]
      %945 = vst [vmem:[%s41 + $0xe18] sm:$0xff] %v944
      %v946 = vld [vmem:[%s40 + $0xe20] sm:$0xff]
      %947 = vst [vmem:[%s41 + $0xe20] sm:$0xff] %v946
      %v948 = vld [vmem:[%s40 + $0xe28] sm:$0xff]
      %949 = vst [vmem:[%s41 + $0xe28] sm:$0xff] %v948
      %v950 = vld [vmem:[%s40 + $0xe30] sm:$0xff]
      %951 = vst [vmem:[%s41 + $0xe30] sm:$0xff] %v950
      %v952 = vld [vmem:[%s40 + $0xe38] sm:$0xff]
      %953 = vst [vmem:[%s41 + $0xe38] sm:$0xff] %v952
      %v954 = vld [vmem:[%s40 + $0xe40] sm:$0xff]
      %955 = vst [vmem:[%s41 + $0xe40] sm:$0xff] %v954
      %v956 = vld [vmem:[%s40 + $0xe48] sm:$0xff]
      %957 = vst [vmem:[%s41 + $0xe48] sm:$0xff] %v956
      %v958 = vld [vmem:[%s40 + $0xe50] sm:$0xff]
      %959 = vst [vmem:[%s41 + $0xe50] sm:$0xff] %v958
      %v960 = vld [vmem:[%s40 + $0xe58] sm:$0xff]
      %961 = vst [vmem:[%s41 + $0xe58] sm:$0xff] %v960
      %v962 = vld [vmem:[%s40 + $0xe60] sm:$0xff]
      %963 = vst [vmem:[%s41 + $0xe60] sm:$0xff] %v962
      %v964 = vld [vmem:[%s40 + $0xe68] sm:$0xff]
      %965 = vst [vmem:[%s41 + $0xe68] sm:$0xff] %v964
      %v966 = vld [vmem:[%s40 + $0xe70] sm:$0xff]
      %967 = vst [vmem:[%s41 + $0xe70] sm:$0xff] %v966
      %v968 = vld [vmem:[%s40 + $0xe78] sm:$0xff]
      %969 = vst [vmem:[%s41 + $0xe78] sm:$0xff] %v968
      %v970 = vld [vmem:[%s40 + $0xe80] sm:$0xff]
      %971 = vst [vmem:[%s41 + $0xe80] sm:$0xff] %v970
      %v972 = vld [vmem:[%s40 + $0xe88] sm:$0xff]
      %973 = vst [vmem:[%s41 + $0xe88] sm:$0xff] %v972
      %v974 = vld [vmem:[%s40 + $0xe90] sm:$0xff]
      %975 = vst [vmem:[%s41 + $0xe90] sm:$0xff] %v974
      %v976 = vld [vmem:[%s40 + $0xe98] sm:$0xff]
      %977 = vst [vmem:[%s41 + $0xe98] sm:$0xff] %v976
      %v978 = vld [vmem:[%s40 + $0xea0] sm:$0xff]
      %979 = vst [vmem:[%s41 + $0xea0] sm:$0xff] %v978
      %v980 = vld [vmem:[%s40 + $0xea8] sm:$0xff]
      %981 = vst [vmem:[%s41 + $0xea8] sm:$0xff] %v980
      %v982 = vld [vmem:[%s40 + $0xeb0] sm:$0xff]
      %983 = vst [vmem:[%s41 + $0xeb0] sm:$0xff] %v982
      %v984 = vld [vmem:[%s40 + $0xeb8] sm:$0xff]
      %985 = vst [vmem:[%s41 + $0xeb8] sm:$0xff] %v984
      %v986 = vld [vmem:[%s40 + $0xec0] sm:$0xff]
      %987 = vst [vmem:[%s41 + $0xec0] sm:$0xff] %v986
      %v988 = vld [vmem:[%s40 + $0xec8] sm:$0xff]
      %989 = vst [vmem:[%s41 + $0xec8] sm:$0xff] %v988
      %v990 = vld [vmem:[%s40 + $0xed0] sm:$0xff]
      %991 = vst [vmem:[%s41 + $0xed0] sm:$0xff] %v990
      %v992 = vld [vmem:[%s40 + $0xed8] sm:$0xff]
      %993 = vst [vmem:[%s41 + $0xed8] sm:$0xff] %v992
      %v994 = vld [vmem:[%s40 + $0xee0] sm:$0xff]
      %995 = vst [vmem:[%s41 + $0xee0] sm:$0xff] %v994
      %v996 = vld [vmem:[%s40 + $0xee8] sm:$0xff]
      %997 = vst [vmem:[%s41 + $0xee8] sm:$0xff] %v996
      %v998 = vld [vmem:[%s40 + $0xef0] sm:$0xff]
      %999 = vst [vmem:[%s41 + $0xef0] sm:$0xff] %v998
      %v1000 = vld [vmem:[%s40 + $0xef8] sm:$0xff]
      %1001 = vst [vmem:[%s41 + $0xef8] sm:$0xff] %v1000
      %v1002 = vld [vmem:[%s40 + $0xf00] sm:$0xff]
      %1003 = vst [vmem:[%s41 + $0xf00] sm:$0xff] %v1002
      %v1004 = vld [vmem:[%s40 + $0xf08] sm:$0xff]
      %1005 = vst [vmem:[%s41 + $0xf08] sm:$0xff] %v1004
      %v1006 = vld [vmem:[%s40 + $0xf10] sm:$0xff]
      %1007 = vst [vmem:[%s41 + $0xf10] sm:$0xff] %v1006
      %v1008 = vld [vmem:[%s40 + $0xf18] sm:$0xff]
      %1009 = vst [vmem:[%s41 + $0xf18] sm:$0xff] %v1008
      %v1010 = vld [vmem:[%s40 + $0xf20] sm:$0xff]
      %1011 = vst [vmem:[%s41 + $0xf20] sm:$0xff] %v1010
      %v1012 = vld [vmem:[%s40 + $0xf28] sm:$0xff]
      %1013 = vst [vmem:[%s41 + $0xf28] sm:$0xff] %v1012
      %v1014 = vld [vmem:[%s40 + $0xf30] sm:$0xff]
      %1015 = vst [vmem:[%s41 + $0xf30] sm:$0xff] %v1014
      %v1016 = vld [vmem:[%s40 + $0xf38] sm:$0xff]
      %1017 = vst [vmem:[%s41 + $0xf38] sm:$0xff] %v1016
      %v1018 = vld [vmem:[%s40 + $0xf40] sm:$0xff]
      %1019 = vst [vmem:[%s41 + $0xf40] sm:$0xff] %v1018
      %v1020 = vld [vmem:[%s40 + $0xf48] sm:$0xff]
      %1021 = vst [vmem:[%s41 + $0xf48] sm:$0xff] %v1020
      %v1022 = vld [vmem:[%s40 + $0xf50] sm:$0xff]
      %1023 = vst [vmem:[%s41 + $0xf50] sm:$0xff] %v1022
      %v1024 = vld [vmem:[%s40 + $0xf58] sm:$0xff]
      %1025 = vst [vmem:[%s41 + $0xf58] sm:$0xff] %v1024
      %v1026 = vld [vmem:[%s40 + $0xf60] sm:$0xff]
      %1027 = vst [vmem:[%s41 + $0xf60] sm:$0xff] %v1026
      %v1028 = vld [vmem:[%s40 + $0xf68] sm:$0xff]
      %1029 = vst [vmem:[%s41 + $0xf68] sm:$0xff] %v1028
      %v1030 = vld [vmem:[%s40 + $0xf70] sm:$0xff]
      %1031 = vst [vmem:[%s41 + $0xf70] sm:$0xff] %v1030
      %v1032 = vld [vmem:[%s40 + $0xf78] sm:$0xff]
      %1033 = vst [vmem:[%s41 + $0xf78] sm:$0xff] %v1032
      %v1034 = vld [vmem:[%s40 + $0xf80] sm:$0xff]
      %1035 = vst [vmem:[%s41 + $0xf80] sm:$0xff] %v1034
      %v1036 = vld [vmem:[%s40 + $0xf88] sm:$0xff]
      %1037 = vst [vmem:[%s41 + $0xf88] sm:$0xff] %v1036
      %v1038 = vld [vmem:[%s40 + $0xf90] sm:$0xff]
      %1039 = vst [vmem:[%s41 + $0xf90] sm:$0xff] %v1038
      %v1040 = vld [vmem:[%s40 + $0xf98] sm:$0xff]
      %1041 = vst [vmem:[%s41 + $0xf98] sm:$0xff] %v1040
      %v1042 = vld [vmem:[%s40 + $0xfa0] sm:$0xff]
      %1043 = vst [vmem:[%s41 + $0xfa0] sm:$0xff] %v1042
      %v1044 = vld [vmem:[%s40 + $0xfa8] sm:$0xff]
      %1045 = vst [vmem:[%s41 + $0xfa8] sm:$0xff] %v1044
      %v1046 = vld [vmem:[%s40 + $0xfb0] sm:$0xff]
      %1047 = vst [vmem:[%s41 + $0xfb0] sm:$0xff] %v1046
      %v1048 = vld [vmem:[%s40 + $0xfb8] sm:$0xff]
      %1049 = vst [vmem:[%s41 + $0xfb8] sm:$0xff] %v1048
      %v1050 = vld [vmem:[%s40 + $0xfc0] sm:$0xff]
      %1051 = vst [vmem:[%s41 + $0xfc0] sm:$0xff] %v1050
      %v1052 = vld [vmem:[%s40 + $0xfc8] sm:$0xff]
      %1053 = vst [vmem:[%s41 + $0xfc8] sm:$0xff] %v1052
      %v1054 = vld [vmem:[%s40 + $0xfd0] sm:$0xff]
      %1055 = vst [vmem:[%s41 + $0xfd0] sm:$0xff] %v1054
      %v1056 = vld [vmem:[%s40 + $0xfd8] sm:$0xff]
      %1057 = vst [vmem:[%s41 + $0xfd8] sm:$0xff] %v1056
      %v1058 = vld [vmem:[%s40 + $0xfe0] sm:$0xff]
      %1059 = vst [vmem:[%s41 + $0xfe0] sm:$0xff] %v1058
      %v1060 = vld [vmem:[%s40 + $0xfe8] sm:$0xff]
      %1061 = vst [vmem:[%s41 + $0xfe8] sm:$0xff] %v1060
      %v1062 = vld [vmem:[%s40 + $0xff0] sm:$0xff]
      %1063 = vst [vmem:[%s41 + $0xff0] sm:$0xff] %v1062
      %v1064 = vld [vmem:[%s40 + $0xff8] sm:$0xff]
      %1065 = vst [vmem:[%s41 + $0xff8] sm:$0xff] %v1064
    $region42: #{two_tower_forward.1} parent=36 // loop_footer
      %s39 = sadd.s32 1, %s35
    $region43: #{two_tower_forward.1} parent=36 // loop_footer_branch
      %34 = sbr.rel target = $region39
    $region44: #{two_tower_forward.1} parent=36 // loop_exit
      _
  $region37: #{two_tower_forward.1} parent=0 // pred_fallthru
    _
  // Predicated region
  $region45: #{two_tower_forward.1} parent=0 // pred_check
    _
  $region46: #{two_tower_forward.1} parent=0 // pred_check_branch
    %1067 = sbr.rel target = $region48
  $region47: #{two_tower_forward.1} parent=0 // pred_region
    _
  $region48: #{two_tower_forward.1} parent=0 // pred_fallthru
    _
  // Predicated region
  $region49: #{two_tower_forward.1} parent=0 // pred_check
    _
  $region50: #{two_tower_forward.1} parent=0 // pred_check_branch
    %1070 = sbr.rel (0) target = $region52
  $region51: #{two_tower_forward.1} parent=0 // pred_region
    %1071 = vsyncadd [#allocation4], 65536
  $region52: #{two_tower_forward.1} parent=0 // pred_fallthru
    _
  %v1072 = vlaneseq
  %v1073 = vshrl.u32 %v1072, 7
  %vm1074 = vcmp.lt.s32.totalorder %v1073, 2
  %v1075 = vsel %vm1074, 1, 0
  %vm1076 = vcmp.eq.s32.totalorder %v1075, 1
  %v1077 = vld [vmem:[%s0] sm:$0xff]
  %v1078 = vld [vmem:[%s0 + $0x8] sm:$0xff]
  %v1079 = vld [vmem:[%s1] sm:$0xff]
  %v1080 = vld [vmem:[%s1 + $0x8] sm:$0xff]
  %v1081 = vld [vmem:[%s1 + $0x10] sm:$0xff]
  %v1082 = vld [vmem:[%s1 + $0x18] sm:$0xff]
  %v1083 = vld [vmem:[%s1 + $0x20] sm:$0xff]
  %v1084 = vld [vmem:[%s1 + $0x28] sm:$0xff]
  %v1085 = vld [vmem:[%s1 + $0x30] sm:$0xff]
  %v1086 = vld [vmem:[%s1 + $0x38] sm:$0xff]
  %v1087 = vld [vmem:[%s1 + $0x40] sm:$0xff]
  %v1088 = vld [vmem:[%s1 + $0x48] sm:$0xff]
  %v1089 = vld [vmem:[%s1 + $0x50] sm:$0xff]
  %v1090 = vld [vmem:[%s1 + $0x58] sm:$0xff]
  %v1091 = vld [vmem:[%s1 + $0x60] sm:$0xff]
  %v1092 = vld [vmem:[%s1 + $0x68] sm:$0xff]
  %v1093 = vld [vmem:[%s1 + $0x70] sm:$0xff]
  %v1094 = vld [vmem:[%s1 + $0x78] sm:$0xff]
  %v1095 = vld [vmem:[%s1 + $0x80] sm:$0xff]
  %v1096 = vld [vmem:[%s1 + $0x88] sm:$0xff]
  %v1097 = vld [vmem:[%s1 + $0x90] sm:$0xff]
  %v1098 = vld [vmem:[%s1 + $0x98] sm:$0xff]
  %v1099 = vld [vmem:[%s1 + $0xa0] sm:$0xff]
  %v1100 = vld [vmem:[%s1 + $0xa8] sm:$0xff]
  %v1101 = vld [vmem:[%s1 + $0xb0] sm:$0xff]
  %v1102 = vld [vmem:[%s1 + $0xb8] sm:$0xff]
  %v1103 = vld [vmem:[%s1 + $0xc0] sm:$0xff]
  %v1104 = vld [vmem:[%s1 + $0xc8] sm:$0xff]
  %v1105 = vld [vmem:[%s1 + $0xd0] sm:$0xff]
  %v1106 = vld [vmem:[%s1 + $0xd8] sm:$0xff]
  %v1107 = vld [vmem:[%s1 + $0xe0] sm:$0xff]
  %v1108 = vld [vmem:[%s1 + $0xe8] sm:$0xff]
  %v1109 = vld [vmem:[%s1 + $0xf0] sm:$0xff]
  %v1110 = vld [vmem:[%s1 + $0xf8] sm:$0xff]
  %v1111 = vld [vmem:[%s1 + $0x100] sm:$0xff]
  %v1112 = vld [vmem:[%s1 + $0x108] sm:$0xff]
  %v1113 = vld [vmem:[%s1 + $0x110] sm:$0xff]
  %v1114 = vld [vmem:[%s1 + $0x118] sm:$0xff]
  %v1115 = vld [vmem:[%s1 + $0x120] sm:$0xff]
  %v1116 = vld [vmem:[%s1 + $0x128] sm:$0xff]
  %v1117 = vld [vmem:[%s1 + $0x130] sm:$0xff]
  %v1118 = vld [vmem:[%s1 + $0x138] sm:$0xff]
  %v1119 = vld [vmem:[%s1 + $0x140] sm:$0xff]
  %v1120 = vld [vmem:[%s1 + $0x148] sm:$0xff]
  %v1121 = vld [vmem:[%s1 + $0x150] sm:$0xff]
  %v1122 = vld [vmem:[%s1 + $0x158] sm:$0xff]
  %v1123 = vld [vmem:[%s1 + $0x160] sm:$0xff]
  %v1124 = vld [vmem:[%s1 + $0x168] sm:$0xff]
  %v1125 = vld [vmem:[%s1 + $0x170] sm:$0xff]
  %v1126 = vld [vmem:[%s1 + $0x178] sm:$0xff]
  %v1127 = vld [vmem:[%s1 + $0x180] sm:$0xff]
  %v1128 = vld [vmem:[%s1 + $0x188] sm:$0xff]
  %v1129 = vld [vmem:[%s1 + $0x190] sm:$0xff]
  %v1130 = vld [vmem:[%s1 + $0x198] sm:$0xff]
  %v1131 = vld [vmem:[%s1 + $0x1a0] sm:$0xff]
  %v1132 = vld [vmem:[%s1 + $0x1a8] sm:$0xff]
  %v1133 = vld [vmem:[%s1 + $0x1b0] sm:$0xff]
  %v1134 = vld [vmem:[%s1 + $0x1b8] sm:$0xff]
  %v1135 = vld [vmem:[%s1 + $0x1c0] sm:$0xff]
  %v1136 = vld [vmem:[%s1 + $0x1c8] sm:$0xff]
  %v1137 = vld [vmem:[%s1 + $0x1d0] sm:$0xff]
  %v1138 = vld [vmem:[%s1 + $0x1d8] sm:$0xff]
  %v1139 = vld [vmem:[%s1 + $0x1e0] sm:$0xff]
  %v1140 = vld [vmem:[%s1 + $0x1e8] sm:$0xff]
  %v1141 = vld [vmem:[%s1 + $0x1f0] sm:$0xff]
  %v1142 = vld [vmem:[%s1 + $0x1f8] sm:$0xff]
  %v1143 = vld [vmem:[%s1 + $0x200] sm:$0xff]
  %v1144 = vld [vmem:[%s1 + $0x208] sm:$0xff]
  %v1145 = vld [vmem:[%s1 + $0x210] sm:$0xff]
  %v1146 = vld [vmem:[%s1 + $0x218] sm:$0xff]
  %v1147 = vld [vmem:[%s1 + $0x220] sm:$0xff]
  %v1148 = vld [vmem:[%s1 + $0x228] sm:$0xff]
  %v1149 = vld [vmem:[%s1 + $0x230] sm:$0xff]
  %v1150 = vld [vmem:[%s1 + $0x238] sm:$0xff]
  %v1151 = vld [vmem:[%s1 + $0x240] sm:$0xff]
  %v1152 = vld [vmem:[%s1 + $0x248] sm:$0xff]
  %v1153 = vld [vmem:[%s1 + $0x250] sm:$0xff]
  %v1154 = vld [vmem:[%s1 + $0x258] sm:$0xff]
  %v1155 = vld [vmem:[%s1 + $0x260] sm:$0xff]
  %v1156 = vld [vmem:[%s1 + $0x268] sm:$0xff]
  %v1157 = vld [vmem:[%s1 + $0x270] sm:$0xff]
  %v1158 = vld [vmem:[%s1 + $0x278] sm:$0xff]
  %v1159 = vld [vmem:[%s1 + $0x280] sm:$0xff]
  %v1160 = vld [vmem:[%s1 + $0x288] sm:$0xff]
  %v1161 = vld [vmem:[%s1 + $0x290] sm:$0xff]
  %v1162 = vld [vmem:[%s1 + $0x298] sm:$0xff]
  %v1163 = vld [vmem:[%s1 + $0x2a0] sm:$0xff]
  %v1164 = vld [vmem:[%s1 + $0x2a8] sm:$0xff]
  %v1165 = vld [vmem:[%s1 + $0x2b0] sm:$0xff]
  %v1166 = vld [vmem:[%s1 + $0x2b8] sm:$0xff]
  %v1167 = vld [vmem:[%s1 + $0x2c0] sm:$0xff]
  %v1168 = vld [vmem:[%s1 + $0x2c8] sm:$0xff]
  %v1169 = vld [vmem:[%s1 + $0x2d0] sm:$0xff]
  %v1170 = vld [vmem:[%s1 + $0x2d8] sm:$0xff]
  %v1171 = vld [vmem:[%s1 + $0x2e0] sm:$0xff]
  %v1172 = vld [vmem:[%s1 + $0x2e8] sm:$0xff]
  %v1173 = vld [vmem:[%s1 + $0x2f0] sm:$0xff]
  %v1174 = vld [vmem:[%s1 + $0x2f8] sm:$0xff]
  %v1175 = vld [vmem:[%s1 + $0x300] sm:$0x3f]
  %v1176 = vld [vmem:[%s1 + $0x308] sm:$0x3f]
  %v1177 = vld [vmem:[%s1 + $0x310] sm:$0x3f]
  %v1178 = vld [vmem:[%s1 + $0x318] sm:$0x3f]
  %v1179 = vld [vmem:[%s1 + $0x320] sm:$0x3f]
  %v1180 = vld [vmem:[%s1 + $0x328] sm:$0x3f]
  %v1181 = vld [vmem:[%s1 + $0x330] sm:$0x3f]
  %v1182 = vld [vmem:[%s1 + $0x338] sm:$0x3f]
  %vm1183 = vcmask 834560
  %v1185 = vsel %vm1183, %v1077, 0
  %v1188 = vsel %vm1183, %v1078, 0
  %vm1190 = vcmask 1045504
  %v1192 = vsel %vm1190, %v1175, 0
  %v1195 = vsel %vm1190, %v1176, 0
  %v1198 = vsel %vm1190, %v1177, 0
  %v1201 = vsel %vm1190, %v1178, 0
  %v1204 = vsel %vm1190, %v1179, 0
  %v1207 = vsel %vm1190, %v1180, 0
  %v1210 = vsel %vm1190, %v1181, 0
  %v1213 = vsel %vm1190, %v1182, 0
  %1215 = vmatpush.msra.mxu0 0.0
  %1216 = vmatpush.msra.mxu0 0.0
  %1217 = vmatpush.msra.mxu0 0.0
  %1218 = vmatpush.msra.mxu0 %v1192
  %1219 = vmatpush.msra.mxu0 %v1167
  %1220 = vmatpush.msra.mxu0 %v1159
  %1221 = vmatpush.msra.mxu0 %v1151
  %1222 = vmatpush.msra.mxu0 %v1143
  %1223 = vmatpush.msra.mxu0 %v1135
  %1224 = vmatpush.msra.mxu0 %v1127
  %1225 = vmatpush.msra.mxu0 %v1119
  %1226 = vmatpush.msra.mxu0 %v1111
  %1227 = vmatpush.msra.mxu0 %v1103
  %1228 = vmatpush.msra.mxu0 %v1095
  %1229 = vmatpush.msra.mxu0 %v1087
  %1230 = vmatpush.msra.mxu0 %v1079
  %1231 = vmatmul.f32.gmra.mxu0 %v1185
  %v1232 = vpop.f32.mrf.mxu0
  %v1233 = vadd.f32 0.0, %v1232
  %1234 = vmatmul.f32.gmra.mxu0 %v1188
  %v1235 = vpop.f32.mrf.mxu0
  %v1236 = vadd.f32 0.0, %v1235
  %1237 = vdwg.mxu0
  %1238 = vmatpush.msra.mxu0 0.0
  %1239 = vmatpush.msra.mxu0 0.0
  %1240 = vmatpush.msra.mxu0 0.0
  %1241 = vmatpush.msra.mxu0 %v1195
  %1242 = vmatpush.msra.mxu0 %v1168
  %1243 = vmatpush.msra.mxu0 %v1160
  %1244 = vmatpush.msra.mxu0 %v1152
  %1245 = vmatpush.msra.mxu0 %v1144
  %1246 = vmatpush.msra.mxu0 %v1136
  %1247 = vmatpush.msra.mxu0 %v1128
  %1248 = vmatpush.msra.mxu0 %v1120
  %1249 = vmatpush.msra.mxu0 %v1112
  %1250 = vmatpush.msra.mxu0 %v1104
  %1251 = vmatpush.msra.mxu0 %v1096
  %1252 = vmatpush.msra.mxu0 %v1088
  %1253 = vmatpush.msra.mxu0 %v1080
  %1254 = vmatmul.f32.gmra.mxu0 %v1185
  %v1255 = vpop.f32.mrf.mxu0
  %v1256 = vadd.f32 0.0, %v1255
  %1257 = vmatmul.f32.gmra.mxu0 %v1188
  %v1258 = vpop.f32.mrf.mxu0
  %v1259 = vadd.f32 0.0, %v1258
  %1260 = vdwg.mxu0
  %1261 = vmatpush.msra.mxu0 0.0
  %1262 = vmatpush.msra.mxu0 0.0
  %1263 = vmatpush.msra.mxu0 0.0
  %1264 = vmatpush.msra.mxu0 %v1198
  %1265 = vmatpush.msra.mxu0 %v1169
  %1266 = vmatpush.msra.mxu0 %v1161
  %1267 = vmatpush.msra.mxu0 %v1153
  %1268 = vmatpush.msra.mxu0 %v1145
  %1269 = vmatpush.msra.mxu0 %v1137
  %1270 = vmatpush.msra.mxu0 %v1129
  %1271 = vmatpush.msra.mxu0 %v1121
  %1272 = vmatpush.msra.mxu0 %v1113
  %1273 = vmatpush.msra.mxu0 %v1105
  %1274 = vmatpush.msra.mxu0 %v1097
  %1275 = vmatpush.msra.mxu0 %v1089
  %1276 = vmatpush.msra.mxu0 %v1081
  %1277 = vmatmul.f32.gmra.mxu0 %v1185
  %v1278 = vpop.f32.mrf.mxu0
  %v1279 = vadd.f32 0.0, %v1278
  %1280 = vmatmul.f32.gmra.mxu0 %v1188
  %v1281 = vpop.f32.mrf.mxu0
  %v1282 = vadd.f32 0.0, %v1281
  %1283 = vdwg.mxu0
  %1284 = vmatpush.msra.mxu0 0.0
  %1285 = vmatpush.msra.mxu0 0.0
  %1286 = vmatpush.msra.mxu0 0.0
  %1287 = vmatpush.msra.mxu0 %v1201
  %1288 = vmatpush.msra.mxu0 %v1170
  %1289 = vmatpush.msra.mxu0 %v1162
  %1290 = vmatpush.msra.mxu0 %v1154
  %1291 = vmatpush.msra.mxu0 %v1146
  %1292 = vmatpush.msra.mxu0 %v1138
  %1293 = vmatpush.msra.mxu0 %v1130
  %1294 = vmatpush.msra.mxu0 %v1122
  %1295 = vmatpush.msra.mxu0 %v1114
  %1296 = vmatpush.msra.mxu0 %v1106
  %1297 = vmatpush.msra.mxu0 %v1098
  %1298 = vmatpush.msra.mxu0 %v1090
  %1299 = vmatpush.msra.mxu0 %v1082
  %1300 = vmatmul.f32.gmra.mxu0 %v1185
  %v1301 = vpop.f32.mrf.mxu0
  %v1302 = vadd.f32 0.0, %v1301
  %1303 = vmatmul.f32.gmra.mxu0 %v1188
  %v1304 = vpop.f32.mrf.mxu0
  %v1305 = vadd.f32 0.0, %v1304
  %1306 = vdwg.mxu0
  %1307 = vmatpush.msra.mxu0 0.0
  %1308 = vmatpush.msra.mxu0 0.0
  %1309 = vmatpush.msra.mxu0 0.0
  %1310 = vmatpush.msra.mxu0 %v1204
  %1311 = vmatpush.msra.mxu0 %v1171
  %1312 = vmatpush.msra.mxu0 %v1163
  %1313 = vmatpush.msra.mxu0 %v1155
  %1314 = vmatpush.msra.mxu0 %v1147
  %1315 = vmatpush.msra.mxu0 %v1139
  %1316 = vmatpush.msra.mxu0 %v1131
  %1317 = vmatpush.msra.mxu0 %v1123
  %1318 = vmatpush.msra.mxu0 %v1115
  %1319 = vmatpush.msra.mxu0 %v1107
  %1320 = vmatpush.msra.mxu0 %v1099
  %1321 = vmatpush.msra.mxu0 %v1091
  %1322 = vmatpush.msra.mxu0 %v1083
  %1323 = vmatmul.f32.gmra.mxu0 %v1185
  %v1324 = vpop.f32.mrf.mxu0
  %v1325 = vadd.f32 0.0, %v1324
  %1326 = vmatmul.f32.gmra.mxu0 %v1188
  %v1327 = vpop.f32.mrf.mxu0
  %v1328 = vadd.f32 0.0, %v1327
  %1329 = vdwg.mxu0
  %1330 = vmatpush.msra.mxu0 0.0
  %1331 = vmatpush.msra.mxu0 0.0
  %1332 = vmatpush.msra.mxu0 0.0
  %1333 = vmatpush.msra.mxu0 %v1207
  %1334 = vmatpush.msra.mxu0 %v1172
  %1335 = vmatpush.msra.mxu0 %v1164
  %1336 = vmatpush.msra.mxu0 %v1156
  %1337 = vmatpush.msra.mxu0 %v1148
  %1338 = vmatpush.msra.mxu0 %v1140
  %1339 = vmatpush.msra.mxu0 %v1132
  %1340 = vmatpush.msra.mxu0 %v1124
  %1341 = vmatpush.msra.mxu0 %v1116
  %1342 = vmatpush.msra.mxu0 %v1108
  %1343 = vmatpush.msra.mxu0 %v1100
  %1344 = vmatpush.msra.mxu0 %v1092
  %1345 = vmatpush.msra.mxu0 %v1084
  %1346 = vmatmul.f32.gmra.mxu0 %v1185
  %v1347 = vpop.f32.mrf.mxu0
  %v1348 = vadd.f32 0.0, %v1347
  %1349 = vmatmul.f32.gmra.mxu0 %v1188
  %v1350 = vpop.f32.mrf.mxu0
  %v1351 = vadd.f32 0.0, %v1350
  %1352 = vdwg.mxu0
  %1353 = vmatpush.msra.mxu0 0.0
  %1354 = vmatpush.msra.mxu0 0.0
  %1355 = vmatpush.msra.mxu0 0.0
  %1356 = vmatpush.msra.mxu0 %v1210
  %1357 = vmatpush.msra.mxu0 %v1173
  %1358 = vmatpush.msra.mxu0 %v1165
  %1359 = vmatpush.msra.mxu0 %v1157
  %1360 = vmatpush.msra.mxu0 %v1149
  %1361 = vmatpush.msra.mxu0 %v1141
  %1362 = vmatpush.msra.mxu0 %v1133
  %1363 = vmatpush.msra.mxu0 %v1125
  %1364 = vmatpush.msra.mxu0 %v1117
  %1365 = vmatpush.msra.mxu0 %v1109
  %1366 = vmatpush.msra.mxu0 %v1101
  %1367 = vmatpush.msra.mxu0 %v1093
  %1368 = vmatpush.msra.mxu0 %v1085
  %1369 = vmatmul.f32.gmra.mxu0 %v1185
  %v1370 = vpop.f32.mrf.mxu0
  %v1371 = vadd.f32 0.0, %v1370
  %1372 = vmatmul.f32.gmra.mxu0 %v1188
  %v1373 = vpop.f32.mrf.mxu0
  %v1374 = vadd.f32 0.0, %v1373
  %1375 = vdwg.mxu0
  %1376 = vmatpush.msra.mxu0 0.0
  %1377 = vmatpush.msra.mxu0 0.0
  %1378 = vmatpush.msra.mxu0 0.0
  %1379 = vmatpush.msra.mxu0 %v1213
  %1380 = vmatpush.msra.mxu0 %v1174
  %1381 = vmatpush.msra.mxu0 %v1166
  %1382 = vmatpush.msra.mxu0 %v1158
  %1383 = vmatpush.msra.mxu0 %v1150
  %1384 = vmatpush.msra.mxu0 %v1142
  %1385 = vmatpush.msra.mxu0 %v1134
  %1386 = vmatpush.msra.mxu0 %v1126
  %1387 = vmatpush.msra.mxu0 %v1118
  %1388 = vmatpush.msra.mxu0 %v1110
  %1389 = vmatpush.msra.mxu0 %v1102
  %1390 = vmatpush.msra.mxu0 %v1094
  %1391 = vmatpush.msra.mxu0 %v1086
  %1392 = vmatmul.f32.gmra.mxu0 %v1185
  %v1393 = vpop.f32.mrf.mxu0
  %v1394 = vadd.f32 0.0, %v1393
  %1395 = vmatmul.f32.gmra.mxu0 %v1188
  %v1396 = vpop.f32.mrf.mxu0
  %v1397 = vadd.f32 0.0, %v1396
  %1398 = vdwg.mxu0
  %v1407 = vrot.slane %v1256, 4
  %v1408 = vrot.slane %v1302, 4
  %v1409 = vrot.slane %v1348, 4
  %v1410 = vrot.slane %v1394, 4
  %vm1411 = vcmask 1043456
  %v1412 = vsel %vm1411, %v1233, %v1407
  %v1413 = vsel %vm1411, %v1279, %v1408
  %v1414 = vsel %vm1411, %v1325, %v1409
  %v1415 = vsel %vm1411, %v1371, %v1410
  %1420 = vst [vmem:[#allocation2] sm:$0xff] %v1412
  %1421 = vst [vmem:[#allocation2 + $0x8] sm:$0xff] %v1413
  %1422 = vst [vmem:[#allocation2 + $0x10] sm:$0xff] %v1414
  %1423 = vst [vmem:[#allocation2 + $0x18] sm:$0xff] %v1415
  %1424 = vst.sshfl [vmem:[#allocation1] sm:$0xff pattern:$0x75316420] %v1233
  %1425 = vst.sshfl [vmem:[#allocation1 + $0x8] sm:$0xff pattern:$0x75316420] %v1256
  %1426 = vst.sshfl [vmem:[#allocation1 + $0x10] sm:$0xff pattern:$0x75316420] %v1279
  %1427 = vst.sshfl [vmem:[#allocation1 + $0x18] sm:$0xff pattern:$0x75316420] %v1302
  %1428 = vst.sshfl [vmem:[#allocation1 + $0x20] sm:$0xff pattern:$0x75316420] %v1325
  %1429 = vst.sshfl [vmem:[#allocation1 + $0x28] sm:$0xff pattern:$0x75316420] %v1348
  %1430 = vst.sshfl [vmem:[#allocation1 + $0x30] sm:$0xff pattern:$0x75316420] %v1371
  %1431 = vst.sshfl [vmem:[#allocation1 + $0x38] sm:$0xff pattern:$0x75316420] %v1394
  %s1432 = scalar_lea.vmem [#allocation1], 1
  %v1433 = vld [vmem:[%s1432] ss:$2 sm:$0xff]
  %s1434 = scalar_lea.vmem [#allocation1], 17
  %v1435 = vld [vmem:[%s1434] ss:$2 sm:$0xff]
  %s1436 = scalar_lea.vmem [#allocation1], 33
  %v1437 = vld [vmem:[%s1436] ss:$2 sm:$0xff]
  %s1438 = scalar_lea.vmem [#allocation1], 49
  %v1439 = vld [vmem:[%s1438] ss:$2 sm:$0xff]
  %s1444 = scalar_lea.vmem [#allocation2], 32
  %1445 = vst [vmem:[%s1444] sm:$0xff] %v1433
  %1446 = vst [vmem:[%s1444 + $0x8] sm:$0xff] %v1435
  %1447 = vst [vmem:[%s1444 + $0x10] sm:$0xff] %v1437
  %1448 = vst [vmem:[%s1444 + $0x18] sm:$0xff] %v1439
  %v1457 = vrot.slane %v1259, 4
  %v1458 = vrot.slane %v1305, 4
  %v1459 = vrot.slane %v1351, 4
  %v1460 = vrot.slane %v1397, 4
  %v1461 = vsel %vm1411, %v1236, %v1457
  %v1462 = vsel %vm1411, %v1282, %v1458
  %v1463 = vsel %vm1411, %v1328, %v1459
  %v1464 = vsel %vm1411, %v1374, %v1460
  %s1469 = scalar_lea.vmem [#allocation2], 64
  %1470 = vst [vmem:[%s1469] sm:$0xff] %v1461
  %1471 = vst [vmem:[%s1469 + $0x8] sm:$0xff] %v1462
  %1472 = vst [vmem:[%s1469 + $0x10] sm:$0xff] %v1463
  %1473 = vst [vmem:[%s1469 + $0x18] sm:$0xff] %v1464
  %1474 = vst.sshfl [vmem:[#allocation1] sm:$0xff pattern:$0x75316420] %v1236
  %1475 = vst.sshfl [vmem:[#allocation1 + $0x8] sm:$0xff pattern:$0x75316420] %v1259
  %1476 = vst.sshfl [vmem:[#allocation1 + $0x10] sm:$0xff pattern:$0x75316420] %v1282
  %1477 = vst.sshfl [vmem:[#allocation1 + $0x18] sm:$0xff pattern:$0x75316420] %v1305
  %1478 = vst.sshfl [vmem:[#allocation1 + $0x20] sm:$0xff pattern:$0x75316420] %v1328
  %1479 = vst.sshfl [vmem:[#allocation1 + $0x28] sm:$0xff pattern:$0x75316420] %v1351
  %1480 = vst.sshfl [vmem:[#allocation1 + $0x30] sm:$0xff pattern:$0x75316420] %v1374
  %1481 = vst.sshfl [vmem:[#allocation1 + $0x38] sm:$0xff pattern:$0x75316420] %v1397
  %s1482 = scalar_lea.vmem [#allocation1], 1
  %v1483 = vld [vmem:[%s1482] ss:$2 sm:$0xff]
  %s1484 = scalar_lea.vmem [#allocation1], 17
  %v1485 = vld [vmem:[%s1484] ss:$2 sm:$0xff]
  %s1486 = scalar_lea.vmem [#allocation1], 33
  %v1487 = vld [vmem:[%s1486] ss:$2 sm:$0xff]
  %s1488 = scalar_lea.vmem [#allocation1], 49
  %v1489 = vld [vmem:[%s1488] ss:$2 sm:$0xff]
  %s1494 = scalar_lea.vmem [#allocation2], 96
  %1495 = vst [vmem:[%s1494] sm:$0xff] %v1483
  %1496 = vst [vmem:[%s1494 + $0x8] sm:$0xff] %v1485
  %1497 = vst [vmem:[%s1494 + $0x10] sm:$0xff] %v1487
  %1498 = vst [vmem:[%s1494 + $0x18] sm:$0xff] %v1489
  %v1499 = vld [vmem:[%s0 + $0x10] sm:$0xff]
  %v1500 = vld [vmem:[%s0 + $0x18] sm:$0xff]
  %v1501 = vld [vmem:[%s1] sm:$0xff]
  %v1502 = vld [vmem:[%s1 + $0x8] sm:$0xff]
  %v1503 = vld [vmem:[%s1 + $0x10] sm:$0xff]
  %v1504 = vld [vmem:[%s1 + $0x18] sm:$0xff]
  %v1505 = vld [vmem:[%s1 + $0x20] sm:$0xff]
  %v1506 = vld [vmem:[%s1 + $0x28] sm:$0xff]
  %v1507 = vld [vmem:[%s1 + $0x30] sm:$0xff]
  %v1508 = vld [vmem:[%s1 + $0x38] sm:$0xff]
  %v1509 = vld [vmem:[%s1 + $0x40] sm:$0xff]
  %v1510 = vld [vmem:[%s1 + $0x48] sm:$0xff]
  %v1511 = vld [vmem:[%s1 + $0x50] sm:$0xff]
  %v1512 = vld [vmem:[%s1 + $0x58] sm:$0xff]
  %v1513 = vld [vmem:[%s1 + $0x60] sm:$0xff]
  %v1514 = vld [vmem:[%s1 + $0x68] sm:$0xff]
  %v1515 = vld [vmem:[%s1 + $0x70] sm:$0xff]
  %v1516 = vld [vmem:[%s1 + $0x78] sm:$0xff]
  %v1517 = vld [vmem:[%s1 + $0x80] sm:$0xff]
  %v1518 = vld [vmem:[%s1 + $0x88] sm:$0xff]
  %v1519 = vld [vmem:[%s1 + $0x90] sm:$0xff]
  %v1520 = vld [vmem:[%s1 + $0x98] sm:$0xff]
  %v1521 = vld [vmem:[%s1 + $0xa0] sm:$0xff]
  %v1522 = vld [vmem:[%s1 + $0xa8] sm:$0xff]
  %v1523 = vld [vmem:[%s1 + $0xb0] sm:$0xff]
  %v1524 = vld [vmem:[%s1 + $0xb8] sm:$0xff]
  %v1525 = vld [vmem:[%s1 + $0xc0] sm:$0xff]
  %v1526 = vld [vmem:[%s1 + $0xc8] sm:$0xff]
  %v1527 = vld [vmem:[%s1 + $0xd0] sm:$0xff]
  %v1528 = vld [vmem:[%s1 + $0xd8] sm:$0xff]
  %v1529 = vld [vmem:[%s1 + $0xe0] sm:$0xff]
  %v1530 = vld [vmem:[%s1 + $0xe8] sm:$0xff]
  %v1531 = vld [vmem:[%s1 + $0xf0] sm:$0xff]
  %v1532 = vld [vmem:[%s1 + $0xf8] sm:$0xff]
  %v1533 = vld [vmem:[%s1 + $0x100] sm:$0xff]
  %v1534 = vld [vmem:[%s1 + $0x108] sm:$0xff]
  %v1535 = vld [vmem:[%s1 + $0x110] sm:$0xff]
  %v1536 = vld [vmem:[%s1 + $0x118] sm:$0xff]
  %v1537 = vld [vmem:[%s1 + $0x120] sm:$0xff]
  %v1538 = vld [vmem:[%s1 + $0x128] sm:$0xff]
  %v1539 = vld [vmem:[%s1 + $0x130] sm:$0xff]
  %v1540 = vld [vmem:[%s1 + $0x138] sm:$0xff]
  %v1541 = vld [vmem:[%s1 + $0x140] sm:$0xff]
  %v1542 = vld [vmem:[%s1 + $0x148] sm:$0xff]
  %v1543 = vld [vmem:[%s1 + $0x150] sm:$0xff]
  %v1544 = vld [vmem:[%s1 + $0x158] sm:$0xff]
  %v1545 = vld [vmem:[%s1 + $0x160] sm:$0xff]
  %v1546 = vld [vmem:[%s1 + $0x168] sm:$0xff]
  %v1547 = vld [vmem:[%s1 + $0x170] sm:$0xff]
  %v1548 = vld [vmem:[%s1 + $0x178] sm:$0xff]
  %v1549 = vld [vmem:[%s1 + $0x180] sm:$0xff]
  %v1550 = vld [vmem:[%s1 + $0x188] sm:$0xff]
  %v1551 = vld [vmem:[%s1 + $0x190] sm:$0xff]
  %v1552 = vld [vmem:[%s1 + $0x198] sm:$0xff]
  %v1553 = vld [vmem:[%s1 + $0x1a0] sm:$0xff]
  %v1554 = vld [vmem:[%s1 + $0x1a8] sm:$0xff]
  %v1555 = vld [vmem:[%s1 + $0x1b0] sm:$0xff]
  %v1556 = vld [vmem:[%s1 + $0x1b8] sm:$0xff]
  %v1557 = vld [vmem:[%s1 + $0x1c0] sm:$0xff]
  %v1558 = vld [vmem:[%s1 + $0x1c8] sm:$0xff]
  %v1559 = vld [vmem:[%s1 + $0x1d0] sm:$0xff]
  %v1560 = vld [vmem:[%s1 + $0x1d8] sm:$0xff]
  %v1561 = vld [vmem:[%s1 + $0x1e0] sm:$0xff]
  %v1562 = vld [vmem:[%s1 + $0x1e8] sm:$0xff]
  %v1563 = vld [vmem:[%s1 + $0x1f0] sm:$0xff]
  %v1564 = vld [vmem:[%s1 + $0x1f8] sm:$0xff]
  %v1565 = vld [vmem:[%s1 + $0x200] sm:$0xff]
  %v1566 = vld [vmem:[%s1 + $0x208] sm:$0xff]
  %v1567 = vld [vmem:[%s1 + $0x210] sm:$0xff]
  %v1568 = vld [vmem:[%s1 + $0x218] sm:$0xff]
  %v1569 = vld [vmem:[%s1 + $0x220] sm:$0xff]
  %v1570 = vld [vmem:[%s1 + $0x228] sm:$0xff]
  %v1571 = vld [vmem:[%s1 + $0x230] sm:$0xff]
  %v1572 = vld [vmem:[%s1 + $0x238] sm:$0xff]
  %v1573 = vld [vmem:[%s1 + $0x240] sm:$0xff]
  %v1574 = vld [vmem:[%s1 + $0x248] sm:$0xff]
  %v1575 = vld [vmem:[%s1 + $0x250] sm:$0xff]
  %v1576 = vld [vmem:[%s1 + $0x258] sm:$0xff]
  %v1577 = vld [vmem:[%s1 + $0x260] sm:$0xff]
  %v1578 = vld [vmem:[%s1 + $0x268] sm:$0xff]
  %v1579 = vld [vmem:[%s1 + $0x270] sm:$0xff]
  %v1580 = vld [vmem:[%s1 + $0x278] sm:$0xff]
  %v1581 = vld [vmem:[%s1 + $0x280] sm:$0xff]
  %v1582 = vld [vmem:[%s1 + $0x288] sm:$0xff]
  %v1583 = vld [vmem:[%s1 + $0x290] sm:$0xff]
  %v1584 = vld [vmem:[%s1 + $0x298] sm:$0xff]
  %v1585 = vld [vmem:[%s1 + $0x2a0] sm:$0xff]
  %v1586 = vld [vmem:[%s1 + $0x2a8] sm:$0xff]
  %v1587 = vld [vmem:[%s1 + $0x2b0] sm:$0xff]
  %v1588 = vld [vmem:[%s1 + $0x2b8] sm:$0xff]
  %v1589 = vld [vmem:[%s1 + $0x2c0] sm:$0xff]
  %v1590 = vld [vmem:[%s1 + $0x2c8] sm:$0xff]
  %v1591 = vld [vmem:[%s1 + $0x2d0] sm:$0xff]
  %v1592 = vld [vmem:[%s1 + $0x2d8] sm:$0xff]
  %v1593 = vld [vmem:[%s1 + $0x2e0] sm:$0xff]
  %v1594 = vld [vmem:[%s1 + $0x2e8] sm:$0xff]
  %v1595 = vld [vmem:[%s1 + $0x2f0] sm:$0xff]
  %v1596 = vld [vmem:[%s1 + $0x2f8] sm:$0xff]
  %v1597 = vld [vmem:[%s1 + $0x300] sm:$0x3f]
  %v1598 = vld [vmem:[%s1 + $0x308] sm:$0x3f]
  %v1599 = vld [vmem:[%s1 + $0x310] sm:$0x3f]
  %v1600 = vld [vmem:[%s1 + $0x318] sm:$0x3f]
  %v1601 = vld [vmem:[%s1 + $0x320] sm:$0x3f]
  %v1602 = vld [vmem:[%s1 + $0x328] sm:$0x3f]
  %v1603 = vld [vmem:[%s1 + $0x330] sm:$0x3f]
  %v1604 = vld [vmem:[%s1 + $0x338] sm:$0x3f]
  %v1606 = vsel %vm1183, %v1499, 0
  %v1609 = vsel %vm1183, %v1500, 0
  %v1612 = vsel %vm1190, %v1597, 0
  %v1615 = vsel %vm1190, %v1598, 0
  %v1618 = vsel %vm1190, %v1599, 0
  %v1621 = vsel %vm1190, %v1600, 0
  %v1624 = vsel %vm1190, %v1601, 0
  %v1627 = vsel %vm1190, %v1602, 0
  %v1630 = vsel %vm1190, %v1603, 0
  %v1633 = vsel %vm1190, %v1604, 0
  %1635 = vmatpush.msra.mxu0 0.0
  %1636 = vmatpush.msra.mxu0 0.0
  %1637 = vmatpush.msra.mxu0 0.0
  %1638 = vmatpush.msra.mxu0 %v1612
  %1639 = vmatpush.msra.mxu0 %v1589
  %1640 = vmatpush.msra.mxu0 %v1581
  %1641 = vmatpush.msra.mxu0 %v1573
  %1642 = vmatpush.msra.mxu0 %v1565
  %1643 = vmatpush.msra.mxu0 %v1557
  %1644 = vmatpush.msra.mxu0 %v1549
  %1645 = vmatpush.msra.mxu0 %v1541
  %1646 = vmatpush.msra.mxu0 %v1533
  %1647 = vmatpush.msra.mxu0 %v1525
  %1648 = vmatpush.msra.mxu0 %v1517
  %1649 = vmatpush.msra.mxu0 %v1509
  %1650 = vmatpush.msra.mxu0 %v1501
  %1651 = vmatmul.f32.gmra.mxu0 %v1606
  %v1652 = vpop.f32.mrf.mxu0
  %v1653 = vadd.f32 0.0, %v1652
  %1654 = vmatmul.f32.gmra.mxu0 %v1609
  %v1655 = vpop.f32.mrf.mxu0
  %v1656 = vadd.f32 0.0, %v1655
  %1657 = vdwg.mxu0
  %1658 = vmatpush.msra.mxu0 0.0
  %1659 = vmatpush.msra.mxu0 0.0
  %1660 = vmatpush.msra.mxu0 0.0
  %1661 = vmatpush.msra.mxu0 %v1615
  %1662 = vmatpush.msra.mxu0 %v1590
  %1663 = vmatpush.msra.mxu0 %v1582
  %1664 = vmatpush.msra.mxu0 %v1574
  %1665 = vmatpush.msra.mxu0 %v1566
  %1666 = vmatpush.msra.mxu0 %v1558
  %1667 = vmatpush.msra.mxu0 %v1550
  %1668 = vmatpush.msra.mxu0 %v1542
  %1669 = vmatpush.msra.mxu0 %v1534
  %1670 = vmatpush.msra.mxu0 %v1526
  %1671 = vmatpush.msra.mxu0 %v1518
  %1672 = vmatpush.msra.mxu0 %v1510
  %1673 = vmatpush.msra.mxu0 %v1502
  %1674 = vmatmul.f32.gmra.mxu0 %v1606
  %v1675 = vpop.f32.mrf.mxu0
  %v1676 = vadd.f32 0.0, %v1675
  %1677 = vmatmul.f32.gmra.mxu0 %v1609
  %v1678 = vpop.f32.mrf.mxu0
  %v1679 = vadd.f32 0.0, %v1678
  %1680 = vdwg.mxu0
  %1681 = vmatpush.msra.mxu0 0.0
  %1682 = vmatpush.msra.mxu0 0.0
  %1683 = vmatpush.msra.mxu0 0.0
  %1684 = vmatpush.msra.mxu0 %v1618
  %1685 = vmatpush.msra.mxu0 %v1591
  %1686 = vmatpush.msra.mxu0 %v1583
  %1687 = vmatpush.msra.mxu0 %v1575
  %1688 = vmatpush.msra.mxu0 %v1567
  %1689 = vmatpush.msra.mxu0 %v1559
  %1690 = vmatpush.msra.mxu0 %v1551
  %1691 = vmatpush.msra.mxu0 %v1543
  %1692 = vmatpush.msra.mxu0 %v1535
  %1693 = vmatpush.msra.mxu0 %v1527
  %1694 = vmatpush.msra.mxu0 %v1519
  %1695 = vmatpush.msra.mxu0 %v1511
  %1696 = vmatpush.msra.mxu0 %v1503
  %1697 = vmatmul.f32.gmra.mxu0 %v1606
  %v1698 = vpop.f32.mrf.mxu0
  %v1699 = vadd.f32 0.0, %v1698
  %1700 = vmatmul.f32.gmra.mxu0 %v1609
  %v1701 = vpop.f32.mrf.mxu0
  %v1702 = vadd.f32 0.0, %v1701
  %1703 = vdwg.mxu0
  %1704 = vmatpush.msra.mxu0 0.0
  %1705 = vmatpush.msra.mxu0 0.0
  %1706 = vmatpush.msra.mxu0 0.0
  %1707 = vmatpush.msra.mxu0 %v1621
  %1708 = vmatpush.msra.mxu0 %v1592
  %1709 = vmatpush.msra.mxu0 %v1584
  %1710 = vmatpush.msra.mxu0 %v1576
  %1711 = vmatpush.msra.mxu0 %v1568
  %1712 = vmatpush.msra.mxu0 %v1560
  %1713 = vmatpush.msra.mxu0 %v1552
  %1714 = vmatpush.msra.mxu0 %v1544
  %1715 = vmatpush.msra.mxu0 %v1536
  %1716 = vmatpush.msra.mxu0 %v1528
  %1717 = vmatpush.msra.mxu0 %v1520
  %1718 = vmatpush.msra.mxu0 %v1512
  %1719 = vmatpush.msra.mxu0 %v1504
  %1720 = vmatmul.f32.gmra.mxu0 %v1606
  %v1721 = vpop.f32.mrf.mxu0
  %v1722 = vadd.f32 0.0, %v1721
  %1723 = vmatmul.f32.gmra.mxu0 %v1609
  %v1724 = vpop.f32.mrf.mxu0
  %v1725 = vadd.f32 0.0, %v1724
  %1726 = vdwg.mxu0
  %1727 = vmatpush.msra.mxu0 0.0
  %1728 = vmatpush.msra.mxu0 0.0
  %1729 = vmatpush.msra.mxu0 0.0
  %1730 = vmatpush.msra.mxu0 %v1624
  %1731 = vmatpush.msra.mxu0 %v1593
  %1732 = vmatpush.msra.mxu0 %v1585
  %1733 = vmatpush.msra.mxu0 %v1577
  %1734 = vmatpush.msra.mxu0 %v1569
  %1735 = vmatpush.msra.mxu0 %v1561
  %1736 = vmatpush.msra.mxu0 %v1553
  %1737 = vmatpush.msra.mxu0 %v1545
  %1738 = vmatpush.msra.mxu0 %v1537
  %1739 = vmatpush.msra.mxu0 %v1529
  %1740 = vmatpush.msra.mxu0 %v1521
  %1741 = vmatpush.msra.mxu0 %v1513
  %1742 = vmatpush.msra.mxu0 %v1505
  %1743 = vmatmul.f32.gmra.mxu0 %v1606
  %v1744 = vpop.f32.mrf.mxu0
  %v1745 = vadd.f32 0.0, %v1744
  %1746 = vmatmul.f32.gmra.mxu0 %v1609
  %v1747 = vpop.f32.mrf.mxu0
  %v1748 = vadd.f32 0.0, %v1747
  %1749 = vdwg.mxu0
  %1750 = vmatpush.msra.mxu0 0.0
  %1751 = vmatpush.msra.mxu0 0.0
  %1752 = vmatpush.msra.mxu0 0.0
  %1753 = vmatpush.msra.mxu0 %v1627
  %1754 = vmatpush.msra.mxu0 %v1594
  %1755 = vmatpush.msra.mxu0 %v1586
  %1756 = vmatpush.msra.mxu0 %v1578
  %1757 = vmatpush.msra.mxu0 %v1570
  %1758 = vmatpush.msra.mxu0 %v1562
  %1759 = vmatpush.msra.mxu0 %v1554
  %1760 = vmatpush.msra.mxu0 %v1546
  %1761 = vmatpush.msra.mxu0 %v1538
  %1762 = vmatpush.msra.mxu0 %v1530
  %1763 = vmatpush.msra.mxu0 %v1522
  %1764 = vmatpush.msra.mxu0 %v1514
  %1765 = vmatpush.msra.mxu0 %v1506
  %1766 = vmatmul.f32.gmra.mxu0 %v1606
  %v1767 = vpop.f32.mrf.mxu0
  %v1768 = vadd.f32 0.0, %v1767
  %1769 = vmatmul.f32.gmra.mxu0 %v1609
  %v1770 = vpop.f32.mrf.mxu0
  %v1771 = vadd.f32 0.0, %v1770
  %1772 = vdwg.mxu0
  %1773 = vmatpush.msra.mxu0 0.0
  %1774 = vmatpush.msra.mxu0 0.0
  %1775 = vmatpush.msra.mxu0 0.0
  %1776 = vmatpush.msra.mxu0 %v1630
  %1777 = vmatpush.msra.mxu0 %v1595
  %1778 = vmatpush.msra.mxu0 %v1587
  %1779 = vmatpush.msra.mxu0 %v1579
  %1780 = vmatpush.msra.mxu0 %v1571
  %1781 = vmatpush.msra.mxu0 %v1563
  %1782 = vmatpush.msra.mxu0 %v1555
  %1783 = vmatpush.msra.mxu0 %v1547
  %1784 = vmatpush.msra.mxu0 %v1539
  %1785 = vmatpush.msra.mxu0 %v1531
  %1786 = vmatpush.msra.mxu0 %v1523
  %1787 = vmatpush.msra.mxu0 %v1515
  %1788 = vmatpush.msra.mxu0 %v1507
  %1789 = vmatmul.f32.gmra.mxu0 %v1606
  %v1790 = vpop.f32.mrf.mxu0
  %v1791 = vadd.f32 0.0, %v1790
  %1792 = vmatmul.f32.gmra.mxu0 %v1609
  %v1793 = vpop.f32.mrf.mxu0
  %v1794 = vadd.f32 0.0, %v1793
  %1795 = vdwg.mxu0
  %1796 = vmatpush.msra.mxu0 0.0
  %1797 = vmatpush.msra.mxu0 0.0
  %1798 = vmatpush.msra.mxu0 0.0
  %1799 = vmatpush.msra.mxu0 %v1633
  %1800 = vmatpush.msra.mxu0 %v1596
  %1801 = vmatpush.msra.mxu0 %v1588
  %1802 = vmatpush.msra.mxu0 %v1580
  %1803 = vmatpush.msra.mxu0 %v1572
  %1804 = vmatpush.msra.mxu0 %v1564
  %1805 = vmatpush.msra.mxu0 %v1556
  %1806 = vmatpush.msra.mxu0 %v1548
  %1807 = vmatpush.msra.mxu0 %v1540
  %1808 = vmatpush.msra.mxu0 %v1532
  %1809 = vmatpush.msra.mxu0 %v1524
  %1810 = vmatpush.msra.mxu0 %v1516
  %1811 = vmatpush.msra.mxu0 %v1508
  %1812 = vmatmul.f32.gmra.mxu0 %v1606
  %v1813 = vpop.f32.mrf.mxu0
  %v1814 = vadd.f32 0.0, %v1813
  %1815 = vmatmul.f32.gmra.mxu0 %v1609
  %v1816 = vpop.f32.mrf.mxu0
  %v1817 = vadd.f32 0.0, %v1816
  %1818 = vdwg.mxu0
  %v1827 = vrot.slane %v1676, 4
  %v1828 = vrot.slane %v1722, 4
  %v1829 = vrot.slane %v1768, 4
  %v1830 = vrot.slane %v1814, 4
  %v1831 = vsel %vm1411, %v1653, %v1827
  %v1832 = vsel %vm1411, %v1699, %v1828
  %v1833 = vsel %vm1411, %v1745, %v1829
  %v1834 = vsel %vm1411, %v1791, %v1830
  %s1839 = scalar_lea.vmem [#allocation2], 128
  %1840 = vst [vmem:[%s1839] sm:$0xff] %v1831
  %1841 = vst [vmem:[%s1839 + $0x8] sm:$0xff] %v1832
  %1842 = vst [vmem:[%s1839 + $0x10] sm:$0xff] %v1833
  %1843 = vst [vmem:[%s1839 + $0x18] sm:$0xff] %v1834
  %1844 = vst.sshfl [vmem:[#allocation1] sm:$0xff pattern:$0x75316420] %v1653
  %1845 = vst.sshfl [vmem:[#allocation1 + $0x8] sm:$0xff pattern:$0x75316420] %v1676
  %1846 = vst.sshfl [vmem:[#allocation1 + $0x10] sm:$0xff pattern:$0x75316420] %v1699
  %1847 = vst.sshfl [vmem:[#allocation1 + $0x18] sm:$0xff pattern:$0x75316420] %v1722
  %1848 = vst.sshfl [vmem:[#allocation1 + $0x20] sm:$0xff pattern:$0x75316420] %v1745
  %1849 = vst.sshfl [vmem:[#allocation1 + $0x28] sm:$0xff pattern:$0x75316420] %v1768
  %1850 = vst.sshfl [vmem:[#allocation1 + $0x30] sm:$0xff pattern:$0x75316420] %v1791
  %1851 = vst.sshfl [vmem:[#allocation1 + $0x38] sm:$0xff pattern:$0x75316420] %v1814
  %s1852 = scalar_lea.vmem [#allocation1], 1
  %v1853 = vld [vmem:[%s1852] ss:$2 sm:$0xff]
  %s1854 = scalar_lea.vmem [#allocation1], 17
  %v1855 = vld [vmem:[%s1854] ss:$2 sm:$0xff]
  %s1856 = scalar_lea.vmem [#allocation1], 33
  %v1857 = vld [vmem:[%s1856] ss:$2 sm:$0xff]
  %s1858 = scalar_lea.vmem [#allocation1], 49
  %v1859 = vld [vmem:[%s1858] ss:$2 sm:$0xff]
  %s1864 = scalar_lea.vmem [#allocation2], 160
  %1865 = vst [vmem:[%s1864] sm:$0xff] %v1853
  %1866 = vst [vmem:[%s1864 + $0x8] sm:$0xff] %v1855
  %1867 = vst [vmem:[%s1864 + $0x10] sm:$0xff] %v1857
  %1868 = vst [vmem:[%s1864 + $0x18] sm:$0xff] %v1859
  %v1877 = vrot.slane %v1679, 4
  %v1878 = vrot.slane %v1725, 4
  %v1879 = vrot.slane %v1771, 4
  %v1880 = vrot.slane %v1817, 4
  %v1881 = vsel %vm1411, %v1656, %v1877
  %v1882 = vsel %vm1411, %v1702, %v1878
  %v1883 = vsel %vm1411, %v1748, %v1879
  %v1884 = vsel %vm1411, %v1794, %v1880
  %s1889 = scalar_lea.vmem [#allocation2], 192
  %1890 = vst [vmem:[%s1889] sm:$0xff] %v1881
  %1891 = vst [vmem:[%s1889 + $0x8] sm:$0xff] %v1882
  %1892 = vst [vmem:[%s1889 + $0x10] sm:$0xff] %v1883
  %1893 = vst [vmem:[%s1889 + $0x18] sm:$0xff] %v1884
  %1894 = vst.sshfl [vmem:[#allocation1] sm:$0xff pattern:$0x75316420] %v1656
  %1895 = vst.sshfl [vmem:[#allocation1 + $0x8] sm:$0xff pattern:$0x75316420] %v1679
  %1896 = vst.sshfl [vmem:[#allocation1 + $0x10] sm:$0xff pattern:$0x75316420] %v1702
  %1897 = vst.sshfl [vmem:[#allocation1 + $0x18] sm:$0xff pattern:$0x75316420] %v1725
  %1898 = vst.sshfl [vmem:[#allocation1 + $0x20] sm:$0xff pattern:$0x75316420] %v1748
  %1899 = vst.sshfl [vmem:[#allocation1 + $0x28] sm:$0xff pattern:$0x75316420] %v1771
  %1900 = vst.sshfl [vmem:[#allocation1 + $0x30] sm:$0xff pattern:$0x75316420] %v1794
  %1901 = vst.sshfl [vmem:[#allocation1 + $0x38] sm:$0xff pattern:$0x75316420] %v1817
  %s1902 = scalar_lea.vmem [#allocation1], 1
  %v1903 = vld [vmem:[%s1902] ss:$2 sm:$0xff]
  %s1904 = scalar_lea.vmem [#allocation1], 17
  %v1905 = vld [vmem:[%s1904] ss:$2 sm:$0xff]
  %s1906 = scalar_lea.vmem [#allocation1], 33
  %v1907 = vld [vmem:[%s1906] ss:$2 sm:$0xff]
  %s1908 = scalar_lea.vmem [#allocation1], 49
  %v1909 = vld [vmem:[%s1908] ss:$2 sm:$0xff]
  %s1914 = scalar_lea.vmem [#allocation2], 224
  %1915 = vst [vmem:[%s1914] sm:$0xff] %v1903
  %1916 = vst [vmem:[%s1914 + $0x8] sm:$0xff] %v1905
  %1917 = vst [vmem:[%s1914 + $0x10] sm:$0xff] %v1907
  %1918 = vst [vmem:[%s1914 + $0x18] sm:$0xff] %v1909
  %s1919 = smul.u32 8, 32
  %s1920 = smul.u32 %s1919, 16
  %s1921 = sshll.u32 %s1920, 4
  %1922 = dma.done [#allocation4], %s1921
  %v1923 = vld [vmem:[#allocation3] sm:$0xff]
  %v1924 = vld [vmem:[#allocation3 + $0x8] sm:$0xff]
  %v1925 = vld [vmem:[#allocation3 + $0x10] sm:$0xff]
  %v1926 = vld [vmem:[#allocation3 + $0x18] sm:$0xff]
  %v1927 = vld [vmem:[#allocation3 + $0x20] sm:$0xff]
  %v1928 = vld [vmem:[#allocation3 + $0x28] sm:$0xff]
  %v1929 = vld [vmem:[#allocation3 + $0x30] sm:$0xff]
  %v1930 = vld [vmem:[#allocation3 + $0x38] sm:$0xff]
  %v1931 = vld [vmem:[#allocation3 + $0x40] sm:$0xff]
  %v1932 = vld [vmem:[#allocation3 + $0x48] sm:$0xff]
  %v1933 = vld [vmem:[#allocation3 + $0x50] sm:$0xff]
  %v1934 = vld [vmem:[#allocation3 + $0x58] sm:$0xff]
  %v1935 = vld [vmem:[#allocation3 + $0x60] sm:$0xff]
  %v1936 = vld [vmem:[#allocation3 + $0x68] sm:$0xff]
  %v1937 = vld [vmem:[#allocation3 + $0x70] sm:$0xff]
  %v1938 = vld [vmem:[#allocation3 + $0x78] sm:$0xff]
  %v1939 = vld [vmem:[#allocation3 + $0x80] sm:$0xff]
  %v1940 = vld [vmem:[#allocation3 + $0x88] sm:$0xff]
  %v1941 = vld [vmem:[#allocation3 + $0x90] sm:$0xff]
  %v1942 = vld [vmem:[#allocation3 + $0x98] sm:$0xff]
  %v1943 = vld [vmem:[#allocation3 + $0xa0] sm:$0xff]
  %v1944 = vld [vmem:[#allocation3 + $0xa8] sm:$0xff]
  %v1945 = vld [vmem:[#allocation3 + $0xb0] sm:$0xff]
  %v1946 = vld [vmem:[#allocation3 + $0xb8] sm:$0xff]
  %v1947 = vld [vmem:[#allocation3 + $0xc0] sm:$0xff]
  %v1948 = vld [vmem:[#allocation3 + $0xc8] sm:$0xff]
  %v1949 = vld [vmem:[#allocation3 + $0xd0] sm:$0xff]
  %v1950 = vld [vmem:[#allocation3 + $0xd8] sm:$0xff]
  %v1951 = vld [vmem:[#allocation3 + $0xe0] sm:$0xff]
  %v1952 = vld [vmem:[#allocation3 + $0xe8] sm:$0xff]
  %v1953 = vld [vmem:[#allocation3 + $0xf0] sm:$0xff]
  %v1954 = vld [vmem:[#allocation3 + $0xf8] sm:$0xff]
  %v1955 = vld [vmem:[#allocation3 + $0x100] sm:$0xff]
  %v1956 = vld [vmem:[#allocation3 + $0x108] sm:$0xff]
  %v1957 = vld [vmem:[#allocation3 + $0x110] sm:$0xff]
  %v1958 = vld [vmem:[#allocation3 + $0x118] sm:$0xff]
  %v1959 = vld [vmem:[#allocation3 + $0x120] sm:$0xff]
  %v1960 = vld [vmem:[#allocation3 + $0x128] sm:$0xff]
  %v1961 = vld [vmem:[#allocation3 + $0x130] sm:$0xff]
  %v1962 = vld [vmem:[#allocation3 + $0x138] sm:$0xff]
  %v1963 = vld [vmem:[#allocation3 + $0x140] sm:$0xff]
  %v1964 = vld [vmem:[#allocation3 + $0x148] sm:$0xff]
  %v1965 = vld [vmem:[#allocation3 + $0x150] sm:$0xff]
  %v1966 = vld [vmem:[#allocation3 + $0x158] sm:$0xff]
  %v1967 = vld [vmem:[#allocation3 + $0x160] sm:$0xff]
  %v1968 = vld [vmem:[#allocation3 + $0x168] sm:$0xff]
  %v1969 = vld [vmem:[#allocation3 + $0x170] sm:$0xff]
  %v1970 = vld [vmem:[#allocation3 + $0x178] sm:$0xff]
  %v1971 = vld [vmem:[#allocation3 + $0x180] sm:$0xff]
  %v1972 = vld [vmem:[#allocation3 + $0x188] sm:$0xff]
  %v1973 = vld [vmem:[#allocation3 + $0x190] sm:$0xff]
  %v1974 = vld [vmem:[#allocation3 + $0x198] sm:$0xff]
  %v1975 = vld [vmem:[#allocation3 + $0x1a0] sm:$0xff]
  %v1976 = vld [vmem:[#allocation3 + $0x1a8] sm:$0xff]
  %v1977 = vld [vmem:[#allocation3 + $0x1b0] sm:$0xff]
  %v1978 = vld [vmem:[#allocation3 + $0x1b8] sm:$0xff]
  %v1979 = vld [vmem:[#allocation3 + $0x1c0] sm:$0xff]
  %v1980 = vld [vmem:[#allocation3 + $0x1c8] sm:$0xff]
  %v1981 = vld [vmem:[#allocation3 + $0x1d0] sm:$0xff]
  %v1982 = vld [vmem:[#allocation3 + $0x1d8] sm:$0xff]
  %v1983 = vld [vmem:[#allocation3 + $0x1e0] sm:$0xff]
  %v1984 = vld [vmem:[#allocation3 + $0x1e8] sm:$0xff]
  %v1985 = vld [vmem:[#allocation3 + $0x1f0] sm:$0xff]
  %v1986 = vld [vmem:[#allocation3 + $0x1f8] sm:$0xff]
  %v1987 = vld [vmem:[#allocation3 + $0x200] sm:$0xff]
  %v1988 = vld [vmem:[#allocation3 + $0x208] sm:$0xff]
  %v1989 = vld [vmem:[#allocation3 + $0x210] sm:$0xff]
  %v1990 = vld [vmem:[#allocation3 + $0x218] sm:$0xff]
  %v1991 = vld [vmem:[#allocation3 + $0x220] sm:$0xff]
  %v1992 = vld [vmem:[#allocation3 + $0x228] sm:$0xff]
  %v1993 = vld [vmem:[#allocation3 + $0x230] sm:$0xff]
  %v1994 = vld [vmem:[#allocation3 + $0x238] sm:$0xff]
  %v1995 = vld [vmem:[#allocation3 + $0x240] sm:$0xff]
  %v1996 = vld [vmem:[#allocation3 + $0x248] sm:$0xff]
  %v1997 = vld [vmem:[#allocation3 + $0x250] sm:$0xff]
  %v1998 = vld [vmem:[#allocation3 + $0x258] sm:$0xff]
  %v1999 = vld [vmem:[#allocation3 + $0x260] sm:$0xff]
  %v2000 = vld [vmem:[#allocation3 + $0x268] sm:$0xff]
  %v2001 = vld [vmem:[#allocation3 + $0x270] sm:$0xff]
  %v2002 = vld [vmem:[#allocation3 + $0x278] sm:$0xff]
  %v2003 = vld [vmem:[#allocation3 + $0x280] sm:$0xff]
  %v2004 = vld [vmem:[#allocation3 + $0x288] sm:$0xff]
  %v2005 = vld [vmem:[#allocation3 + $0x290] sm:$0xff]
  %v2006 = vld [vmem:[#allocation3 + $0x298] sm:$0xff]
  %v2007 = vld [vmem:[#allocation3 + $0x2a0] sm:$0xff]
  %v2008 = vld [vmem:[#allocation3 + $0x2a8] sm:$0xff]
  %v2009 = vld [vmem:[#allocation3 + $0x2b0] sm:$0xff]
  %v2010 = vld [vmem:[#allocation3 + $0x2b8] sm:$0xff]
  %v2011 = vld [vmem:[#allocation3 + $0x2c0] sm:$0xff]
  %v2012 = vld [vmem:[#allocation3 + $0x2c8] sm:$0xff]
  %v2013 = vld [vmem:[#allocation3 + $0x2d0] sm:$0xff]
  %v2014 = vld [vmem:[#allocation3 + $0x2d8] sm:$0xff]
  %v2015 = vld [vmem:[#allocation3 + $0x2e0] sm:$0xff]
  %v2016 = vld [vmem:[#allocation3 + $0x2e8] sm:$0xff]
  %v2017 = vld [vmem:[#allocation3 + $0x2f0] sm:$0xff]
  %v2018 = vld [vmem:[#allocation3 + $0x2f8] sm:$0xff]
  %v2019 = vld [vmem:[#allocation3 + $0x300] sm:$0xff]
  %v2020 = vld [vmem:[#allocation3 + $0x308] sm:$0xff]
  %v2021 = vld [vmem:[#allocation3 + $0x310] sm:$0xff]
  %v2022 = vld [vmem:[#allocation3 + $0x318] sm:$0xff]
  %v2023 = vld [vmem:[#allocation3 + $0x320] sm:$0xff]
  %v2024 = vld [vmem:[#allocation3 + $0x328] sm:$0xff]
  %v2025 = vld [vmem:[#allocation3 + $0x330] sm:$0xff]
  %v2026 = vld [vmem:[#allocation3 + $0x338] sm:$0xff]
  %v2027 = vld [vmem:[#allocation3 + $0x340] sm:$0xff]
  %v2028 = vld [vmem:[#allocation3 + $0x348] sm:$0xff]
  %v2029 = vld [vmem:[#allocation3 + $0x350] sm:$0xff]
  %v2030 = vld [vmem:[#allocation3 + $0x358] sm:$0xff]
  %v2031 = vld [vmem:[#allocation3 + $0x360] sm:$0xff]
  %v2032 = vld [vmem:[#allocation3 + $0x368] sm:$0xff]
  %v2033 = vld [vmem:[#allocation3 + $0x370] sm:$0xff]
  %v2034 = vld [vmem:[#allocation3 + $0x378] sm:$0xff]
  %v2035 = vld [vmem:[#allocation3 + $0x380] sm:$0xff]
  %v2036 = vld [vmem:[#allocation3 + $0x388] sm:$0xff]
  %v2037 = vld [vmem:[#allocation3 + $0x390] sm:$0xff]
  %v2038 = vld [vmem:[#allocation3 + $0x398] sm:$0xff]
  %v2039 = vld [vmem:[#allocation3 + $0x3a0] sm:$0xff]
  %v2040 = vld [vmem:[#allocation3 + $0x3a8] sm:$0xff]
  %v2041 = vld [vmem:[#allocation3 + $0x3b0] sm:$0xff]
  %v2042 = vld [vmem:[#allocation3 + $0x3b8] sm:$0xff]
  %v2043 = vld [vmem:[#allocation3 + $0x3c0] sm:$0xff]
  %v2044 = vld [vmem:[#allocation3 + $0x3c8] sm:$0xff]
  %v2045 = vld [vmem:[#allocation3 + $0x3d0] sm:$0xff]
  %v2046 = vld [vmem:[#allocation3 + $0x3d8] sm:$0xff]
  %v2047 = vld [vmem:[#allocation3 + $0x3e0] sm:$0xff]
  %v2048 = vld [vmem:[#allocation3 + $0x3e8] sm:$0xff]
  %v2049 = vld [vmem:[#allocation3 + $0x3f0] sm:$0xff]
  %v2050 = vld [vmem:[#allocation3 + $0x3f8] sm:$0xff]
  %v2051 = vld [vmem:[#allocation3 + $0x400] sm:$0xff]
  %v2052 = vld [vmem:[#allocation3 + $0x408] sm:$0xff]
  %v2053 = vld [vmem:[#allocation3 + $0x410] sm:$0xff]
  %v2054 = vld [vmem:[#allocation3 + $0x418] sm:$0xff]
  %v2055 = vld [vmem:[#allocation3 + $0x420] sm:$0xff]
  %v2056 = vld [vmem:[#allocation3 + $0x428] sm:$0xff]
  %v2057 = vld [vmem:[#allocation3 + $0x430] sm:$0xff]
  %v2058 = vld [vmem:[#allocation3 + $0x438] sm:$0xff]
  %v2059 = vld [vmem:[#allocation3 + $0x440] sm:$0xff]
  %v2060 = vld [vmem:[#allocation3 + $0x448] sm:$0xff]
  %v2061 = vld [vmem:[#allocation3 + $0x450] sm:$0xff]
  %v2062 = vld [vmem:[#allocation3 + $0x458] sm:$0xff]
  %v2063 = vld [vmem:[#allocation3 + $0x460] sm:$0xff]
  %v2064 = vld [vmem:[#allocation3 + $0x468] sm:$0xff]
  %v2065 = vld [vmem:[#allocation3 + $0x470] sm:$0xff]
  %v2066 = vld [vmem:[#allocation3 + $0x478] sm:$0xff]
  %v2067 = vld [vmem:[#allocation3 + $0x480] sm:$0xff]
  %v2068 = vld [vmem:[#allocation3 + $0x488] sm:$0xff]
  %v2069 = vld [vmem:[#allocation3 + $0x490] sm:$0xff]
  %v2070 = vld [vmem:[#allocation3 + $0x498] sm:$0xff]
  %v2071 = vld [vmem:[#allocation3 + $0x4a0] sm:$0xff]
  %v2072 = vld [vmem:[#allocation3 + $0x4a8] sm:$0xff]
  %v2073 = vld [vmem:[#allocation3 + $0x4b0] sm:$0xff]
  %v2074 = vld [vmem:[#allocation3 + $0x4b8] sm:$0xff]
  %v2075 = vld [vmem:[#allocation3 + $0x4c0] sm:$0xff]
  %v2076 = vld [vmem:[#allocation3 + $0x4c8] sm:$0xff]
  %v2077 = vld [vmem:[#allocation3 + $0x4d0] sm:$0xff]
  %v2078 = vld [vmem:[#allocation3 + $0x4d8] sm:$0xff]
  %v2079 = vld [vmem:[#allocation3 + $0x4e0] sm:$0xff]
  %v2080 = vld [vmem:[#allocation3 + $0x4e8] sm:$0xff]
  %v2081 = vld [vmem:[#allocation3 + $0x4f0] sm:$0xff]
  %v2082 = vld [vmem:[#allocation3 + $0x4f8] sm:$0xff]
  %v2083 = vld [vmem:[#allocation3 + $0x500] sm:$0xff]
  %v2084 = vld [vmem:[#allocation3 + $0x508] sm:$0xff]
  %v2085 = vld [vmem:[#allocation3 + $0x510] sm:$0xff]
  %v2086 = vld [vmem:[#allocation3 + $0x518] sm:$0xff]
  %v2087 = vld [vmem:[#allocation3 + $0x520] sm:$0xff]
  %v2088 = vld [vmem:[#allocation3 + $0x528] sm:$0xff]
  %v2089 = vld [vmem:[#allocation3 + $0x530] sm:$0xff]
  %v2090 = vld [vmem:[#allocation3 + $0x538] sm:$0xff]
  %v2091 = vld [vmem:[#allocation3 + $0x540] sm:$0xff]
  %v2092 = vld [vmem:[#allocation3 + $0x548] sm:$0xff]
  %v2093 = vld [vmem:[#allocation3 + $0x550] sm:$0xff]
  %v2094 = vld [vmem:[#allocation3 + $0x558] sm:$0xff]
  %v2095 = vld [vmem:[#allocation3 + $0x560] sm:$0xff]
  %v2096 = vld [vmem:[#allocation3 + $0x568] sm:$0xff]
  %v2097 = vld [vmem:[#allocation3 + $0x570] sm:$0xff]
  %v2098 = vld [vmem:[#allocation3 + $0x578] sm:$0xff]
  %v2099 = vld [vmem:[#allocation3 + $0x580] sm:$0xff]
  %v2100 = vld [vmem:[#allocation3 + $0x588] sm:$0xff]
  %v2101 = vld [vmem:[#allocation3 + $0x590] sm:$0xff]
  %v2102 = vld [vmem:[#allocation3 + $0x598] sm:$0xff]
  %v2103 = vld [vmem:[#allocation3 + $0x5a0] sm:$0xff]
  %v2104 = vld [vmem:[#allocation3 + $0x5a8] sm:$0xff]
  %v2105 = vld [vmem:[#allocation3 + $0x5b0] sm:$0xff]
  %v2106 = vld [vmem:[#allocation3 + $0x5b8] sm:$0xff]
  %v2107 = vld [vmem:[#allocation3 + $0x5c0] sm:$0xff]
  %v2108 = vld [vmem:[#allocation3 + $0x5c8] sm:$0xff]
  %v2109 = vld [vmem:[#allocation3 + $0x5d0] sm:$0xff]
  %v2110 = vld [vmem:[#allocation3 + $0x5d8] sm:$0xff]
  %v2111 = vld [vmem:[#allocation3 + $0x5e0] sm:$0xff]
  %v2112 = vld [vmem:[#allocation3 + $0x5e8] sm:$0xff]
  %v2113 = vld [vmem:[#allocation3 + $0x5f0] sm:$0xff]
  %v2114 = vld [vmem:[#allocation3 + $0x5f8] sm:$0xff]
  %v2115 = vld [vmem:[#allocation3 + $0x600] sm:$0xff]
  %v2116 = vld [vmem:[#allocation3 + $0x608] sm:$0xff]
  %v2117 = vld [vmem:[#allocation3 + $0x610] sm:$0xff]
  %v2118 = vld [vmem:[#allocation3 + $0x618] sm:$0xff]
  %v2119 = vld [vmem:[#allocation3 + $0x620] sm:$0xff]
  %v2120 = vld [vmem:[#allocation3 + $0x628] sm:$0xff]
  %v2121 = vld [vmem:[#allocation3 + $0x630] sm:$0xff]
  %v2122 = vld [vmem:[#allocation3 + $0x638] sm:$0xff]
  %v2123 = vld [vmem:[#allocation3 + $0x640] sm:$0xff]
  %v2124 = vld [vmem:[#allocation3 + $0x648] sm:$0xff]
  %v2125 = vld [vmem:[#allocation3 + $0x650] sm:$0xff]
  %v2126 = vld [vmem:[#allocation3 + $0x658] sm:$0xff]
  %v2127 = vld [vmem:[#allocation3 + $0x660] sm:$0xff]
  %v2128 = vld [vmem:[#allocation3 + $0x668] sm:$0xff]
  %v2129 = vld [vmem:[#allocation3 + $0x670] sm:$0xff]
  %v2130 = vld [vmem:[#allocation3 + $0x678] sm:$0xff]
  %v2131 = vld [vmem:[#allocation3 + $0x680] sm:$0xff]
  %v2132 = vld [vmem:[#allocation3 + $0x688] sm:$0xff]
  %v2133 = vld [vmem:[#allocation3 + $0x690] sm:$0xff]
  %v2134 = vld [vmem:[#allocation3 + $0x698] sm:$0xff]
  %v2135 = vld [vmem:[#allocation3 + $0x6a0] sm:$0xff]
  %v2136 = vld [vmem:[#allocation3 + $0x6a8] sm:$0xff]
  %v2137 = vld [vmem:[#allocation3 + $0x6b0] sm:$0xff]
  %v2138 = vld [vmem:[#allocation3 + $0x6b8] sm:$0xff]
  %v2139 = vld [vmem:[#allocation3 + $0x6c0] sm:$0xff]
  %v2140 = vld [vmem:[#allocation3 + $0x6c8] sm:$0xff]
  %v2141 = vld [vmem:[#allocation3 + $0x6d0] sm:$0xff]
  %v2142 = vld [vmem:[#allocation3 + $0x6d8] sm:$0xff]
  %v2143 = vld [vmem:[#allocation3 + $0x6e0] sm:$0xff]
  %v2144 = vld [vmem:[#allocation3 + $0x6e8] sm:$0xff]
  %v2145 = vld [vmem:[#allocation3 + $0x6f0] sm:$0xff]
  %v2146 = vld [vmem:[#allocation3 + $0x6f8] sm:$0xff]
  %v2147 = vld [vmem:[#allocation3 + $0x700] sm:$0xff]
  %v2148 = vld [vmem:[#allocation3 + $0x708] sm:$0xff]
  %v2149 = vld [vmem:[#allocation3 + $0x710] sm:$0xff]
  %v2150 = vld [vmem:[#allocation3 + $0x718] sm:$0xff]
  %v2151 = vld [vmem:[#allocation3 + $0x720] sm:$0xff]
  %v2152 = vld [vmem:[#allocation3 + $0x728] sm:$0xff]
  %v2153 = vld [vmem:[#allocation3 + $0x730] sm:$0xff]
  %v2154 = vld [vmem:[#allocation3 + $0x738] sm:$0xff]
  %v2155 = vld [vmem:[#allocation3 + $0x740] sm:$0xff]
  %v2156 = vld [vmem:[#allocation3 + $0x748] sm:$0xff]
  %v2157 = vld [vmem:[#allocation3 + $0x750] sm:$0xff]
  %v2158 = vld [vmem:[#allocation3 + $0x758] sm:$0xff]
  %v2159 = vld [vmem:[#allocation3 + $0x760] sm:$0xff]
  %v2160 = vld [vmem:[#allocation3 + $0x768] sm:$0xff]
  %v2161 = vld [vmem:[#allocation3 + $0x770] sm:$0xff]
  %v2162 = vld [vmem:[#allocation3 + $0x778] sm:$0xff]
  %v2163 = vld [vmem:[#allocation3 + $0x780] sm:$0xff]
  %v2164 = vld [vmem:[#allocation3 + $0x788] sm:$0xff]
  %v2165 = vld [vmem:[#allocation3 + $0x790] sm:$0xff]
  %v2166 = vld [vmem:[#allocation3 + $0x798] sm:$0xff]
  %v2167 = vld [vmem:[#allocation3 + $0x7a0] sm:$0xff]
  %v2168 = vld [vmem:[#allocation3 + $0x7a8] sm:$0xff]
  %v2169 = vld [vmem:[#allocation3 + $0x7b0] sm:$0xff]
  %v2170 = vld [vmem:[#allocation3 + $0x7b8] sm:$0xff]
  %v2171 = vld [vmem:[#allocation3 + $0x7c0] sm:$0xff]
  %v2172 = vld [vmem:[#allocation3 + $0x7c8] sm:$0xff]
  %v2173 = vld [vmem:[#allocation3 + $0x7d0] sm:$0xff]
  %v2174 = vld [vmem:[#allocation3 + $0x7d8] sm:$0xff]
  %v2175 = vld [vmem:[#allocation3 + $0x7e0] sm:$0xff]
  %v2176 = vld [vmem:[#allocation3 + $0x7e8] sm:$0xff]
  %v2177 = vld [vmem:[#allocation3 + $0x7f0] sm:$0xff]
  %v2178 = vld [vmem:[#allocation3 + $0x7f8] sm:$0xff]
  %v2179 = vld [vmem:[#allocation3 + $0x800] sm:$0xff]
  %v2180 = vld [vmem:[#allocation3 + $0x808] sm:$0xff]
  %v2181 = vld [vmem:[#allocation3 + $0x810] sm:$0xff]
  %v2182 = vld [vmem:[#allocation3 + $0x818] sm:$0xff]
  %v2183 = vld [vmem:[#allocation3 + $0x820] sm:$0xff]
  %v2184 = vld [vmem:[#allocation3 + $0x828] sm:$0xff]
  %v2185 = vld [vmem:[#allocation3 + $0x830] sm:$0xff]
  %v2186 = vld [vmem:[#allocation3 + $0x838] sm:$0xff]
  %v2187 = vld [vmem:[#allocation3 + $0x840] sm:$0xff]
  %v2188 = vld [vmem:[#allocation3 + $0x848] sm:$0xff]
  %v2189 = vld [vmem:[#allocation3 + $0x850] sm:$0xff]
  %v2190 = vld [vmem:[#allocation3 + $0x858] sm:$0xff]
  %v2191 = vld [vmem:[#allocation3 + $0x860] sm:$0xff]
  %v2192 = vld [vmem:[#allocation3 + $0x868] sm:$0xff]
  %v2193 = vld [vmem:[#allocation3 + $0x870] sm:$0xff]
  %v2194 = vld [vmem:[#allocation3 + $0x878] sm:$0xff]
  %v2195 = vld [vmem:[#allocation3 + $0x880] sm:$0xff]
  %v2196 = vld [vmem:[#allocation3 + $0x888] sm:$0xff]
  %v2197 = vld [vmem:[#allocation3 + $0x890] sm:$0xff]
  %v2198 = vld [vmem:[#allocation3 + $0x898] sm:$0xff]
  %v2199 = vld [vmem:[#allocation3 + $0x8a0] sm:$0xff]
  %v2200 = vld [vmem:[#allocation3 + $0x8a8] sm:$0xff]
  %v2201 = vld [vmem:[#allocation3 + $0x8b0] sm:$0xff]
  %v2202 = vld [vmem:[#allocation3 + $0x8b8] sm:$0xff]
  %v2203 = vld [vmem:[#allocation3 + $0x8c0] sm:$0xff]
  %v2204 = vld [vmem:[#allocation3 + $0x8c8] sm:$0xff]
  %v2205 = vld [vmem:[#allocation3 + $0x8d0] sm:$0xff]
  %v2206 = vld [vmem:[#allocation3 + $0x8d8] sm:$0xff]
  %v2207 = vld [vmem:[#allocation3 + $0x8e0] sm:$0xff]
  %v2208 = vld [vmem:[#allocation3 + $0x8e8] sm:$0xff]
  %v2209 = vld [vmem:[#allocation3 + $0x8f0] sm:$0xff]
  %v2210 = vld [vmem:[#allocation3 + $0x8f8] sm:$0xff]
  %v2211 = vld [vmem:[#allocation3 + $0x900] sm:$0xff]
  %v2212 = vld [vmem:[#allocation3 + $0x908] sm:$0xff]
  %v2213 = vld [vmem:[#allocation3 + $0x910] sm:$0xff]
  %v2214 = vld [vmem:[#allocation3 + $0x918] sm:$0xff]
  %v2215 = vld [vmem:[#allocation3 + $0x920] sm:$0xff]
  %v2216 = vld [vmem:[#allocation3 + $0x928] sm:$0xff]
  %v2217 = vld [vmem:[#allocation3 + $0x930] sm:$0xff]
  %v2218 = vld [vmem:[#allocation3 + $0x938] sm:$0xff]
  %v2219 = vld [vmem:[#allocation3 + $0x940] sm:$0xff]
  %v2220 = vld [vmem:[#allocation3 + $0x948] sm:$0xff]
  %v2221 = vld [vmem:[#allocation3 + $0x950] sm:$0xff]
  %v2222 = vld [vmem:[#allocation3 + $0x958] sm:$0xff]
  %v2223 = vld [vmem:[#allocation3 + $0x960] sm:$0xff]
  %v2224 = vld [vmem:[#allocation3 + $0x968] sm:$0xff]
  %v2225 = vld [vmem:[#allocation3 + $0x970] sm:$0xff]
  %v2226 = vld [vmem:[#allocation3 + $0x978] sm:$0xff]
  %v2227 = vld [vmem:[#allocation3 + $0x980] sm:$0xff]
  %v2228 = vld [vmem:[#allocation3 + $0x988] sm:$0xff]
  %v2229 = vld [vmem:[#allocation3 + $0x990] sm:$0xff]
  %v2230 = vld [vmem:[#allocation3 + $0x998] sm:$0xff]
  %v2231 = vld [vmem:[#allocation3 + $0x9a0] sm:$0xff]
  %v2232 = vld [vmem:[#allocation3 + $0x9a8] sm:$0xff]
  %v2233 = vld [vmem:[#allocation3 + $0x9b0] sm:$0xff]
  %v2234 = vld [vmem:[#allocation3 + $0x9b8] sm:$0xff]
  %v2235 = vld [vmem:[#allocation3 + $0x9c0] sm:$0xff]
  %v2236 = vld [vmem:[#allocation3 + $0x9c8] sm:$0xff]
  %v2237 = vld [vmem:[#allocation3 + $0x9d0] sm:$0xff]
  %v2238 = vld [vmem:[#allocation3 + $0x9d8] sm:$0xff]
  %v2239 = vld [vmem:[#allocation3 + $0x9e0] sm:$0xff]
  %v2240 = vld [vmem:[#allocation3 + $0x9e8] sm:$0xff]
  %v2241 = vld [vmem:[#allocation3 + $0x9f0] sm:$0xff]
  %v2242 = vld [vmem:[#allocation3 + $0x9f8] sm:$0xff]
  %v2243 = vld [vmem:[#allocation3 + $0xa00] sm:$0xff]
  %v2244 = vld [vmem:[#allocation3 + $0xa08] sm:$0xff]
  %v2245 = vld [vmem:[#allocation3 + $0xa10] sm:$0xff]
  %v2246 = vld [vmem:[#allocation3 + $0xa18] sm:$0xff]
  %v2247 = vld [vmem:[#allocation3 + $0xa20] sm:$0xff]
  %v2248 = vld [vmem:[#allocation3 + $0xa28] sm:$0xff]
  %v2249 = vld [vmem:[#allocation3 + $0xa30] sm:$0xff]
  %v2250 = vld [vmem:[#allocation3 + $0xa38] sm:$0xff]
  %v2251 = vld [vmem:[#allocation3 + $0xa40] sm:$0xff]
  %v2252 = vld [vmem:[#allocation3 + $0xa48] sm:$0xff]
  %v2253 = vld [vmem:[#allocation3 + $0xa50] sm:$0xff]
  %v2254 = vld [vmem:[#allocation3 + $0xa58] sm:$0xff]
  %v2255 = vld [vmem:[#allocation3 + $0xa60] sm:$0xff]
  %v2256 = vld [vmem:[#allocation3 + $0xa68] sm:$0xff]
  %v2257 = vld [vmem:[#allocation3 + $0xa70] sm:$0xff]
  %v2258 = vld [vmem:[#allocation3 + $0xa78] sm:$0xff]
  %v2259 = vld [vmem:[#allocation3 + $0xa80] sm:$0xff]
  %v2260 = vld [vmem:[#allocation3 + $0xa88] sm:$0xff]
  %v2261 = vld [vmem:[#allocation3 + $0xa90] sm:$0xff]
  %v2262 = vld [vmem:[#allocation3 + $0xa98] sm:$0xff]
  %v2263 = vld [vmem:[#allocation3 + $0xaa0] sm:$0xff]
  %v2264 = vld [vmem:[#allocation3 + $0xaa8] sm:$0xff]
  %v2265 = vld [vmem:[#allocation3 + $0xab0] sm:$0xff]
  %v2266 = vld [vmem:[#allocation3 + $0xab8] sm:$0xff]
  %v2267 = vld [vmem:[#allocation3 + $0xac0] sm:$0xff]
  %v2268 = vld [vmem:[#allocation3 + $0xac8] sm:$0xff]
  %v2269 = vld [vmem:[#allocation3 + $0xad0] sm:$0xff]
  %v2270 = vld [vmem:[#allocation3 + $0xad8] sm:$0xff]
  %v2271 = vld [vmem:[#allocation3 + $0xae0] sm:$0xff]
  %v2272 = vld [vmem:[#allocation3 + $0xae8] sm:$0xff]
  %v2273 = vld [vmem:[#allocation3 + $0xaf0] sm:$0xff]
  %v2274 = vld [vmem:[#allocation3 + $0xaf8] sm:$0xff]
  %v2275 = vld [vmem:[#allocation3 + $0xb00] sm:$0xff]
  %v2276 = vld [vmem:[#allocation3 + $0xb08] sm:$0xff]
  %v2277 = vld [vmem:[#allocation3 + $0xb10] sm:$0xff]
  %v2278 = vld [vmem:[#allocation3 + $0xb18] sm:$0xff]
  %v2279 = vld [vmem:[#allocation3 + $0xb20] sm:$0xff]
  %v2280 = vld [vmem:[#allocation3 + $0xb28] sm:$0xff]
  %v2281 = vld [vmem:[#allocation3 + $0xb30] sm:$0xff]
  %v2282 = vld [vmem:[#allocation3 + $0xb38] sm:$0xff]
  %v2283 = vld [vmem:[#allocation3 + $0xb40] sm:$0xff]
  %v2284 = vld [vmem:[#allocation3 + $0xb48] sm:$0xff]
  %v2285 = vld [vmem:[#allocation3 + $0xb50] sm:$0xff]
  %v2286 = vld [vmem:[#allocation3 + $0xb58] sm:$0xff]
  %v2287 = vld [vmem:[#allocation3 + $0xb60] sm:$0xff]
  %v2288 = vld [vmem:[#allocation3 + $0xb68] sm:$0xff]
  %v2289 = vld [vmem:[#allocation3 + $0xb70] sm:$0xff]
  %v2290 = vld [vmem:[#allocation3 + $0xb78] sm:$0xff]
  %v2291 = vld [vmem:[#allocation3 + $0xb80] sm:$0xff]
  %v2292 = vld [vmem:[#allocation3 + $0xb88] sm:$0xff]
  %v2293 = vld [vmem:[#allocation3 + $0xb90] sm:$0xff]
  %v2294 = vld [vmem:[#allocation3 + $0xb98] sm:$0xff]
  %v2295 = vld [vmem:[#allocation3 + $0xba0] sm:$0xff]
  %v2296 = vld [vmem:[#allocation3 + $0xba8] sm:$0xff]
  %v2297 = vld [vmem:[#allocation3 + $0xbb0] sm:$0xff]
  %v2298 = vld [vmem:[#allocation3 + $0xbb8] sm:$0xff]
  %v2299 = vld [vmem:[#allocation3 + $0xbc0] sm:$0xff]
  %v2300 = vld [vmem:[#allocation3 + $0xbc8] sm:$0xff]
  %v2301 = vld [vmem:[#allocation3 + $0xbd0] sm:$0xff]
  %v2302 = vld [vmem:[#allocation3 + $0xbd8] sm:$0xff]
  %v2303 = vld [vmem:[#allocation3 + $0xbe0] sm:$0xff]
  %v2304 = vld [vmem:[#allocation3 + $0xbe8] sm:$0xff]
  %v2305 = vld [vmem:[#allocation3 + $0xbf0] sm:$0xff]
  %v2306 = vld [vmem:[#allocation3 + $0xbf8] sm:$0xff]
  %v2307 = vld [vmem:[#allocation3 + $0xc00] sm:$0xff]
  %v2308 = vld [vmem:[#allocation3 + $0xc08] sm:$0xff]
  %v2309 = vld [vmem:[#allocation3 + $0xc10] sm:$0xff]
  %v2310 = vld [vmem:[#allocation3 + $0xc18] sm:$0xff]
  %v2311 = vld [vmem:[#allocation3 + $0xc20] sm:$0xff]
  %v2312 = vld [vmem:[#allocation3 + $0xc28] sm:$0xff]
  %v2313 = vld [vmem:[#allocation3 + $0xc30] sm:$0xff]
  %v2314 = vld [vmem:[#allocation3 + $0xc38] sm:$0xff]
  %v2315 = vld [vmem:[#allocation3 + $0xc40] sm:$0xff]
  %v2316 = vld [vmem:[#allocation3 + $0xc48] sm:$0xff]
  %v2317 = vld [vmem:[#allocation3 + $0xc50] sm:$0xff]
  %v2318 = vld [vmem:[#allocation3 + $0xc58] sm:$0xff]
  %v2319 = vld [vmem:[#allocation3 + $0xc60] sm:$0xff]
  %v2320 = vld [vmem:[#allocation3 + $0xc68] sm:$0xff]
  %v2321 = vld [vmem:[#allocation3 + $0xc70] sm:$0xff]
  %v2322 = vld [vmem:[#allocation3 + $0xc78] sm:$0xff]
  %v2323 = vld [vmem:[#allocation3 + $0xc80] sm:$0xff]
  %v2324 = vld [vmem:[#allocation3 + $0xc88] sm:$0xff]
  %v2325 = vld [vmem:[#allocation3 + $0xc90] sm:$0xff]
  %v2326 = vld [vmem:[#allocation3 + $0xc98] sm:$0xff]
  %v2327 = vld [vmem:[#allocation3 + $0xca0] sm:$0xff]
  %v2328 = vld [vmem:[#allocation3 + $0xca8] sm:$0xff]
  %v2329 = vld [vmem:[#allocation3 + $0xcb0] sm:$0xff]
  %v2330 = vld [vmem:[#allocation3 + $0xcb8] sm:$0xff]
  %v2331 = vld [vmem:[#allocation3 + $0xcc0] sm:$0xff]
  %v2332 = vld [vmem:[#allocation3 + $0xcc8] sm:$0xff]
  %v2333 = vld [vmem:[#allocation3 + $0xcd0] sm:$0xff]
  %v2334 = vld [vmem:[#allocation3 + $0xcd8] sm:$0xff]
  %v2335 = vld [vmem:[#allocation3 + $0xce0] sm:$0xff]
  %v2336 = vld [vmem:[#allocation3 + $0xce8] sm:$0xff]
  %v2337 = vld [vmem:[#allocation3 + $0xcf0] sm:$0xff]
  %v2338 = vld [vmem:[#allocation3 + $0xcf8] sm:$0xff]
  %v2339 = vld [vmem:[#allocation3 + $0xd00] sm:$0xff]
  %v2340 = vld [vmem:[#allocation3 + $0xd08] sm:$0xff]
  %v2341 = vld [vmem:[#allocation3 + $0xd10] sm:$0xff]
  %v2342 = vld [vmem:[#allocation3 + $0xd18] sm:$0xff]
  %v2343 = vld [vmem:[#allocation3 + $0xd20] sm:$0xff]
  %v2344 = vld [vmem:[#allocation3 + $0xd28] sm:$0xff]
  %v2345 = vld [vmem:[#allocation3 + $0xd30] sm:$0xff]
  %v2346 = vld [vmem:[#allocation3 + $0xd38] sm:$0xff]
  %v2347 = vld [vmem:[#allocation3 + $0xd40] sm:$0xff]
  %v2348 = vld [vmem:[#allocation3 + $0xd48] sm:$0xff]
  %v2349 = vld [vmem:[#allocation3 + $0xd50] sm:$0xff]
  %v2350 = vld [vmem:[#allocation3 + $0xd58] sm:$0xff]
  %v2351 = vld [vmem:[#allocation3 + $0xd60] sm:$0xff]
  %v2352 = vld [vmem:[#allocation3 + $0xd68] sm:$0xff]
  %v2353 = vld [vmem:[#allocation3 + $0xd70] sm:$0xff]
  %v2354 = vld [vmem:[#allocation3 + $0xd78] sm:$0xff]
  %v2355 = vld [vmem:[#allocation3 + $0xd80] sm:$0xff]
  %v2356 = vld [vmem:[#allocation3 + $0xd88] sm:$0xff]
  %v2357 = vld [vmem:[#allocation3 + $0xd90] sm:$0xff]
  %v2358 = vld [vmem:[#allocation3 + $0xd98] sm:$0xff]
  %v2359 = vld [vmem:[#allocation3 + $0xda0] sm:$0xff]
  %v2360 = vld [vmem:[#allocation3 + $0xda8] sm:$0xff]
  %v2361 = vld [vmem:[#allocation3 + $0xdb0] sm:$0xff]
  %v2362 = vld [vmem:[#allocation3 + $0xdb8] sm:$0xff]
  %v2363 = vld [vmem:[#allocation3 + $0xdc0] sm:$0xff]
  %v2364 = vld [vmem:[#allocation3 + $0xdc8] sm:$0xff]
  %v2365 = vld [vmem:[#allocation3 + $0xdd0] sm:$0xff]
  %v2366 = vld [vmem:[#allocation3 + $0xdd8] sm:$0xff]
  %v2367 = vld [vmem:[#allocation3 + $0xde0] sm:$0xff]
  %v2368 = vld [vmem:[#allocation3 + $0xde8] sm:$0xff]
  %v2369 = vld [vmem:[#allocation3 + $0xdf0] sm:$0xff]
  %v2370 = vld [vmem:[#allocation3 + $0xdf8] sm:$0xff]
  %v2371 = vld [vmem:[#allocation3 + $0xe00] sm:$0xff]
  %v2372 = vld [vmem:[#allocation3 + $0xe08] sm:$0xff]
  %v2373 = vld [vmem:[#allocation3 + $0xe10] sm:$0xff]
  %v2374 = vld [vmem:[#allocation3 + $0xe18] sm:$0xff]
  %v2375 = vld [vmem:[#allocation3 + $0xe20] sm:$0xff]
  %v2376 = vld [vmem:[#allocation3 + $0xe28] sm:$0xff]
  %v2377 = vld [vmem:[#allocation3 + $0xe30] sm:$0xff]
  %v2378 = vld [vmem:[#allocation3 + $0xe38] sm:$0xff]
  %v2379 = vld [vmem:[#allocation3 + $0xe40] sm:$0xff]
  %v2380 = vld [vmem:[#allocation3 + $0xe48] sm:$0xff]
  %v2381 = vld [vmem:[#allocation3 + $0xe50] sm:$0xff]
  %v2382 = vld [vmem:[#allocation3 + $0xe58] sm:$0xff]
  %v2383 = vld [vmem:[#allocation3 + $0xe60] sm:$0xff]
  %v2384 = vld [vmem:[#allocation3 + $0xe68] sm:$0xff]
  %v2385 = vld [vmem:[#allocation3 + $0xe70] sm:$0xff]
  %v2386 = vld [vmem:[#allocation3 + $0xe78] sm:$0xff]
  %v2387 = vld [vmem:[#allocation3 + $0xe80] sm:$0xff]
  %v2388 = vld [vmem:[#allocation3 + $0xe88] sm:$0xff]
  %v2389 = vld [vmem:[#allocation3 + $0xe90] sm:$0xff]
  %v2390 = vld [vmem:[#allocation3 + $0xe98] sm:$0xff]
  %v2391 = vld [vmem:[#allocation3 + $0xea0] sm:$0xff]
  %v2392 = vld [vmem:[#allocation3 + $0xea8] sm:$0xff]
  %v2393 = vld [vmem:[#allocation3 + $0xeb0] sm:$0xff]
  %v2394 = vld [vmem:[#allocation3 + $0xeb8] sm:$0xff]
  %v2395 = vld [vmem:[#allocation3 + $0xec0] sm:$0xff]
  %v2396 = vld [vmem:[#allocation3 + $0xec8] sm:$0xff]
  %v2397 = vld [vmem:[#allocation3 + $0xed0] sm:$0xff]
  %v2398 = vld [vmem:[#allocation3 + $0xed8] sm:$0xff]
  %v2399 = vld [vmem:[#allocation3 + $0xee0] sm:$0xff]
  %v2400 = vld [vmem:[#allocation3 + $0xee8] sm:$0xff]
  %v2401 = vld [vmem:[#allocation3 + $0xef0] sm:$0xff]
  %v2402 = vld [vmem:[#allocation3 + $0xef8] sm:$0xff]
  %v2403 = vld [vmem:[#allocation3 + $0xf00] sm:$0xff]
  %v2404 = vld [vmem:[#allocation3 + $0xf08] sm:$0xff]
  %v2405 = vld [vmem:[#allocation3 + $0xf10] sm:$0xff]
  %v2406 = vld [vmem:[#allocation3 + $0xf18] sm:$0xff]
  %v2407 = vld [vmem:[#allocation3 + $0xf20] sm:$0xff]
  %v2408 = vld [vmem:[#allocation3 + $0xf28] sm:$0xff]
  %v2409 = vld [vmem:[#allocation3 + $0xf30] sm:$0xff]
  %v2410 = vld [vmem:[#allocation3 + $0xf38] sm:$0xff]
  %v2411 = vld [vmem:[#allocation3 + $0xf40] sm:$0xff]
  %v2412 = vld [vmem:[#allocation3 + $0xf48] sm:$0xff]
  %v2413 = vld [vmem:[#allocation3 + $0xf50] sm:$0xff]
  %v2414 = vld [vmem:[#allocation3 + $0xf58] sm:$0xff]
  %v2415 = vld [vmem:[#allocation3 + $0xf60] sm:$0xff]
  %v2416 = vld [vmem:[#allocation3 + $0xf68] sm:$0xff]
  %v2417 = vld [vmem:[#allocation3 + $0xf70] sm:$0xff]
  %v2418 = vld [vmem:[#allocation3 + $0xf78] sm:$0xff]
  %v2419 = vld [vmem:[#allocation3 + $0xf80] sm:$0xff]
  %v2420 = vld [vmem:[#allocation3 + $0xf88] sm:$0xff]
  %v2421 = vld [vmem:[#allocation3 + $0xf90] sm:$0xff]
  %v2422 = vld [vmem:[#allocation3 + $0xf98] sm:$0xff]
  %v2423 = vld [vmem:[#allocation3 + $0xfa0] sm:$0xff]
  %v2424 = vld [vmem:[#allocation3 + $0xfa8] sm:$0xff]
  %v2425 = vld [vmem:[#allocation3 + $0xfb0] sm:$0xff]
  %v2426 = vld [vmem:[#allocation3 + $0xfb8] sm:$0xff]
  %v2427 = vld [vmem:[#allocation3 + $0xfc0] sm:$0xff]
  %v2428 = vld [vmem:[#allocation3 + $0xfc8] sm:$0xff]
  %v2429 = vld [vmem:[#allocation3 + $0xfd0] sm:$0xff]
  %v2430 = vld [vmem:[#allocation3 + $0xfd8] sm:$0xff]
  %v2431 = vld [vmem:[#allocation3 + $0xfe0] sm:$0xff]
  %v2432 = vld [vmem:[#allocation3 + $0xfe8] sm:$0xff]
  %v2433 = vld [vmem:[#allocation3 + $0xff0] sm:$0xff]
  %v2434 = vld [vmem:[#allocation3 + $0xff8] sm:$0xff]
  %2435 = vmatpush.msra.mxu0 %v2163
  %2436 = vmatpush.msra.mxu0 %v2147
  %2437 = vmatpush.msra.mxu0 %v2131
  %2438 = vmatpush.msra.mxu0 %v2115
  %2439 = vmatpush.msra.mxu0 %v2099
  %2440 = vmatpush.msra.mxu0 %v2083
  %2441 = vmatpush.msra.mxu0 %v2067
  %2442 = vmatpush.msra.mxu0 %v2051
  %2443 = vmatpush.msra.mxu0 %v2035
  %2444 = vmatpush.msra.mxu0 %v2019
  %2445 = vmatpush.msra.mxu0 %v2003
  %2446 = vmatpush.msra.mxu0 %v1987
  %2447 = vmatpush.msra.mxu0 %v1971
  %2448 = vmatpush.msra.mxu0 %v1955
  %2449 = vmatpush.msra.mxu0 %v1939
  %2450 = vmatpush.msra.mxu0 %v1923
  %2451 = vmatmul.f32.gmra.mxu0 0.0
  %v2452 = vpop.f32.mrf.mxu0
  %v2453 = vadd.f32 0.0, %v2452
  %2454 = vdwg.mxu0
  %2455 = vmatpush.msra.mxu0 %v2419
  %2456 = vmatpush.msra.mxu0 %v2403
  %2457 = vmatpush.msra.mxu0 %v2387
  %2458 = vmatpush.msra.mxu0 %v2371
  %2459 = vmatpush.msra.mxu0 %v2355
  %2460 = vmatpush.msra.mxu0 %v2339
  %2461 = vmatpush.msra.mxu0 %v2323
  %2462 = vmatpush.msra.mxu0 %v2307
  %2463 = vmatpush.msra.mxu0 %v2291
  %2464 = vmatpush.msra.mxu0 %v2275
  %2465 = vmatpush.msra.mxu0 %v2259
  %2466 = vmatpush.msra.mxu0 %v2243
  %2467 = vmatpush.msra.mxu0 %v2227
  %2468 = vmatpush.msra.mxu0 %v2211
  %2469 = vmatpush.msra.mxu0 %v2195
  %2470 = vmatpush.msra.mxu0 %v2179
  %2471 = vmatmul.f32.gmra.mxu0 0.0
  %v2472 = vpop.f32.mrf.mxu0
  %v2473 = vadd.f32 %v2453, %v2472
  %2474 = vdwg.mxu0
  %2475 = vmatpush.msra.mxu0 %v2164
  %2476 = vmatpush.msra.mxu0 %v2148
  %2477 = vmatpush.msra.mxu0 %v2132
  %2478 = vmatpush.msra.mxu0 %v2116
  %2479 = vmatpush.msra.mxu0 %v2100
  %2480 = vmatpush.msra.mxu0 %v2084
  %2481 = vmatpush.msra.mxu0 %v2068
  %2482 = vmatpush.msra.mxu0 %v2052
  %2483 = vmatpush.msra.mxu0 %v2036
  %2484 = vmatpush.msra.mxu0 %v2020
  %2485 = vmatpush.msra.mxu0 %v2004
  %2486 = vmatpush.msra.mxu0 %v1988
  %2487 = vmatpush.msra.mxu0 %v1972
  %2488 = vmatpush.msra.mxu0 %v1956
  %2489 = vmatpush.msra.mxu0 %v1940
  %2490 = vmatpush.msra.mxu0 %v1924
  %2491 = vmatmul.f32.gmra.mxu0 0.0
  %v2492 = vpop.f32.mrf.mxu0
  %v2493 = vadd.f32 0.0, %v2492
  %2494 = vdwg.mxu0
  %2495 = vmatpush.msra.mxu0 %v2420
  %2496 = vmatpush.msra.mxu0 %v2404
  %2497 = vmatpush.msra.mxu0 %v2388
  %2498 = vmatpush.msra.mxu0 %v2372
  %2499 = vmatpush.msra.mxu0 %v2356
  %2500 = vmatpush.msra.mxu0 %v2340
  %2501 = vmatpush.msra.mxu0 %v2324
  %2502 = vmatpush.msra.mxu0 %v2308
  %2503 = vmatpush.msra.mxu0 %v2292
  %2504 = vmatpush.msra.mxu0 %v2276
  %2505 = vmatpush.msra.mxu0 %v2260
  %2506 = vmatpush.msra.mxu0 %v2244
  %2507 = vmatpush.msra.mxu0 %v2228
  %2508 = vmatpush.msra.mxu0 %v2212
  %2509 = vmatpush.msra.mxu0 %v2196
  %2510 = vmatpush.msra.mxu0 %v2180
  %2511 = vmatmul.f32.gmra.mxu0 0.0
  %v2512 = vpop.f32.mrf.mxu0
  %v2513 = vadd.f32 %v2493, %v2512
  %2514 = vdwg.mxu0
  %2515 = vmatpush.msra.mxu0 %v2165
  %2516 = vmatpush.msra.mxu0 %v2149
  %2517 = vmatpush.msra.mxu0 %v2133
  %2518 = vmatpush.msra.mxu0 %v2117
  %2519 = vmatpush.msra.mxu0 %v2101
  %2520 = vmatpush.msra.mxu0 %v2085
  %2521 = vmatpush.msra.mxu0 %v2069
  %2522 = vmatpush.msra.mxu0 %v2053
  %2523 = vmatpush.msra.mxu0 %v2037
  %2524 = vmatpush.msra.mxu0 %v2021
  %2525 = vmatpush.msra.mxu0 %v2005
  %2526 = vmatpush.msra.mxu0 %v1989
  %2527 = vmatpush.msra.mxu0 %v1973
  %2528 = vmatpush.msra.mxu0 %v1957
  %2529 = vmatpush.msra.mxu0 %v1941
  %2530 = vmatpush.msra.mxu0 %v1925
  %2531 = vmatmul.f32.gmra.mxu0 0.0
  %v2532 = vpop.f32.mrf.mxu0
  %v2533 = vadd.f32 0.0, %v2532
  %2534 = vdwg.mxu0
  %2535 = vmatpush.msra.mxu0 %v2421
  %2536 = vmatpush.msra.mxu0 %v2405
  %2537 = vmatpush.msra.mxu0 %v2389
  %2538 = vmatpush.msra.mxu0 %v2373
  %2539 = vmatpush.msra.mxu0 %v2357
  %2540 = vmatpush.msra.mxu0 %v2341
  %2541 = vmatpush.msra.mxu0 %v2325
  %2542 = vmatpush.msra.mxu0 %v2309
  %2543 = vmatpush.msra.mxu0 %v2293
  %2544 = vmatpush.msra.mxu0 %v2277
  %2545 = vmatpush.msra.mxu0 %v2261
  %2546 = vmatpush.msra.mxu0 %v2245
  %2547 = vmatpush.msra.mxu0 %v2229
  %2548 = vmatpush.msra.mxu0 %v2213
  %2549 = vmatpush.msra.mxu0 %v2197
  %2550 = vmatpush.msra.mxu0 %v2181
  %2551 = vmatmul.f32.gmra.mxu0 0.0
  %v2552 = vpop.f32.mrf.mxu0
  %v2553 = vadd.f32 %v2533, %v2552
  %2554 = vdwg.mxu0
  %2555 = vmatpush.msra.mxu0 %v2166
  %2556 = vmatpush.msra.mxu0 %v2150
  %2557 = vmatpush.msra.mxu0 %v2134
  %2558 = vmatpush.msra.mxu0 %v2118
  %2559 = vmatpush.msra.mxu0 %v2102
  %2560 = vmatpush.msra.mxu0 %v2086
  %2561 = vmatpush.msra.mxu0 %v2070
  %2562 = vmatpush.msra.mxu0 %v2054
  %2563 = vmatpush.msra.mxu0 %v2038
  %2564 = vmatpush.msra.mxu0 %v2022
  %2565 = vmatpush.msra.mxu0 %v2006
  %2566 = vmatpush.msra.mxu0 %v1990
  %2567 = vmatpush.msra.mxu0 %v1974
  %2568 = vmatpush.msra.mxu0 %v1958
  %2569 = vmatpush.msra.mxu0 %v1942
  %2570 = vmatpush.msra.mxu0 %v1926
  %2571 = vmatmul.f32.gmra.mxu0 0.0
  %v2572 = vpop.f32.mrf.mxu0
  %v2573 = vadd.f32 0.0, %v2572
  %2574 = vdwg.mxu0
  %2575 = vmatpush.msra.mxu0 %v2422
  %2576 = vmatpush.msra.mxu0 %v2406
  %2577 = vmatpush.msra.mxu0 %v2390
  %2578 = vmatpush.msra.mxu0 %v2374
  %2579 = vmatpush.msra.mxu0 %v2358
  %2580 = vmatpush.msra.mxu0 %v2342
  %2581 = vmatpush.msra.mxu0 %v2326
  %2582 = vmatpush.msra.mxu0 %v2310
  %2583 = vmatpush.msra.mxu0 %v2294
  %2584 = vmatpush.msra.mxu0 %v2278
  %2585 = vmatpush.msra.mxu0 %v2262
  %2586 = vmatpush.msra.mxu0 %v2246
  %2587 = vmatpush.msra.mxu0 %v2230
  %2588 = vmatpush.msra.mxu0 %v2214
  %2589 = vmatpush.msra.mxu0 %v2198
  %2590 = vmatpush.msra.mxu0 %v2182
  %2591 = vmatmul.f32.gmra.mxu0 0.0
  %v2592 = vpop.f32.mrf.mxu0
  %v2593 = vadd.f32 %v2573, %v2592
  %2594 = vdwg.mxu0
  %2595 = vmatpush.msra.mxu0 %v2167
  %2596 = vmatpush.msra.mxu0 %v2151
  %2597 = vmatpush.msra.mxu0 %v2135
  %2598 = vmatpush.msra.mxu0 %v2119
  %2599 = vmatpush.msra.mxu0 %v2103
  %2600 = vmatpush.msra.mxu0 %v2087
  %2601 = vmatpush.msra.mxu0 %v2071
  %2602 = vmatpush.msra.mxu0 %v2055
  %2603 = vmatpush.msra.mxu0 %v2039
  %2604 = vmatpush.msra.mxu0 %v2023
  %2605 = vmatpush.msra.mxu0 %v2007
  %2606 = vmatpush.msra.mxu0 %v1991
  %2607 = vmatpush.msra.mxu0 %v1975
  %2608 = vmatpush.msra.mxu0 %v1959
  %2609 = vmatpush.msra.mxu0 %v1943
  %2610 = vmatpush.msra.mxu0 %v1927
  %2611 = vmatmul.f32.gmra.mxu0 0.0
  %v2612 = vpop.f32.mrf.mxu0
  %v2613 = vadd.f32 0.0, %v2612
  %2614 = vdwg.mxu0
  %2615 = vmatpush.msra.mxu0 %v2423
  %2616 = vmatpush.msra.mxu0 %v2407
  %2617 = vmatpush.msra.mxu0 %v2391
  %2618 = vmatpush.msra.mxu0 %v2375
  %2619 = vmatpush.msra.mxu0 %v2359
  %2620 = vmatpush.msra.mxu0 %v2343
  %2621 = vmatpush.msra.mxu0 %v2327
  %2622 = vmatpush.msra.mxu0 %v2311
  %2623 = vmatpush.msra.mxu0 %v2295
  %2624 = vmatpush.msra.mxu0 %v2279
  %2625 = vmatpush.msra.mxu0 %v2263
  %2626 = vmatpush.msra.mxu0 %v2247
  %2627 = vmatpush.msra.mxu0 %v2231
  %2628 = vmatpush.msra.mxu0 %v2215
  %2629 = vmatpush.msra.mxu0 %v2199
  %2630 = vmatpush.msra.mxu0 %v2183
  %2631 = vmatmul.f32.gmra.mxu0 0.0
  %v2632 = vpop.f32.mrf.mxu0
  %v2633 = vadd.f32 %v2613, %v2632
  %2634 = vdwg.mxu0
  %2635 = vmatpush.msra.mxu0 %v2168
  %2636 = vmatpush.msra.mxu0 %v2152
  %2637 = vmatpush.msra.mxu0 %v2136
  %2638 = vmatpush.msra.mxu0 %v2120
  %2639 = vmatpush.msra.mxu0 %v2104
  %2640 = vmatpush.msra.mxu0 %v2088
  %2641 = vmatpush.msra.mxu0 %v2072
  %2642 = vmatpush.msra.mxu0 %v2056
  %2643 = vmatpush.msra.mxu0 %v2040
  %2644 = vmatpush.msra.mxu0 %v2024
  %2645 = vmatpush.msra.mxu0 %v2008
  %2646 = vmatpush.msra.mxu0 %v1992
  %2647 = vmatpush.msra.mxu0 %v1976
  %2648 = vmatpush.msra.mxu0 %v1960
  %2649 = vmatpush.msra.mxu0 %v1944
  %2650 = vmatpush.msra.mxu0 %v1928
  %2651 = vmatmul.f32.gmra.mxu0 0.0
  %v2652 = vpop.f32.mrf.mxu0
  %v2653 = vadd.f32 0.0, %v2652
  %2654 = vdwg.mxu0
  %2655 = vmatpush.msra.mxu0 %v2424
  %2656 = vmatpush.msra.mxu0 %v2408
  %2657 = vmatpush.msra.mxu0 %v2392
  %2658 = vmatpush.msra.mxu0 %v2376
  %2659 = vmatpush.msra.mxu0 %v2360
  %2660 = vmatpush.msra.mxu0 %v2344
  %2661 = vmatpush.msra.mxu0 %v2328
  %2662 = vmatpush.msra.mxu0 %v2312
  %2663 = vmatpush.msra.mxu0 %v2296
  %2664 = vmatpush.msra.mxu0 %v2280
  %2665 = vmatpush.msra.mxu0 %v2264
  %2666 = vmatpush.msra.mxu0 %v2248
  %2667 = vmatpush.msra.mxu0 %v2232
  %2668 = vmatpush.msra.mxu0 %v2216
  %2669 = vmatpush.msra.mxu0 %v2200
  %2670 = vmatpush.msra.mxu0 %v2184
  %2671 = vmatmul.f32.gmra.mxu0 0.0
  %v2672 = vpop.f32.mrf.mxu0
  %v2673 = vadd.f32 %v2653, %v2672
  %2674 = vdwg.mxu0
  %2675 = vmatpush.msra.mxu0 %v2169
  %2676 = vmatpush.msra.mxu0 %v2153
  %2677 = vmatpush.msra.mxu0 %v2137
  %2678 = vmatpush.msra.mxu0 %v2121
  %2679 = vmatpush.msra.mxu0 %v2105
  %2680 = vmatpush.msra.mxu0 %v2089
  %2681 = vmatpush.msra.mxu0 %v2073
  %2682 = vmatpush.msra.mxu0 %v2057
  %2683 = vmatpush.msra.mxu0 %v2041
  %2684 = vmatpush.msra.mxu0 %v2025
  %2685 = vmatpush.msra.mxu0 %v2009
  %2686 = vmatpush.msra.mxu0 %v1993
  %2687 = vmatpush.msra.mxu0 %v1977
  %2688 = vmatpush.msra.mxu0 %v1961
  %2689 = vmatpush.msra.mxu0 %v1945
  %2690 = vmatpush.msra.mxu0 %v1929
  %2691 = vmatmul.f32.gmra.mxu0 0.0
  %v2692 = vpop.f32.mrf.mxu0
  %v2693 = vadd.f32 0.0, %v2692
  %2694 = vdwg.mxu0
  %2695 = vmatpush.msra.mxu0 %v2425
  %2696 = vmatpush.msra.mxu0 %v2409
  %2697 = vmatpush.msra.mxu0 %v2393
  %2698 = vmatpush.msra.mxu0 %v2377
  %2699 = vmatpush.msra.mxu0 %v2361
  %2700 = vmatpush.msra.mxu0 %v2345
  %2701 = vmatpush.msra.mxu0 %v2329
  %2702 = vmatpush.msra.mxu0 %v2313
  %2703 = vmatpush.msra.mxu0 %v2297
  %2704 = vmatpush.msra.mxu0 %v2281
  %2705 = vmatpush.msra.mxu0 %v2265
  %2706 = vmatpush.msra.mxu0 %v2249
  %2707 = vmatpush.msra.mxu0 %v2233
  %2708 = vmatpush.msra.mxu0 %v2217
  %2709 = vmatpush.msra.mxu0 %v2201
  %2710 = vmatpush.msra.mxu0 %v2185
  %2711 = vmatmul.f32.gmra.mxu0 0.0
  %v2712 = vpop.f32.mrf.mxu0
  %v2713 = vadd.f32 %v2693, %v2712
  %2714 = vdwg.mxu0
  %2715 = vmatpush.msra.mxu0 %v2170
  %2716 = vmatpush.msra.mxu0 %v2154
  %2717 = vmatpush.msra.mxu0 %v2138
  %2718 = vmatpush.msra.mxu0 %v2122
  %2719 = vmatpush.msra.mxu0 %v2106
  %2720 = vmatpush.msra.mxu0 %v2090
  %2721 = vmatpush.msra.mxu0 %v2074
  %2722 = vmatpush.msra.mxu0 %v2058
  %2723 = vmatpush.msra.mxu0 %v2042
  %2724 = vmatpush.msra.mxu0 %v2026
  %2725 = vmatpush.msra.mxu0 %v2010
  %2726 = vmatpush.msra.mxu0 %v1994
  %2727 = vmatpush.msra.mxu0 %v1978
  %2728 = vmatpush.msra.mxu0 %v1962
  %2729 = vmatpush.msra.mxu0 %v1946
  %2730 = vmatpush.msra.mxu0 %v1930
  %2731 = vmatmul.f32.gmra.mxu0 0.0
  %v2732 = vpop.f32.mrf.mxu0
  %v2733 = vadd.f32 0.0, %v2732
  %2734 = vdwg.mxu0
  %2735 = vmatpush.msra.mxu0 %v2426
  %2736 = vmatpush.msra.mxu0 %v2410
  %2737 = vmatpush.msra.mxu0 %v2394
  %2738 = vmatpush.msra.mxu0 %v2378
  %2739 = vmatpush.msra.mxu0 %v2362
  %2740 = vmatpush.msra.mxu0 %v2346
  %2741 = vmatpush.msra.mxu0 %v2330
  %2742 = vmatpush.msra.mxu0 %v2314
  %2743 = vmatpush.msra.mxu0 %v2298
  %2744 = vmatpush.msra.mxu0 %v2282
  %2745 = vmatpush.msra.mxu0 %v2266
  %2746 = vmatpush.msra.mxu0 %v2250
  %2747 = vmatpush.msra.mxu0 %v2234
  %2748 = vmatpush.msra.mxu0 %v2218
  %2749 = vmatpush.msra.mxu0 %v2202
  %2750 = vmatpush.msra.mxu0 %v2186
  %2751 = vmatmul.f32.gmra.mxu0 0.0
  %v2752 = vpop.f32.mrf.mxu0
  %v2753 = vadd.f32 %v2733, %v2752
  %2754 = vdwg.mxu0
  %2755 = vmatpush.msra.mxu0 %v2171
  %2756 = vmatpush.msra.mxu0 %v2155
  %2757 = vmatpush.msra.mxu0 %v2139
  %2758 = vmatpush.msra.mxu0 %v2123
  %2759 = vmatpush.msra.mxu0 %v2107
  %2760 = vmatpush.msra.mxu0 %v2091
  %2761 = vmatpush.msra.mxu0 %v2075
  %2762 = vmatpush.msra.mxu0 %v2059
  %2763 = vmatpush.msra.mxu0 %v2043
  %2764 = vmatpush.msra.mxu0 %v2027
  %2765 = vmatpush.msra.mxu0 %v2011
  %2766 = vmatpush.msra.mxu0 %v1995
  %2767 = vmatpush.msra.mxu0 %v1979
  %2768 = vmatpush.msra.mxu0 %v1963
  %2769 = vmatpush.msra.mxu0 %v1947
  %2770 = vmatpush.msra.mxu0 %v1931
  %2771 = vmatmul.f32.gmra.mxu0 0.0
  %v2772 = vpop.f32.mrf.mxu0
  %v2773 = vadd.f32 0.0, %v2772
  %2774 = vdwg.mxu0
  %2775 = vmatpush.msra.mxu0 %v2427
  %2776 = vmatpush.msra.mxu0 %v2411
  %2777 = vmatpush.msra.mxu0 %v2395
  %2778 = vmatpush.msra.mxu0 %v2379
  %2779 = vmatpush.msra.mxu0 %v2363
  %2780 = vmatpush.msra.mxu0 %v2347
  %2781 = vmatpush.msra.mxu0 %v2331
  %2782 = vmatpush.msra.mxu0 %v2315
  %2783 = vmatpush.msra.mxu0 %v2299
  %2784 = vmatpush.msra.mxu0 %v2283
  %2785 = vmatpush.msra.mxu0 %v2267
  %2786 = vmatpush.msra.mxu0 %v2251
  %2787 = vmatpush.msra.mxu0 %v2235
  %2788 = vmatpush.msra.mxu0 %v2219
  %2789 = vmatpush.msra.mxu0 %v2203
  %2790 = vmatpush.msra.mxu0 %v2187
  %2791 = vmatmul.f32.gmra.mxu0 0.0
  %v2792 = vpop.f32.mrf.mxu0
  %v2793 = vadd.f32 %v2773, %v2792
  %2794 = vdwg.mxu0
  %2795 = vmatpush.msra.mxu0 %v2172
  %2796 = vmatpush.msra.mxu0 %v2156
  %2797 = vmatpush.msra.mxu0 %v2140
  %2798 = vmatpush.msra.mxu0 %v2124
  %2799 = vmatpush.msra.mxu0 %v2108
  %2800 = vmatpush.msra.mxu0 %v2092
  %2801 = vmatpush.msra.mxu0 %v2076
  %2802 = vmatpush.msra.mxu0 %v2060
  %2803 = vmatpush.msra.mxu0 %v2044
  %2804 = vmatpush.msra.mxu0 %v2028
  %2805 = vmatpush.msra.mxu0 %v2012
  %2806 = vmatpush.msra.mxu0 %v1996
  %2807 = vmatpush.msra.mxu0 %v1980
  %2808 = vmatpush.msra.mxu0 %v1964
  %2809 = vmatpush.msra.mxu0 %v1948
  %2810 = vmatpush.msra.mxu0 %v1932
  %2811 = vmatmul.f32.gmra.mxu0 0.0
  %v2812 = vpop.f32.mrf.mxu0
  %v2813 = vadd.f32 0.0, %v2812
  %2814 = vdwg.mxu0
  %2815 = vmatpush.msra.mxu0 %v2428
  %2816 = vmatpush.msra.mxu0 %v2412
  %2817 = vmatpush.msra.mxu0 %v2396
  %2818 = vmatpush.msra.mxu0 %v2380
  %2819 = vmatpush.msra.mxu0 %v2364
  %2820 = vmatpush.msra.mxu0 %v2348
  %2821 = vmatpush.msra.mxu0 %v2332
  %2822 = vmatpush.msra.mxu0 %v2316
  %2823 = vmatpush.msra.mxu0 %v2300
  %2824 = vmatpush.msra.mxu0 %v2284
  %2825 = vmatpush.msra.mxu0 %v2268
  %2826 = vmatpush.msra.mxu0 %v2252
  %2827 = vmatpush.msra.mxu0 %v2236
  %2828 = vmatpush.msra.mxu0 %v2220
  %2829 = vmatpush.msra.mxu0 %v2204
  %2830 = vmatpush.msra.mxu0 %v2188
  %2831 = vmatmul.f32.gmra.mxu0 0.0
  %v2832 = vpop.f32.mrf.mxu0
  %v2833 = vadd.f32 %v2813, %v2832
  %2834 = vdwg.mxu0
  %2835 = vmatpush.msra.mxu0 %v2173
  %2836 = vmatpush.msra.mxu0 %v2157
  %2837 = vmatpush.msra.mxu0 %v2141
  %2838 = vmatpush.msra.mxu0 %v2125
  %2839 = vmatpush.msra.mxu0 %v2109
  %2840 = vmatpush.msra.mxu0 %v2093
  %2841 = vmatpush.msra.mxu0 %v2077
  %2842 = vmatpush.msra.mxu0 %v2061
  %2843 = vmatpush.msra.mxu0 %v2045
  %2844 = vmatpush.msra.mxu0 %v2029
  %2845 = vmatpush.msra.mxu0 %v2013
  %2846 = vmatpush.msra.mxu0 %v1997
  %2847 = vmatpush.msra.mxu0 %v1981
  %2848 = vmatpush.msra.mxu0 %v1965
  %2849 = vmatpush.msra.mxu0 %v1949
  %2850 = vmatpush.msra.mxu0 %v1933
  %2851 = vmatmul.f32.gmra.mxu0 0.0
  %v2852 = vpop.f32.mrf.mxu0
  %v2853 = vadd.f32 0.0, %v2852
  %2854 = vdwg.mxu0
  %2855 = vmatpush.msra.mxu0 %v2429
  %2856 = vmatpush.msra.mxu0 %v2413
  %2857 = vmatpush.msra.mxu0 %v2397
  %2858 = vmatpush.msra.mxu0 %v2381
  %2859 = vmatpush.msra.mxu0 %v2365
  %2860 = vmatpush.msra.mxu0 %v2349
  %2861 = vmatpush.msra.mxu0 %v2333
  %2862 = vmatpush.msra.mxu0 %v2317
  %2863 = vmatpush.msra.mxu0 %v2301
  %2864 = vmatpush.msra.mxu0 %v2285
  %2865 = vmatpush.msra.mxu0 %v2269
  %2866 = vmatpush.msra.mxu0 %v2253
  %2867 = vmatpush.msra.mxu0 %v2237
  %2868 = vmatpush.msra.mxu0 %v2221
  %2869 = vmatpush.msra.mxu0 %v2205
  %2870 = vmatpush.msra.mxu0 %v2189
  %2871 = vmatmul.f32.gmra.mxu0 0.0
  %v2872 = vpop.f32.mrf.mxu0
  %v2873 = vadd.f32 %v2853, %v2872
  %2874 = vdwg.mxu0
  %2875 = vmatpush.msra.mxu0 %v2174
  %2876 = vmatpush.msra.mxu0 %v2158
  %2877 = vmatpush.msra.mxu0 %v2142
  %2878 = vmatpush.msra.mxu0 %v2126
  %2879 = vmatpush.msra.mxu0 %v2110
  %2880 = vmatpush.msra.mxu0 %v2094
  %2881 = vmatpush.msra.mxu0 %v2078
  %2882 = vmatpush.msra.mxu0 %v2062
  %2883 = vmatpush.msra.mxu0 %v2046
  %2884 = vmatpush.msra.mxu0 %v2030
  %2885 = vmatpush.msra.mxu0 %v2014
  %2886 = vmatpush.msra.mxu0 %v1998
  %2887 = vmatpush.msra.mxu0 %v1982
  %2888 = vmatpush.msra.mxu0 %v1966
  %2889 = vmatpush.msra.mxu0 %v1950
  %2890 = vmatpush.msra.mxu0 %v1934
  %2891 = vmatmul.f32.gmra.mxu0 0.0
  %v2892 = vpop.f32.mrf.mxu0
  %v2893 = vadd.f32 0.0, %v2892
  %2894 = vdwg.mxu0
  %2895 = vmatpush.msra.mxu0 %v2430
  %2896 = vmatpush.msra.mxu0 %v2414
  %2897 = vmatpush.msra.mxu0 %v2398
  %2898 = vmatpush.msra.mxu0 %v2382
  %2899 = vmatpush.msra.mxu0 %v2366
  %2900 = vmatpush.msra.mxu0 %v2350
  %2901 = vmatpush.msra.mxu0 %v2334
  %2902 = vmatpush.msra.mxu0 %v2318
  %2903 = vmatpush.msra.mxu0 %v2302
  %2904 = vmatpush.msra.mxu0 %v2286
  %2905 = vmatpush.msra.mxu0 %v2270
  %2906 = vmatpush.msra.mxu0 %v2254
  %2907 = vmatpush.msra.mxu0 %v2238
  %2908 = vmatpush.msra.mxu0 %v2222
  %2909 = vmatpush.msra.mxu0 %v2206
  %2910 = vmatpush.msra.mxu0 %v2190
  %2911 = vmatmul.f32.gmra.mxu0 0.0
  %v2912 = vpop.f32.mrf.mxu0
  %v2913 = vadd.f32 %v2893, %v2912
  %2914 = vdwg.mxu0
  %2915 = vmatpush.msra.mxu0 %v2175
  %2916 = vmatpush.msra.mxu0 %v2159
  %2917 = vmatpush.msra.mxu0 %v2143
  %2918 = vmatpush.msra.mxu0 %v2127
  %2919 = vmatpush.msra.mxu0 %v2111
  %2920 = vmatpush.msra.mxu0 %v2095
  %2921 = vmatpush.msra.mxu0 %v2079
  %2922 = vmatpush.msra.mxu0 %v2063
  %2923 = vmatpush.msra.mxu0 %v2047
  %2924 = vmatpush.msra.mxu0 %v2031
  %2925 = vmatpush.msra.mxu0 %v2015
  %2926 = vmatpush.msra.mxu0 %v1999
  %2927 = vmatpush.msra.mxu0 %v1983
  %2928 = vmatpush.msra.mxu0 %v1967
  %2929 = vmatpush.msra.mxu0 %v1951
  %2930 = vmatpush.msra.mxu0 %v1935
  %2931 = vmatmul.f32.gmra.mxu0 0.0
  %v2932 = vpop.f32.mrf.mxu0
  %v2933 = vadd.f32 0.0, %v2932
  %2934 = vdwg.mxu0
  %2935 = vmatpush.msra.mxu0 %v2431
  %2936 = vmatpush.msra.mxu0 %v2415
  %2937 = vmatpush.msra.mxu0 %v2399
  %2938 = vmatpush.msra.mxu0 %v2383
  %2939 = vmatpush.msra.mxu0 %v2367
  %2940 = vmatpush.msra.mxu0 %v2351
  %2941 = vmatpush.msra.mxu0 %v2335
  %2942 = vmatpush.msra.mxu0 %v2319
  %2943 = vmatpush.msra.mxu0 %v2303
  %2944 = vmatpush.msra.mxu0 %v2287
  %2945 = vmatpush.msra.mxu0 %v2271
  %2946 = vmatpush.msra.mxu0 %v2255
  %2947 = vmatpush.msra.mxu0 %v2239
  %2948 = vmatpush.msra.mxu0 %v2223
  %2949 = vmatpush.msra.mxu0 %v2207
  %2950 = vmatpush.msra.mxu0 %v2191
  %2951 = vmatmul.f32.gmra.mxu0 0.0
  %v2952 = vpop.f32.mrf.mxu0
  %v2953 = vadd.f32 %v2933, %v2952
  %2954 = vdwg.mxu0
  %2955 = vmatpush.msra.mxu0 %v2176
  %2956 = vmatpush.msra.mxu0 %v2160
  %2957 = vmatpush.msra.mxu0 %v2144
  %2958 = vmatpush.msra.mxu0 %v2128
  %2959 = vmatpush.msra.mxu0 %v2112
  %2960 = vmatpush.msra.mxu0 %v2096
  %2961 = vmatpush.msra.mxu0 %v2080
  %2962 = vmatpush.msra.mxu0 %v2064
  %2963 = vmatpush.msra.mxu0 %v2048
  %2964 = vmatpush.msra.mxu0 %v2032
  %2965 = vmatpush.msra.mxu0 %v2016
  %2966 = vmatpush.msra.mxu0 %v2000
  %2967 = vmatpush.msra.mxu0 %v1984
  %2968 = vmatpush.msra.mxu0 %v1968
  %2969 = vmatpush.msra.mxu0 %v1952
  %2970 = vmatpush.msra.mxu0 %v1936
  %2971 = vmatmul.f32.gmra.mxu0 0.0
  %v2972 = vpop.f32.mrf.mxu0
  %v2973 = vadd.f32 0.0, %v2972
  %2974 = vdwg.mxu0
  %2975 = vmatpush.msra.mxu0 %v2432
  %2976 = vmatpush.msra.mxu0 %v2416
  %2977 = vmatpush.msra.mxu0 %v2400
  %2978 = vmatpush.msra.mxu0 %v2384
  %2979 = vmatpush.msra.mxu0 %v2368
  %2980 = vmatpush.msra.mxu0 %v2352
  %2981 = vmatpush.msra.mxu0 %v2336
  %2982 = vmatpush.msra.mxu0 %v2320
  %2983 = vmatpush.msra.mxu0 %v2304
  %2984 = vmatpush.msra.mxu0 %v2288
  %2985 = vmatpush.msra.mxu0 %v2272
  %2986 = vmatpush.msra.mxu0 %v2256
  %2987 = vmatpush.msra.mxu0 %v2240
  %2988 = vmatpush.msra.mxu0 %v2224
  %2989 = vmatpush.msra.mxu0 %v2208
  %2990 = vmatpush.msra.mxu0 %v2192
  %2991 = vmatmul.f32.gmra.mxu0 0.0
  %v2992 = vpop.f32.mrf.mxu0
  %v2993 = vadd.f32 %v2973, %v2992
  %2994 = vdwg.mxu0
  %2995 = vmatpush.msra.mxu0 %v2177
  %2996 = vmatpush.msra.mxu0 %v2161
  %2997 = vmatpush.msra.mxu0 %v2145
  %2998 = vmatpush.msra.mxu0 %v2129
  %2999 = vmatpush.msra.mxu0 %v2113
  %3000 = vmatpush.msra.mxu0 %v2097
  %3001 = vmatpush.msra.mxu0 %v2081
  %3002 = vmatpush.msra.mxu0 %v2065
  %3003 = vmatpush.msra.mxu0 %v2049
  %3004 = vmatpush.msra.mxu0 %v2033
  %3005 = vmatpush.msra.mxu0 %v2017
  %3006 = vmatpush.msra.mxu0 %v2001
  %3007 = vmatpush.msra.mxu0 %v1985
  %3008 = vmatpush.msra.mxu0 %v1969
  %3009 = vmatpush.msra.mxu0 %v1953
  %3010 = vmatpush.msra.mxu0 %v1937
  %3011 = vmatmul.f32.gmra.mxu0 0.0
  %v3012 = vpop.f32.mrf.mxu0
  %v3013 = vadd.f32 0.0, %v3012
  %3014 = vdwg.mxu0
  %3015 = vmatpush.msra.mxu0 %v2433
  %3016 = vmatpush.msra.mxu0 %v2417
  %3017 = vmatpush.msra.mxu0 %v2401
  %3018 = vmatpush.msra.mxu0 %v2385
  %3019 = vmatpush.msra.mxu0 %v2369
  %3020 = vmatpush.msra.mxu0 %v2353
  %3021 = vmatpush.msra.mxu0 %v2337
  %3022 = vmatpush.msra.mxu0 %v2321
  %3023 = vmatpush.msra.mxu0 %v2305
  %3024 = vmatpush.msra.mxu0 %v2289
  %3025 = vmatpush.msra.mxu0 %v2273
  %3026 = vmatpush.msra.mxu0 %v2257
  %3027 = vmatpush.msra.mxu0 %v2241
  %3028 = vmatpush.msra.mxu0 %v2225
  %3029 = vmatpush.msra.mxu0 %v2209
  %3030 = vmatpush.msra.mxu0 %v2193
  %3031 = vmatmul.f32.gmra.mxu0 0.0
  %v3032 = vpop.f32.mrf.mxu0
  %v3033 = vadd.f32 %v3013, %v3032
  %3034 = vdwg.mxu0
  %3035 = vmatpush.msra.mxu0 %v2178
  %3036 = vmatpush.msra.mxu0 %v2162
  %3037 = vmatpush.msra.mxu0 %v2146
  %3038 = vmatpush.msra.mxu0 %v2130
  %3039 = vmatpush.msra.mxu0 %v2114
  %3040 = vmatpush.msra.mxu0 %v2098
  %3041 = vmatpush.msra.mxu0 %v2082
  %3042 = vmatpush.msra.mxu0 %v2066
  %3043 = vmatpush.msra.mxu0 %v2050
  %3044 = vmatpush.msra.mxu0 %v2034
  %3045 = vmatpush.msra.mxu0 %v2018
  %3046 = vmatpush.msra.mxu0 %v2002
  %3047 = vmatpush.msra.mxu0 %v1986
  %3048 = vmatpush.msra.mxu0 %v1970
  %3049 = vmatpush.msra.mxu0 %v1954
  %3050 = vmatpush.msra.mxu0 %v1938
  %3051 = vmatmul.f32.gmra.mxu0 0.0
  %v3052 = vpop.f32.mrf.mxu0
  %v3053 = vadd.f32 0.0, %v3052
  %3054 = vdwg.mxu0
  %3055 = vmatpush.msra.mxu0 %v2434
  %3056 = vmatpush.msra.mxu0 %v2418
  %3057 = vmatpush.msra.mxu0 %v2402
  %3058 = vmatpush.msra.mxu0 %v2386
  %3059 = vmatpush.msra.mxu0 %v2370
  %3060 = vmatpush.msra.mxu0 %v2354
  %3061 = vmatpush.msra.mxu0 %v2338
  %3062 = vmatpush.msra.mxu0 %v2322
  %3063 = vmatpush.msra.mxu0 %v2306
  %3064 = vmatpush.msra.mxu0 %v2290
  %3065 = vmatpush.msra.mxu0 %v2274
  %3066 = vmatpush.msra.mxu0 %v2258
  %3067 = vmatpush.msra.mxu0 %v2242
  %3068 = vmatpush.msra.mxu0 %v2226
  %3069 = vmatpush.msra.mxu0 %v2210
  %3070 = vmatpush.msra.mxu0 %v2194
  %3071 = vmatmul.f32.gmra.mxu0 0.0
  %v3072 = vpop.f32.mrf.mxu0
  %v3073 = vadd.f32 %v3053, %v3072
  %3074 = vdwg.mxu0
  %v3075 = vsel %vm1076, %v2473, %v2793
  %v3076 = vsel %vm1076, %v2513, %v2833
  %v3077 = vsel %vm1076, %v2553, %v2873
  %v3078 = vsel %vm1076, %v2593, %v2913
  %v3079 = vsel %vm1076, %v2633, %v2953
  %v3080 = vsel %vm1076, %v2673, %v2993
  %v3081 = vsel %vm1076, %v2713, %v3033
  %v3082 = vsel %vm1076, %v2753, %v3073
  %v3083 = vld [vmem:[#allocation2] sm:$0xff]
  %v3084 = vld [vmem:[#allocation2 + $0x8] sm:$0xff]
  %v3085 = vld [vmem:[#allocation2 + $0x10] sm:$0xff]
  %v3086 = vld [vmem:[#allocation2 + $0x18] sm:$0xff]
  %3091 = vst [vmem:[#allocation1] ss:$2 sm:$0xff] %v3083
  %s3092 = scalar_lea.vmem [#allocation1], 16
  %3093 = vst [vmem:[%s3092] ss:$2 sm:$0xff] %v3084
  %s3094 = scalar_lea.vmem [#allocation1], 32
  %3095 = vst [vmem:[%s3094] ss:$2 sm:$0xff] %v3085
  %s3096 = scalar_lea.vmem [#allocation1], 48
  %3097 = vst [vmem:[%s3096] ss:$2 sm:$0xff] %v3086
  %v3098 = vld.sshfl [vmem:[#allocation1] sm:$0xff pattern:$0x75316420]
  %v3099 = vld.sshfl [vmem:[#allocation1 + $0x8] sm:$0xff pattern:$0x75316420]
  %v3100 = vld.sshfl [vmem:[#allocation1 + $0x10] sm:$0xff pattern:$0x75316420]
  %v3101 = vld.sshfl [vmem:[#allocation1 + $0x18] sm:$0xff pattern:$0x75316420]
  %v3102 = vld.sshfl [vmem:[#allocation1 + $0x20] sm:$0xff pattern:$0x75316420]
  %v3103 = vld.sshfl [vmem:[#allocation1 + $0x28] sm:$0xff pattern:$0x75316420]
  %v3104 = vld.sshfl [vmem:[#allocation1 + $0x30] sm:$0xff pattern:$0x75316420]
  %v3105 = vld.sshfl [vmem:[#allocation1 + $0x38] sm:$0xff pattern:$0x75316420]
  %v3114 = vadd.f32 %v3075, %v3098
  %v3115 = vadd.f32 %v3076, %v3099
  %v3116 = vadd.f32 %v3077, %v3100
  %v3117 = vadd.f32 %v3078, %v3101
  %v3118 = vadd.f32 %v3079, %v3102
  %v3119 = vadd.f32 %v3080, %v3103
  %v3120 = vadd.f32 %v3081, %v3104
  %v3121 = vadd.f32 %v3082, %v3105
  %v3122 = vmul.f32 %v3114, 0.5
  %v3123 = vmul.f32 %v3115, 0.5
  %v3124 = vtanh.pop %v3122
  %v3125 = vtanh.pop %v3123
  %v3126 = vadd.f32 %v3124, 1.0
  %v3127 = vadd.f32 %v3125, 1.0
  %v3128 = vmul.f32 %v3126, 0.5
  %v3129 = vmul.f32 %v3127, 0.5
  %v3130 = vmul.f32 %v3116, 0.5
  %v3131 = vmul.f32 %v3117, 0.5
  %v3132 = vtanh.pop %v3130
  %v3133 = vtanh.pop %v3131
  %v3134 = vadd.f32 %v3132, 1.0
  %v3135 = vadd.f32 %v3133, 1.0
  %v3136 = vmul.f32 %v3134, 0.5
  %v3137 = vmul.f32 %v3135, 0.5
  %v3138 = vtanh.pop %v3118
  %v3139 = vtanh.pop %v3119
  %v3140 = vmul.f32 %v3120, 0.5
  %v3141 = vmul.f32 %v3121, 0.5
  %v3142 = vtanh.pop %v3140
  %v3143 = vtanh.pop %v3141
  %v3144 = vadd.f32 %v3142, 1.0
  %v3145 = vadd.f32 %v3143, 1.0
  %v3146 = vmul.f32 %v3144, 0.5
  %v3147 = vmul.f32 %v3145, 0.5
  %v3148 = vmul.f32 %v3136, 0.0
  %v3149 = vmul.f32 %v3137, 0.0
  %v3150 = vmul.f32 %v3128, %v3138
  %v3151 = vmul.f32 %v3129, %v3139
  %v3152 = vadd.f32 %v3148, %v3150
  %v3153 = vadd.f32 %v3149, %v3151
  %v3154 = vtanh.pop %v3152
  %v3155 = vtanh.pop %v3153
  %v3156 = vmul.f32 %v3146, %v3154
  %v3157 = vmul.f32 %v3147, %v3155
  %3158 = vmatpush.msra.mxu0 %v2163
  %3159 = vmatpush.msra.mxu0 %v2147
  %3160 = vmatpush.msra.mxu0 %v2131
  %3161 = vmatpush.msra.mxu0 %v2115
  %3162 = vmatpush.msra.mxu0 %v2099
  %3163 = vmatpush.msra.mxu0 %v2083
  %3164 = vmatpush.msra.mxu0 %v2067
  %3165 = vmatpush.msra.mxu0 %v2051
  %3166 = vmatpush.msra.mxu0 %v2035
  %3167 = vmatpush.msra.mxu0 %v2019
  %3168 = vmatpush.msra.mxu0 %v2003
  %3169 = vmatpush.msra.mxu0 %v1987
  %3170 = vmatpush.msra.mxu0 %v1971
  %3171 = vmatpush.msra.mxu0 %v1955
  %3172 = vmatpush.msra.mxu0 %v1939
  %3173 = vmatpush.msra.mxu0 %v1923
  %3174 = vmatmul.f32.gmra.mxu0 %v3156
  %v3175 = vpop.f32.mrf.mxu0
  %v3176 = vadd.f32 0.0, %v3175
  %3177 = vdwg.mxu0
  %3178 = vmatpush.msra.mxu0 %v2419
  %3179 = vmatpush.msra.mxu0 %v2403
  %3180 = vmatpush.msra.mxu0 %v2387
  %3181 = vmatpush.msra.mxu0 %v2371
  %3182 = vmatpush.msra.mxu0 %v2355
  %3183 = vmatpush.msra.mxu0 %v2339
  %3184 = vmatpush.msra.mxu0 %v2323
  %3185 = vmatpush.msra.mxu0 %v2307
  %3186 = vmatpush.msra.mxu0 %v2291
  %3187 = vmatpush.msra.mxu0 %v2275
  %3188 = vmatpush.msra.mxu0 %v2259
  %3189 = vmatpush.msra.mxu0 %v2243
  %3190 = vmatpush.msra.mxu0 %v2227
  %3191 = vmatpush.msra.mxu0 %v2211
  %3192 = vmatpush.msra.mxu0 %v2195
  %3193 = vmatpush.msra.mxu0 %v2179
  %3194 = vmatmul.f32.gmra.mxu0 %v3157
  %v3195 = vpop.f32.mrf.mxu0
  %v3196 = vadd.f32 %v3176, %v3195
  %3197 = vdwg.mxu0
  %3198 = vmatpush.msra.mxu0 %v2164
  %3199 = vmatpush.msra.mxu0 %v2148
  %3200 = vmatpush.msra.mxu0 %v2132
  %3201 = vmatpush.msra.mxu0 %v2116
  %3202 = vmatpush.msra.mxu0 %v2100
  %3203 = vmatpush.msra.mxu0 %v2084
  %3204 = vmatpush.msra.mxu0 %v2068
  %3205 = vmatpush.msra.mxu0 %v2052
  %3206 = vmatpush.msra.mxu0 %v2036
  %3207 = vmatpush.msra.mxu0 %v2020
  %3208 = vmatpush.msra.mxu0 %v2004
  %3209 = vmatpush.msra.mxu0 %v1988
  %3210 = vmatpush.msra.mxu0 %v1972
  %3211 = vmatpush.msra.mxu0 %v1956
  %3212 = vmatpush.msra.mxu0 %v1940
  %3213 = vmatpush.msra.mxu0 %v1924
  %3214 = vmatmul.f32.gmra.mxu0 %v3156
  %v3215 = vpop.f32.mrf.mxu0
  %v3216 = vadd.f32 0.0, %v3215
  %3217 = vdwg.mxu0
  %3218 = vmatpush.msra.mxu0 %v2420
  %3219 = vmatpush.msra.mxu0 %v2404
  %3220 = vmatpush.msra.mxu0 %v2388
  %3221 = vmatpush.msra.mxu0 %v2372
  %3222 = vmatpush.msra.mxu0 %v2356
  %3223 = vmatpush.msra.mxu0 %v2340
  %3224 = vmatpush.msra.mxu0 %v2324
  %3225 = vmatpush.msra.mxu0 %v2308
  %3226 = vmatpush.msra.mxu0 %v2292
  %3227 = vmatpush.msra.mxu0 %v2276
  %3228 = vmatpush.msra.mxu0 %v2260
  %3229 = vmatpush.msra.mxu0 %v2244
  %3230 = vmatpush.msra.mxu0 %v2228
  %3231 = vmatpush.msra.mxu0 %v2212
  %3232 = vmatpush.msra.mxu0 %v2196
  %3233 = vmatpush.msra.mxu0 %v2180
  %3234 = vmatmul.f32.gmra.mxu0 %v3157
  %v3235 = vpop.f32.mrf.mxu0
  %v3236 = vadd.f32 %v3216, %v3235
  %3237 = vdwg.mxu0
  %3238 = vmatpush.msra.mxu0 %v2165
  %3239 = vmatpush.msra.mxu0 %v2149
  %3240 = vmatpush.msra.mxu0 %v2133
  %3241 = vmatpush.msra.mxu0 %v2117
  %3242 = vmatpush.msra.mxu0 %v2101
  %3243 = vmatpush.msra.mxu0 %v2085
  %3244 = vmatpush.msra.mxu0 %v2069
  %3245 = vmatpush.msra.mxu0 %v2053
  %3246 = vmatpush.msra.mxu0 %v2037
  %3247 = vmatpush.msra.mxu0 %v2021
  %3248 = vmatpush.msra.mxu0 %v2005
  %3249 = vmatpush.msra.mxu0 %v1989
  %3250 = vmatpush.msra.mxu0 %v1973
  %3251 = vmatpush.msra.mxu0 %v1957
  %3252 = vmatpush.msra.mxu0 %v1941
  %3253 = vmatpush.msra.mxu0 %v1925
  %3254 = vmatmul.f32.gmra.mxu0 %v3156
  %v3255 = vpop.f32.mrf.mxu0
  %v3256 = vadd.f32 0.0, %v3255
  %3257 = vdwg.mxu0
  %3258 = vmatpush.msra.mxu0 %v2421
  %3259 = vmatpush.msra.mxu0 %v2405
  %3260 = vmatpush.msra.mxu0 %v2389
  %3261 = vmatpush.msra.mxu0 %v2373
  %3262 = vmatpush.msra.mxu0 %v2357
  %3263 = vmatpush.msra.mxu0 %v2341
  %3264 = vmatpush.msra.mxu0 %v2325
  %3265 = vmatpush.msra.mxu0 %v2309
  %3266 = vmatpush.msra.mxu0 %v2293
  %3267 = vmatpush.msra.mxu0 %v2277
  %3268 = vmatpush.msra.mxu0 %v2261
  %3269 = vmatpush.msra.mxu0 %v2245
  %3270 = vmatpush.msra.mxu0 %v2229
  %3271 = vmatpush.msra.mxu0 %v2213
  %3272 = vmatpush.msra.mxu0 %v2197
  %3273 = vmatpush.msra.mxu0 %v2181
  %3274 = vmatmul.f32.gmra.mxu0 %v3157
  %v3275 = vpop.f32.mrf.mxu0
  %v3276 = vadd.f32 %v3256, %v3275
  %3277 = vdwg.mxu0
  %3278 = vmatpush.msra.mxu0 %v2166
  %3279 = vmatpush.msra.mxu0 %v2150
  %3280 = vmatpush.msra.mxu0 %v2134
  %3281 = vmatpush.msra.mxu0 %v2118
  %3282 = vmatpush.msra.mxu0 %v2102
  %3283 = vmatpush.msra.mxu0 %v2086
  %3284 = vmatpush.msra.mxu0 %v2070
  %3285 = vmatpush.msra.mxu0 %v2054
  %3286 = vmatpush.msra.mxu0 %v2038
  %3287 = vmatpush.msra.mxu0 %v2022
  %3288 = vmatpush.msra.mxu0 %v2006
  %3289 = vmatpush.msra.mxu0 %v1990
  %3290 = vmatpush.msra.mxu0 %v1974
  %3291 = vmatpush.msra.mxu0 %v1958
  %3292 = vmatpush.msra.mxu0 %v1942
  %3293 = vmatpush.msra.mxu0 %v1926
  %3294 = vmatmul.f32.gmra.mxu0 %v3156
  %v3295 = vpop.f32.mrf.mxu0
  %v3296 = vadd.f32 0.0, %v3295
  %3297 = vdwg.mxu0
  %3298 = vmatpush.msra.mxu0 %v2422
  %3299 = vmatpush.msra.mxu0 %v2406
  %3300 = vmatpush.msra.mxu0 %v2390
  %3301 = vmatpush.msra.mxu0 %v2374
  %3302 = vmatpush.msra.mxu0 %v2358
  %3303 = vmatpush.msra.mxu0 %v2342
  %3304 = vmatpush.msra.mxu0 %v2326
  %3305 = vmatpush.msra.mxu0 %v2310
  %3306 = vmatpush.msra.mxu0 %v2294
  %3307 = vmatpush.msra.mxu0 %v2278
  %3308 = vmatpush.msra.mxu0 %v2262
  %3309 = vmatpush.msra.mxu0 %v2246
  %3310 = vmatpush.msra.mxu0 %v2230
  %3311 = vmatpush.msra.mxu0 %v2214
  %3312 = vmatpush.msra.mxu0 %v2198
  %3313 = vmatpush.msra.mxu0 %v2182
  %3314 = vmatmul.f32.gmra.mxu0 %v3157
  %v3315 = vpop.f32.mrf.mxu0
  %v3316 = vadd.f32 %v3296, %v3315
  %3317 = vdwg.mxu0
  %3318 = vmatpush.msra.mxu0 %v2167
  %3319 = vmatpush.msra.mxu0 %v2151
  %3320 = vmatpush.msra.mxu0 %v2135
  %3321 = vmatpush.msra.mxu0 %v2119
  %3322 = vmatpush.msra.mxu0 %v2103
  %3323 = vmatpush.msra.mxu0 %v2087
  %3324 = vmatpush.msra.mxu0 %v2071
  %3325 = vmatpush.msra.mxu0 %v2055
  %3326 = vmatpush.msra.mxu0 %v2039
  %3327 = vmatpush.msra.mxu0 %v2023
  %3328 = vmatpush.msra.mxu0 %v2007
  %3329 = vmatpush.msra.mxu0 %v1991
  %3330 = vmatpush.msra.mxu0 %v1975
  %3331 = vmatpush.msra.mxu0 %v1959
  %3332 = vmatpush.msra.mxu0 %v1943
  %3333 = vmatpush.msra.mxu0 %v1927
  %3334 = vmatmul.f32.gmra.mxu0 %v3156
  %v3335 = vpop.f32.mrf.mxu0
  %v3336 = vadd.f32 0.0, %v3335
  %3337 = vdwg.mxu0
  %3338 = vmatpush.msra.mxu0 %v2423
  %3339 = vmatpush.msra.mxu0 %v2407
  %3340 = vmatpush.msra.mxu0 %v2391
  %3341 = vmatpush.msra.mxu0 %v2375
  %3342 = vmatpush.msra.mxu0 %v2359
  %3343 = vmatpush.msra.mxu0 %v2343
  %3344 = vmatpush.msra.mxu0 %v2327
  %3345 = vmatpush.msra.mxu0 %v2311
  %3346 = vmatpush.msra.mxu0 %v2295
  %3347 = vmatpush.msra.mxu0 %v2279
  %3348 = vmatpush.msra.mxu0 %v2263
  %3349 = vmatpush.msra.mxu0 %v2247
  %3350 = vmatpush.msra.mxu0 %v2231
  %3351 = vmatpush.msra.mxu0 %v2215
  %3352 = vmatpush.msra.mxu0 %v2199
  %3353 = vmatpush.msra.mxu0 %v2183
  %3354 = vmatmul.f32.gmra.mxu0 %v3157
  %v3355 = vpop.f32.mrf.mxu0
  %v3356 = vadd.f32 %v3336, %v3355
  %3357 = vdwg.mxu0
  %3358 = vmatpush.msra.mxu0 %v2168
  %3359 = vmatpush.msra.mxu0 %v2152
  %3360 = vmatpush.msra.mxu0 %v2136
  %3361 = vmatpush.msra.mxu0 %v2120
  %3362 = vmatpush.msra.mxu0 %v2104
  %3363 = vmatpush.msra.mxu0 %v2088
  %3364 = vmatpush.msra.mxu0 %v2072
  %3365 = vmatpush.msra.mxu0 %v2056
  %3366 = vmatpush.msra.mxu0 %v2040
  %3367 = vmatpush.msra.mxu0 %v2024
  %3368 = vmatpush.msra.mxu0 %v2008
  %3369 = vmatpush.msra.mxu0 %v1992
  %3370 = vmatpush.msra.mxu0 %v1976
  %3371 = vmatpush.msra.mxu0 %v1960
  %3372 = vmatpush.msra.mxu0 %v1944
  %3373 = vmatpush.msra.mxu0 %v1928
  %3374 = vmatmul.f32.gmra.mxu0 %v3156
  %v3375 = vpop.f32.mrf.mxu0
  %v3376 = vadd.f32 0.0, %v3375
  %3377 = vdwg.mxu0
  %3378 = vmatpush.msra.mxu0 %v2424
  %3379 = vmatpush.msra.mxu0 %v2408
  %3380 = vmatpush.msra.mxu0 %v2392
  %3381 = vmatpush.msra.mxu0 %v2376
  %3382 = vmatpush.msra.mxu0 %v2360
  %3383 = vmatpush.msra.mxu0 %v2344
  %3384 = vmatpush.msra.mxu0 %v2328
  %3385 = vmatpush.msra.mxu0 %v2312
  %3386 = vmatpush.msra.mxu0 %v2296
  %3387 = vmatpush.msra.mxu0 %v2280
  %3388 = vmatpush.msra.mxu0 %v2264
  %3389 = vmatpush.msra.mxu0 %v2248
  %3390 = vmatpush.msra.mxu0 %v2232
  %3391 = vmatpush.msra.mxu0 %v2216
  %3392 = vmatpush.msra.mxu0 %v2200
  %3393 = vmatpush.msra.mxu0 %v2184
  %3394 = vmatmul.f32.gmra.mxu0 %v3157
  %v3395 = vpop.f32.mrf.mxu0
  %v3396 = vadd.f32 %v3376, %v3395
  %3397 = vdwg.mxu0
  %3398 = vmatpush.msra.mxu0 %v2169
  %3399 = vmatpush.msra.mxu0 %v2153
  %3400 = vmatpush.msra.mxu0 %v2137
  %3401 = vmatpush.msra.mxu0 %v2121
  %3402 = vmatpush.msra.mxu0 %v2105
  %3403 = vmatpush.msra.mxu0 %v2089
  %3404 = vmatpush.msra.mxu0 %v2073
  %3405 = vmatpush.msra.mxu0 %v2057
  %3406 = vmatpush.msra.mxu0 %v2041
  %3407 = vmatpush.msra.mxu0 %v2025
  %3408 = vmatpush.msra.mxu0 %v2009
  %3409 = vmatpush.msra.mxu0 %v1993
  %3410 = vmatpush.msra.mxu0 %v1977
  %3411 = vmatpush.msra.mxu0 %v1961
  %3412 = vmatpush.msra.mxu0 %v1945
  %3413 = vmatpush.msra.mxu0 %v1929
  %3414 = vmatmul.f32.gmra.mxu0 %v3156
  %v3415 = vpop.f32.mrf.mxu0
  %v3416 = vadd.f32 0.0, %v3415
  %3417 = vdwg.mxu0
  %3418 = vmatpush.msra.mxu0 %v2425
  %3419 = vmatpush.msra.mxu0 %v2409
  %3420 = vmatpush.msra.mxu0 %v2393
  %3421 = vmatpush.msra.mxu0 %v2377
  %3422 = vmatpush.msra.mxu0 %v2361
  %3423 = vmatpush.msra.mxu0 %v2345
  %3424 = vmatpush.msra.mxu0 %v2329
  %3425 = vmatpush.msra.mxu0 %v2313
  %3426 = vmatpush.msra.mxu0 %v2297
  %3427 = vmatpush.msra.mxu0 %v2281
  %3428 = vmatpush.msra.mxu0 %v2265
  %3429 = vmatpush.msra.mxu0 %v2249
  %3430 = vmatpush.msra.mxu0 %v2233
  %3431 = vmatpush.msra.mxu0 %v2217
  %3432 = vmatpush.msra.mxu0 %v2201
  %3433 = vmatpush.msra.mxu0 %v2185
  %3434 = vmatmul.f32.gmra.mxu0 %v3157
  %v3435 = vpop.f32.mrf.mxu0
  %v3436 = vadd.f32 %v3416, %v3435
  %3437 = vdwg.mxu0
  %3438 = vmatpush.msra.mxu0 %v2170
  %3439 = vmatpush.msra.mxu0 %v2154
  %3440 = vmatpush.msra.mxu0 %v2138
  %3441 = vmatpush.msra.mxu0 %v2122
  %3442 = vmatpush.msra.mxu0 %v2106
  %3443 = vmatpush.msra.mxu0 %v2090
  %3444 = vmatpush.msra.mxu0 %v2074
  %3445 = vmatpush.msra.mxu0 %v2058
  %3446 = vmatpush.msra.mxu0 %v2042
  %3447 = vmatpush.msra.mxu0 %v2026
  %3448 = vmatpush.msra.mxu0 %v2010
  %3449 = vmatpush.msra.mxu0 %v1994
  %3450 = vmatpush.msra.mxu0 %v1978
  %3451 = vmatpush.msra.mxu0 %v1962
  %3452 = vmatpush.msra.mxu0 %v1946
  %3453 = vmatpush.msra.mxu0 %v1930
  %3454 = vmatmul.f32.gmra.mxu0 %v3156
  %v3455 = vpop.f32.mrf.mxu0
  %v3456 = vadd.f32 0.0, %v3455
  %3457 = vdwg.mxu0
  %3458 = vmatpush.msra.mxu0 %v2426
  %3459 = vmatpush.msra.mxu0 %v2410
  %3460 = vmatpush.msra.mxu0 %v2394
  %3461 = vmatpush.msra.mxu0 %v2378
  %3462 = vmatpush.msra.mxu0 %v2362
  %3463 = vmatpush.msra.mxu0 %v2346
  %3464 = vmatpush.msra.mxu0 %v2330
  %3465 = vmatpush.msra.mxu0 %v2314
  %3466 = vmatpush.msra.mxu0 %v2298
  %3467 = vmatpush.msra.mxu0 %v2282
  %3468 = vmatpush.msra.mxu0 %v2266
  %3469 = vmatpush.msra.mxu0 %v2250
  %3470 = vmatpush.msra.mxu0 %v2234
  %3471 = vmatpush.msra.mxu0 %v2218
  %3472 = vmatpush.msra.mxu0 %v2202
  %3473 = vmatpush.msra.mxu0 %v2186
  %3474 = vmatmul.f32.gmra.mxu0 %v3157
  %v3475 = vpop.f32.mrf.mxu0
  %v3476 = vadd.f32 %v3456, %v3475
  %3477 = vdwg.mxu0
  %3478 = vmatpush.msra.mxu0 %v2171
  %3479 = vmatpush.msra.mxu0 %v2155
  %3480 = vmatpush.msra.mxu0 %v2139
  %3481 = vmatpush.msra.mxu0 %v2123
  %3482 = vmatpush.msra.mxu0 %v2107
  %3483 = vmatpush.msra.mxu0 %v2091
  %3484 = vmatpush.msra.mxu0 %v2075
  %3485 = vmatpush.msra.mxu0 %v2059
  %3486 = vmatpush.msra.mxu0 %v2043
  %3487 = vmatpush.msra.mxu0 %v2027
  %3488 = vmatpush.msra.mxu0 %v2011
  %3489 = vmatpush.msra.mxu0 %v1995
  %3490 = vmatpush.msra.mxu0 %v1979
  %3491 = vmatpush.msra.mxu0 %v1963
  %3492 = vmatpush.msra.mxu0 %v1947
  %3493 = vmatpush.msra.mxu0 %v1931
  %3494 = vmatmul.f32.gmra.mxu0 %v3156
  %v3495 = vpop.f32.mrf.mxu0
  %v3496 = vadd.f32 0.0, %v3495
  %3497 = vdwg.mxu0
  %3498 = vmatpush.msra.mxu0 %v2427
  %3499 = vmatpush.msra.mxu0 %v2411
  %3500 = vmatpush.msra.mxu0 %v2395
  %3501 = vmatpush.msra.mxu0 %v2379
  %3502 = vmatpush.msra.mxu0 %v2363
  %3503 = vmatpush.msra.mxu0 %v2347
  %3504 = vmatpush.msra.mxu0 %v2331
  %3505 = vmatpush.msra.mxu0 %v2315
  %3506 = vmatpush.msra.mxu0 %v2299
  %3507 = vmatpush.msra.mxu0 %v2283
  %3508 = vmatpush.msra.mxu0 %v2267
  %3509 = vmatpush.msra.mxu0 %v2251
  %3510 = vmatpush.msra.mxu0 %v2235
  %3511 = vmatpush.msra.mxu0 %v2219
  %3512 = vmatpush.msra.mxu0 %v2203
  %3513 = vmatpush.msra.mxu0 %v2187
  %3514 = vmatmul.f32.gmra.mxu0 %v3157
  %v3515 = vpop.f32.mrf.mxu0
  %v3516 = vadd.f32 %v3496, %v3515
  %3517 = vdwg.mxu0
  %3518 = vmatpush.msra.mxu0 %v2172
  %3519 = vmatpush.msra.mxu0 %v2156
  %3520 = vmatpush.msra.mxu0 %v2140
  %3521 = vmatpush.msra.mxu0 %v2124
  %3522 = vmatpush.msra.mxu0 %v2108
  %3523 = vmatpush.msra.mxu0 %v2092
  %3524 = vmatpush.msra.mxu0 %v2076
  %3525 = vmatpush.msra.mxu0 %v2060
  %3526 = vmatpush.msra.mxu0 %v2044
  %3527 = vmatpush.msra.mxu0 %v2028
  %3528 = vmatpush.msra.mxu0 %v2012
  %3529 = vmatpush.msra.mxu0 %v1996
  %3530 = vmatpush.msra.mxu0 %v1980
  %3531 = vmatpush.msra.mxu0 %v1964
  %3532 = vmatpush.msra.mxu0 %v1948
  %3533 = vmatpush.msra.mxu0 %v1932
  %3534 = vmatmul.f32.gmra.mxu0 %v3156
  %v3535 = vpop.f32.mrf.mxu0
  %v3536 = vadd.f32 0.0, %v3535
  %3537 = vdwg.mxu0
  %3538 = vmatpush.msra.mxu0 %v2428
  %3539 = vmatpush.msra.mxu0 %v2412
  %3540 = vmatpush.msra.mxu0 %v2396
  %3541 = vmatpush.msra.mxu0 %v2380
  %3542 = vmatpush.msra.mxu0 %v2364
  %3543 = vmatpush.msra.mxu0 %v2348
  %3544 = vmatpush.msra.mxu0 %v2332
  %3545 = vmatpush.msra.mxu0 %v2316
  %3546 = vmatpush.msra.mxu0 %v2300
  %3547 = vmatpush.msra.mxu0 %v2284
  %3548 = vmatpush.msra.mxu0 %v2268
  %3549 = vmatpush.msra.mxu0 %v2252
  %3550 = vmatpush.msra.mxu0 %v2236
  %3551 = vmatpush.msra.mxu0 %v2220
  %3552 = vmatpush.msra.mxu0 %v2204
  %3553 = vmatpush.msra.mxu0 %v2188
  %3554 = vmatmul.f32.gmra.mxu0 %v3157
  %v3555 = vpop.f32.mrf.mxu0
  %v3556 = vadd.f32 %v3536, %v3555
  %3557 = vdwg.mxu0
  %3558 = vmatpush.msra.mxu0 %v2173
  %3559 = vmatpush.msra.mxu0 %v2157
  %3560 = vmatpush.msra.mxu0 %v2141
  %3561 = vmatpush.msra.mxu0 %v2125
  %3562 = vmatpush.msra.mxu0 %v2109
  %3563 = vmatpush.msra.mxu0 %v2093
  %3564 = vmatpush.msra.mxu0 %v2077
  %3565 = vmatpush.msra.mxu0 %v2061
  %3566 = vmatpush.msra.mxu0 %v2045
  %3567 = vmatpush.msra.mxu0 %v2029
  %3568 = vmatpush.msra.mxu0 %v2013
  %3569 = vmatpush.msra.mxu0 %v1997
  %3570 = vmatpush.msra.mxu0 %v1981
  %3571 = vmatpush.msra.mxu0 %v1965
  %3572 = vmatpush.msra.mxu0 %v1949
  %3573 = vmatpush.msra.mxu0 %v1933
  %3574 = vmatmul.f32.gmra.mxu0 %v3156
  %v3575 = vpop.f32.mrf.mxu0
  %v3576 = vadd.f32 0.0, %v3575
  %3577 = vdwg.mxu0
  %3578 = vmatpush.msra.mxu0 %v2429
  %3579 = vmatpush.msra.mxu0 %v2413
  %3580 = vmatpush.msra.mxu0 %v2397
  %3581 = vmatpush.msra.mxu0 %v2381
  %3582 = vmatpush.msra.mxu0 %v2365
  %3583 = vmatpush.msra.mxu0 %v2349
  %3584 = vmatpush.msra.mxu0 %v2333
  %3585 = vmatpush.msra.mxu0 %v2317
  %3586 = vmatpush.msra.mxu0 %v2301
  %3587 = vmatpush.msra.mxu0 %v2285
  %3588 = vmatpush.msra.mxu0 %v2269
  %3589 = vmatpush.msra.mxu0 %v2253
  %3590 = vmatpush.msra.mxu0 %v2237
  %3591 = vmatpush.msra.mxu0 %v2221
  %3592 = vmatpush.msra.mxu0 %v2205
  %3593 = vmatpush.msra.mxu0 %v2189
  %3594 = vmatmul.f32.gmra.mxu0 %v3157
  %v3595 = vpop.f32.mrf.mxu0
  %v3596 = vadd.f32 %v3576, %v3595
  %3597 = vdwg.mxu0
  %3598 = vmatpush.msra.mxu0 %v2174
  %3599 = vmatpush.msra.mxu0 %v2158
  %3600 = vmatpush.msra.mxu0 %v2142
  %3601 = vmatpush.msra.mxu0 %v2126
  %3602 = vmatpush.msra.mxu0 %v2110
  %3603 = vmatpush.msra.mxu0 %v2094
  %3604 = vmatpush.msra.mxu0 %v2078
  %3605 = vmatpush.msra.mxu0 %v2062
  %3606 = vmatpush.msra.mxu0 %v2046
  %3607 = vmatpush.msra.mxu0 %v2030
  %3608 = vmatpush.msra.mxu0 %v2014
  %3609 = vmatpush.msra.mxu0 %v1998
  %3610 = vmatpush.msra.mxu0 %v1982
  %3611 = vmatpush.msra.mxu0 %v1966
  %3612 = vmatpush.msra.mxu0 %v1950
  %3613 = vmatpush.msra.mxu0 %v1934
  %3614 = vmatmul.f32.gmra.mxu0 %v3156
  %v3615 = vpop.f32.mrf.mxu0
  %v3616 = vadd.f32 0.0, %v3615
  %3617 = vdwg.mxu0
  %3618 = vmatpush.msra.mxu0 %v2430
  %3619 = vmatpush.msra.mxu0 %v2414
  %3620 = vmatpush.msra.mxu0 %v2398
  %3621 = vmatpush.msra.mxu0 %v2382
  %3622 = vmatpush.msra.mxu0 %v2366
  %3623 = vmatpush.msra.mxu0 %v2350
  %3624 = vmatpush.msra.mxu0 %v2334
  %3625 = vmatpush.msra.mxu0 %v2318
  %3626 = vmatpush.msra.mxu0 %v2302
  %3627 = vmatpush.msra.mxu0 %v2286
  %3628 = vmatpush.msra.mxu0 %v2270
  %3629 = vmatpush.msra.mxu0 %v2254
  %3630 = vmatpush.msra.mxu0 %v2238
  %3631 = vmatpush.msra.mxu0 %v2222
  %3632 = vmatpush.msra.mxu0 %v2206
  %3633 = vmatpush.msra.mxu0 %v2190
  %3634 = vmatmul.f32.gmra.mxu0 %v3157
  %v3635 = vpop.f32.mrf.mxu0
  %v3636 = vadd.f32 %v3616, %v3635
  %3637 = vdwg.mxu0
  %3638 = vmatpush.msra.mxu0 %v2175
  %3639 = vmatpush.msra.mxu0 %v2159
  %3640 = vmatpush.msra.mxu0 %v2143
  %3641 = vmatpush.msra.mxu0 %v2127
  %3642 = vmatpush.msra.mxu0 %v2111
  %3643 = vmatpush.msra.mxu0 %v2095
  %3644 = vmatpush.msra.mxu0 %v2079
  %3645 = vmatpush.msra.mxu0 %v2063
  %3646 = vmatpush.msra.mxu0 %v2047
  %3647 = vmatpush.msra.mxu0 %v2031
  %3648 = vmatpush.msra.mxu0 %v2015
  %3649 = vmatpush.msra.mxu0 %v1999
  %3650 = vmatpush.msra.mxu0 %v1983
  %3651 = vmatpush.msra.mxu0 %v1967
  %3652 = vmatpush.msra.mxu0 %v1951
  %3653 = vmatpush.msra.mxu0 %v1935
  %3654 = vmatmul.f32.gmra.mxu0 %v3156
  %v3655 = vpop.f32.mrf.mxu0
  %v3656 = vadd.f32 0.0, %v3655
  %3657 = vdwg.mxu0
  %3658 = vmatpush.msra.mxu0 %v2431
  %3659 = vmatpush.msra.mxu0 %v2415
  %3660 = vmatpush.msra.mxu0 %v2399
  %3661 = vmatpush.msra.mxu0 %v2383
  %3662 = vmatpush.msra.mxu0 %v2367
  %3663 = vmatpush.msra.mxu0 %v2351
  %3664 = vmatpush.msra.mxu0 %v2335
  %3665 = vmatpush.msra.mxu0 %v2319
  %3666 = vmatpush.msra.mxu0 %v2303
  %3667 = vmatpush.msra.mxu0 %v2287
  %3668 = vmatpush.msra.mxu0 %v2271
  %3669 = vmatpush.msra.mxu0 %v2255
  %3670 = vmatpush.msra.mxu0 %v2239
  %3671 = vmatpush.msra.mxu0 %v2223
  %3672 = vmatpush.msra.mxu0 %v2207
  %3673 = vmatpush.msra.mxu0 %v2191
  %3674 = vmatmul.f32.gmra.mxu0 %v3157
  %v3675 = vpop.f32.mrf.mxu0
  %v3676 = vadd.f32 %v3656, %v3675
  %3677 = vdwg.mxu0
  %3678 = vmatpush.msra.mxu0 %v2176
  %3679 = vmatpush.msra.mxu0 %v2160
  %3680 = vmatpush.msra.mxu0 %v2144
  %3681 = vmatpush.msra.mxu0 %v2128
  %3682 = vmatpush.msra.mxu0 %v2112
  %3683 = vmatpush.msra.mxu0 %v2096
  %3684 = vmatpush.msra.mxu0 %v2080
  %3685 = vmatpush.msra.mxu0 %v2064
  %3686 = vmatpush.msra.mxu0 %v2048
  %3687 = vmatpush.msra.mxu0 %v2032
  %3688 = vmatpush.msra.mxu0 %v2016
  %3689 = vmatpush.msra.mxu0 %v2000
  %3690 = vmatpush.msra.mxu0 %v1984
  %3691 = vmatpush.msra.mxu0 %v1968
  %3692 = vmatpush.msra.mxu0 %v1952
  %3693 = vmatpush.msra.mxu0 %v1936
  %3694 = vmatmul.f32.gmra.mxu0 %v3156
  %v3695 = vpop.f32.mrf.mxu0
  %v3696 = vadd.f32 0.0, %v3695
  %3697 = vdwg.mxu0
  %3698 = vmatpush.msra.mxu0 %v2432
  %3699 = vmatpush.msra.mxu0 %v2416
  %3700 = vmatpush.msra.mxu0 %v2400
  %3701 = vmatpush.msra.mxu0 %v2384
  %3702 = vmatpush.msra.mxu0 %v2368
  %3703 = vmatpush.msra.mxu0 %v2352
  %3704 = vmatpush.msra.mxu0 %v2336
  %3705 = vmatpush.msra.mxu0 %v2320
  %3706 = vmatpush.msra.mxu0 %v2304
  %3707 = vmatpush.msra.mxu0 %v2288
  %3708 = vmatpush.msra.mxu0 %v2272
  %3709 = vmatpush.msra.mxu0 %v2256
  %3710 = vmatpush.msra.mxu0 %v2240
  %3711 = vmatpush.msra.mxu0 %v2224
  %3712 = vmatpush.msra.mxu0 %v2208
  %3713 = vmatpush.msra.mxu0 %v2192
  %3714 = vmatmul.f32.gmra.mxu0 %v3157
  %v3715 = vpop.f32.mrf.mxu0
  %v3716 = vadd.f32 %v3696, %v3715
  %3717 = vdwg.mxu0
  %3718 = vmatpush.msra.mxu0 %v2177
  %3719 = vmatpush.msra.mxu0 %v2161
  %3720 = vmatpush.msra.mxu0 %v2145
  %3721 = vmatpush.msra.mxu0 %v2129
  %3722 = vmatpush.msra.mxu0 %v2113
  %3723 = vmatpush.msra.mxu0 %v2097
  %3724 = vmatpush.msra.mxu0 %v2081
  %3725 = vmatpush.msra.mxu0 %v2065
  %3726 = vmatpush.msra.mxu0 %v2049
  %3727 = vmatpush.msra.mxu0 %v2033
  %3728 = vmatpush.msra.mxu0 %v2017
  %3729 = vmatpush.msra.mxu0 %v2001
  %3730 = vmatpush.msra.mxu0 %v1985
  %3731 = vmatpush.msra.mxu0 %v1969
  %3732 = vmatpush.msra.mxu0 %v1953
  %3733 = vmatpush.msra.mxu0 %v1937
  %3734 = vmatmul.f32.gmra.mxu0 %v3156
  %v3735 = vpop.f32.mrf.mxu0
  %v3736 = vadd.f32 0.0, %v3735
  %3737 = vdwg.mxu0
  %3738 = vmatpush.msra.mxu0 %v2433
  %3739 = vmatpush.msra.mxu0 %v2417
  %3740 = vmatpush.msra.mxu0 %v2401
  %3741 = vmatpush.msra.mxu0 %v2385
  %3742 = vmatpush.msra.mxu0 %v2369
  %3743 = vmatpush.msra.mxu0 %v2353
  %3744 = vmatpush.msra.mxu0 %v2337
  %3745 = vmatpush.msra.mxu0 %v2321
  %3746 = vmatpush.msra.mxu0 %v2305
  %3747 = vmatpush.msra.mxu0 %v2289
  %3748 = vmatpush.msra.mxu0 %v2273
  %3749 = vmatpush.msra.mxu0 %v2257
  %3750 = vmatpush.msra.mxu0 %v2241
  %3751 = vmatpush.msra.mxu0 %v2225
  %3752 = vmatpush.msra.mxu0 %v2209
  %3753 = vmatpush.msra.mxu0 %v2193
  %3754 = vmatmul.f32.gmra.mxu0 %v3157
  %v3755 = vpop.f32.mrf.mxu0
  %v3756 = vadd.f32 %v3736, %v3755
  %3757 = vdwg.mxu0
  %3758 = vmatpush.msra.mxu0 %v2178
  %3759 = vmatpush.msra.mxu0 %v2162
  %3760 = vmatpush.msra.mxu0 %v2146
  %3761 = vmatpush.msra.mxu0 %v2130
  %3762 = vmatpush.msra.mxu0 %v2114
  %3763 = vmatpush.msra.mxu0 %v2098
  %3764 = vmatpush.msra.mxu0 %v2082
  %3765 = vmatpush.msra.mxu0 %v2066
  %3766 = vmatpush.msra.mxu0 %v2050
  %3767 = vmatpush.msra.mxu0 %v2034
  %3768 = vmatpush.msra.mxu0 %v2018
  %3769 = vmatpush.msra.mxu0 %v2002
  %3770 = vmatpush.msra.mxu0 %v1986
  %3771 = vmatpush.msra.mxu0 %v1970
  %3772 = vmatpush.msra.mxu0 %v1954
  %3773 = vmatpush.msra.mxu0 %v1938
  %3774 = vmatmul.f32.gmra.mxu0 %v3156
  %v3775 = vpop.f32.mrf.mxu0
  %v3776 = vadd.f32 0.0, %v3775
  %3777 = vdwg.mxu0
  %3778 = vmatpush.msra.mxu0 %v2434
  %3779 = vmatpush.msra.mxu0 %v2418
  %3780 = vmatpush.msra.mxu0 %v2402
  %3781 = vmatpush.msra.mxu0 %v2386
  %3782 = vmatpush.msra.mxu0 %v2370
  %3783 = vmatpush.msra.mxu0 %v2354
  %3784 = vmatpush.msra.mxu0 %v2338
  %3785 = vmatpush.msra.mxu0 %v2322
  %3786 = vmatpush.msra.mxu0 %v2306
  %3787 = vmatpush.msra.mxu0 %v2290
  %3788 = vmatpush.msra.mxu0 %v2274
  %3789 = vmatpush.msra.mxu0 %v2258
  %3790 = vmatpush.msra.mxu0 %v2242
  %3791 = vmatpush.msra.mxu0 %v2226
  %3792 = vmatpush.msra.mxu0 %v2210
  %3793 = vmatpush.msra.mxu0 %v2194
  %3794 = vmatmul.f32.gmra.mxu0 %v3157
  %v3795 = vpop.f32.mrf.mxu0
  %v3796 = vadd.f32 %v3776, %v3795
  %3797 = vdwg.mxu0
  %v3798 = vsel %vm1076, %v3196, %v3516
  %v3799 = vsel %vm1076, %v3236, %v3556
  %v3800 = vsel %vm1076, %v3276, %v3596
  %v3801 = vsel %vm1076, %v3316, %v3636
  %v3802 = vsel %vm1076, %v3356, %v3676
  %v3803 = vsel %vm1076, %v3396, %v3716
  %v3804 = vsel %vm1076, %v3436, %v3756
  %v3805 = vsel %vm1076, %v3476, %v3796
  %v3806 = vld [vmem:[%s1444] sm:$0xff]
  %v3807 = vld [vmem:[%s1444 + $0x8] sm:$0xff]
  %v3808 = vld [vmem:[%s1444 + $0x10] sm:$0xff]
  %v3809 = vld [vmem:[%s1444 + $0x18] sm:$0xff]
  %3814 = vst [vmem:[#allocation1] ss:$2 sm:$0xff] %v3806
  %s3815 = scalar_lea.vmem [#allocation1], 16
  %3816 = vst [vmem:[%s3815] ss:$2 sm:$0xff] %v3807
  %s3817 = scalar_lea.vmem [#allocation1], 32
  %3818 = vst [vmem:[%s3817] ss:$2 sm:$0xff] %v3808
  %s3819 = scalar_lea.vmem [#allocation1], 48
  %3820 = vst [vmem:[%s3819] ss:$2 sm:$0xff] %v3809
  %v3821 = vld.sshfl [vmem:[#allocation1] sm:$0xff pattern:$0x75316420]
  %v3822 = vld.sshfl [vmem:[#allocation1 + $0x8] sm:$0xff pattern:$0x75316420]
  %v3823 = vld.sshfl [vmem:[#allocation1 + $0x10] sm:$0xff pattern:$0x75316420]
  %v3824 = vld.sshfl [vmem:[#allocation1 + $0x18] sm:$0xff pattern:$0x75316420]
  %v3825 = vld.sshfl [vmem:[#allocation1 + $0x20] sm:$0xff pattern:$0x75316420]
  %v3826 = vld.sshfl [vmem:[#allocation1 + $0x28] sm:$0xff pattern:$0x75316420]
  %v3827 = vld.sshfl [vmem:[#allocation1 + $0x30] sm:$0xff pattern:$0x75316420]
  %v3828 = vld.sshfl [vmem:[#allocation1 + $0x38] sm:$0xff pattern:$0x75316420]
  %v3837 = vadd.f32 %v3798, %v3821
  %v3838 = vadd.f32 %v3799, %v3822
  %v3839 = vadd.f32 %v3800, %v3823
  %v3840 = vadd.f32 %v3801, %v3824
  %v3841 = vadd.f32 %v3802, %v3825
  %v3842 = vadd.f32 %v3803, %v3826
  %v3843 = vadd.f32 %v3804, %v3827
  %v3844 = vadd.f32 %v3805, %v3828
  %v3845 = vmul.f32 %v3837, 0.5
  %v3846 = vmul.f32 %v3838, 0.5
  %v3847 = vtanh.pop %v3845
  %v3848 = vtanh.pop %v3846
  %v3849 = vadd.f32 %v3847, 1.0
  %v3850 = vadd.f32 %v3848, 1.0
  %v3851 = vmul.f32 %v3849, 0.5
  %v3852 = vmul.f32 %v3850, 0.5
  %v3853 = vmul.f32 %v3839, 0.5
  %v3854 = vmul.f32 %v3840, 0.5
  %v3855 = vtanh.pop %v3853
  %v3856 = vtanh.pop %v3854
  %v3857 = vadd.f32 %v3855, 1.0
  %v3858 = vadd.f32 %v3856, 1.0
  %v3859 = vmul.f32 %v3857, 0.5
  %v3860 = vmul.f32 %v3858, 0.5
  %v3861 = vtanh.pop %v3841
  %v3862 = vtanh.pop %v3842
  %v3863 = vmul.f32 %v3843, 0.5
  %v3864 = vmul.f32 %v3844, 0.5
  %v3865 = vtanh.pop %v3863
  %v3866 = vtanh.pop %v3864
  %v3867 = vadd.f32 %v3865, 1.0
  %v3868 = vadd.f32 %v3866, 1.0
  %v3869 = vmul.f32 %v3867, 0.5
  %v3870 = vmul.f32 %v3868, 0.5
  %v3871 = vmul.f32 %v3859, %v3152
  %v3872 = vmul.f32 %v3860, %v3153
  %v3873 = vmul.f32 %v3851, %v3861
  %v3874 = vmul.f32 %v3852, %v3862
  %v3875 = vadd.f32 %v3871, %v3873
  %v3876 = vadd.f32 %v3872, %v3874
  %v3877 = vtanh.pop %v3875
  %v3878 = vtanh.pop %v3876
  %v3879 = vmul.f32 %v3869, %v3877
  %v3880 = vmul.f32 %v3870, %v3878
  %3881 = vmatpush.msra.mxu0 %v2163
  %3882 = vmatpush.msra.mxu0 %v2147
  %3883 = vmatpush.msra.mxu0 %v2131
  %3884 = vmatpush.msra.mxu0 %v2115
  %3885 = vmatpush.msra.mxu0 %v2099
  %3886 = vmatpush.msra.mxu0 %v2083
  %3887 = vmatpush.msra.mxu0 %v2067
  %3888 = vmatpush.msra.mxu0 %v2051
  %3889 = vmatpush.msra.mxu0 %v2035
  %3890 = vmatpush.msra.mxu0 %v2019
  %3891 = vmatpush.msra.mxu0 %v2003
  %3892 = vmatpush.msra.mxu0 %v1987
  %3893 = vmatpush.msra.mxu0 %v1971
  %3894 = vmatpush.msra.mxu0 %v1955
  %3895 = vmatpush.msra.mxu0 %v1939
  %3896 = vmatpush.msra.mxu0 %v1923
  %3897 = vmatmul.f32.gmra.mxu0 %v3879
  %v3898 = vpop.f32.mrf.mxu0
  %v3899 = vadd.f32 0.0, %v3898
  %3900 = vdwg.mxu0
  %3901 = vmatpush.msra.mxu0 %v2419
  %3902 = vmatpush.msra.mxu0 %v2403
  %3903 = vmatpush.msra.mxu0 %v2387
  %3904 = vmatpush.msra.mxu0 %v2371
  %3905 = vmatpush.msra.mxu0 %v2355
  %3906 = vmatpush.msra.mxu0 %v2339
  %3907 = vmatpush.msra.mxu0 %v2323
  %3908 = vmatpush.msra.mxu0 %v2307
  %3909 = vmatpush.msra.mxu0 %v2291
  %3910 = vmatpush.msra.mxu0 %v2275
  %3911 = vmatpush.msra.mxu0 %v2259
  %3912 = vmatpush.msra.mxu0 %v2243
  %3913 = vmatpush.msra.mxu0 %v2227
  %3914 = vmatpush.msra.mxu0 %v2211
  %3915 = vmatpush.msra.mxu0 %v2195
  %3916 = vmatpush.msra.mxu0 %v2179
  %3917 = vmatmul.f32.gmra.mxu0 %v3880
  %v3918 = vpop.f32.mrf.mxu0
  %v3919 = vadd.f32 %v3899, %v3918
  %3920 = vdwg.mxu0
  %3921 = vmatpush.msra.mxu0 %v2164
  %3922 = vmatpush.msra.mxu0 %v2148
  %3923 = vmatpush.msra.mxu0 %v2132
  %3924 = vmatpush.msra.mxu0 %v2116
  %3925 = vmatpush.msra.mxu0 %v2100
  %3926 = vmatpush.msra.mxu0 %v2084
  %3927 = vmatpush.msra.mxu0 %v2068
  %3928 = vmatpush.msra.mxu0 %v2052
  %3929 = vmatpush.msra.mxu0 %v2036
  %3930 = vmatpush.msra.mxu0 %v2020
  %3931 = vmatpush.msra.mxu0 %v2004
  %3932 = vmatpush.msra.mxu0 %v1988
  %3933 = vmatpush.msra.mxu0 %v1972
  %3934 = vmatpush.msra.mxu0 %v1956
  %3935 = vmatpush.msra.mxu0 %v1940
  %3936 = vmatpush.msra.mxu0 %v1924
  %3937 = vmatmul.f32.gmra.mxu0 %v3879
  %v3938 = vpop.f32.mrf.mxu0
  %v3939 = vadd.f32 0.0, %v3938
  %3940 = vdwg.mxu0
  %3941 = vmatpush.msra.mxu0 %v2420
  %3942 = vmatpush.msra.mxu0 %v2404
  %3943 = vmatpush.msra.mxu0 %v2388
  %3944 = vmatpush.msra.mxu0 %v2372
  %3945 = vmatpush.msra.mxu0 %v2356
  %3946 = vmatpush.msra.mxu0 %v2340
  %3947 = vmatpush.msra.mxu0 %v2324
  %3948 = vmatpush.msra.mxu0 %v2308
  %3949 = vmatpush.msra.mxu0 %v2292
  %3950 = vmatpush.msra.mxu0 %v2276
  %3951 = vmatpush.msra.mxu0 %v2260
  %3952 = vmatpush.msra.mxu0 %v2244
  %3953 = vmatpush.msra.mxu0 %v2228
  %3954 = vmatpush.msra.mxu0 %v2212
  %3955 = vmatpush.msra.mxu0 %v2196
  %3956 = vmatpush.msra.mxu0 %v2180
  %3957 = vmatmul.f32.gmra.mxu0 %v3880
  %v3958 = vpop.f32.mrf.mxu0
  %v3959 = vadd.f32 %v3939, %v3958
  %3960 = vdwg.mxu0
  %3961 = vmatpush.msra.mxu0 %v2165
  %3962 = vmatpush.msra.mxu0 %v2149
  %3963 = vmatpush.msra.mxu0 %v2133
  %3964 = vmatpush.msra.mxu0 %v2117
  %3965 = vmatpush.msra.mxu0 %v2101
  %3966 = vmatpush.msra.mxu0 %v2085
  %3967 = vmatpush.msra.mxu0 %v2069
  %3968 = vmatpush.msra.mxu0 %v2053
  %3969 = vmatpush.msra.mxu0 %v2037
  %3970 = vmatpush.msra.mxu0 %v2021
  %3971 = vmatpush.msra.mxu0 %v2005
  %3972 = vmatpush.msra.mxu0 %v1989
  %3973 = vmatpush.msra.mxu0 %v1973
  %3974 = vmatpush.msra.mxu0 %v1957
  %3975 = vmatpush.msra.mxu0 %v1941
  %3976 = vmatpush.msra.mxu0 %v1925
  %3977 = vmatmul.f32.gmra.mxu0 %v3879
  %v3978 = vpop.f32.mrf.mxu0
  %v3979 = vadd.f32 0.0, %v3978
  %3980 = vdwg.mxu0
  %3981 = vmatpush.msra.mxu0 %v2421
  %3982 = vmatpush.msra.mxu0 %v2405
  %3983 = vmatpush.msra.mxu0 %v2389
  %3984 = vmatpush.msra.mxu0 %v2373
  %3985 = vmatpush.msra.mxu0 %v2357
  %3986 = vmatpush.msra.mxu0 %v2341
  %3987 = vmatpush.msra.mxu0 %v2325
  %3988 = vmatpush.msra.mxu0 %v2309
  %3989 = vmatpush.msra.mxu0 %v2293
  %3990 = vmatpush.msra.mxu0 %v2277
  %3991 = vmatpush.msra.mxu0 %v2261
  %3992 = vmatpush.msra.mxu0 %v2245
  %3993 = vmatpush.msra.mxu0 %v2229
  %3994 = vmatpush.msra.mxu0 %v2213
  %3995 = vmatpush.msra.mxu0 %v2197
  %3996 = vmatpush.msra.mxu0 %v2181
  %3997 = vmatmul.f32.gmra.mxu0 %v3880
  %v3998 = vpop.f32.mrf.mxu0
  %v3999 = vadd.f32 %v3979, %v3998
  %4000 = vdwg.mxu0
  %4001 = vmatpush.msra.mxu0 %v2166
  %4002 = vmatpush.msra.mxu0 %v2150
  %4003 = vmatpush.msra.mxu0 %v2134
  %4004 = vmatpush.msra.mxu0 %v2118
  %4005 = vmatpush.msra.mxu0 %v2102
  %4006 = vmatpush.msra.mxu0 %v2086
  %4007 = vmatpush.msra.mxu0 %v2070
  %4008 = vmatpush.msra.mxu0 %v2054
  %4009 = vmatpush.msra.mxu0 %v2038
  %4010 = vmatpush.msra.mxu0 %v2022
  %4011 = vmatpush.msra.mxu0 %v2006
  %4012 = vmatpush.msra.mxu0 %v1990
  %4013 = vmatpush.msra.mxu0 %v1974
  %4014 = vmatpush.msra.mxu0 %v1958
  %4015 = vmatpush.msra.mxu0 %v1942
  %4016 = vmatpush.msra.mxu0 %v1926
  %4017 = vmatmul.f32.gmra.mxu0 %v3879
  %v4018 = vpop.f32.mrf.mxu0
  %v4019 = vadd.f32 0.0, %v4018
  %4020 = vdwg.mxu0
  %4021 = vmatpush.msra.mxu0 %v2422
  %4022 = vmatpush.msra.mxu0 %v2406
  %4023 = vmatpush.msra.mxu0 %v2390
  %4024 = vmatpush.msra.mxu0 %v2374
  %4025 = vmatpush.msra.mxu0 %v2358
  %4026 = vmatpush.msra.mxu0 %v2342
  %4027 = vmatpush.msra.mxu0 %v2326
  %4028 = vmatpush.msra.mxu0 %v2310
  %4029 = vmatpush.msra.mxu0 %v2294
  %4030 = vmatpush.msra.mxu0 %v2278
  %4031 = vmatpush.msra.mxu0 %v2262
  %4032 = vmatpush.msra.mxu0 %v2246
  %4033 = vmatpush.msra.mxu0 %v2230
  %4034 = vmatpush.msra.mxu0 %v2214
  %4035 = vmatpush.msra.mxu0 %v2198
  %4036 = vmatpush.msra.mxu0 %v2182
  %4037 = vmatmul.f32.gmra.mxu0 %v3880
  %v4038 = vpop.f32.mrf.mxu0
  %v4039 = vadd.f32 %v4019, %v4038
  %4040 = vdwg.mxu0
  %4041 = vmatpush.msra.mxu0 %v2167
  %4042 = vmatpush.msra.mxu0 %v2151
  %4043 = vmatpush.msra.mxu0 %v2135
  %4044 = vmatpush.msra.mxu0 %v2119
  %4045 = vmatpush.msra.mxu0 %v2103
  %4046 = vmatpush.msra.mxu0 %v2087
  %4047 = vmatpush.msra.mxu0 %v2071
  %4048 = vmatpush.msra.mxu0 %v2055
  %4049 = vmatpush.msra.mxu0 %v2039
  %4050 = vmatpush.msra.mxu0 %v2023
  %4051 = vmatpush.msra.mxu0 %v2007
  %4052 = vmatpush.msra.mxu0 %v1991
  %4053 = vmatpush.msra.mxu0 %v1975
  %4054 = vmatpush.msra.mxu0 %v1959
  %4055 = vmatpush.msra.mxu0 %v1943
  %4056 = vmatpush.msra.mxu0 %v1927
  %4057 = vmatmul.f32.gmra.mxu0 %v3879
  %v4058 = vpop.f32.mrf.mxu0
  %v4059 = vadd.f32 0.0, %v4058
  %4060 = vdwg.mxu0
  %4061 = vmatpush.msra.mxu0 %v2423
  %4062 = vmatpush.msra.mxu0 %v2407
  %4063 = vmatpush.msra.mxu0 %v2391
  %4064 = vmatpush.msra.mxu0 %v2375
  %4065 = vmatpush.msra.mxu0 %v2359
  %4066 = vmatpush.msra.mxu0 %v2343
  %4067 = vmatpush.msra.mxu0 %v2327
  %4068 = vmatpush.msra.mxu0 %v2311
  %4069 = vmatpush.msra.mxu0 %v2295
  %4070 = vmatpush.msra.mxu0 %v2279
  %4071 = vmatpush.msra.mxu0 %v2263
  %4072 = vmatpush.msra.mxu0 %v2247
  %4073 = vmatpush.msra.mxu0 %v2231
  %4074 = vmatpush.msra.mxu0 %v2215
  %4075 = vmatpush.msra.mxu0 %v2199
  %4076 = vmatpush.msra.mxu0 %v2183
  %4077 = vmatmul.f32.gmra.mxu0 %v3880
  %v4078 = vpop.f32.mrf.mxu0
  %v4079 = vadd.f32 %v4059, %v4078
  %4080 = vdwg.mxu0
  %4081 = vmatpush.msra.mxu0 %v2168
  %4082 = vmatpush.msra.mxu0 %v2152
  %4083 = vmatpush.msra.mxu0 %v2136
  %4084 = vmatpush.msra.mxu0 %v2120
  %4085 = vmatpush.msra.mxu0 %v2104
  %4086 = vmatpush.msra.mxu0 %v2088
  %4087 = vmatpush.msra.mxu0 %v2072
  %4088 = vmatpush.msra.mxu0 %v2056
  %4089 = vmatpush.msra.mxu0 %v2040
  %4090 = vmatpush.msra.mxu0 %v2024
  %4091 = vmatpush.msra.mxu0 %v2008
  %4092 = vmatpush.msra.mxu0 %v1992
  %4093 = vmatpush.msra.mxu0 %v1976
  %4094 = vmatpush.msra.mxu0 %v1960
  %4095 = vmatpush.msra.mxu0 %v1944
  %4096 = vmatpush.msra.mxu0 %v1928
  %4097 = vmatmul.f32.gmra.mxu0 %v3879
  %v4098 = vpop.f32.mrf.mxu0
  %v4099 = vadd.f32 0.0, %v4098
  %4100 = vdwg.mxu0
  %4101 = vmatpush.msra.mxu0 %v2424
  %4102 = vmatpush.msra.mxu0 %v2408
  %4103 = vmatpush.msra.mxu0 %v2392
  %4104 = vmatpush.msra.mxu0 %v2376
  %4105 = vmatpush.msra.mxu0 %v2360
  %4106 = vmatpush.msra.mxu0 %v2344
  %4107 = vmatpush.msra.mxu0 %v2328
  %4108 = vmatpush.msra.mxu0 %v2312
  %4109 = vmatpush.msra.mxu0 %v2296
  %4110 = vmatpush.msra.mxu0 %v2280
  %4111 = vmatpush.msra.mxu0 %v2264
  %4112 = vmatpush.msra.mxu0 %v2248
  %4113 = vmatpush.msra.mxu0 %v2232
  %4114 = vmatpush.msra.mxu0 %v2216
  %4115 = vmatpush.msra.mxu0 %v2200
  %4116 = vmatpush.msra.mxu0 %v2184
  %4117 = vmatmul.f32.gmra.mxu0 %v3880
  %v4118 = vpop.f32.mrf.mxu0
  %v4119 = vadd.f32 %v4099, %v4118
  %4120 = vdwg.mxu0
  %4121 = vmatpush.msra.mxu0 %v2169
  %4122 = vmatpush.msra.mxu0 %v2153
  %4123 = vmatpush.msra.mxu0 %v2137
  %4124 = vmatpush.msra.mxu0 %v2121
  %4125 = vmatpush.msra.mxu0 %v2105
  %4126 = vmatpush.msra.mxu0 %v2089
  %4127 = vmatpush.msra.mxu0 %v2073
  %4128 = vmatpush.msra.mxu0 %v2057
  %4129 = vmatpush.msra.mxu0 %v2041
  %4130 = vmatpush.msra.mxu0 %v2025
  %4131 = vmatpush.msra.mxu0 %v2009
  %4132 = vmatpush.msra.mxu0 %v1993
  %4133 = vmatpush.msra.mxu0 %v1977
  %4134 = vmatpush.msra.mxu0 %v1961
  %4135 = vmatpush.msra.mxu0 %v1945
  %4136 = vmatpush.msra.mxu0 %v1929
  %4137 = vmatmul.f32.gmra.mxu0 %v3879
  %v4138 = vpop.f32.mrf.mxu0
  %v4139 = vadd.f32 0.0, %v4138
  %4140 = vdwg.mxu0
  %4141 = vmatpush.msra.mxu0 %v2425
  %4142 = vmatpush.msra.mxu0 %v2409
  %4143 = vmatpush.msra.mxu0 %v2393
  %4144 = vmatpush.msra.mxu0 %v2377
  %4145 = vmatpush.msra.mxu0 %v2361
  %4146 = vmatpush.msra.mxu0 %v2345
  %4147 = vmatpush.msra.mxu0 %v2329
  %4148 = vmatpush.msra.mxu0 %v2313
  %4149 = vmatpush.msra.mxu0 %v2297
  %4150 = vmatpush.msra.mxu0 %v2281
  %4151 = vmatpush.msra.mxu0 %v2265
  %4152 = vmatpush.msra.mxu0 %v2249
  %4153 = vmatpush.msra.mxu0 %v2233
  %4154 = vmatpush.msra.mxu0 %v2217
  %4155 = vmatpush.msra.mxu0 %v2201
  %4156 = vmatpush.msra.mxu0 %v2185
  %4157 = vmatmul.f32.gmra.mxu0 %v3880
  %v4158 = vpop.f32.mrf.mxu0
  %v4159 = vadd.f32 %v4139, %v4158
  %4160 = vdwg.mxu0
  %4161 = vmatpush.msra.mxu0 %v2170
  %4162 = vmatpush.msra.mxu0 %v2154
  %4163 = vmatpush.msra.mxu0 %v2138
  %4164 = vmatpush.msra.mxu0 %v2122
  %4165 = vmatpush.msra.mxu0 %v2106
  %4166 = vmatpush.msra.mxu0 %v2090
  %4167 = vmatpush.msra.mxu0 %v2074
  %4168 = vmatpush.msra.mxu0 %v2058
  %4169 = vmatpush.msra.mxu0 %v2042
  %4170 = vmatpush.msra.mxu0 %v2026
  %4171 = vmatpush.msra.mxu0 %v2010
  %4172 = vmatpush.msra.mxu0 %v1994
  %4173 = vmatpush.msra.mxu0 %v1978
  %4174 = vmatpush.msra.mxu0 %v1962
  %4175 = vmatpush.msra.mxu0 %v1946
  %4176 = vmatpush.msra.mxu0 %v1930
  %4177 = vmatmul.f32.gmra.mxu0 %v3879
  %v4178 = vpop.f32.mrf.mxu0
  %v4179 = vadd.f32 0.0, %v4178
  %4180 = vdwg.mxu0
  %4181 = vmatpush.msra.mxu0 %v2426
  %4182 = vmatpush.msra.mxu0 %v2410
  %4183 = vmatpush.msra.mxu0 %v2394
  %4184 = vmatpush.msra.mxu0 %v2378
  %4185 = vmatpush.msra.mxu0 %v2362
  %4186 = vmatpush.msra.mxu0 %v2346
  %4187 = vmatpush.msra.mxu0 %v2330
  %4188 = vmatpush.msra.mxu0 %v2314
  %4189 = vmatpush.msra.mxu0 %v2298
  %4190 = vmatpush.msra.mxu0 %v2282
  %4191 = vmatpush.msra.mxu0 %v2266
  %4192 = vmatpush.msra.mxu0 %v2250
  %4193 = vmatpush.msra.mxu0 %v2234
  %4194 = vmatpush.msra.mxu0 %v2218
  %4195 = vmatpush.msra.mxu0 %v2202
  %4196 = vmatpush.msra.mxu0 %v2186
  %4197 = vmatmul.f32.gmra.mxu0 %v3880
  %v4198 = vpop.f32.mrf.mxu0
  %v4199 = vadd.f32 %v4179, %v4198
  %4200 = vdwg.mxu0
  %4201 = vmatpush.msra.mxu0 %v2171
  %4202 = vmatpush.msra.mxu0 %v2155
  %4203 = vmatpush.msra.mxu0 %v2139
  %4204 = vmatpush.msra.mxu0 %v2123
  %4205 = vmatpush.msra.mxu0 %v2107
  %4206 = vmatpush.msra.mxu0 %v2091
  %4207 = vmatpush.msra.mxu0 %v2075
  %4208 = vmatpush.msra.mxu0 %v2059
  %4209 = vmatpush.msra.mxu0 %v2043
  %4210 = vmatpush.msra.mxu0 %v2027
  %4211 = vmatpush.msra.mxu0 %v2011
  %4212 = vmatpush.msra.mxu0 %v1995
  %4213 = vmatpush.msra.mxu0 %v1979
  %4214 = vmatpush.msra.mxu0 %v1963
  %4215 = vmatpush.msra.mxu0 %v1947
  %4216 = vmatpush.msra.mxu0 %v1931
  %4217 = vmatmul.f32.gmra.mxu0 %v3879
  %v4218 = vpop.f32.mrf.mxu0
  %v4219 = vadd.f32 0.0, %v4218
  %4220 = vdwg.mxu0
  %4221 = vmatpush.msra.mxu0 %v2427
  %4222 = vmatpush.msra.mxu0 %v2411
  %4223 = vmatpush.msra.mxu0 %v2395
  %4224 = vmatpush.msra.mxu0 %v2379
  %4225 = vmatpush.msra.mxu0 %v2363
  %4226 = vmatpush.msra.mxu0 %v2347
  %4227 = vmatpush.msra.mxu0 %v2331
  %4228 = vmatpush.msra.mxu0 %v2315
  %4229 = vmatpush.msra.mxu0 %v2299
  %4230 = vmatpush.msra.mxu0 %v2283
  %4231 = vmatpush.msra.mxu0 %v2267
  %4232 = vmatpush.msra.mxu0 %v2251
  %4233 = vmatpush.msra.mxu0 %v2235
  %4234 = vmatpush.msra.mxu0 %v2219
  %4235 = vmatpush.msra.mxu0 %v2203
  %4236 = vmatpush.msra.mxu0 %v2187
  %4237 = vmatmul.f32.gmra.mxu0 %v3880
  %v4238 = vpop.f32.mrf.mxu0
  %v4239 = vadd.f32 %v4219, %v4238
  %4240 = vdwg.mxu0
  %4241 = vmatpush.msra.mxu0 %v2172
  %4242 = vmatpush.msra.mxu0 %v2156
  %4243 = vmatpush.msra.mxu0 %v2140
  %4244 = vmatpush.msra.mxu0 %v2124
  %4245 = vmatpush.msra.mxu0 %v2108
  %4246 = vmatpush.msra.mxu0 %v2092
  %4247 = vmatpush.msra.mxu0 %v2076
  %4248 = vmatpush.msra.mxu0 %v2060
  %4249 = vmatpush.msra.mxu0 %v2044
  %4250 = vmatpush.msra.mxu0 %v2028
  %4251 = vmatpush.msra.mxu0 %v2012
  %4252 = vmatpush.msra.mxu0 %v1996
  %4253 = vmatpush.msra.mxu0 %v1980
  %4254 = vmatpush.msra.mxu0 %v1964
  %4255 = vmatpush.msra.mxu0 %v1948
  %4256 = vmatpush.msra.mxu0 %v1932
  %4257 = vmatmul.f32.gmra.mxu0 %v3879
  %v4258 = vpop.f32.mrf.mxu0
  %v4259 = vadd.f32 0.0, %v4258
  %4260 = vdwg.mxu0
  %4261 = vmatpush.msra.mxu0 %v2428
  %4262 = vmatpush.msra.mxu0 %v2412
  %4263 = vmatpush.msra.mxu0 %v2396
  %4264 = vmatpush.msra.mxu0 %v2380
  %4265 = vmatpush.msra.mxu0 %v2364
  %4266 = vmatpush.msra.mxu0 %v2348
  %4267 = vmatpush.msra.mxu0 %v2332
  %4268 = vmatpush.msra.mxu0 %v2316
  %4269 = vmatpush.msra.mxu0 %v2300
  %4270 = vmatpush.msra.mxu0 %v2284
  %4271 = vmatpush.msra.mxu0 %v2268
  %4272 = vmatpush.msra.mxu0 %v2252
  %4273 = vmatpush.msra.mxu0 %v2236
  %4274 = vmatpush.msra.mxu0 %v2220
  %4275 = vmatpush.msra.mxu0 %v2204
  %4276 = vmatpush.msra.mxu0 %v2188
  %4277 = vmatmul.f32.gmra.mxu0 %v3880
  %v4278 = vpop.f32.mrf.mxu0
  %v4279 = vadd.f32 %v4259, %v4278
  %4280 = vdwg.mxu0
  %4281 = vmatpush.msra.mxu0 %v2173
  %4282 = vmatpush.msra.mxu0 %v2157
  %4283 = vmatpush.msra.mxu0 %v2141
  %4284 = vmatpush.msra.mxu0 %v2125
  %4285 = vmatpush.msra.mxu0 %v2109
  %4286 = vmatpush.msra.mxu0 %v2093
  %4287 = vmatpush.msra.mxu0 %v2077
  %4288 = vmatpush.msra.mxu0 %v2061
  %4289 = vmatpush.msra.mxu0 %v2045
  %4290 = vmatpush.msra.mxu0 %v2029
  %4291 = vmatpush.msra.mxu0 %v2013
  %4292 = vmatpush.msra.mxu0 %v1997
  %4293 = vmatpush.msra.mxu0 %v1981
  %4294 = vmatpush.msra.mxu0 %v1965
  %4295 = vmatpush.msra.mxu0 %v1949
  %4296 = vmatpush.msra.mxu0 %v1933
  %4297 = vmatmul.f32.gmra.mxu0 %v3879
  %v4298 = vpop.f32.mrf.mxu0
  %v4299 = vadd.f32 0.0, %v4298
  %4300 = vdwg.mxu0
  %4301 = vmatpush.msra.mxu0 %v2429
  %4302 = vmatpush.msra.mxu0 %v2413
  %4303 = vmatpush.msra.mxu0 %v2397
  %4304 = vmatpush.msra.mxu0 %v2381
  %4305 = vmatpush.msra.mxu0 %v2365
  %4306 = vmatpush.msra.mxu0 %v2349
  %4307 = vmatpush.msra.mxu0 %v2333
  %4308 = vmatpush.msra.mxu0 %v2317
  %4309 = vmatpush.msra.mxu0 %v2301
  %4310 = vmatpush.msra.mxu0 %v2285
  %4311 = vmatpush.msra.mxu0 %v2269
  %4312 = vmatpush.msra.mxu0 %v2253
  %4313 = vmatpush.msra.mxu0 %v2237
  %4314 = vmatpush.msra.mxu0 %v2221
  %4315 = vmatpush.msra.mxu0 %v2205
  %4316 = vmatpush.msra.mxu0 %v2189
  %4317 = vmatmul.f32.gmra.mxu0 %v3880
  %v4318 = vpop.f32.mrf.mxu0
  %v4319 = vadd.f32 %v4299, %v4318
  %4320 = vdwg.mxu0
  %4321 = vmatpush.msra.mxu0 %v2174
  %4322 = vmatpush.msra.mxu0 %v2158
  %4323 = vmatpush.msra.mxu0 %v2142
  %4324 = vmatpush.msra.mxu0 %v2126
  %4325 = vmatpush.msra.mxu0 %v2110
  %4326 = vmatpush.msra.mxu0 %v2094
  %4327 = vmatpush.msra.mxu0 %v2078
  %4328 = vmatpush.msra.mxu0 %v2062
  %4329 = vmatpush.msra.mxu0 %v2046
  %4330 = vmatpush.msra.mxu0 %v2030
  %4331 = vmatpush.msra.mxu0 %v2014
  %4332 = vmatpush.msra.mxu0 %v1998
  %4333 = vmatpush.msra.mxu0 %v1982
  %4334 = vmatpush.msra.mxu0 %v1966
  %4335 = vmatpush.msra.mxu0 %v1950
  %4336 = vmatpush.msra.mxu0 %v1934
  %4337 = vmatmul.f32.gmra.mxu0 %v3879
  %v4338 = vpop.f32.mrf.mxu0
  %v4339 = vadd.f32 0.0, %v4338
  %4340 = vdwg.mxu0
  %4341 = vmatpush.msra.mxu0 %v2430
  %4342 = vmatpush.msra.mxu0 %v2414
  %4343 = vmatpush.msra.mxu0 %v2398
  %4344 = vmatpush.msra.mxu0 %v2382
  %4345 = vmatpush.msra.mxu0 %v2366
  %4346 = vmatpush.msra.mxu0 %v2350
  %4347 = vmatpush.msra.mxu0 %v2334
  %4348 = vmatpush.msra.mxu0 %v2318
  %4349 = vmatpush.msra.mxu0 %v2302
  %4350 = vmatpush.msra.mxu0 %v2286
  %4351 = vmatpush.msra.mxu0 %v2270
  %4352 = vmatpush.msra.mxu0 %v2254
  %4353 = vmatpush.msra.mxu0 %v2238
  %4354 = vmatpush.msra.mxu0 %v2222
  %4355 = vmatpush.msra.mxu0 %v2206
  %4356 = vmatpush.msra.mxu0 %v2190
  %4357 = vmatmul.f32.gmra.mxu0 %v3880
  %v4358 = vpop.f32.mrf.mxu0
  %v4359 = vadd.f32 %v4339, %v4358
  %4360 = vdwg.mxu0
  %4361 = vmatpush.msra.mxu0 %v2175
  %4362 = vmatpush.msra.mxu0 %v2159
  %4363 = vmatpush.msra.mxu0 %v2143
  %4364 = vmatpush.msra.mxu0 %v2127
  %4365 = vmatpush.msra.mxu0 %v2111
  %4366 = vmatpush.msra.mxu0 %v2095
  %4367 = vmatpush.msra.mxu0 %v2079
  %4368 = vmatpush.msra.mxu0 %v2063
  %4369 = vmatpush.msra.mxu0 %v2047
  %4370 = vmatpush.msra.mxu0 %v2031
  %4371 = vmatpush.msra.mxu0 %v2015
  %4372 = vmatpush.msra.mxu0 %v1999
  %4373 = vmatpush.msra.mxu0 %v1983
  %4374 = vmatpush.msra.mxu0 %v1967
  %4375 = vmatpush.msra.mxu0 %v1951
  %4376 = vmatpush.msra.mxu0 %v1935
  %4377 = vmatmul.f32.gmra.mxu0 %v3879
  %v4378 = vpop.f32.mrf.mxu0
  %v4379 = vadd.f32 0.0, %v4378
  %4380 = vdwg.mxu0
  %4381 = vmatpush.msra.mxu0 %v2431
  %4382 = vmatpush.msra.mxu0 %v2415
  %4383 = vmatpush.msra.mxu0 %v2399
  %4384 = vmatpush.msra.mxu0 %v2383
  %4385 = vmatpush.msra.mxu0 %v2367
  %4386 = vmatpush.msra.mxu0 %v2351
  %4387 = vmatpush.msra.mxu0 %v2335
  %4388 = vmatpush.msra.mxu0 %v2319
  %4389 = vmatpush.msra.mxu0 %v2303
  %4390 = vmatpush.msra.mxu0 %v2287
  %4391 = vmatpush.msra.mxu0 %v2271
  %4392 = vmatpush.msra.mxu0 %v2255
  %4393 = vmatpush.msra.mxu0 %v2239
  %4394 = vmatpush.msra.mxu0 %v2223
  %4395 = vmatpush.msra.mxu0 %v2207
  %4396 = vmatpush.msra.mxu0 %v2191
  %4397 = vmatmul.f32.gmra.mxu0 %v3880
  %v4398 = vpop.f32.mrf.mxu0
  %v4399 = vadd.f32 %v4379, %v4398
  %4400 = vdwg.mxu0
  %4401 = vmatpush.msra.mxu0 %v2176
  %4402 = vmatpush.msra.mxu0 %v2160
  %4403 = vmatpush.msra.mxu0 %v2144
  %4404 = vmatpush.msra.mxu0 %v2128
  %4405 = vmatpush.msra.mxu0 %v2112
  %4406 = vmatpush.msra.mxu0 %v2096
  %4407 = vmatpush.msra.mxu0 %v2080
  %4408 = vmatpush.msra.mxu0 %v2064
  %4409 = vmatpush.msra.mxu0 %v2048
  %4410 = vmatpush.msra.mxu0 %v2032
  %4411 = vmatpush.msra.mxu0 %v2016
  %4412 = vmatpush.msra.mxu0 %v2000
  %4413 = vmatpush.msra.mxu0 %v1984
  %4414 = vmatpush.msra.mxu0 %v1968
  %4415 = vmatpush.msra.mxu0 %v1952
  %4416 = vmatpush.msra.mxu0 %v1936
  %4417 = vmatmul.f32.gmra.mxu0 %v3879
  %v4418 = vpop.f32.mrf.mxu0
  %v4419 = vadd.f32 0.0, %v4418
  %4420 = vdwg.mxu0
  %4421 = vmatpush.msra.mxu0 %v2432
  %4422 = vmatpush.msra.mxu0 %v2416
  %4423 = vmatpush.msra.mxu0 %v2400
  %4424 = vmatpush.msra.mxu0 %v2384
  %4425 = vmatpush.msra.mxu0 %v2368
  %4426 = vmatpush.msra.mxu0 %v2352
  %4427 = vmatpush.msra.mxu0 %v2336
  %4428 = vmatpush.msra.mxu0 %v2320
  %4429 = vmatpush.msra.mxu0 %v2304
  %4430 = vmatpush.msra.mxu0 %v2288
  %4431 = vmatpush.msra.mxu0 %v2272
  %4432 = vmatpush.msra.mxu0 %v2256
  %4433 = vmatpush.msra.mxu0 %v2240
  %4434 = vmatpush.msra.mxu0 %v2224
  %4435 = vmatpush.msra.mxu0 %v2208
  %4436 = vmatpush.msra.mxu0 %v2192
  %4437 = vmatmul.f32.gmra.mxu0 %v3880
  %v4438 = vpop.f32.mrf.mxu0
  %v4439 = vadd.f32 %v4419, %v4438
  %4440 = vdwg.mxu0
  %4441 = vmatpush.msra.mxu0 %v2177
  %4442 = vmatpush.msra.mxu0 %v2161
  %4443 = vmatpush.msra.mxu0 %v2145
  %4444 = vmatpush.msra.mxu0 %v2129
  %4445 = vmatpush.msra.mxu0 %v2113
  %4446 = vmatpush.msra.mxu0 %v2097
  %4447 = vmatpush.msra.mxu0 %v2081
  %4448 = vmatpush.msra.mxu0 %v2065
  %4449 = vmatpush.msra.mxu0 %v2049
  %4450 = vmatpush.msra.mxu0 %v2033
  %4451 = vmatpush.msra.mxu0 %v2017
  %4452 = vmatpush.msra.mxu0 %v2001
  %4453 = vmatpush.msra.mxu0 %v1985
  %4454 = vmatpush.msra.mxu0 %v1969
  %4455 = vmatpush.msra.mxu0 %v1953
  %4456 = vmatpush.msra.mxu0 %v1937
  %4457 = vmatmul.f32.gmra.mxu0 %v3879
  %v4458 = vpop.f32.mrf.mxu0
  %v4459 = vadd.f32 0.0, %v4458
  %4460 = vdwg.mxu0
  %4461 = vmatpush.msra.mxu0 %v2433
  %4462 = vmatpush.msra.mxu0 %v2417
  %4463 = vmatpush.msra.mxu0 %v2401
  %4464 = vmatpush.msra.mxu0 %v2385
  %4465 = vmatpush.msra.mxu0 %v2369
  %4466 = vmatpush.msra.mxu0 %v2353
  %4467 = vmatpush.msra.mxu0 %v2337
  %4468 = vmatpush.msra.mxu0 %v2321
  %4469 = vmatpush.msra.mxu0 %v2305
  %4470 = vmatpush.msra.mxu0 %v2289
  %4471 = vmatpush.msra.mxu0 %v2273
  %4472 = vmatpush.msra.mxu0 %v2257
  %4473 = vmatpush.msra.mxu0 %v2241
  %4474 = vmatpush.msra.mxu0 %v2225
  %4475 = vmatpush.msra.mxu0 %v2209
  %4476 = vmatpush.msra.mxu0 %v2193
  %4477 = vmatmul.f32.gmra.mxu0 %v3880
  %v4478 = vpop.f32.mrf.mxu0
  %v4479 = vadd.f32 %v4459, %v4478
  %4480 = vdwg.mxu0
  %4481 = vmatpush.msra.mxu0 %v2178
  %4482 = vmatpush.msra.mxu0 %v2162
  %4483 = vmatpush.msra.mxu0 %v2146
  %4484 = vmatpush.msra.mxu0 %v2130
  %4485 = vmatpush.msra.mxu0 %v2114
  %4486 = vmatpush.msra.mxu0 %v2098
  %4487 = vmatpush.msra.mxu0 %v2082
  %4488 = vmatpush.msra.mxu0 %v2066
  %4489 = vmatpush.msra.mxu0 %v2050
  %4490 = vmatpush.msra.mxu0 %v2034
  %4491 = vmatpush.msra.mxu0 %v2018
  %4492 = vmatpush.msra.mxu0 %v2002
  %4493 = vmatpush.msra.mxu0 %v1986
  %4494 = vmatpush.msra.mxu0 %v1970
  %4495 = vmatpush.msra.mxu0 %v1954
  %4496 = vmatpush.msra.mxu0 %v1938
  %4497 = vmatmul.f32.gmra.mxu0 %v3879
  %v4498 = vpop.f32.mrf.mxu0
  %v4499 = vadd.f32 0.0, %v4498
  %4500 = vdwg.mxu0
  %4501 = vmatpush.msra.mxu0 %v2434
  %4502 = vmatpush.msra.mxu0 %v2418
  %4503 = vmatpush.msra.mxu0 %v2402
  %4504 = vmatpush.msra.mxu0 %v2386
  %4505 = vmatpush.msra.mxu0 %v2370
  %4506 = vmatpush.msra.mxu0 %v2354
  %4507 = vmatpush.msra.mxu0 %v2338
  %4508 = vmatpush.msra.mxu0 %v2322
  %4509 = vmatpush.msra.mxu0 %v2306
  %4510 = vmatpush.msra.mxu0 %v2290
  %4511 = vmatpush.msra.mxu0 %v2274
  %4512 = vmatpush.msra.mxu0 %v2258
  %4513 = vmatpush.msra.mxu0 %v2242
  %4514 = vmatpush.msra.mxu0 %v2226
  %4515 = vmatpush.msra.mxu0 %v2210
  %4516 = vmatpush.msra.mxu0 %v2194
  %4517 = vmatmul.f32.gmra.mxu0 %v3880
  %v4518 = vpop.f32.mrf.mxu0
  %v4519 = vadd.f32 %v4499, %v4518
  %4520 = vdwg.mxu0
  %v4521 = vsel %vm1076, %v3919, %v4239
  %v4522 = vsel %vm1076, %v3959, %v4279
  %v4523 = vsel %vm1076, %v3999, %v4319
  %v4524 = vsel %vm1076, %v4039, %v4359
  %v4525 = vsel %vm1076, %v4079, %v4399
  %v4526 = vsel %vm1076, %v4119, %v4439
  %v4527 = vsel %vm1076, %v4159, %v4479
  %v4528 = vsel %vm1076, %v4199, %v4519
  %v4529 = vld [vmem:[%s1469] sm:$0xff]
  %v4530 = vld [vmem:[%s1469 + $0x8] sm:$0xff]
  %v4531 = vld [vmem:[%s1469 + $0x10] sm:$0xff]
  %v4532 = vld [vmem:[%s1469 + $0x18] sm:$0xff]
  %4537 = vst [vmem:[#allocation1] ss:$2 sm:$0xff] %v4529
  %s4538 = scalar_lea.vmem [#allocation1], 16
  %4539 = vst [vmem:[%s4538] ss:$2 sm:$0xff] %v4530
  %s4540 = scalar_lea.vmem [#allocation1], 32
  %4541 = vst [vmem:[%s4540] ss:$2 sm:$0xff] %v4531
  %s4542 = scalar_lea.vmem [#allocation1], 48
  %4543 = vst [vmem:[%s4542] ss:$2 sm:$0xff] %v4532
  %v4544 = vld.sshfl [vmem:[#allocation1] sm:$0xff pattern:$0x75316420]
  %v4545 = vld.sshfl [vmem:[#allocation1 + $0x8] sm:$0xff pattern:$0x75316420]
  %v4546 = vld.sshfl [vmem:[#allocation1 + $0x10] sm:$0xff pattern:$0x75316420]
  %v4547 = vld.sshfl [vmem:[#allocation1 + $0x18] sm:$0xff pattern:$0x75316420]
  %v4548 = vld.sshfl [vmem:[#allocation1 + $0x20] sm:$0xff pattern:$0x75316420]
  %v4549 = vld.sshfl [vmem:[#allocation1 + $0x28] sm:$0xff pattern:$0x75316420]
  %v4550 = vld.sshfl [vmem:[#allocation1 + $0x30] sm:$0xff pattern:$0x75316420]
  %v4551 = vld.sshfl [vmem:[#allocation1 + $0x38] sm:$0xff pattern:$0x75316420]
  %v4560 = vadd.f32 %v4521, %v4544
  %v4561 = vadd.f32 %v4522, %v4545
  %v4562 = vadd.f32 %v4523, %v4546
  %v4563 = vadd.f32 %v4524, %v4547
  %v4564 = vadd.f32 %v4525, %v4548
  %v4565 = vadd.f32 %v4526, %v4549
  %v4566 = vadd.f32 %v4527, %v4550
  %v4567 = vadd.f32 %v4528, %v4551
  %v4568 = vmul.f32 %v4560, 0.5
  %v4569 = vmul.f32 %v4561, 0.5
  %v4570 = vtanh.pop %v4568
  %v4571 = vtanh.pop %v4569
  %v4572 = vadd.f32 %v4570, 1.0
  %v4573 = vadd.f32 %v4571, 1.0
  %v4574 = vmul.f32 %v4572, 0.5
  %v4575 = vmul.f32 %v4573, 0.5
  %v4576 = vmul.f32 %v4562, 0.5
  %v4577 = vmul.f32 %v4563, 0.5
  %v4578 = vtanh.pop %v4576
  %v4579 = vtanh.pop %v4577
  %v4580 = vadd.f32 %v4578, 1.0
  %v4581 = vadd.f32 %v4579, 1.0
  %v4582 = vmul.f32 %v4580, 0.5
  %v4583 = vmul.f32 %v4581, 0.5
  %v4584 = vtanh.pop %v4564
  %v4585 = vtanh.pop %v4565
  %v4586 = vmul.f32 %v4566, 0.5
  %v4587 = vmul.f32 %v4567, 0.5
  %v4588 = vtanh.pop %v4586
  %v4589 = vtanh.pop %v4587
  %v4590 = vadd.f32 %v4588, 1.0
  %v4591 = vadd.f32 %v4589, 1.0
  %v4592 = vmul.f32 %v4590, 0.5
  %v4593 = vmul.f32 %v4591, 0.5
  %v4594 = vmul.f32 %v4582, %v3875
  %v4595 = vmul.f32 %v4583, %v3876
  %v4596 = vmul.f32 %v4574, %v4584
  %v4597 = vmul.f32 %v4575, %v4585
  %v4598 = vadd.f32 %v4594, %v4596
  %v4599 = vadd.f32 %v4595, %v4597
  %v4600 = vtanh.pop %v4598
  %v4601 = vtanh.pop %v4599
  %v4602 = vmul.f32 %v4592, %v4600
  %v4603 = vmul.f32 %v4593, %v4601
  %4604 = vmatpush.msra.mxu0 %v2163
  %4605 = vmatpush.msra.mxu0 %v2147
  %4606 = vmatpush.msra.mxu0 %v2131
  %4607 = vmatpush.msra.mxu0 %v2115
  %4608 = vmatpush.msra.mxu0 %v2099
  %4609 = vmatpush.msra.mxu0 %v2083
  %4610 = vmatpush.msra.mxu0 %v2067
  %4611 = vmatpush.msra.mxu0 %v2051
  %4612 = vmatpush.msra.mxu0 %v2035
  %4613 = vmatpush.msra.mxu0 %v2019
  %4614 = vmatpush.msra.mxu0 %v2003
  %4615 = vmatpush.msra.mxu0 %v1987
  %4616 = vmatpush.msra.mxu0 %v1971
  %4617 = vmatpush.msra.mxu0 %v1955
  %4618 = vmatpush.msra.mxu0 %v1939
  %4619 = vmatpush.msra.mxu0 %v1923
  %4620 = vmatmul.f32.gmra.mxu0 %v4602
  %v4621 = vpop.f32.mrf.mxu0
  %v4622 = vadd.f32 0.0, %v4621
  %4623 = vdwg.mxu0
  %4624 = vmatpush.msra.mxu0 %v2419
  %4625 = vmatpush.msra.mxu0 %v2403
  %4626 = vmatpush.msra.mxu0 %v2387
  %4627 = vmatpush.msra.mxu0 %v2371
  %4628 = vmatpush.msra.mxu0 %v2355
  %4629 = vmatpush.msra.mxu0 %v2339
  %4630 = vmatpush.msra.mxu0 %v2323
  %4631 = vmatpush.msra.mxu0 %v2307
  %4632 = vmatpush.msra.mxu0 %v2291
  %4633 = vmatpush.msra.mxu0 %v2275
  %4634 = vmatpush.msra.mxu0 %v2259
  %4635 = vmatpush.msra.mxu0 %v2243
  %4636 = vmatpush.msra.mxu0 %v2227
  %4637 = vmatpush.msra.mxu0 %v2211
  %4638 = vmatpush.msra.mxu0 %v2195
  %4639 = vmatpush.msra.mxu0 %v2179
  %4640 = vmatmul.f32.gmra.mxu0 %v4603
  %v4641 = vpop.f32.mrf.mxu0
  %v4642 = vadd.f32 %v4622, %v4641
  %4643 = vdwg.mxu0
  %4644 = vmatpush.msra.mxu0 %v2164
  %4645 = vmatpush.msra.mxu0 %v2148
  %4646 = vmatpush.msra.mxu0 %v2132
  %4647 = vmatpush.msra.mxu0 %v2116
  %4648 = vmatpush.msra.mxu0 %v2100
  %4649 = vmatpush.msra.mxu0 %v2084
  %4650 = vmatpush.msra.mxu0 %v2068
  %4651 = vmatpush.msra.mxu0 %v2052
  %4652 = vmatpush.msra.mxu0 %v2036
  %4653 = vmatpush.msra.mxu0 %v2020
  %4654 = vmatpush.msra.mxu0 %v2004
  %4655 = vmatpush.msra.mxu0 %v1988
  %4656 = vmatpush.msra.mxu0 %v1972
  %4657 = vmatpush.msra.mxu0 %v1956
  %4658 = vmatpush.msra.mxu0 %v1940
  %4659 = vmatpush.msra.mxu0 %v1924
  %4660 = vmatmul.f32.gmra.mxu0 %v4602
  %v4661 = vpop.f32.mrf.mxu0
  %v4662 = vadd.f32 0.0, %v4661
  %4663 = vdwg.mxu0
  %4664 = vmatpush.msra.mxu0 %v2420
  %4665 = vmatpush.msra.mxu0 %v2404
  %4666 = vmatpush.msra.mxu0 %v2388
  %4667 = vmatpush.msra.mxu0 %v2372
  %4668 = vmatpush.msra.mxu0 %v2356
  %4669 = vmatpush.msra.mxu0 %v2340
  %4670 = vmatpush.msra.mxu0 %v2324
  %4671 = vmatpush.msra.mxu0 %v2308
  %4672 = vmatpush.msra.mxu0 %v2292
  %4673 = vmatpush.msra.mxu0 %v2276
  %4674 = vmatpush.msra.mxu0 %v2260
  %4675 = vmatpush.msra.mxu0 %v2244
  %4676 = vmatpush.msra.mxu0 %v2228
  %4677 = vmatpush.msra.mxu0 %v2212
  %4678 = vmatpush.msra.mxu0 %v2196
  %4679 = vmatpush.msra.mxu0 %v2180
  %4680 = vmatmul.f32.gmra.mxu0 %v4603
  %v4681 = vpop.f32.mrf.mxu0
  %v4682 = vadd.f32 %v4662, %v4681
  %4683 = vdwg.mxu0
  %4684 = vmatpush.msra.mxu0 %v2165
  %4685 = vmatpush.msra.mxu0 %v2149
  %4686 = vmatpush.msra.mxu0 %v2133
  %4687 = vmatpush.msra.mxu0 %v2117
  %4688 = vmatpush.msra.mxu0 %v2101
  %4689 = vmatpush.msra.mxu0 %v2085
  %4690 = vmatpush.msra.mxu0 %v2069
  %4691 = vmatpush.msra.mxu0 %v2053
  %4692 = vmatpush.msra.mxu0 %v2037
  %4693 = vmatpush.msra.mxu0 %v2021
  %4694 = vmatpush.msra.mxu0 %v2005
  %4695 = vmatpush.msra.mxu0 %v1989
  %4696 = vmatpush.msra.mxu0 %v1973
  %4697 = vmatpush.msra.mxu0 %v1957
  %4698 = vmatpush.msra.mxu0 %v1941
  %4699 = vmatpush.msra.mxu0 %v1925
  %4700 = vmatmul.f32.gmra.mxu0 %v4602
  %v4701 = vpop.f32.mrf.mxu0
  %v4702 = vadd.f32 0.0, %v4701
  %4703 = vdwg.mxu0
  %4704 = vmatpush.msra.mxu0 %v2421
  %4705 = vmatpush.msra.mxu0 %v2405
  %4706 = vmatpush.msra.mxu0 %v2389
  %4707 = vmatpush.msra.mxu0 %v2373
  %4708 = vmatpush.msra.mxu0 %v2357
  %4709 = vmatpush.msra.mxu0 %v2341
  %4710 = vmatpush.msra.mxu0 %v2325
  %4711 = vmatpush.msra.mxu0 %v2309
  %4712 = vmatpush.msra.mxu0 %v2293
  %4713 = vmatpush.msra.mxu0 %v2277
  %4714 = vmatpush.msra.mxu0 %v2261
  %4715 = vmatpush.msra.mxu0 %v2245
  %4716 = vmatpush.msra.mxu0 %v2229
  %4717 = vmatpush.msra.mxu0 %v2213
  %4718 = vmatpush.msra.mxu0 %v2197
  %4719 = vmatpush.msra.mxu0 %v2181
  %4720 = vmatmul.f32.gmra.mxu0 %v4603
  %v4721 = vpop.f32.mrf.mxu0
  %v4722 = vadd.f32 %v4702, %v4721
  %4723 = vdwg.mxu0
  %4724 = vmatpush.msra.mxu0 %v2166
  %4725 = vmatpush.msra.mxu0 %v2150
  %4726 = vmatpush.msra.mxu0 %v2134
  %4727 = vmatpush.msra.mxu0 %v2118
  %4728 = vmatpush.msra.mxu0 %v2102
  %4729 = vmatpush.msra.mxu0 %v2086
  %4730 = vmatpush.msra.mxu0 %v2070
  %4731 = vmatpush.msra.mxu0 %v2054
  %4732 = vmatpush.msra.mxu0 %v2038
  %4733 = vmatpush.msra.mxu0 %v2022
  %4734 = vmatpush.msra.mxu0 %v2006
  %4735 = vmatpush.msra.mxu0 %v1990
  %4736 = vmatpush.msra.mxu0 %v1974
  %4737 = vmatpush.msra.mxu0 %v1958
  %4738 = vmatpush.msra.mxu0 %v1942
  %4739 = vmatpush.msra.mxu0 %v1926
  %4740 = vmatmul.f32.gmra.mxu0 %v4602
  %v4741 = vpop.f32.mrf.mxu0
  %v4742 = vadd.f32 0.0, %v4741
  %4743 = vdwg.mxu0
  %4744 = vmatpush.msra.mxu0 %v2422
  %4745 = vmatpush.msra.mxu0 %v2406
  %4746 = vmatpush.msra.mxu0 %v2390
  %4747 = vmatpush.msra.mxu0 %v2374
  %4748 = vmatpush.msra.mxu0 %v2358
  %4749 = vmatpush.msra.mxu0 %v2342
  %4750 = vmatpush.msra.mxu0 %v2326
  %4751 = vmatpush.msra.mxu0 %v2310
  %4752 = vmatpush.msra.mxu0 %v2294
  %4753 = vmatpush.msra.mxu0 %v2278
  %4754 = vmatpush.msra.mxu0 %v2262
  %4755 = vmatpush.msra.mxu0 %v2246
  %4756 = vmatpush.msra.mxu0 %v2230
  %4757 = vmatpush.msra.mxu0 %v2214
  %4758 = vmatpush.msra.mxu0 %v2198
  %4759 = vmatpush.msra.mxu0 %v2182
  %4760 = vmatmul.f32.gmra.mxu0 %v4603
  %v4761 = vpop.f32.mrf.mxu0
  %v4762 = vadd.f32 %v4742, %v4761
  %4763 = vdwg.mxu0
  %4764 = vmatpush.msra.mxu0 %v2167
  %4765 = vmatpush.msra.mxu0 %v2151
  %4766 = vmatpush.msra.mxu0 %v2135
  %4767 = vmatpush.msra.mxu0 %v2119
  %4768 = vmatpush.msra.mxu0 %v2103
  %4769 = vmatpush.msra.mxu0 %v2087
  %4770 = vmatpush.msra.mxu0 %v2071
  %4771 = vmatpush.msra.mxu0 %v2055
  %4772 = vmatpush.msra.mxu0 %v2039
  %4773 = vmatpush.msra.mxu0 %v2023
  %4774 = vmatpush.msra.mxu0 %v2007
  %4775 = vmatpush.msra.mxu0 %v1991
  %4776 = vmatpush.msra.mxu0 %v1975
  %4777 = vmatpush.msra.mxu0 %v1959
  %4778 = vmatpush.msra.mxu0 %v1943
  %4779 = vmatpush.msra.mxu0 %v1927
  %4780 = vmatmul.f32.gmra.mxu0 %v4602
  %v4781 = vpop.f32.mrf.mxu0
  %v4782 = vadd.f32 0.0, %v4781
  %4783 = vdwg.mxu0
  %4784 = vmatpush.msra.mxu0 %v2423
  %4785 = vmatpush.msra.mxu0 %v2407
  %4786 = vmatpush.msra.mxu0 %v2391
  %4787 = vmatpush.msra.mxu0 %v2375
  %4788 = vmatpush.msra.mxu0 %v2359
  %4789 = vmatpush.msra.mxu0 %v2343
  %4790 = vmatpush.msra.mxu0 %v2327
  %4791 = vmatpush.msra.mxu0 %v2311
  %4792 = vmatpush.msra.mxu0 %v2295
  %4793 = vmatpush.msra.mxu0 %v2279
  %4794 = vmatpush.msra.mxu0 %v2263
  %4795 = vmatpush.msra.mxu0 %v2247
  %4796 = vmatpush.msra.mxu0 %v2231
  %4797 = vmatpush.msra.mxu0 %v2215
  %4798 = vmatpush.msra.mxu0 %v2199
  %4799 = vmatpush.msra.mxu0 %v2183
  %4800 = vmatmul.f32.gmra.mxu0 %v4603
  %v4801 = vpop.f32.mrf.mxu0
  %v4802 = vadd.f32 %v4782, %v4801
  %4803 = vdwg.mxu0
  %4804 = vmatpush.msra.mxu0 %v2168
  %4805 = vmatpush.msra.mxu0 %v2152
  %4806 = vmatpush.msra.mxu0 %v2136
  %4807 = vmatpush.msra.mxu0 %v2120
  %4808 = vmatpush.msra.mxu0 %v2104
  %4809 = vmatpush.msra.mxu0 %v2088
  %4810 = vmatpush.msra.mxu0 %v2072
  %4811 = vmatpush.msra.mxu0 %v2056
  %4812 = vmatpush.msra.mxu0 %v2040
  %4813 = vmatpush.msra.mxu0 %v2024
  %4814 = vmatpush.msra.mxu0 %v2008
  %4815 = vmatpush.msra.mxu0 %v1992
  %4816 = vmatpush.msra.mxu0 %v1976
  %4817 = vmatpush.msra.mxu0 %v1960
  %4818 = vmatpush.msra.mxu0 %v1944
  %4819 = vmatpush.msra.mxu0 %v1928
  %4820 = vmatmul.f32.gmra.mxu0 %v4602
  %v4821 = vpop.f32.mrf.mxu0
  %v4822 = vadd.f32 0.0, %v4821
  %4823 = vdwg.mxu0
  %4824 = vmatpush.msra.mxu0 %v2424
  %4825 = vmatpush.msra.mxu0 %v2408
  %4826 = vmatpush.msra.mxu0 %v2392
  %4827 = vmatpush.msra.mxu0 %v2376
  %4828 = vmatpush.msra.mxu0 %v2360
  %4829 = vmatpush.msra.mxu0 %v2344
  %4830 = vmatpush.msra.mxu0 %v2328
  %4831 = vmatpush.msra.mxu0 %v2312
  %4832 = vmatpush.msra.mxu0 %v2296
  %4833 = vmatpush.msra.mxu0 %v2280
  %4834 = vmatpush.msra.mxu0 %v2264
  %4835 = vmatpush.msra.mxu0 %v2248
  %4836 = vmatpush.msra.mxu0 %v2232
  %4837 = vmatpush.msra.mxu0 %v2216
  %4838 = vmatpush.msra.mxu0 %v2200
  %4839 = vmatpush.msra.mxu0 %v2184
  %4840 = vmatmul.f32.gmra.mxu0 %v4603
  %v4841 = vpop.f32.mrf.mxu0
  %v4842 = vadd.f32 %v4822, %v4841
  %4843 = vdwg.mxu0
  %4844 = vmatpush.msra.mxu0 %v2169
  %4845 = vmatpush.msra.mxu0 %v2153
  %4846 = vmatpush.msra.mxu0 %v2137
  %4847 = vmatpush.msra.mxu0 %v2121
  %4848 = vmatpush.msra.mxu0 %v2105
  %4849 = vmatpush.msra.mxu0 %v2089
  %4850 = vmatpush.msra.mxu0 %v2073
  %4851 = vmatpush.msra.mxu0 %v2057
  %4852 = vmatpush.msra.mxu0 %v2041
  %4853 = vmatpush.msra.mxu0 %v2025
  %4854 = vmatpush.msra.mxu0 %v2009
  %4855 = vmatpush.msra.mxu0 %v1993
  %4856 = vmatpush.msra.mxu0 %v1977
  %4857 = vmatpush.msra.mxu0 %v1961
  %4858 = vmatpush.msra.mxu0 %v1945
  %4859 = vmatpush.msra.mxu0 %v1929
  %4860 = vmatmul.f32.gmra.mxu0 %v4602
  %v4861 = vpop.f32.mrf.mxu0
  %v4862 = vadd.f32 0.0, %v4861
  %4863 = vdwg.mxu0
  %4864 = vmatpush.msra.mxu0 %v2425
  %4865 = vmatpush.msra.mxu0 %v2409
  %4866 = vmatpush.msra.mxu0 %v2393
  %4867 = vmatpush.msra.mxu0 %v2377
  %4868 = vmatpush.msra.mxu0 %v2361
  %4869 = vmatpush.msra.mxu0 %v2345
  %4870 = vmatpush.msra.mxu0 %v2329
  %4871 = vmatpush.msra.mxu0 %v2313
  %4872 = vmatpush.msra.mxu0 %v2297
  %4873 = vmatpush.msra.mxu0 %v2281
  %4874 = vmatpush.msra.mxu0 %v2265
  %4875 = vmatpush.msra.mxu0 %v2249
  %4876 = vmatpush.msra.mxu0 %v2233
  %4877 = vmatpush.msra.mxu0 %v2217
  %4878 = vmatpush.msra.mxu0 %v2201
  %4879 = vmatpush.msra.mxu0 %v2185
  %4880 = vmatmul.f32.gmra.mxu0 %v4603
  %v4881 = vpop.f32.mrf.mxu0
  %v4882 = vadd.f32 %v4862, %v4881
  %4883 = vdwg.mxu0
  %4884 = vmatpush.msra.mxu0 %v2170
  %4885 = vmatpush.msra.mxu0 %v2154
  %4886 = vmatpush.msra.mxu0 %v2138
  %4887 = vmatpush.msra.mxu0 %v2122
  %4888 = vmatpush.msra.mxu0 %v2106
  %4889 = vmatpush.msra.mxu0 %v2090
  %4890 = vmatpush.msra.mxu0 %v2074
  %4891 = vmatpush.msra.mxu0 %v2058
  %4892 = vmatpush.msra.mxu0 %v2042
  %4893 = vmatpush.msra.mxu0 %v2026
  %4894 = vmatpush.msra.mxu0 %v2010
  %4895 = vmatpush.msra.mxu0 %v1994
  %4896 = vmatpush.msra.mxu0 %v1978
  %4897 = vmatpush.msra.mxu0 %v1962
  %4898 = vmatpush.msra.mxu0 %v1946
  %4899 = vmatpush.msra.mxu0 %v1930
  %4900 = vmatmul.f32.gmra.mxu0 %v4602
  %v4901 = vpop.f32.mrf.mxu0
  %v4902 = vadd.f32 0.0, %v4901
  %4903 = vdwg.mxu0
  %4904 = vmatpush.msra.mxu0 %v2426
  %4905 = vmatpush.msra.mxu0 %v2410
  %4906 = vmatpush.msra.mxu0 %v2394
  %4907 = vmatpush.msra.mxu0 %v2378
  %4908 = vmatpush.msra.mxu0 %v2362
  %4909 = vmatpush.msra.mxu0 %v2346
  %4910 = vmatpush.msra.mxu0 %v2330
  %4911 = vmatpush.msra.mxu0 %v2314
  %4912 = vmatpush.msra.mxu0 %v2298
  %4913 = vmatpush.msra.mxu0 %v2282
  %4914 = vmatpush.msra.mxu0 %v2266
  %4915 = vmatpush.msra.mxu0 %v2250
  %4916 = vmatpush.msra.mxu0 %v2234
  %4917 = vmatpush.msra.mxu0 %v2218
  %4918 = vmatpush.msra.mxu0 %v2202
  %4919 = vmatpush.msra.mxu0 %v2186
  %4920 = vmatmul.f32.gmra.mxu0 %v4603
  %v4921 = vpop.f32.mrf.mxu0
  %v4922 = vadd.f32 %v4902, %v4921
  %4923 = vdwg.mxu0
  %4924 = vmatpush.msra.mxu0 %v2171
  %4925 = vmatpush.msra.mxu0 %v2155
  %4926 = vmatpush.msra.mxu0 %v2139
  %4927 = vmatpush.msra.mxu0 %v2123
  %4928 = vmatpush.msra.mxu0 %v2107
  %4929 = vmatpush.msra.mxu0 %v2091
  %4930 = vmatpush.msra.mxu0 %v2075
  %4931 = vmatpush.msra.mxu0 %v2059
  %4932 = vmatpush.msra.mxu0 %v2043
  %4933 = vmatpush.msra.mxu0 %v2027
  %4934 = vmatpush.msra.mxu0 %v2011
  %4935 = vmatpush.msra.mxu0 %v1995
  %4936 = vmatpush.msra.mxu0 %v1979
  %4937 = vmatpush.msra.mxu0 %v1963
  %4938 = vmatpush.msra.mxu0 %v1947
  %4939 = vmatpush.msra.mxu0 %v1931
  %4940 = vmatmul.f32.gmra.mxu0 %v4602
  %v4941 = vpop.f32.mrf.mxu0
  %v4942 = vadd.f32 0.0, %v4941
  %4943 = vdwg.mxu0
  %4944 = vmatpush.msra.mxu0 %v2427
  %4945 = vmatpush.msra.mxu0 %v2411
  %4946 = vmatpush.msra.mxu0 %v2395
  %4947 = vmatpush.msra.mxu0 %v2379
  %4948 = vmatpush.msra.mxu0 %v2363
  %4949 = vmatpush.msra.mxu0 %v2347
  %4950 = vmatpush.msra.mxu0 %v2331
  %4951 = vmatpush.msra.mxu0 %v2315
  %4952 = vmatpush.msra.mxu0 %v2299
  %4953 = vmatpush.msra.mxu0 %v2283
  %4954 = vmatpush.msra.mxu0 %v2267
  %4955 = vmatpush.msra.mxu0 %v2251
  %4956 = vmatpush.msra.mxu0 %v2235
  %4957 = vmatpush.msra.mxu0 %v2219
  %4958 = vmatpush.msra.mxu0 %v2203
  %4959 = vmatpush.msra.mxu0 %v2187
  %4960 = vmatmul.f32.gmra.mxu0 %v4603
  %v4961 = vpop.f32.mrf.mxu0
  %v4962 = vadd.f32 %v4942, %v4961
  %4963 = vdwg.mxu0
  %4964 = vmatpush.msra.mxu0 %v2172
  %4965 = vmatpush.msra.mxu0 %v2156
  %4966 = vmatpush.msra.mxu0 %v2140
  %4967 = vmatpush.msra.mxu0 %v2124
  %4968 = vmatpush.msra.mxu0 %v2108
  %4969 = vmatpush.msra.mxu0 %v2092
  %4970 = vmatpush.msra.mxu0 %v2076
  %4971 = vmatpush.msra.mxu0 %v2060
  %4972 = vmatpush.msra.mxu0 %v2044
  %4973 = vmatpush.msra.mxu0 %v2028
  %4974 = vmatpush.msra.mxu0 %v2012
  %4975 = vmatpush.msra.mxu0 %v1996
  %4976 = vmatpush.msra.mxu0 %v1980
  %4977 = vmatpush.msra.mxu0 %v1964
  %4978 = vmatpush.msra.mxu0 %v1948
  %4979 = vmatpush.msra.mxu0 %v1932
  %4980 = vmatmul.f32.gmra.mxu0 %v4602
  %v4981 = vpop.f32.mrf.mxu0
  %v4982 = vadd.f32 0.0, %v4981
  %4983 = vdwg.mxu0
  %4984 = vmatpush.msra.mxu0 %v2428
  %4985 = vmatpush.msra.mxu0 %v2412
  %4986 = vmatpush.msra.mxu0 %v2396
  %4987 = vmatpush.msra.mxu0 %v2380
  %4988 = vmatpush.msra.mxu0 %v2364
  %4989 = vmatpush.msra.mxu0 %v2348
  %4990 = vmatpush.msra.mxu0 %v2332
  %4991 = vmatpush.msra.mxu0 %v2316
  %4992 = vmatpush.msra.mxu0 %v2300
  %4993 = vmatpush.msra.mxu0 %v2284
  %4994 = vmatpush.msra.mxu0 %v2268
  %4995 = vmatpush.msra.mxu0 %v2252
  %4996 = vmatpush.msra.mxu0 %v2236
  %4997 = vmatpush.msra.mxu0 %v2220
  %4998 = vmatpush.msra.mxu0 %v2204
  %4999 = vmatpush.msra.mxu0 %v2188
  %5000 = vmatmul.f32.gmra.mxu0 %v4603
  %v5001 = vpop.f32.mrf.mxu0
  %v5002 = vadd.f32 %v4982, %v5001
  %5003 = vdwg.mxu0
  %5004 = vmatpush.msra.mxu0 %v2173
  %5005 = vmatpush.msra.mxu0 %v2157
  %5006 = vmatpush.msra.mxu0 %v2141
  %5007 = vmatpush.msra.mxu0 %v2125
  %5008 = vmatpush.msra.mxu0 %v2109
  %5009 = vmatpush.msra.mxu0 %v2093
  %5010 = vmatpush.msra.mxu0 %v2077
  %5011 = vmatpush.msra.mxu0 %v2061
  %5012 = vmatpush.msra.mxu0 %v2045
  %5013 = vmatpush.msra.mxu0 %v2029
  %5014 = vmatpush.msra.mxu0 %v2013
  %5015 = vmatpush.msra.mxu0 %v1997
  %5016 = vmatpush.msra.mxu0 %v1981
  %5017 = vmatpush.msra.mxu0 %v1965
  %5018 = vmatpush.msra.mxu0 %v1949
  %5019 = vmatpush.msra.mxu0 %v1933
  %5020 = vmatmul.f32.gmra.mxu0 %v4602
  %v5021 = vpop.f32.mrf.mxu0
  %v5022 = vadd.f32 0.0, %v5021
  %5023 = vdwg.mxu0
  %5024 = vmatpush.msra.mxu0 %v2429
  %5025 = vmatpush.msra.mxu0 %v2413
  %5026 = vmatpush.msra.mxu0 %v2397
  %5027 = vmatpush.msra.mxu0 %v2381
  %5028 = vmatpush.msra.mxu0 %v2365
  %5029 = vmatpush.msra.mxu0 %v2349
  %5030 = vmatpush.msra.mxu0 %v2333
  %5031 = vmatpush.msra.mxu0 %v2317
  %5032 = vmatpush.msra.mxu0 %v2301
  %5033 = vmatpush.msra.mxu0 %v2285
  %5034 = vmatpush.msra.mxu0 %v2269
  %5035 = vmatpush.msra.mxu0 %v2253
  %5036 = vmatpush.msra.mxu0 %v2237
  %5037 = vmatpush.msra.mxu0 %v2221
  %5038 = vmatpush.msra.mxu0 %v2205
  %5039 = vmatpush.msra.mxu0 %v2189
  %5040 = vmatmul.f32.gmra.mxu0 %v4603
  %v5041 = vpop.f32.mrf.mxu0
  %v5042 = vadd.f32 %v5022, %v5041
  %5043 = vdwg.mxu0
  %5044 = vmatpush.msra.mxu0 %v2174
  %5045 = vmatpush.msra.mxu0 %v2158
  %5046 = vmatpush.msra.mxu0 %v2142
  %5047 = vmatpush.msra.mxu0 %v2126
  %5048 = vmatpush.msra.mxu0 %v2110
  %5049 = vmatpush.msra.mxu0 %v2094
  %5050 = vmatpush.msra.mxu0 %v2078
  %5051 = vmatpush.msra.mxu0 %v2062
  %5052 = vmatpush.msra.mxu0 %v2046
  %5053 = vmatpush.msra.mxu0 %v2030
  %5054 = vmatpush.msra.mxu0 %v2014
  %5055 = vmatpush.msra.mxu0 %v1998
  %5056 = vmatpush.msra.mxu0 %v1982
  %5057 = vmatpush.msra.mxu0 %v1966
  %5058 = vmatpush.msra.mxu0 %v1950
  %5059 = vmatpush.msra.mxu0 %v1934
  %5060 = vmatmul.f32.gmra.mxu0 %v4602
  %v5061 = vpop.f32.mrf.mxu0
  %v5062 = vadd.f32 0.0, %v5061
  %5063 = vdwg.mxu0
  %5064 = vmatpush.msra.mxu0 %v2430
  %5065 = vmatpush.msra.mxu0 %v2414
  %5066 = vmatpush.msra.mxu0 %v2398
  %5067 = vmatpush.msra.mxu0 %v2382
  %5068 = vmatpush.msra.mxu0 %v2366
  %5069 = vmatpush.msra.mxu0 %v2350
  %5070 = vmatpush.msra.mxu0 %v2334
  %5071 = vmatpush.msra.mxu0 %v2318
  %5072 = vmatpush.msra.mxu0 %v2302
  %5073 = vmatpush.msra.mxu0 %v2286
  %5074 = vmatpush.msra.mxu0 %v2270
  %5075 = vmatpush.msra.mxu0 %v2254
  %5076 = vmatpush.msra.mxu0 %v2238
  %5077 = vmatpush.msra.mxu0 %v2222
  %5078 = vmatpush.msra.mxu0 %v2206
  %5079 = vmatpush.msra.mxu0 %v2190
  %5080 = vmatmul.f32.gmra.mxu0 %v4603
  %v5081 = vpop.f32.mrf.mxu0
  %v5082 = vadd.f32 %v5062, %v5081
  %5083 = vdwg.mxu0
  %5084 = vmatpush.msra.mxu0 %v2175
  %5085 = vmatpush.msra.mxu0 %v2159
  %5086 = vmatpush.msra.mxu0 %v2143
  %5087 = vmatpush.msra.mxu0 %v2127
  %5088 = vmatpush.msra.mxu0 %v2111
  %5089 = vmatpush.msra.mxu0 %v2095
  %5090 = vmatpush.msra.mxu0 %v2079
  %5091 = vmatpush.msra.mxu0 %v2063
  %5092 = vmatpush.msra.mxu0 %v2047
  %5093 = vmatpush.msra.mxu0 %v2031
  %5094 = vmatpush.msra.mxu0 %v2015
  %5095 = vmatpush.msra.mxu0 %v1999
  %5096 = vmatpush.msra.mxu0 %v1983
  %5097 = vmatpush.msra.mxu0 %v1967
  %5098 = vmatpush.msra.mxu0 %v1951
  %5099 = vmatpush.msra.mxu0 %v1935
  %5100 = vmatmul.f32.gmra.mxu0 %v4602
  %v5101 = vpop.f32.mrf.mxu0
  %v5102 = vadd.f32 0.0, %v5101
  %5103 = vdwg.mxu0
  %5104 = vmatpush.msra.mxu0 %v2431
  %5105 = vmatpush.msra.mxu0 %v2415
  %5106 = vmatpush.msra.mxu0 %v2399
  %5107 = vmatpush.msra.mxu0 %v2383
  %5108 = vmatpush.msra.mxu0 %v2367
  %5109 = vmatpush.msra.mxu0 %v2351
  %5110 = vmatpush.msra.mxu0 %v2335
  %5111 = vmatpush.msra.mxu0 %v2319
  %5112 = vmatpush.msra.mxu0 %v2303
  %5113 = vmatpush.msra.mxu0 %v2287
  %5114 = vmatpush.msra.mxu0 %v2271
  %5115 = vmatpush.msra.mxu0 %v2255
  %5116 = vmatpush.msra.mxu0 %v2239
  %5117 = vmatpush.msra.mxu0 %v2223
  %5118 = vmatpush.msra.mxu0 %v2207
  %5119 = vmatpush.msra.mxu0 %v2191
  %5120 = vmatmul.f32.gmra.mxu0 %v4603
  %v5121 = vpop.f32.mrf.mxu0
  %v5122 = vadd.f32 %v5102, %v5121
  %5123 = vdwg.mxu0
  %5124 = vmatpush.msra.mxu0 %v2176
  %5125 = vmatpush.msra.mxu0 %v2160
  %5126 = vmatpush.msra.mxu0 %v2144
  %5127 = vmatpush.msra.mxu0 %v2128
  %5128 = vmatpush.msra.mxu0 %v2112
  %5129 = vmatpush.msra.mxu0 %v2096
  %5130 = vmatpush.msra.mxu0 %v2080
  %5131 = vmatpush.msra.mxu0 %v2064
  %5132 = vmatpush.msra.mxu0 %v2048
  %5133 = vmatpush.msra.mxu0 %v2032
  %5134 = vmatpush.msra.mxu0 %v2016
  %5135 = vmatpush.msra.mxu0 %v2000
  %5136 = vmatpush.msra.mxu0 %v1984
  %5137 = vmatpush.msra.mxu0 %v1968
  %5138 = vmatpush.msra.mxu0 %v1952
  %5139 = vmatpush.msra.mxu0 %v1936
  %5140 = vmatmul.f32.gmra.mxu0 %v4602
  %v5141 = vpop.f32.mrf.mxu0
  %v5142 = vadd.f32 0.0, %v5141
  %5143 = vdwg.mxu0
  %5144 = vmatpush.msra.mxu0 %v2432
  %5145 = vmatpush.msra.mxu0 %v2416
  %5146 = vmatpush.msra.mxu0 %v2400
  %5147 = vmatpush.msra.mxu0 %v2384
  %5148 = vmatpush.msra.mxu0 %v2368
  %5149 = vmatpush.msra.mxu0 %v2352
  %5150 = vmatpush.msra.mxu0 %v2336
  %5151 = vmatpush.msra.mxu0 %v2320
  %5152 = vmatpush.msra.mxu0 %v2304
  %5153 = vmatpush.msra.mxu0 %v2288
  %5154 = vmatpush.msra.mxu0 %v2272
  %5155 = vmatpush.msra.mxu0 %v2256
  %5156 = vmatpush.msra.mxu0 %v2240
  %5157 = vmatpush.msra.mxu0 %v2224
  %5158 = vmatpush.msra.mxu0 %v2208
  %5159 = vmatpush.msra.mxu0 %v2192
  %5160 = vmatmul.f32.gmra.mxu0 %v4603
  %v5161 = vpop.f32.mrf.mxu0
  %v5162 = vadd.f32 %v5142, %v5161
  %5163 = vdwg.mxu0
  %5164 = vmatpush.msra.mxu0 %v2177
  %5165 = vmatpush.msra.mxu0 %v2161
  %5166 = vmatpush.msra.mxu0 %v2145
  %5167 = vmatpush.msra.mxu0 %v2129
  %5168 = vmatpush.msra.mxu0 %v2113
  %5169 = vmatpush.msra.mxu0 %v2097
  %5170 = vmatpush.msra.mxu0 %v2081
  %5171 = vmatpush.msra.mxu0 %v2065
  %5172 = vmatpush.msra.mxu0 %v2049
  %5173 = vmatpush.msra.mxu0 %v2033
  %5174 = vmatpush.msra.mxu0 %v2017
  %5175 = vmatpush.msra.mxu0 %v2001
  %5176 = vmatpush.msra.mxu0 %v1985
  %5177 = vmatpush.msra.mxu0 %v1969
  %5178 = vmatpush.msra.mxu0 %v1953
  %5179 = vmatpush.msra.mxu0 %v1937
  %5180 = vmatmul.f32.gmra.mxu0 %v4602
  %v5181 = vpop.f32.mrf.mxu0
  %v5182 = vadd.f32 0.0, %v5181
  %5183 = vdwg.mxu0
  %5184 = vmatpush.msra.mxu0 %v2433
  %5185 = vmatpush.msra.mxu0 %v2417
  %5186 = vmatpush.msra.mxu0 %v2401
  %5187 = vmatpush.msra.mxu0 %v2385
  %5188 = vmatpush.msra.mxu0 %v2369
  %5189 = vmatpush.msra.mxu0 %v2353
  %5190 = vmatpush.msra.mxu0 %v2337
  %5191 = vmatpush.msra.mxu0 %v2321
  %5192 = vmatpush.msra.mxu0 %v2305
  %5193 = vmatpush.msra.mxu0 %v2289
  %5194 = vmatpush.msra.mxu0 %v2273
  %5195 = vmatpush.msra.mxu0 %v2257
  %5196 = vmatpush.msra.mxu0 %v2241
  %5197 = vmatpush.msra.mxu0 %v2225
  %5198 = vmatpush.msra.mxu0 %v2209
  %5199 = vmatpush.msra.mxu0 %v2193
  %5200 = vmatmul.f32.gmra.mxu0 %v4603
  %v5201 = vpop.f32.mrf.mxu0
  %v5202 = vadd.f32 %v5182, %v5201
  %5203 = vdwg.mxu0
  %5204 = vmatpush.msra.mxu0 %v2178
  %5205 = vmatpush.msra.mxu0 %v2162
  %5206 = vmatpush.msra.mxu0 %v2146
  %5207 = vmatpush.msra.mxu0 %v2130
  %5208 = vmatpush.msra.mxu0 %v2114
  %5209 = vmatpush.msra.mxu0 %v2098
  %5210 = vmatpush.msra.mxu0 %v2082
  %5211 = vmatpush.msra.mxu0 %v2066
  %5212 = vmatpush.msra.mxu0 %v2050
  %5213 = vmatpush.msra.mxu0 %v2034
  %5214 = vmatpush.msra.mxu0 %v2018
  %5215 = vmatpush.msra.mxu0 %v2002
  %5216 = vmatpush.msra.mxu0 %v1986
  %5217 = vmatpush.msra.mxu0 %v1970
  %5218 = vmatpush.msra.mxu0 %v1954
  %5219 = vmatpush.msra.mxu0 %v1938
  %5220 = vmatmul.f32.gmra.mxu0 %v4602
  %v5221 = vpop.f32.mrf.mxu0
  %v5222 = vadd.f32 0.0, %v5221
  %5223 = vdwg.mxu0
  %5224 = vmatpush.msra.mxu0 %v2434
  %5225 = vmatpush.msra.mxu0 %v2418
  %5226 = vmatpush.msra.mxu0 %v2402
  %5227 = vmatpush.msra.mxu0 %v2386
  %5228 = vmatpush.msra.mxu0 %v2370
  %5229 = vmatpush.msra.mxu0 %v2354
  %5230 = vmatpush.msra.mxu0 %v2338
  %5231 = vmatpush.msra.mxu0 %v2322
  %5232 = vmatpush.msra.mxu0 %v2306
  %5233 = vmatpush.msra.mxu0 %v2290
  %5234 = vmatpush.msra.mxu0 %v2274
  %5235 = vmatpush.msra.mxu0 %v2258
  %5236 = vmatpush.msra.mxu0 %v2242
  %5237 = vmatpush.msra.mxu0 %v2226
  %5238 = vmatpush.msra.mxu0 %v2210
  %5239 = vmatpush.msra.mxu0 %v2194
  %5240 = vmatmul.f32.gmra.mxu0 %v4603
  %v5241 = vpop.f32.mrf.mxu0
  %v5242 = vadd.f32 %v5222, %v5241
  %5243 = vdwg.mxu0
  %v5244 = vsel %vm1076, %v4642, %v4962
  %v5245 = vsel %vm1076, %v4682, %v5002
  %v5246 = vsel %vm1076, %v4722, %v5042
  %v5247 = vsel %vm1076, %v4762, %v5082
  %v5248 = vsel %vm1076, %v4802, %v5122
  %v5249 = vsel %vm1076, %v4842, %v5162
  %v5250 = vsel %vm1076, %v4882, %v5202
  %v5251 = vsel %vm1076, %v4922, %v5242
  %v5252 = vld [vmem:[%s1494] sm:$0xff]
  %v5253 = vld [vmem:[%s1494 + $0x8] sm:$0xff]
  %v5254 = vld [vmem:[%s1494 + $0x10] sm:$0xff]
  %v5255 = vld [vmem:[%s1494 + $0x18] sm:$0xff]
  %5260 = vst [vmem:[#allocation1] ss:$2 sm:$0xff] %v5252
  %s5261 = scalar_lea.vmem [#allocation1], 16
  %5262 = vst [vmem:[%s5261] ss:$2 sm:$0xff] %v5253
  %s5263 = scalar_lea.vmem [#allocation1], 32
  %5264 = vst [vmem:[%s5263] ss:$2 sm:$0xff] %v5254
  %s5265 = scalar_lea.vmem [#allocation1], 48
  %5266 = vst [vmem:[%s5265] ss:$2 sm:$0xff] %v5255
  %v5267 = vld.sshfl [vmem:[#allocation1] sm:$0xff pattern:$0x75316420]
  %v5268 = vld.sshfl [vmem:[#allocation1 + $0x8] sm:$0xff pattern:$0x75316420]
  %v5269 = vld.sshfl [vmem:[#allocation1 + $0x10] sm:$0xff pattern:$0x75316420]
  %v5270 = vld.sshfl [vmem:[#allocation1 + $0x18] sm:$0xff pattern:$0x75316420]
  %v5271 = vld.sshfl [vmem:[#allocation1 + $0x20] sm:$0xff pattern:$0x75316420]
  %v5272 = vld.sshfl [vmem:[#allocation1 + $0x28] sm:$0xff pattern:$0x75316420]
  %v5273 = vld.sshfl [vmem:[#allocation1 + $0x30] sm:$0xff pattern:$0x75316420]
  %v5274 = vld.sshfl [vmem:[#allocation1 + $0x38] sm:$0xff pattern:$0x75316420]
  %v5283 = vadd.f32 %v5244, %v5267
  %v5284 = vadd.f32 %v5245, %v5268
  %v5285 = vadd.f32 %v5246, %v5269
  %v5286 = vadd.f32 %v5247, %v5270
  %v5287 = vadd.f32 %v5248, %v5271
  %v5288 = vadd.f32 %v5249, %v5272
  %v5289 = vadd.f32 %v5250, %v5273
  %v5290 = vadd.f32 %v5251, %v5274
  %v5291 = vmul.f32 %v5283, 0.5
  %v5292 = vmul.f32 %v5284, 0.5
  %v5293 = vtanh.pop %v5291
  %v5294 = vtanh.pop %v5292
  %v5295 = vadd.f32 %v5293, 1.0
  %v5296 = vadd.f32 %v5294, 1.0
  %v5297 = vmul.f32 %v5295, 0.5
  %v5298 = vmul.f32 %v5296, 0.5
  %v5299 = vmul.f32 %v5285, 0.5
  %v5300 = vmul.f32 %v5286, 0.5
  %v5301 = vtanh.pop %v5299
  %v5302 = vtanh.pop %v5300
  %v5303 = vadd.f32 %v5301, 1.0
  %v5304 = vadd.f32 %v5302, 1.0
  %v5305 = vmul.f32 %v5303, 0.5
  %v5306 = vmul.f32 %v5304, 0.5
  %v5307 = vtanh.pop %v5287
  %v5308 = vtanh.pop %v5288
  %v5309 = vmul.f32 %v5289, 0.5
  %v5310 = vmul.f32 %v5290, 0.5
  %v5311 = vtanh.pop %v5309
  %v5312 = vtanh.pop %v5310
  %v5313 = vadd.f32 %v5311, 1.0
  %v5314 = vadd.f32 %v5312, 1.0
  %v5315 = vmul.f32 %v5313, 0.5
  %v5316 = vmul.f32 %v5314, 0.5
  %v5317 = vmul.f32 %v5305, %v4598
  %v5318 = vmul.f32 %v5306, %v4599
  %v5319 = vmul.f32 %v5297, %v5307
  %v5320 = vmul.f32 %v5298, %v5308
  %v5321 = vadd.f32 %v5317, %v5319
  %v5322 = vadd.f32 %v5318, %v5320
  %v5323 = vtanh.pop %v5321
  %v5324 = vtanh.pop %v5322
  %v5325 = vmul.f32 %v5315, %v5323
  %v5326 = vmul.f32 %v5316, %v5324
  %5327 = vmatpush.msra.mxu0 %v2163
  %5328 = vmatpush.msra.mxu0 %v2147
  %5329 = vmatpush.msra.mxu0 %v2131
  %5330 = vmatpush.msra.mxu0 %v2115
  %5331 = vmatpush.msra.mxu0 %v2099
  %5332 = vmatpush.msra.mxu0 %v2083
  %5333 = vmatpush.msra.mxu0 %v2067
  %5334 = vmatpush.msra.mxu0 %v2051
  %5335 = vmatpush.msra.mxu0 %v2035
  %5336 = vmatpush.msra.mxu0 %v2019
  %5337 = vmatpush.msra.mxu0 %v2003
  %5338 = vmatpush.msra.mxu0 %v1987
  %5339 = vmatpush.msra.mxu0 %v1971
  %5340 = vmatpush.msra.mxu0 %v1955
  %5341 = vmatpush.msra.mxu0 %v1939
  %5342 = vmatpush.msra.mxu0 %v1923
  %5343 = vmatmul.f32.gmra.mxu0 %v5325
  %v5344 = vpop.f32.mrf.mxu0
  %v5345 = vadd.f32 0.0, %v5344
  %5346 = vdwg.mxu0
  %5347 = vmatpush.msra.mxu0 %v2419
  %5348 = vmatpush.msra.mxu0 %v2403
  %5349 = vmatpush.msra.mxu0 %v2387
  %5350 = vmatpush.msra.mxu0 %v2371
  %5351 = vmatpush.msra.mxu0 %v2355
  %5352 = vmatpush.msra.mxu0 %v2339
  %5353 = vmatpush.msra.mxu0 %v2323
  %5354 = vmatpush.msra.mxu0 %v2307
  %5355 = vmatpush.msra.mxu0 %v2291
  %5356 = vmatpush.msra.mxu0 %v2275
  %5357 = vmatpush.msra.mxu0 %v2259
  %5358 = vmatpush.msra.mxu0 %v2243
  %5359 = vmatpush.msra.mxu0 %v2227
  %5360 = vmatpush.msra.mxu0 %v2211
  %5361 = vmatpush.msra.mxu0 %v2195
  %5362 = vmatpush.msra.mxu0 %v2179
  %5363 = vmatmul.f32.gmra.mxu0 %v5326
  %v5364 = vpop.f32.mrf.mxu0
  %v5365 = vadd.f32 %v5345, %v5364
  %5366 = vdwg.mxu0
  %5367 = vmatpush.msra.mxu0 %v2164
  %5368 = vmatpush.msra.mxu0 %v2148
  %5369 = vmatpush.msra.mxu0 %v2132
  %5370 = vmatpush.msra.mxu0 %v2116
  %5371 = vmatpush.msra.mxu0 %v2100
  %5372 = vmatpush.msra.mxu0 %v2084
  %5373 = vmatpush.msra.mxu0 %v2068
  %5374 = vmatpush.msra.mxu0 %v2052
  %5375 = vmatpush.msra.mxu0 %v2036
  %5376 = vmatpush.msra.mxu0 %v2020
  %5377 = vmatpush.msra.mxu0 %v2004
  %5378 = vmatpush.msra.mxu0 %v1988
  %5379 = vmatpush.msra.mxu0 %v1972
  %5380 = vmatpush.msra.mxu0 %v1956
  %5381 = vmatpush.msra.mxu0 %v1940
  %5382 = vmatpush.msra.mxu0 %v1924
  %5383 = vmatmul.f32.gmra.mxu0 %v5325
  %v5384 = vpop.f32.mrf.mxu0
  %v5385 = vadd.f32 0.0, %v5384
  %5386 = vdwg.mxu0
  %5387 = vmatpush.msra.mxu0 %v2420
  %5388 = vmatpush.msra.mxu0 %v2404
  %5389 = vmatpush.msra.mxu0 %v2388
  %5390 = vmatpush.msra.mxu0 %v2372
  %5391 = vmatpush.msra.mxu0 %v2356
  %5392 = vmatpush.msra.mxu0 %v2340
  %5393 = vmatpush.msra.mxu0 %v2324
  %5394 = vmatpush.msra.mxu0 %v2308
  %5395 = vmatpush.msra.mxu0 %v2292
  %5396 = vmatpush.msra.mxu0 %v2276
  %5397 = vmatpush.msra.mxu0 %v2260
  %5398 = vmatpush.msra.mxu0 %v2244
  %5399 = vmatpush.msra.mxu0 %v2228
  %5400 = vmatpush.msra.mxu0 %v2212
  %5401 = vmatpush.msra.mxu0 %v2196
  %5402 = vmatpush.msra.mxu0 %v2180
  %5403 = vmatmul.f32.gmra.mxu0 %v5326
  %v5404 = vpop.f32.mrf.mxu0
  %v5405 = vadd.f32 %v5385, %v5404
  %5406 = vdwg.mxu0
  %5407 = vmatpush.msra.mxu0 %v2165
  %5408 = vmatpush.msra.mxu0 %v2149
  %5409 = vmatpush.msra.mxu0 %v2133
  %5410 = vmatpush.msra.mxu0 %v2117
  %5411 = vmatpush.msra.mxu0 %v2101
  %5412 = vmatpush.msra.mxu0 %v2085
  %5413 = vmatpush.msra.mxu0 %v2069
  %5414 = vmatpush.msra.mxu0 %v2053
  %5415 = vmatpush.msra.mxu0 %v2037
  %5416 = vmatpush.msra.mxu0 %v2021
  %5417 = vmatpush.msra.mxu0 %v2005
  %5418 = vmatpush.msra.mxu0 %v1989
  %5419 = vmatpush.msra.mxu0 %v1973
  %5420 = vmatpush.msra.mxu0 %v1957
  %5421 = vmatpush.msra.mxu0 %v1941
  %5422 = vmatpush.msra.mxu0 %v1925
  %5423 = vmatmul.f32.gmra.mxu0 %v5325
  %v5424 = vpop.f32.mrf.mxu0
  %v5425 = vadd.f32 0.0, %v5424
  %5426 = vdwg.mxu0
  %5427 = vmatpush.msra.mxu0 %v2421
  %5428 = vmatpush.msra.mxu0 %v2405
  %5429 = vmatpush.msra.mxu0 %v2389
  %5430 = vmatpush.msra.mxu0 %v2373
  %5431 = vmatpush.msra.mxu0 %v2357
  %5432 = vmatpush.msra.mxu0 %v2341
  %5433 = vmatpush.msra.mxu0 %v2325
  %5434 = vmatpush.msra.mxu0 %v2309
  %5435 = vmatpush.msra.mxu0 %v2293
  %5436 = vmatpush.msra.mxu0 %v2277
  %5437 = vmatpush.msra.mxu0 %v2261
  %5438 = vmatpush.msra.mxu0 %v2245
  %5439 = vmatpush.msra.mxu0 %v2229
  %5440 = vmatpush.msra.mxu0 %v2213
  %5441 = vmatpush.msra.mxu0 %v2197
  %5442 = vmatpush.msra.mxu0 %v2181
  %5443 = vmatmul.f32.gmra.mxu0 %v5326
  %v5444 = vpop.f32.mrf.mxu0
  %v5445 = vadd.f32 %v5425, %v5444
  %5446 = vdwg.mxu0
  %5447 = vmatpush.msra.mxu0 %v2166
  %5448 = vmatpush.msra.mxu0 %v2150
  %5449 = vmatpush.msra.mxu0 %v2134
  %5450 = vmatpush.msra.mxu0 %v2118
  %5451 = vmatpush.msra.mxu0 %v2102
  %5452 = vmatpush.msra.mxu0 %v2086
  %5453 = vmatpush.msra.mxu0 %v2070
  %5454 = vmatpush.msra.mxu0 %v2054
  %5455 = vmatpush.msra.mxu0 %v2038
  %5456 = vmatpush.msra.mxu0 %v2022
  %5457 = vmatpush.msra.mxu0 %v2006
  %5458 = vmatpush.msra.mxu0 %v1990
  %5459 = vmatpush.msra.mxu0 %v1974
  %5460 = vmatpush.msra.mxu0 %v1958
  %5461 = vmatpush.msra.mxu0 %v1942
  %5462 = vmatpush.msra.mxu0 %v1926
  %5463 = vmatmul.f32.gmra.mxu0 %v5325
  %v5464 = vpop.f32.mrf.mxu0
  %v5465 = vadd.f32 0.0, %v5464
  %5466 = vdwg.mxu0
  %5467 = vmatpush.msra.mxu0 %v2422
  %5468 = vmatpush.msra.mxu0 %v2406
  %5469 = vmatpush.msra.mxu0 %v2390
  %5470 = vmatpush.msra.mxu0 %v2374
  %5471 = vmatpush.msra.mxu0 %v2358
  %5472 = vmatpush.msra.mxu0 %v2342
  %5473 = vmatpush.msra.mxu0 %v2326
  %5474 = vmatpush.msra.mxu0 %v2310
  %5475 = vmatpush.msra.mxu0 %v2294
  %5476 = vmatpush.msra.mxu0 %v2278
  %5477 = vmatpush.msra.mxu0 %v2262
  %5478 = vmatpush.msra.mxu0 %v2246
  %5479 = vmatpush.msra.mxu0 %v2230
  %5480 = vmatpush.msra.mxu0 %v2214
  %5481 = vmatpush.msra.mxu0 %v2198
  %5482 = vmatpush.msra.mxu0 %v2182
  %5483 = vmatmul.f32.gmra.mxu0 %v5326
  %v5484 = vpop.f32.mrf.mxu0
  %v5485 = vadd.f32 %v5465, %v5484
  %5486 = vdwg.mxu0
  %5487 = vmatpush.msra.mxu0 %v2167
  %5488 = vmatpush.msra.mxu0 %v2151
  %5489 = vmatpush.msra.mxu0 %v2135
  %5490 = vmatpush.msra.mxu0 %v2119
  %5491 = vmatpush.msra.mxu0 %v2103
  %5492 = vmatpush.msra.mxu0 %v2087
  %5493 = vmatpush.msra.mxu0 %v2071
  %5494 = vmatpush.msra.mxu0 %v2055
  %5495 = vmatpush.msra.mxu0 %v2039
  %5496 = vmatpush.msra.mxu0 %v2023
  %5497 = vmatpush.msra.mxu0 %v2007
  %5498 = vmatpush.msra.mxu0 %v1991
  %5499 = vmatpush.msra.mxu0 %v1975
  %5500 = vmatpush.msra.mxu0 %v1959
  %5501 = vmatpush.msra.mxu0 %v1943
  %5502 = vmatpush.msra.mxu0 %v1927
  %5503 = vmatmul.f32.gmra.mxu0 %v5325
  %v5504 = vpop.f32.mrf.mxu0
  %v5505 = vadd.f32 0.0, %v5504
  %5506 = vdwg.mxu0
  %5507 = vmatpush.msra.mxu0 %v2423
  %5508 = vmatpush.msra.mxu0 %v2407
  %5509 = vmatpush.msra.mxu0 %v2391
  %5510 = vmatpush.msra.mxu0 %v2375
  %5511 = vmatpush.msra.mxu0 %v2359
  %5512 = vmatpush.msra.mxu0 %v2343
  %5513 = vmatpush.msra.mxu0 %v2327
  %5514 = vmatpush.msra.mxu0 %v2311
  %5515 = vmatpush.msra.mxu0 %v2295
  %5516 = vmatpush.msra.mxu0 %v2279
  %5517 = vmatpush.msra.mxu0 %v2263
  %5518 = vmatpush.msra.mxu0 %v2247
  %5519 = vmatpush.msra.mxu0 %v2231
  %5520 = vmatpush.msra.mxu0 %v2215
  %5521 = vmatpush.msra.mxu0 %v2199
  %5522 = vmatpush.msra.mxu0 %v2183
  %5523 = vmatmul.f32.gmra.mxu0 %v5326
  %v5524 = vpop.f32.mrf.mxu0
  %v5525 = vadd.f32 %v5505, %v5524
  %5526 = vdwg.mxu0
  %5527 = vmatpush.msra.mxu0 %v2168
  %5528 = vmatpush.msra.mxu0 %v2152
  %5529 = vmatpush.msra.mxu0 %v2136
  %5530 = vmatpush.msra.mxu0 %v2120
  %5531 = vmatpush.msra.mxu0 %v2104
  %5532 = vmatpush.msra.mxu0 %v2088
  %5533 = vmatpush.msra.mxu0 %v2072
  %5534 = vmatpush.msra.mxu0 %v2056
  %5535 = vmatpush.msra.mxu0 %v2040
  %5536 = vmatpush.msra.mxu0 %v2024
  %5537 = vmatpush.msra.mxu0 %v2008
  %5538 = vmatpush.msra.mxu0 %v1992
  %5539 = vmatpush.msra.mxu0 %v1976
  %5540 = vmatpush.msra.mxu0 %v1960
  %5541 = vmatpush.msra.mxu0 %v1944
  %5542 = vmatpush.msra.mxu0 %v1928
  %5543 = vmatmul.f32.gmra.mxu0 %v5325
  %v5544 = vpop.f32.mrf.mxu0
  %v5545 = vadd.f32 0.0, %v5544
  %5546 = vdwg.mxu0
  %5547 = vmatpush.msra.mxu0 %v2424
  %5548 = vmatpush.msra.mxu0 %v2408
  %5549 = vmatpush.msra.mxu0 %v2392
  %5550 = vmatpush.msra.mxu0 %v2376
  %5551 = vmatpush.msra.mxu0 %v2360
  %5552 = vmatpush.msra.mxu0 %v2344
  %5553 = vmatpush.msra.mxu0 %v2328
  %5554 = vmatpush.msra.mxu0 %v2312
  %5555 = vmatpush.msra.mxu0 %v2296
  %5556 = vmatpush.msra.mxu0 %v2280
  %5557 = vmatpush.msra.mxu0 %v2264
  %5558 = vmatpush.msra.mxu0 %v2248
  %5559 = vmatpush.msra.mxu0 %v2232
  %5560 = vmatpush.msra.mxu0 %v2216
  %5561 = vmatpush.msra.mxu0 %v2200
  %5562 = vmatpush.msra.mxu0 %v2184
  %5563 = vmatmul.f32.gmra.mxu0 %v5326
  %v5564 = vpop.f32.mrf.mxu0
  %v5565 = vadd.f32 %v5545, %v5564
  %5566 = vdwg.mxu0
  %5567 = vmatpush.msra.mxu0 %v2169
  %5568 = vmatpush.msra.mxu0 %v2153
  %5569 = vmatpush.msra.mxu0 %v2137
  %5570 = vmatpush.msra.mxu0 %v2121
  %5571 = vmatpush.msra.mxu0 %v2105
  %5572 = vmatpush.msra.mxu0 %v2089
  %5573 = vmatpush.msra.mxu0 %v2073
  %5574 = vmatpush.msra.mxu0 %v2057
  %5575 = vmatpush.msra.mxu0 %v2041
  %5576 = vmatpush.msra.mxu0 %v2025
  %5577 = vmatpush.msra.mxu0 %v2009
  %5578 = vmatpush.msra.mxu0 %v1993
  %5579 = vmatpush.msra.mxu0 %v1977
  %5580 = vmatpush.msra.mxu0 %v1961
  %5581 = vmatpush.msra.mxu0 %v1945
  %5582 = vmatpush.msra.mxu0 %v1929
  %5583 = vmatmul.f32.gmra.mxu0 %v5325
  %v5584 = vpop.f32.mrf.mxu0
  %v5585 = vadd.f32 0.0, %v5584
  %5586 = vdwg.mxu0
  %5587 = vmatpush.msra.mxu0 %v2425
  %5588 = vmatpush.msra.mxu0 %v2409
  %5589 = vmatpush.msra.mxu0 %v2393
  %5590 = vmatpush.msra.mxu0 %v2377
  %5591 = vmatpush.msra.mxu0 %v2361
  %5592 = vmatpush.msra.mxu0 %v2345
  %5593 = vmatpush.msra.mxu0 %v2329
  %5594 = vmatpush.msra.mxu0 %v2313
  %5595 = vmatpush.msra.mxu0 %v2297
  %5596 = vmatpush.msra.mxu0 %v2281
  %5597 = vmatpush.msra.mxu0 %v2265
  %5598 = vmatpush.msra.mxu0 %v2249
  %5599 = vmatpush.msra.mxu0 %v2233
  %5600 = vmatpush.msra.mxu0 %v2217
  %5601 = vmatpush.msra.mxu0 %v2201
  %5602 = vmatpush.msra.mxu0 %v2185
  %5603 = vmatmul.f32.gmra.mxu0 %v5326
  %v5604 = vpop.f32.mrf.mxu0
  %v5605 = vadd.f32 %v5585, %v5604
  %5606 = vdwg.mxu0
  %5607 = vmatpush.msra.mxu0 %v2170
  %5608 = vmatpush.msra.mxu0 %v2154
  %5609 = vmatpush.msra.mxu0 %v2138
  %5610 = vmatpush.msra.mxu0 %v2122
  %5611 = vmatpush.msra.mxu0 %v2106
  %5612 = vmatpush.msra.mxu0 %v2090
  %5613 = vmatpush.msra.mxu0 %v2074
  %5614 = vmatpush.msra.mxu0 %v2058
  %5615 = vmatpush.msra.mxu0 %v2042
  %5616 = vmatpush.msra.mxu0 %v2026
  %5617 = vmatpush.msra.mxu0 %v2010
  %5618 = vmatpush.msra.mxu0 %v1994
  %5619 = vmatpush.msra.mxu0 %v1978
  %5620 = vmatpush.msra.mxu0 %v1962
  %5621 = vmatpush.msra.mxu0 %v1946
  %5622 = vmatpush.msra.mxu0 %v1930
  %5623 = vmatmul.f32.gmra.mxu0 %v5325
  %v5624 = vpop.f32.mrf.mxu0
  %v5625 = vadd.f32 0.0, %v5624
  %5626 = vdwg.mxu0
  %5627 = vmatpush.msra.mxu0 %v2426
  %5628 = vmatpush.msra.mxu0 %v2410
  %5629 = vmatpush.msra.mxu0 %v2394
  %5630 = vmatpush.msra.mxu0 %v2378
  %5631 = vmatpush.msra.mxu0 %v2362
  %5632 = vmatpush.msra.mxu0 %v2346
  %5633 = vmatpush.msra.mxu0 %v2330
  %5634 = vmatpush.msra.mxu0 %v2314
  %5635 = vmatpush.msra.mxu0 %v2298
  %5636 = vmatpush.msra.mxu0 %v2282
  %5637 = vmatpush.msra.mxu0 %v2266
  %5638 = vmatpush.msra.mxu0 %v2250
  %5639 = vmatpush.msra.mxu0 %v2234
  %5640 = vmatpush.msra.mxu0 %v2218
  %5641 = vmatpush.msra.mxu0 %v2202
  %5642 = vmatpush.msra.mxu0 %v2186
  %5643 = vmatmul.f32.gmra.mxu0 %v5326
  %v5644 = vpop.f32.mrf.mxu0
  %v5645 = vadd.f32 %v5625, %v5644
  %5646 = vdwg.mxu0
  %5647 = vmatpush.msra.mxu0 %v2171
  %5648 = vmatpush.msra.mxu0 %v2155
  %5649 = vmatpush.msra.mxu0 %v2139
  %5650 = vmatpush.msra.mxu0 %v2123
  %5651 = vmatpush.msra.mxu0 %v2107
  %5652 = vmatpush.msra.mxu0 %v2091
  %5653 = vmatpush.msra.mxu0 %v2075
  %5654 = vmatpush.msra.mxu0 %v2059
  %5655 = vmatpush.msra.mxu0 %v2043
  %5656 = vmatpush.msra.mxu0 %v2027
  %5657 = vmatpush.msra.mxu0 %v2011
  %5658 = vmatpush.msra.mxu0 %v1995
  %5659 = vmatpush.msra.mxu0 %v1979
  %5660 = vmatpush.msra.mxu0 %v1963
  %5661 = vmatpush.msra.mxu0 %v1947
  %5662 = vmatpush.msra.mxu0 %v1931
  %5663 = vmatmul.f32.gmra.mxu0 %v5325
  %v5664 = vpop.f32.mrf.mxu0
  %v5665 = vadd.f32 0.0, %v5664
  %5666 = vdwg.mxu0
  %5667 = vmatpush.msra.mxu0 %v2427
  %5668 = vmatpush.msra.mxu0 %v2411
  %5669 = vmatpush.msra.mxu0 %v2395
  %5670 = vmatpush.msra.mxu0 %v2379
  %5671 = vmatpush.msra.mxu0 %v2363
  %5672 = vmatpush.msra.mxu0 %v2347
  %5673 = vmatpush.msra.mxu0 %v2331
  %5674 = vmatpush.msra.mxu0 %v2315
  %5675 = vmatpush.msra.mxu0 %v2299
  %5676 = vmatpush.msra.mxu0 %v2283
  %5677 = vmatpush.msra.mxu0 %v2267
  %5678 = vmatpush.msra.mxu0 %v2251
  %5679 = vmatpush.msra.mxu0 %v2235
  %5680 = vmatpush.msra.mxu0 %v2219
  %5681 = vmatpush.msra.mxu0 %v2203
  %5682 = vmatpush.msra.mxu0 %v2187
  %5683 = vmatmul.f32.gmra.mxu0 %v5326
  %v5684 = vpop.f32.mrf.mxu0
  %v5685 = vadd.f32 %v5665, %v5684
  %5686 = vdwg.mxu0
  %5687 = vmatpush.msra.mxu0 %v2172
  %5688 = vmatpush.msra.mxu0 %v2156
  %5689 = vmatpush.msra.mxu0 %v2140
  %5690 = vmatpush.msra.mxu0 %v2124
  %5691 = vmatpush.msra.mxu0 %v2108
  %5692 = vmatpush.msra.mxu0 %v2092
  %5693 = vmatpush.msra.mxu0 %v2076
  %5694 = vmatpush.msra.mxu0 %v2060
  %5695 = vmatpush.msra.mxu0 %v2044
  %5696 = vmatpush.msra.mxu0 %v2028
  %5697 = vmatpush.msra.mxu0 %v2012
  %5698 = vmatpush.msra.mxu0 %v1996
  %5699 = vmatpush.msra.mxu0 %v1980
  %5700 = vmatpush.msra.mxu0 %v1964
  %5701 = vmatpush.msra.mxu0 %v1948
  %5702 = vmatpush.msra.mxu0 %v1932
  %5703 = vmatmul.f32.gmra.mxu0 %v5325
  %v5704 = vpop.f32.mrf.mxu0
  %v5705 = vadd.f32 0.0, %v5704
  %5706 = vdwg.mxu0
  %5707 = vmatpush.msra.mxu0 %v2428
  %5708 = vmatpush.msra.mxu0 %v2412
  %5709 = vmatpush.msra.mxu0 %v2396
  %5710 = vmatpush.msra.mxu0 %v2380
  %5711 = vmatpush.msra.mxu0 %v2364
  %5712 = vmatpush.msra.mxu0 %v2348
  %5713 = vmatpush.msra.mxu0 %v2332
  %5714 = vmatpush.msra.mxu0 %v2316
  %5715 = vmatpush.msra.mxu0 %v2300
  %5716 = vmatpush.msra.mxu0 %v2284
  %5717 = vmatpush.msra.mxu0 %v2268
  %5718 = vmatpush.msra.mxu0 %v2252
  %5719 = vmatpush.msra.mxu0 %v2236
  %5720 = vmatpush.msra.mxu0 %v2220
  %5721 = vmatpush.msra.mxu0 %v2204
  %5722 = vmatpush.msra.mxu0 %v2188
  %5723 = vmatmul.f32.gmra.mxu0 %v5326
  %v5724 = vpop.f32.mrf.mxu0
  %v5725 = vadd.f32 %v5705, %v5724
  %5726 = vdwg.mxu0
  %5727 = vmatpush.msra.mxu0 %v2173
  %5728 = vmatpush.msra.mxu0 %v2157
  %5729 = vmatpush.msra.mxu0 %v2141
  %5730 = vmatpush.msra.mxu0 %v2125
  %5731 = vmatpush.msra.mxu0 %v2109
  %5732 = vmatpush.msra.mxu0 %v2093
  %5733 = vmatpush.msra.mxu0 %v2077
  %5734 = vmatpush.msra.mxu0 %v2061
  %5735 = vmatpush.msra.mxu0 %v2045
  %5736 = vmatpush.msra.mxu0 %v2029
  %5737 = vmatpush.msra.mxu0 %v2013
  %5738 = vmatpush.msra.mxu0 %v1997
  %5739 = vmatpush.msra.mxu0 %v1981
  %5740 = vmatpush.msra.mxu0 %v1965
  %5741 = vmatpush.msra.mxu0 %v1949
  %5742 = vmatpush.msra.mxu0 %v1933
  %5743 = vmatmul.f32.gmra.mxu0 %v5325
  %v5744 = vpop.f32.mrf.mxu0
  %v5745 = vadd.f32 0.0, %v5744
  %5746 = vdwg.mxu0
  %5747 = vmatpush.msra.mxu0 %v2429
  %5748 = vmatpush.msra.mxu0 %v2413
  %5749 = vmatpush.msra.mxu0 %v2397
  %5750 = vmatpush.msra.mxu0 %v2381
  %5751 = vmatpush.msra.mxu0 %v2365
  %5752 = vmatpush.msra.mxu0 %v2349
  %5753 = vmatpush.msra.mxu0 %v2333
  %5754 = vmatpush.msra.mxu0 %v2317
  %5755 = vmatpush.msra.mxu0 %v2301
  %5756 = vmatpush.msra.mxu0 %v2285
  %5757 = vmatpush.msra.mxu0 %v2269
  %5758 = vmatpush.msra.mxu0 %v2253
  %5759 = vmatpush.msra.mxu0 %v2237
  %5760 = vmatpush.msra.mxu0 %v2221
  %5761 = vmatpush.msra.mxu0 %v2205
  %5762 = vmatpush.msra.mxu0 %v2189
  %5763 = vmatmul.f32.gmra.mxu0 %v5326
  %v5764 = vpop.f32.mrf.mxu0
  %v5765 = vadd.f32 %v5745, %v5764
  %5766 = vdwg.mxu0
  %5767 = vmatpush.msra.mxu0 %v2174
  %5768 = vmatpush.msra.mxu0 %v2158
  %5769 = vmatpush.msra.mxu0 %v2142
  %5770 = vmatpush.msra.mxu0 %v2126
  %5771 = vmatpush.msra.mxu0 %v2110
  %5772 = vmatpush.msra.mxu0 %v2094
  %5773 = vmatpush.msra.mxu0 %v2078
  %5774 = vmatpush.msra.mxu0 %v2062
  %5775 = vmatpush.msra.mxu0 %v2046
  %5776 = vmatpush.msra.mxu0 %v2030
  %5777 = vmatpush.msra.mxu0 %v2014
  %5778 = vmatpush.msra.mxu0 %v1998
  %5779 = vmatpush.msra.mxu0 %v1982
  %5780 = vmatpush.msra.mxu0 %v1966
  %5781 = vmatpush.msra.mxu0 %v1950
  %5782 = vmatpush.msra.mxu0 %v1934
  %5783 = vmatmul.f32.gmra.mxu0 %v5325
  %v5784 = vpop.f32.mrf.mxu0
  %v5785 = vadd.f32 0.0, %v5784
  %5786 = vdwg.mxu0
  %5787 = vmatpush.msra.mxu0 %v2430
  %5788 = vmatpush.msra.mxu0 %v2414
  %5789 = vmatpush.msra.mxu0 %v2398
  %5790 = vmatpush.msra.mxu0 %v2382
  %5791 = vmatpush.msra.mxu0 %v2366
  %5792 = vmatpush.msra.mxu0 %v2350
  %5793 = vmatpush.msra.mxu0 %v2334
  %5794 = vmatpush.msra.mxu0 %v2318
  %5795 = vmatpush.msra.mxu0 %v2302
  %5796 = vmatpush.msra.mxu0 %v2286
  %5797 = vmatpush.msra.mxu0 %v2270
  %5798 = vmatpush.msra.mxu0 %v2254
  %5799 = vmatpush.msra.mxu0 %v2238
  %5800 = vmatpush.msra.mxu0 %v2222
  %5801 = vmatpush.msra.mxu0 %v2206
  %5802 = vmatpush.msra.mxu0 %v2190
  %5803 = vmatmul.f32.gmra.mxu0 %v5326
  %v5804 = vpop.f32.mrf.mxu0
  %v5805 = vadd.f32 %v5785, %v5804
  %5806 = vdwg.mxu0
  %5807 = vmatpush.msra.mxu0 %v2175
  %5808 = vmatpush.msra.mxu0 %v2159
  %5809 = vmatpush.msra.mxu0 %v2143
  %5810 = vmatpush.msra.mxu0 %v2127
  %5811 = vmatpush.msra.mxu0 %v2111
  %5812 = vmatpush.msra.mxu0 %v2095
  %5813 = vmatpush.msra.mxu0 %v2079
  %5814 = vmatpush.msra.mxu0 %v2063
  %5815 = vmatpush.msra.mxu0 %v2047
  %5816 = vmatpush.msra.mxu0 %v2031
  %5817 = vmatpush.msra.mxu0 %v2015
  %5818 = vmatpush.msra.mxu0 %v1999
  %5819 = vmatpush.msra.mxu0 %v1983
  %5820 = vmatpush.msra.mxu0 %v1967
  %5821 = vmatpush.msra.mxu0 %v1951
  %5822 = vmatpush.msra.mxu0 %v1935
  %5823 = vmatmul.f32.gmra.mxu0 %v5325
  %v5824 = vpop.f32.mrf.mxu0
  %v5825 = vadd.f32 0.0, %v5824
  %5826 = vdwg.mxu0
  %5827 = vmatpush.msra.mxu0 %v2431
  %5828 = vmatpush.msra.mxu0 %v2415
  %5829 = vmatpush.msra.mxu0 %v2399
  %5830 = vmatpush.msra.mxu0 %v2383
  %5831 = vmatpush.msra.mxu0 %v2367
  %5832 = vmatpush.msra.mxu0 %v2351
  %5833 = vmatpush.msra.mxu0 %v2335
  %5834 = vmatpush.msra.mxu0 %v2319
  %5835 = vmatpush.msra.mxu0 %v2303
  %5836 = vmatpush.msra.mxu0 %v2287
  %5837 = vmatpush.msra.mxu0 %v2271
  %5838 = vmatpush.msra.mxu0 %v2255
  %5839 = vmatpush.msra.mxu0 %v2239
  %5840 = vmatpush.msra.mxu0 %v2223
  %5841 = vmatpush.msra.mxu0 %v2207
  %5842 = vmatpush.msra.mxu0 %v2191
  %5843 = vmatmul.f32.gmra.mxu0 %v5326
  %v5844 = vpop.f32.mrf.mxu0
  %v5845 = vadd.f32 %v5825, %v5844
  %5846 = vdwg.mxu0
  %5847 = vmatpush.msra.mxu0 %v2176
  %5848 = vmatpush.msra.mxu0 %v2160
  %5849 = vmatpush.msra.mxu0 %v2144
  %5850 = vmatpush.msra.mxu0 %v2128
  %5851 = vmatpush.msra.mxu0 %v2112
  %5852 = vmatpush.msra.mxu0 %v2096
  %5853 = vmatpush.msra.mxu0 %v2080
  %5854 = vmatpush.msra.mxu0 %v2064
  %5855 = vmatpush.msra.mxu0 %v2048
  %5856 = vmatpush.msra.mxu0 %v2032
  %5857 = vmatpush.msra.mxu0 %v2016
  %5858 = vmatpush.msra.mxu0 %v2000
  %5859 = vmatpush.msra.mxu0 %v1984
  %5860 = vmatpush.msra.mxu0 %v1968
  %5861 = vmatpush.msra.mxu0 %v1952
  %5862 = vmatpush.msra.mxu0 %v1936
  %5863 = vmatmul.f32.gmra.mxu0 %v5325
  %v5864 = vpop.f32.mrf.mxu0
  %v5865 = vadd.f32 0.0, %v5864
  %5866 = vdwg.mxu0
  %5867 = vmatpush.msra.mxu0 %v2432
  %5868 = vmatpush.msra.mxu0 %v2416
  %5869 = vmatpush.msra.mxu0 %v2400
  %5870 = vmatpush.msra.mxu0 %v2384
  %5871 = vmatpush.msra.mxu0 %v2368
  %5872 = vmatpush.msra.mxu0 %v2352
  %5873 = vmatpush.msra.mxu0 %v2336
  %5874 = vmatpush.msra.mxu0 %v2320
  %5875 = vmatpush.msra.mxu0 %v2304
  %5876 = vmatpush.msra.mxu0 %v2288
  %5877 = vmatpush.msra.mxu0 %v2272
  %5878 = vmatpush.msra.mxu0 %v2256
  %5879 = vmatpush.msra.mxu0 %v2240
  %5880 = vmatpush.msra.mxu0 %v2224
  %5881 = vmatpush.msra.mxu0 %v2208
  %5882 = vmatpush.msra.mxu0 %v2192
  %5883 = vmatmul.f32.gmra.mxu0 %v5326
  %v5884 = vpop.f32.mrf.mxu0
  %v5885 = vadd.f32 %v5865, %v5884
  %5886 = vdwg.mxu0
  %5887 = vmatpush.msra.mxu0 %v2177
  %5888 = vmatpush.msra.mxu0 %v2161
  %5889 = vmatpush.msra.mxu0 %v2145
  %5890 = vmatpush.msra.mxu0 %v2129
  %5891 = vmatpush.msra.mxu0 %v2113
  %5892 = vmatpush.msra.mxu0 %v2097
  %5893 = vmatpush.msra.mxu0 %v2081
  %5894 = vmatpush.msra.mxu0 %v2065
  %5895 = vmatpush.msra.mxu0 %v2049
  %5896 = vmatpush.msra.mxu0 %v2033
  %5897 = vmatpush.msra.mxu0 %v2017
  %5898 = vmatpush.msra.mxu0 %v2001
  %5899 = vmatpush.msra.mxu0 %v1985
  %5900 = vmatpush.msra.mxu0 %v1969
  %5901 = vmatpush.msra.mxu0 %v1953
  %5902 = vmatpush.msra.mxu0 %v1937
  %5903 = vmatmul.f32.gmra.mxu0 %v5325
  %v5904 = vpop.f32.mrf.mxu0
  %v5905 = vadd.f32 0.0, %v5904
  %5906 = vdwg.mxu0
  %5907 = vmatpush.msra.mxu0 %v2433
  %5908 = vmatpush.msra.mxu0 %v2417
  %5909 = vmatpush.msra.mxu0 %v2401
  %5910 = vmatpush.msra.mxu0 %v2385
  %5911 = vmatpush.msra.mxu0 %v2369
  %5912 = vmatpush.msra.mxu0 %v2353
  %5913 = vmatpush.msra.mxu0 %v2337
  %5914 = vmatpush.msra.mxu0 %v2321
  %5915 = vmatpush.msra.mxu0 %v2305
  %5916 = vmatpush.msra.mxu0 %v2289
  %5917 = vmatpush.msra.mxu0 %v2273
  %5918 = vmatpush.msra.mxu0 %v2257
  %5919 = vmatpush.msra.mxu0 %v2241
  %5920 = vmatpush.msra.mxu0 %v2225
  %5921 = vmatpush.msra.mxu0 %v2209
  %5922 = vmatpush.msra.mxu0 %v2193
  %5923 = vmatmul.f32.gmra.mxu0 %v5326
  %v5924 = vpop.f32.mrf.mxu0
  %v5925 = vadd.f32 %v5905, %v5924
  %5926 = vdwg.mxu0
  %5927 = vmatpush.msra.mxu0 %v2178
  %5928 = vmatpush.msra.mxu0 %v2162
  %5929 = vmatpush.msra.mxu0 %v2146
  %5930 = vmatpush.msra.mxu0 %v2130
  %5931 = vmatpush.msra.mxu0 %v2114
  %5932 = vmatpush.msra.mxu0 %v2098
  %5933 = vmatpush.msra.mxu0 %v2082
  %5934 = vmatpush.msra.mxu0 %v2066
  %5935 = vmatpush.msra.mxu0 %v2050
  %5936 = vmatpush.msra.mxu0 %v2034
  %5937 = vmatpush.msra.mxu0 %v2018
  %5938 = vmatpush.msra.mxu0 %v2002
  %5939 = vmatpush.msra.mxu0 %v1986
  %5940 = vmatpush.msra.mxu0 %v1970
  %5941 = vmatpush.msra.mxu0 %v1954
  %5942 = vmatpush.msra.mxu0 %v1938
  %5943 = vmatmul.f32.gmra.mxu0 %v5325
  %v5944 = vpop.f32.mrf.mxu0
  %v5945 = vadd.f32 0.0, %v5944
  %5946 = vdwg.mxu0
  %5947 = vmatpush.msra.mxu0 %v2434
  %5948 = vmatpush.msra.mxu0 %v2418
  %5949 = vmatpush.msra.mxu0 %v2402
  %5950 = vmatpush.msra.mxu0 %v2386
  %5951 = vmatpush.msra.mxu0 %v2370
  %5952 = vmatpush.msra.mxu0 %v2354
  %5953 = vmatpush.msra.mxu0 %v2338
  %5954 = vmatpush.msra.mxu0 %v2322
  %5955 = vmatpush.msra.mxu0 %v2306
  %5956 = vmatpush.msra.mxu0 %v2290
  %5957 = vmatpush.msra.mxu0 %v2274
  %5958 = vmatpush.msra.mxu0 %v2258
  %5959 = vmatpush.msra.mxu0 %v2242
  %5960 = vmatpush.msra.mxu0 %v2226
  %5961 = vmatpush.msra.mxu0 %v2210
  %5962 = vmatpush.msra.mxu0 %v2194
  %5963 = vmatmul.f32.gmra.mxu0 %v5326
  %v5964 = vpop.f32.mrf.mxu0
  %v5965 = vadd.f32 %v5945, %v5964
  %5966 = vdwg.mxu0
  %v5967 = vsel %vm1076, %v5365, %v5685
  %v5968 = vsel %vm1076, %v5405, %v5725
  %v5969 = vsel %vm1076, %v5445, %v5765
  %v5970 = vsel %vm1076, %v5485, %v5805
  %v5971 = vsel %vm1076, %v5525, %v5845
  %v5972 = vsel %vm1076, %v5565, %v5885
  %v5973 = vsel %vm1076, %v5605, %v5925
  %v5974 = vsel %vm1076, %v5645, %v5965
  %v5975 = vld [vmem:[%s1839] sm:$0xff]
  %v5976 = vld [vmem:[%s1839 + $0x8] sm:$0xff]
  %v5977 = vld [vmem:[%s1839 + $0x10] sm:$0xff]
  %v5978 = vld [vmem:[%s1839 + $0x18] sm:$0xff]
  %5983 = vst [vmem:[#allocation1] ss:$2 sm:$0xff] %v5975
  %s5984 = scalar_lea.vmem [#allocation1], 16
  %5985 = vst [vmem:[%s5984] ss:$2 sm:$0xff] %v5976
  %s5986 = scalar_lea.vmem [#allocation1], 32
  %5987 = vst [vmem:[%s5986] ss:$2 sm:$0xff] %v5977
  %s5988 = scalar_lea.vmem [#allocation1], 48
  %5989 = vst [vmem:[%s5988] ss:$2 sm:$0xff] %v5978
  %v5990 = vld.sshfl [vmem:[#allocation1] sm:$0xff pattern:$0x75316420]
  %v5991 = vld.sshfl [vmem:[#allocation1 + $0x8] sm:$0xff pattern:$0x75316420]
  %v5992 = vld.sshfl [vmem:[#allocation1 + $0x10] sm:$0xff pattern:$0x75316420]
  %v5993 = vld.sshfl [vmem:[#allocation1 + $0x18] sm:$0xff pattern:$0x75316420]
  %v5994 = vld.sshfl [vmem:[#allocation1 + $0x20] sm:$0xff pattern:$0x75316420]
  %v5995 = vld.sshfl [vmem:[#allocation1 + $0x28] sm:$0xff pattern:$0x75316420]
  %v5996 = vld.sshfl [vmem:[#allocation1 + $0x30] sm:$0xff pattern:$0x75316420]
  %v5997 = vld.sshfl [vmem:[#allocation1 + $0x38] sm:$0xff pattern:$0x75316420]
  %v6006 = vadd.f32 %v5967, %v5990
  %v6007 = vadd.f32 %v5968, %v5991
  %v6008 = vadd.f32 %v5969, %v5992
  %v6009 = vadd.f32 %v5970, %v5993
  %v6010 = vadd.f32 %v5971, %v5994
  %v6011 = vadd.f32 %v5972, %v5995
  %v6012 = vadd.f32 %v5973, %v5996
  %v6013 = vadd.f32 %v5974, %v5997
  %v6014 = vmul.f32 %v6006, 0.5
  %v6015 = vmul.f32 %v6007, 0.5
  %v6016 = vtanh.pop %v6014
  %v6017 = vtanh.pop %v6015
  %v6018 = vadd.f32 %v6016, 1.0
  %v6019 = vadd.f32 %v6017, 1.0
  %v6020 = vmul.f32 %v6018, 0.5
  %v6021 = vmul.f32 %v6019, 0.5
  %v6022 = vmul.f32 %v6008, 0.5
  %v6023 = vmul.f32 %v6009, 0.5
  %v6024 = vtanh.pop %v6022
  %v6025 = vtanh.pop %v6023
  %v6026 = vadd.f32 %v6024, 1.0
  %v6027 = vadd.f32 %v6025, 1.0
  %v6028 = vmul.f32 %v6026, 0.5
  %v6029 = vmul.f32 %v6027, 0.5
  %v6030 = vtanh.pop %v6010
  %v6031 = vtanh.pop %v6011
  %v6032 = vmul.f32 %v6012, 0.5
  %v6033 = vmul.f32 %v6013, 0.5
  %v6034 = vtanh.pop %v6032
  %v6035 = vtanh.pop %v6033
  %v6036 = vadd.f32 %v6034, 1.0
  %v6037 = vadd.f32 %v6035, 1.0
  %v6038 = vmul.f32 %v6036, 0.5
  %v6039 = vmul.f32 %v6037, 0.5
  %v6040 = vmul.f32 %v6028, %v5321
  %v6041 = vmul.f32 %v6029, %v5322
  %v6042 = vmul.f32 %v6020, %v6030
  %v6043 = vmul.f32 %v6021, %v6031
  %v6044 = vadd.f32 %v6040, %v6042
  %v6045 = vadd.f32 %v6041, %v6043
  %v6046 = vtanh.pop %v6044
  %v6047 = vtanh.pop %v6045
  %v6048 = vmul.f32 %v6038, %v6046
  %v6049 = vmul.f32 %v6039, %v6047
  %6050 = vmatpush.msra.mxu0 %v2163
  %6051 = vmatpush.msra.mxu0 %v2147
  %6052 = vmatpush.msra.mxu0 %v2131
  %6053 = vmatpush.msra.mxu0 %v2115
  %6054 = vmatpush.msra.mxu0 %v2099
  %6055 = vmatpush.msra.mxu0 %v2083
  %6056 = vmatpush.msra.mxu0 %v2067
  %6057 = vmatpush.msra.mxu0 %v2051
  %6058 = vmatpush.msra.mxu0 %v2035
  %6059 = vmatpush.msra.mxu0 %v2019
  %6060 = vmatpush.msra.mxu0 %v2003
  %6061 = vmatpush.msra.mxu0 %v1987
  %6062 = vmatpush.msra.mxu0 %v1971
  %6063 = vmatpush.msra.mxu0 %v1955
  %6064 = vmatpush.msra.mxu0 %v1939
  %6065 = vmatpush.msra.mxu0 %v1923
  %6066 = vmatmul.f32.gmra.mxu0 %v6048
  %v6067 = vpop.f32.mrf.mxu0
  %v6068 = vadd.f32 0.0, %v6067
  %6069 = vdwg.mxu0
  %6070 = vmatpush.msra.mxu0 %v2419
  %6071 = vmatpush.msra.mxu0 %v2403
  %6072 = vmatpush.msra.mxu0 %v2387
  %6073 = vmatpush.msra.mxu0 %v2371
  %6074 = vmatpush.msra.mxu0 %v2355
  %6075 = vmatpush.msra.mxu0 %v2339
  %6076 = vmatpush.msra.mxu0 %v2323
  %6077 = vmatpush.msra.mxu0 %v2307
  %6078 = vmatpush.msra.mxu0 %v2291
  %6079 = vmatpush.msra.mxu0 %v2275
  %6080 = vmatpush.msra.mxu0 %v2259
  %6081 = vmatpush.msra.mxu0 %v2243
  %6082 = vmatpush.msra.mxu0 %v2227
  %6083 = vmatpush.msra.mxu0 %v2211
  %6084 = vmatpush.msra.mxu0 %v2195
  %6085 = vmatpush.msra.mxu0 %v2179
  %6086 = vmatmul.f32.gmra.mxu0 %v6049
  %v6087 = vpop.f32.mrf.mxu0
  %v6088 = vadd.f32 %v6068, %v6087
  %6089 = vdwg.mxu0
  %6090 = vmatpush.msra.mxu0 %v2164
  %6091 = vmatpush.msra.mxu0 %v2148
  %6092 = vmatpush.msra.mxu0 %v2132
  %6093 = vmatpush.msra.mxu0 %v2116
  %6094 = vmatpush.msra.mxu0 %v2100
  %6095 = vmatpush.msra.mxu0 %v2084
  %6096 = vmatpush.msra.mxu0 %v2068
  %6097 = vmatpush.msra.mxu0 %v2052
  %6098 = vmatpush.msra.mxu0 %v2036
  %6099 = vmatpush.msra.mxu0 %v2020
  %6100 = vmatpush.msra.mxu0 %v2004
  %6101 = vmatpush.msra.mxu0 %v1988
  %6102 = vmatpush.msra.mxu0 %v1972
  %6103 = vmatpush.msra.mxu0 %v1956
  %6104 = vmatpush.msra.mxu0 %v1940
  %6105 = vmatpush.msra.mxu0 %v1924
  %6106 = vmatmul.f32.gmra.mxu0 %v6048
  %v6107 = vpop.f32.mrf.mxu0
  %v6108 = vadd.f32 0.0, %v6107
  %6109 = vdwg.mxu0
  %6110 = vmatpush.msra.mxu0 %v2420
  %6111 = vmatpush.msra.mxu0 %v2404
  %6112 = vmatpush.msra.mxu0 %v2388
  %6113 = vmatpush.msra.mxu0 %v2372
  %6114 = vmatpush.msra.mxu0 %v2356
  %6115 = vmatpush.msra.mxu0 %v2340
  %6116 = vmatpush.msra.mxu0 %v2324
  %6117 = vmatpush.msra.mxu0 %v2308
  %6118 = vmatpush.msra.mxu0 %v2292
  %6119 = vmatpush.msra.mxu0 %v2276
  %6120 = vmatpush.msra.mxu0 %v2260
  %6121 = vmatpush.msra.mxu0 %v2244
  %6122 = vmatpush.msra.mxu0 %v2228
  %6123 = vmatpush.msra.mxu0 %v2212
  %6124 = vmatpush.msra.mxu0 %v2196
  %6125 = vmatpush.msra.mxu0 %v2180
  %6126 = vmatmul.f32.gmra.mxu0 %v6049
  %v6127 = vpop.f32.mrf.mxu0
  %v6128 = vadd.f32 %v6108, %v6127
  %6129 = vdwg.mxu0
  %6130 = vmatpush.msra.mxu0 %v2165
  %6131 = vmatpush.msra.mxu0 %v2149
  %6132 = vmatpush.msra.mxu0 %v2133
  %6133 = vmatpush.msra.mxu0 %v2117
  %6134 = vmatpush.msra.mxu0 %v2101
  %6135 = vmatpush.msra.mxu0 %v2085
  %6136 = vmatpush.msra.mxu0 %v2069
  %6137 = vmatpush.msra.mxu0 %v2053
  %6138 = vmatpush.msra.mxu0 %v2037
  %6139 = vmatpush.msra.mxu0 %v2021
  %6140 = vmatpush.msra.mxu0 %v2005
  %6141 = vmatpush.msra.mxu0 %v1989
  %6142 = vmatpush.msra.mxu0 %v1973
  %6143 = vmatpush.msra.mxu0 %v1957
  %6144 = vmatpush.msra.mxu0 %v1941
  %6145 = vmatpush.msra.mxu0 %v1925
  %6146 = vmatmul.f32.gmra.mxu0 %v6048
  %v6147 = vpop.f32.mrf.mxu0
  %v6148 = vadd.f32 0.0, %v6147
  %6149 = vdwg.mxu0
  %6150 = vmatpush.msra.mxu0 %v2421
  %6151 = vmatpush.msra.mxu0 %v2405
  %6152 = vmatpush.msra.mxu0 %v2389
  %6153 = vmatpush.msra.mxu0 %v2373
  %6154 = vmatpush.msra.mxu0 %v2357
  %6155 = vmatpush.msra.mxu0 %v2341
  %6156 = vmatpush.msra.mxu0 %v2325
  %6157 = vmatpush.msra.mxu0 %v2309
  %6158 = vmatpush.msra.mxu0 %v2293
  %6159 = vmatpush.msra.mxu0 %v2277
  %6160 = vmatpush.msra.mxu0 %v2261
  %6161 = vmatpush.msra.mxu0 %v2245
  %6162 = vmatpush.msra.mxu0 %v2229
  %6163 = vmatpush.msra.mxu0 %v2213
  %6164 = vmatpush.msra.mxu0 %v2197
  %6165 = vmatpush.msra.mxu0 %v2181
  %6166 = vmatmul.f32.gmra.mxu0 %v6049
  %v6167 = vpop.f32.mrf.mxu0
  %v6168 = vadd.f32 %v6148, %v6167
  %6169 = vdwg.mxu0
  %6170 = vmatpush.msra.mxu0 %v2166
  %6171 = vmatpush.msra.mxu0 %v2150
  %6172 = vmatpush.msra.mxu0 %v2134
  %6173 = vmatpush.msra.mxu0 %v2118
  %6174 = vmatpush.msra.mxu0 %v2102
  %6175 = vmatpush.msra.mxu0 %v2086
  %6176 = vmatpush.msra.mxu0 %v2070
  %6177 = vmatpush.msra.mxu0 %v2054
  %6178 = vmatpush.msra.mxu0 %v2038
  %6179 = vmatpush.msra.mxu0 %v2022
  %6180 = vmatpush.msra.mxu0 %v2006
  %6181 = vmatpush.msra.mxu0 %v1990
  %6182 = vmatpush.msra.mxu0 %v1974
  %6183 = vmatpush.msra.mxu0 %v1958
  %6184 = vmatpush.msra.mxu0 %v1942
  %6185 = vmatpush.msra.mxu0 %v1926
  %6186 = vmatmul.f32.gmra.mxu0 %v6048
  %v6187 = vpop.f32.mrf.mxu0
  %v6188 = vadd.f32 0.0, %v6187
  %6189 = vdwg.mxu0
  %6190 = vmatpush.msra.mxu0 %v2422
  %6191 = vmatpush.msra.mxu0 %v2406
  %6192 = vmatpush.msra.mxu0 %v2390
  %6193 = vmatpush.msra.mxu0 %v2374
  %6194 = vmatpush.msra.mxu0 %v2358
  %6195 = vmatpush.msra.mxu0 %v2342
  %6196 = vmatpush.msra.mxu0 %v2326
  %6197 = vmatpush.msra.mxu0 %v2310
  %6198 = vmatpush.msra.mxu0 %v2294
  %6199 = vmatpush.msra.mxu0 %v2278
  %6200 = vmatpush.msra.mxu0 %v2262
  %6201 = vmatpush.msra.mxu0 %v2246
  %6202 = vmatpush.msra.mxu0 %v2230
  %6203 = vmatpush.msra.mxu0 %v2214
  %6204 = vmatpush.msra.mxu0 %v2198
  %6205 = vmatpush.msra.mxu0 %v2182
  %6206 = vmatmul.f32.gmra.mxu0 %v6049
  %v6207 = vpop.f32.mrf.mxu0
  %v6208 = vadd.f32 %v6188, %v6207
  %6209 = vdwg.mxu0
  %6210 = vmatpush.msra.mxu0 %v2167
  %6211 = vmatpush.msra.mxu0 %v2151
  %6212 = vmatpush.msra.mxu0 %v2135
  %6213 = vmatpush.msra.mxu0 %v2119
  %6214 = vmatpush.msra.mxu0 %v2103
  %6215 = vmatpush.msra.mxu0 %v2087
  %6216 = vmatpush.msra.mxu0 %v2071
  %6217 = vmatpush.msra.mxu0 %v2055
  %6218 = vmatpush.msra.mxu0 %v2039
  %6219 = vmatpush.msra.mxu0 %v2023
  %6220 = vmatpush.msra.mxu0 %v2007
  %6221 = vmatpush.msra.mxu0 %v1991
  %6222 = vmatpush.msra.mxu0 %v1975
  %6223 = vmatpush.msra.mxu0 %v1959
  %6224 = vmatpush.msra.mxu0 %v1943
  %6225 = vmatpush.msra.mxu0 %v1927
  %6226 = vmatmul.f32.gmra.mxu0 %v6048
  %v6227 = vpop.f32.mrf.mxu0
  %v6228 = vadd.f32 0.0, %v6227
  %6229 = vdwg.mxu0
  %6230 = vmatpush.msra.mxu0 %v2423
  %6231 = vmatpush.msra.mxu0 %v2407
  %6232 = vmatpush.msra.mxu0 %v2391
  %6233 = vmatpush.msra.mxu0 %v2375
  %6234 = vmatpush.msra.mxu0 %v2359
  %6235 = vmatpush.msra.mxu0 %v2343
  %6236 = vmatpush.msra.mxu0 %v2327
  %6237 = vmatpush.msra.mxu0 %v2311
  %6238 = vmatpush.msra.mxu0 %v2295
  %6239 = vmatpush.msra.mxu0 %v2279
  %6240 = vmatpush.msra.mxu0 %v2263
  %6241 = vmatpush.msra.mxu0 %v2247
  %6242 = vmatpush.msra.mxu0 %v2231
  %6243 = vmatpush.msra.mxu0 %v2215
  %6244 = vmatpush.msra.mxu0 %v2199
  %6245 = vmatpush.msra.mxu0 %v2183
  %6246 = vmatmul.f32.gmra.mxu0 %v6049
  %v6247 = vpop.f32.mrf.mxu0
  %v6248 = vadd.f32 %v6228, %v6247
  %6249 = vdwg.mxu0
  %6250 = vmatpush.msra.mxu0 %v2168
  %6251 = vmatpush.msra.mxu0 %v2152
  %6252 = vmatpush.msra.mxu0 %v2136
  %6253 = vmatpush.msra.mxu0 %v2120
  %6254 = vmatpush.msra.mxu0 %v2104
  %6255 = vmatpush.msra.mxu0 %v2088
  %6256 = vmatpush.msra.mxu0 %v2072
  %6257 = vmatpush.msra.mxu0 %v2056
  %6258 = vmatpush.msra.mxu0 %v2040
  %6259 = vmatpush.msra.mxu0 %v2024
  %6260 = vmatpush.msra.mxu0 %v2008
  %6261 = vmatpush.msra.mxu0 %v1992
  %6262 = vmatpush.msra.mxu0 %v1976
  %6263 = vmatpush.msra.mxu0 %v1960
  %6264 = vmatpush.msra.mxu0 %v1944
  %6265 = vmatpush.msra.mxu0 %v1928
  %6266 = vmatmul.f32.gmra.mxu0 %v6048
  %v6267 = vpop.f32.mrf.mxu0
  %v6268 = vadd.f32 0.0, %v6267
  %6269 = vdwg.mxu0
  %6270 = vmatpush.msra.mxu0 %v2424
  %6271 = vmatpush.msra.mxu0 %v2408
  %6272 = vmatpush.msra.mxu0 %v2392
  %6273 = vmatpush.msra.mxu0 %v2376
  %6274 = vmatpush.msra.mxu0 %v2360
  %6275 = vmatpush.msra.mxu0 %v2344
  %6276 = vmatpush.msra.mxu0 %v2328
  %6277 = vmatpush.msra.mxu0 %v2312
  %6278 = vmatpush.msra.mxu0 %v2296
  %6279 = vmatpush.msra.mxu0 %v2280
  %6280 = vmatpush.msra.mxu0 %v2264
  %6281 = vmatpush.msra.mxu0 %v2248
  %6282 = vmatpush.msra.mxu0 %v2232
  %6283 = vmatpush.msra.mxu0 %v2216
  %6284 = vmatpush.msra.mxu0 %v2200
  %6285 = vmatpush.msra.mxu0 %v2184
  %6286 = vmatmul.f32.gmra.mxu0 %v6049
  %v6287 = vpop.f32.mrf.mxu0
  %v6288 = vadd.f32 %v6268, %v6287
  %6289 = vdwg.mxu0
  %6290 = vmatpush.msra.mxu0 %v2169
  %6291 = vmatpush.msra.mxu0 %v2153
  %6292 = vmatpush.msra.mxu0 %v2137
  %6293 = vmatpush.msra.mxu0 %v2121
  %6294 = vmatpush.msra.mxu0 %v2105
  %6295 = vmatpush.msra.mxu0 %v2089
  %6296 = vmatpush.msra.mxu0 %v2073
  %6297 = vmatpush.msra.mxu0 %v2057
  %6298 = vmatpush.msra.mxu0 %v2041
  %6299 = vmatpush.msra.mxu0 %v2025
  %6300 = vmatpush.msra.mxu0 %v2009
  %6301 = vmatpush.msra.mxu0 %v1993
  %6302 = vmatpush.msra.mxu0 %v1977
  %6303 = vmatpush.msra.mxu0 %v1961
  %6304 = vmatpush.msra.mxu0 %v1945
  %6305 = vmatpush.msra.mxu0 %v1929
  %6306 = vmatmul.f32.gmra.mxu0 %v6048
  %v6307 = vpop.f32.mrf.mxu0
  %v6308 = vadd.f32 0.0, %v6307
  %6309 = vdwg.mxu0
  %6310 = vmatpush.msra.mxu0 %v2425
  %6311 = vmatpush.msra.mxu0 %v2409
  %6312 = vmatpush.msra.mxu0 %v2393
  %6313 = vmatpush.msra.mxu0 %v2377
  %6314 = vmatpush.msra.mxu0 %v2361
  %6315 = vmatpush.msra.mxu0 %v2345
  %6316 = vmatpush.msra.mxu0 %v2329
  %6317 = vmatpush.msra.mxu0 %v2313
  %6318 = vmatpush.msra.mxu0 %v2297
  %6319 = vmatpush.msra.mxu0 %v2281
  %6320 = vmatpush.msra.mxu0 %v2265
  %6321 = vmatpush.msra.mxu0 %v2249
  %6322 = vmatpush.msra.mxu0 %v2233
  %6323 = vmatpush.msra.mxu0 %v2217
  %6324 = vmatpush.msra.mxu0 %v2201
  %6325 = vmatpush.msra.mxu0 %v2185
  %6326 = vmatmul.f32.gmra.mxu0 %v6049
  %v6327 = vpop.f32.mrf.mxu0
  %v6328 = vadd.f32 %v6308, %v6327
  %6329 = vdwg.mxu0
  %6330 = vmatpush.msra.mxu0 %v2170
  %6331 = vmatpush.msra.mxu0 %v2154
  %6332 = vmatpush.msra.mxu0 %v2138
  %6333 = vmatpush.msra.mxu0 %v2122
  %6334 = vmatpush.msra.mxu0 %v2106
  %6335 = vmatpush.msra.mxu0 %v2090
  %6336 = vmatpush.msra.mxu0 %v2074
  %6337 = vmatpush.msra.mxu0 %v2058
  %6338 = vmatpush.msra.mxu0 %v2042
  %6339 = vmatpush.msra.mxu0 %v2026
  %6340 = vmatpush.msra.mxu0 %v2010
  %6341 = vmatpush.msra.mxu0 %v1994
  %6342 = vmatpush.msra.mxu0 %v1978
  %6343 = vmatpush.msra.mxu0 %v1962
  %6344 = vmatpush.msra.mxu0 %v1946
  %6345 = vmatpush.msra.mxu0 %v1930
  %6346 = vmatmul.f32.gmra.mxu0 %v6048
  %v6347 = vpop.f32.mrf.mxu0
  %v6348 = vadd.f32 0.0, %v6347
  %6349 = vdwg.mxu0
  %6350 = vmatpush.msra.mxu0 %v2426
  %6351 = vmatpush.msra.mxu0 %v2410
  %6352 = vmatpush.msra.mxu0 %v2394
  %6353 = vmatpush.msra.mxu0 %v2378
  %6354 = vmatpush.msra.mxu0 %v2362
  %6355 = vmatpush.msra.mxu0 %v2346
  %6356 = vmatpush.msra.mxu0 %v2330
  %6357 = vmatpush.msra.mxu0 %v2314
  %6358 = vmatpush.msra.mxu0 %v2298
  %6359 = vmatpush.msra.mxu0 %v2282
  %6360 = vmatpush.msra.mxu0 %v2266
  %6361 = vmatpush.msra.mxu0 %v2250
  %6362 = vmatpush.msra.mxu0 %v2234
  %6363 = vmatpush.msra.mxu0 %v2218
  %6364 = vmatpush.msra.mxu0 %v2202
  %6365 = vmatpush.msra.mxu0 %v2186
  %6366 = vmatmul.f32.gmra.mxu0 %v6049
  %v6367 = vpop.f32.mrf.mxu0
  %v6368 = vadd.f32 %v6348, %v6367
  %6369 = vdwg.mxu0
  %6370 = vmatpush.msra.mxu0 %v2171
  %6371 = vmatpush.msra.mxu0 %v2155
  %6372 = vmatpush.msra.mxu0 %v2139
  %6373 = vmatpush.msra.mxu0 %v2123
  %6374 = vmatpush.msra.mxu0 %v2107
  %6375 = vmatpush.msra.mxu0 %v2091
  %6376 = vmatpush.msra.mxu0 %v2075
  %6377 = vmatpush.msra.mxu0 %v2059
  %6378 = vmatpush.msra.mxu0 %v2043
  %6379 = vmatpush.msra.mxu0 %v2027
  %6380 = vmatpush.msra.mxu0 %v2011
  %6381 = vmatpush.msra.mxu0 %v1995
  %6382 = vmatpush.msra.mxu0 %v1979
  %6383 = vmatpush.msra.mxu0 %v1963
  %6384 = vmatpush.msra.mxu0 %v1947
  %6385 = vmatpush.msra.mxu0 %v1931
  %6386 = vmatmul.f32.gmra.mxu0 %v6048
  %v6387 = vpop.f32.mrf.mxu0
  %v6388 = vadd.f32 0.0, %v6387
  %6389 = vdwg.mxu0
  %6390 = vmatpush.msra.mxu0 %v2427
  %6391 = vmatpush.msra.mxu0 %v2411
  %6392 = vmatpush.msra.mxu0 %v2395
  %6393 = vmatpush.msra.mxu0 %v2379
  %6394 = vmatpush.msra.mxu0 %v2363
  %6395 = vmatpush.msra.mxu0 %v2347
  %6396 = vmatpush.msra.mxu0 %v2331
  %6397 = vmatpush.msra.mxu0 %v2315
  %6398 = vmatpush.msra.mxu0 %v2299
  %6399 = vmatpush.msra.mxu0 %v2283
  %6400 = vmatpush.msra.mxu0 %v2267
  %6401 = vmatpush.msra.mxu0 %v2251
  %6402 = vmatpush.msra.mxu0 %v2235
  %6403 = vmatpush.msra.mxu0 %v2219
  %6404 = vmatpush.msra.mxu0 %v2203
  %6405 = vmatpush.msra.mxu0 %v2187
  %6406 = vmatmul.f32.gmra.mxu0 %v6049
  %v6407 = vpop.f32.mrf.mxu0
  %v6408 = vadd.f32 %v6388, %v6407
  %6409 = vdwg.mxu0
  %6410 = vmatpush.msra.mxu0 %v2172
  %6411 = vmatpush.msra.mxu0 %v2156
  %6412 = vmatpush.msra.mxu0 %v2140
  %6413 = vmatpush.msra.mxu0 %v2124
  %6414 = vmatpush.msra.mxu0 %v2108
  %6415 = vmatpush.msra.mxu0 %v2092
  %6416 = vmatpush.msra.mxu0 %v2076
  %6417 = vmatpush.msra.mxu0 %v2060
  %6418 = vmatpush.msra.mxu0 %v2044
  %6419 = vmatpush.msra.mxu0 %v2028
  %6420 = vmatpush.msra.mxu0 %v2012
  %6421 = vmatpush.msra.mxu0 %v1996
  %6422 = vmatpush.msra.mxu0 %v1980
  %6423 = vmatpush.msra.mxu0 %v1964
  %6424 = vmatpush.msra.mxu0 %v1948
  %6425 = vmatpush.msra.mxu0 %v1932
  %6426 = vmatmul.f32.gmra.mxu0 %v6048
  %v6427 = vpop.f32.mrf.mxu0
  %v6428 = vadd.f32 0.0, %v6427
  %6429 = vdwg.mxu0
  %6430 = vmatpush.msra.mxu0 %v2428
  %6431 = vmatpush.msra.mxu0 %v2412
  %6432 = vmatpush.msra.mxu0 %v2396
  %6433 = vmatpush.msra.mxu0 %v2380
  %6434 = vmatpush.msra.mxu0 %v2364
  %6435 = vmatpush.msra.mxu0 %v2348
  %6436 = vmatpush.msra.mxu0 %v2332
  %6437 = vmatpush.msra.mxu0 %v2316
  %6438 = vmatpush.msra.mxu0 %v2300
  %6439 = vmatpush.msra.mxu0 %v2284
  %6440 = vmatpush.msra.mxu0 %v2268
  %6441 = vmatpush.msra.mxu0 %v2252
  %6442 = vmatpush.msra.mxu0 %v2236
  %6443 = vmatpush.msra.mxu0 %v2220
  %6444 = vmatpush.msra.mxu0 %v2204
  %6445 = vmatpush.msra.mxu0 %v2188
  %6446 = vmatmul.f32.gmra.mxu0 %v6049
  %v6447 = vpop.f32.mrf.mxu0
  %v6448 = vadd.f32 %v6428, %v6447
  %6449 = vdwg.mxu0
  %6450 = vmatpush.msra.mxu0 %v2173
  %6451 = vmatpush.msra.mxu0 %v2157
  %6452 = vmatpush.msra.mxu0 %v2141
  %6453 = vmatpush.msra.mxu0 %v2125
  %6454 = vmatpush.msra.mxu0 %v2109
  %6455 = vmatpush.msra.mxu0 %v2093
  %6456 = vmatpush.msra.mxu0 %v2077
  %6457 = vmatpush.msra.mxu0 %v2061
  %6458 = vmatpush.msra.mxu0 %v2045
  %6459 = vmatpush.msra.mxu0 %v2029
  %6460 = vmatpush.msra.mxu0 %v2013
  %6461 = vmatpush.msra.mxu0 %v1997
  %6462 = vmatpush.msra.mxu0 %v1981
  %6463 = vmatpush.msra.mxu0 %v1965
  %6464 = vmatpush.msra.mxu0 %v1949
  %6465 = vmatpush.msra.mxu0 %v1933
  %6466 = vmatmul.f32.gmra.mxu0 %v6048
  %v6467 = vpop.f32.mrf.mxu0
  %v6468 = vadd.f32 0.0, %v6467
  %6469 = vdwg.mxu0
  %6470 = vmatpush.msra.mxu0 %v2429
  %6471 = vmatpush.msra.mxu0 %v2413
  %6472 = vmatpush.msra.mxu0 %v2397
  %6473 = vmatpush.msra.mxu0 %v2381
  %6474 = vmatpush.msra.mxu0 %v2365
  %6475 = vmatpush.msra.mxu0 %v2349
  %6476 = vmatpush.msra.mxu0 %v2333
  %6477 = vmatpush.msra.mxu0 %v2317
  %6478 = vmatpush.msra.mxu0 %v2301
  %6479 = vmatpush.msra.mxu0 %v2285
  %6480 = vmatpush.msra.mxu0 %v2269
  %6481 = vmatpush.msra.mxu0 %v2253
  %6482 = vmatpush.msra.mxu0 %v2237
  %6483 = vmatpush.msra.mxu0 %v2221
  %6484 = vmatpush.msra.mxu0 %v2205
  %6485 = vmatpush.msra.mxu0 %v2189
  %6486 = vmatmul.f32.gmra.mxu0 %v6049
  %v6487 = vpop.f32.mrf.mxu0
  %v6488 = vadd.f32 %v6468, %v6487
  %6489 = vdwg.mxu0
  %6490 = vmatpush.msra.mxu0 %v2174
  %6491 = vmatpush.msra.mxu0 %v2158
  %6492 = vmatpush.msra.mxu0 %v2142
  %6493 = vmatpush.msra.mxu0 %v2126
  %6494 = vmatpush.msra.mxu0 %v2110
  %6495 = vmatpush.msra.mxu0 %v2094
  %6496 = vmatpush.msra.mxu0 %v2078
  %6497 = vmatpush.msra.mxu0 %v2062
  %6498 = vmatpush.msra.mxu0 %v2046
  %6499 = vmatpush.msra.mxu0 %v2030
  %6500 = vmatpush.msra.mxu0 %v2014
  %6501 = vmatpush.msra.mxu0 %v1998
  %6502 = vmatpush.msra.mxu0 %v1982
  %6503 = vmatpush.msra.mxu0 %v1966
  %6504 = vmatpush.msra.mxu0 %v1950
  %6505 = vmatpush.msra.mxu0 %v1934
  %6506 = vmatmul.f32.gmra.mxu0 %v6048
  %v6507 = vpop.f32.mrf.mxu0
  %v6508 = vadd.f32 0.0, %v6507
  %6509 = vdwg.mxu0
  %6510 = vmatpush.msra.mxu0 %v2430
  %6511 = vmatpush.msra.mxu0 %v2414
  %6512 = vmatpush.msra.mxu0 %v2398
  %6513 = vmatpush.msra.mxu0 %v2382
  %6514 = vmatpush.msra.mxu0 %v2366
  %6515 = vmatpush.msra.mxu0 %v2350
  %6516 = vmatpush.msra.mxu0 %v2334
  %6517 = vmatpush.msra.mxu0 %v2318
  %6518 = vmatpush.msra.mxu0 %v2302
  %6519 = vmatpush.msra.mxu0 %v2286
  %6520 = vmatpush.msra.mxu0 %v2270
  %6521 = vmatpush.msra.mxu0 %v2254
  %6522 = vmatpush.msra.mxu0 %v2238
  %6523 = vmatpush.msra.mxu0 %v2222
  %6524 = vmatpush.msra.mxu0 %v2206
  %6525 = vmatpush.msra.mxu0 %v2190
  %6526 = vmatmul.f32.gmra.mxu0 %v6049
  %v6527 = vpop.f32.mrf.mxu0
  %v6528 = vadd.f32 %v6508, %v6527
  %6529 = vdwg.mxu0
  %6530 = vmatpush.msra.mxu0 %v2175
  %6531 = vmatpush.msra.mxu0 %v2159
  %6532 = vmatpush.msra.mxu0 %v2143
  %6533 = vmatpush.msra.mxu0 %v2127
  %6534 = vmatpush.msra.mxu0 %v2111
  %6535 = vmatpush.msra.mxu0 %v2095
  %6536 = vmatpush.msra.mxu0 %v2079
  %6537 = vmatpush.msra.mxu0 %v2063
  %6538 = vmatpush.msra.mxu0 %v2047
  %6539 = vmatpush.msra.mxu0 %v2031
  %6540 = vmatpush.msra.mxu0 %v2015
  %6541 = vmatpush.msra.mxu0 %v1999
  %6542 = vmatpush.msra.mxu0 %v1983
  %6543 = vmatpush.msra.mxu0 %v1967
  %6544 = vmatpush.msra.mxu0 %v1951
  %6545 = vmatpush.msra.mxu0 %v1935
  %6546 = vmatmul.f32.gmra.mxu0 %v6048
  %v6547 = vpop.f32.mrf.mxu0
  %v6548 = vadd.f32 0.0, %v6547
  %6549 = vdwg.mxu0
  %6550 = vmatpush.msra.mxu0 %v2431
  %6551 = vmatpush.msra.mxu0 %v2415
  %6552 = vmatpush.msra.mxu0 %v2399
  %6553 = vmatpush.msra.mxu0 %v2383
  %6554 = vmatpush.msra.mxu0 %v2367
  %6555 = vmatpush.msra.mxu0 %v2351
  %6556 = vmatpush.msra.mxu0 %v2335
  %6557 = vmatpush.msra.mxu0 %v2319
  %6558 = vmatpush.msra.mxu0 %v2303
  %6559 = vmatpush.msra.mxu0 %v2287
  %6560 = vmatpush.msra.mxu0 %v2271
  %6561 = vmatpush.msra.mxu0 %v2255
  %6562 = vmatpush.msra.mxu0 %v2239
  %6563 = vmatpush.msra.mxu0 %v2223
  %6564 = vmatpush.msra.mxu0 %v2207
  %6565 = vmatpush.msra.mxu0 %v2191
  %6566 = vmatmul.f32.gmra.mxu0 %v6049
  %v6567 = vpop.f32.mrf.mxu0
  %v6568 = vadd.f32 %v6548, %v6567
  %6569 = vdwg.mxu0
  %6570 = vmatpush.msra.mxu0 %v2176
  %6571 = vmatpush.msra.mxu0 %v2160
  %6572 = vmatpush.msra.mxu0 %v2144
  %6573 = vmatpush.msra.mxu0 %v2128
  %6574 = vmatpush.msra.mxu0 %v2112
  %6575 = vmatpush.msra.mxu0 %v2096
  %6576 = vmatpush.msra.mxu0 %v2080
  %6577 = vmatpush.msra.mxu0 %v2064
  %6578 = vmatpush.msra.mxu0 %v2048
  %6579 = vmatpush.msra.mxu0 %v2032
  %6580 = vmatpush.msra.mxu0 %v2016
  %6581 = vmatpush.msra.mxu0 %v2000
  %6582 = vmatpush.msra.mxu0 %v1984
  %6583 = vmatpush.msra.mxu0 %v1968
  %6584 = vmatpush.msra.mxu0 %v1952
  %6585 = vmatpush.msra.mxu0 %v1936
  %6586 = vmatmul.f32.gmra.mxu0 %v6048
  %v6587 = vpop.f32.mrf.mxu0
  %v6588 = vadd.f32 0.0, %v6587
  %6589 = vdwg.mxu0
  %6590 = vmatpush.msra.mxu0 %v2432
  %6591 = vmatpush.msra.mxu0 %v2416
  %6592 = vmatpush.msra.mxu0 %v2400
  %6593 = vmatpush.msra.mxu0 %v2384
  %6594 = vmatpush.msra.mxu0 %v2368
  %6595 = vmatpush.msra.mxu0 %v2352
  %6596 = vmatpush.msra.mxu0 %v2336
  %6597 = vmatpush.msra.mxu0 %v2320
  %6598 = vmatpush.msra.mxu0 %v2304
  %6599 = vmatpush.msra.mxu0 %v2288
  %6600 = vmatpush.msra.mxu0 %v2272
  %6601 = vmatpush.msra.mxu0 %v2256
  %6602 = vmatpush.msra.mxu0 %v2240
  %6603 = vmatpush.msra.mxu0 %v2224
  %6604 = vmatpush.msra.mxu0 %v2208
  %6605 = vmatpush.msra.mxu0 %v2192
  %6606 = vmatmul.f32.gmra.mxu0 %v6049
  %v6607 = vpop.f32.mrf.mxu0
  %v6608 = vadd.f32 %v6588, %v6607
  %6609 = vdwg.mxu0
  %6610 = vmatpush.msra.mxu0 %v2177
  %6611 = vmatpush.msra.mxu0 %v2161
  %6612 = vmatpush.msra.mxu0 %v2145
  %6613 = vmatpush.msra.mxu0 %v2129
  %6614 = vmatpush.msra.mxu0 %v2113
  %6615 = vmatpush.msra.mxu0 %v2097
  %6616 = vmatpush.msra.mxu0 %v2081
  %6617 = vmatpush.msra.mxu0 %v2065
  %6618 = vmatpush.msra.mxu0 %v2049
  %6619 = vmatpush.msra.mxu0 %v2033
  %6620 = vmatpush.msra.mxu0 %v2017
  %6621 = vmatpush.msra.mxu0 %v2001
  %6622 = vmatpush.msra.mxu0 %v1985
  %6623 = vmatpush.msra.mxu0 %v1969
  %6624 = vmatpush.msra.mxu0 %v1953
  %6625 = vmatpush.msra.mxu0 %v1937
  %6626 = vmatmul.f32.gmra.mxu0 %v6048
  %v6627 = vpop.f32.mrf.mxu0
  %v6628 = vadd.f32 0.0, %v6627
  %6629 = vdwg.mxu0
  %6630 = vmatpush.msra.mxu0 %v2433
  %6631 = vmatpush.msra.mxu0 %v2417
  %6632 = vmatpush.msra.mxu0 %v2401
  %6633 = vmatpush.msra.mxu0 %v2385
  %6634 = vmatpush.msra.mxu0 %v2369
  %6635 = vmatpush.msra.mxu0 %v2353
  %6636 = vmatpush.msra.mxu0 %v2337
  %6637 = vmatpush.msra.mxu0 %v2321
  %6638 = vmatpush.msra.mxu0 %v2305
  %6639 = vmatpush.msra.mxu0 %v2289
  %6640 = vmatpush.msra.mxu0 %v2273
  %6641 = vmatpush.msra.mxu0 %v2257
  %6642 = vmatpush.msra.mxu0 %v2241
  %6643 = vmatpush.msra.mxu0 %v2225
  %6644 = vmatpush.msra.mxu0 %v2209
  %6645 = vmatpush.msra.mxu0 %v2193
  %6646 = vmatmul.f32.gmra.mxu0 %v6049
  %v6647 = vpop.f32.mrf.mxu0
  %v6648 = vadd.f32 %v6628, %v6647
  %6649 = vdwg.mxu0
  %6650 = vmatpush.msra.mxu0 %v2178
  %6651 = vmatpush.msra.mxu0 %v2162
  %6652 = vmatpush.msra.mxu0 %v2146
  %6653 = vmatpush.msra.mxu0 %v2130
  %6654 = vmatpush.msra.mxu0 %v2114
  %6655 = vmatpush.msra.mxu0 %v2098
  %6656 = vmatpush.msra.mxu0 %v2082
  %6657 = vmatpush.msra.mxu0 %v2066
  %6658 = vmatpush.msra.mxu0 %v2050
  %6659 = vmatpush.msra.mxu0 %v2034
  %6660 = vmatpush.msra.mxu0 %v2018
  %6661 = vmatpush.msra.mxu0 %v2002
  %6662 = vmatpush.msra.mxu0 %v1986
  %6663 = vmatpush.msra.mxu0 %v1970
  %6664 = vmatpush.msra.mxu0 %v1954
  %6665 = vmatpush.msra.mxu0 %v1938
  %6666 = vmatmul.f32.gmra.mxu0 %v6048
  %v6667 = vpop.f32.mrf.mxu0
  %v6668 = vadd.f32 0.0, %v6667
  %6669 = vdwg.mxu0
  %6670 = vmatpush.msra.mxu0 %v2434
  %6671 = vmatpush.msra.mxu0 %v2418
  %6672 = vmatpush.msra.mxu0 %v2402
  %6673 = vmatpush.msra.mxu0 %v2386
  %6674 = vmatpush.msra.mxu0 %v2370
  %6675 = vmatpush.msra.mxu0 %v2354
  %6676 = vmatpush.msra.mxu0 %v2338
  %6677 = vmatpush.msra.mxu0 %v2322
  %6678 = vmatpush.msra.mxu0 %v2306
  %6679 = vmatpush.msra.mxu0 %v2290
  %6680 = vmatpush.msra.mxu0 %v2274
  %6681 = vmatpush.msra.mxu0 %v2258
  %6682 = vmatpush.msra.mxu0 %v2242
  %6683 = vmatpush.msra.mxu0 %v2226
  %6684 = vmatpush.msra.mxu0 %v2210
  %6685 = vmatpush.msra.mxu0 %v2194
  %6686 = vmatmul.f32.gmra.mxu0 %v6049
  %v6687 = vpop.f32.mrf.mxu0
  %v6688 = vadd.f32 %v6668, %v6687
  %6689 = vdwg.mxu0
  %v6690 = vsel %vm1076, %v6088, %v6408
  %v6691 = vsel %vm1076, %v6128, %v6448
  %v6692 = vsel %vm1076, %v6168, %v6488
  %v6693 = vsel %vm1076, %v6208, %v6528
  %v6694 = vsel %vm1076, %v6248, %v6568
  %v6695 = vsel %vm1076, %v6288, %v6608
  %v6696 = vsel %vm1076, %v6328, %v6648
  %v6697 = vsel %vm1076, %v6368, %v6688
  %v6698 = vld [vmem:[%s1864] sm:$0xff]
  %v6699 = vld [vmem:[%s1864 + $0x8] sm:$0xff]
  %v6700 = vld [vmem:[%s1864 + $0x10] sm:$0xff]
  %v6701 = vld [vmem:[%s1864 + $0x18] sm:$0xff]
  %6706 = vst [vmem:[#allocation1] ss:$2 sm:$0xff] %v6698
  %s6707 = scalar_lea.vmem [#allocation1], 16
  %6708 = vst [vmem:[%s6707] ss:$2 sm:$0xff] %v6699
  %s6709 = scalar_lea.vmem [#allocation1], 32
  %6710 = vst [vmem:[%s6709] ss:$2 sm:$0xff] %v6700
  %s6711 = scalar_lea.vmem [#allocation1], 48
  %6712 = vst [vmem:[%s6711] ss:$2 sm:$0xff] %v6701
  %v6713 = vld.sshfl [vmem:[#allocation1] sm:$0xff pattern:$0x75316420]
  %v6714 = vld.sshfl [vmem:[#allocation1 + $0x8] sm:$0xff pattern:$0x75316420]
  %v6715 = vld.sshfl [vmem:[#allocation1 + $0x10] sm:$0xff pattern:$0x75316420]
  %v6716 = vld.sshfl [vmem:[#allocation1 + $0x18] sm:$0xff pattern:$0x75316420]
  %v6717 = vld.sshfl [vmem:[#allocation1 + $0x20] sm:$0xff pattern:$0x75316420]
  %v6718 = vld.sshfl [vmem:[#allocation1 + $0x28] sm:$0xff pattern:$0x75316420]
  %v6719 = vld.sshfl [vmem:[#allocation1 + $0x30] sm:$0xff pattern:$0x75316420]
  %v6720 = vld.sshfl [vmem:[#allocation1 + $0x38] sm:$0xff pattern:$0x75316420]
  %v6729 = vadd.f32 %v6690, %v6713
  %v6730 = vadd.f32 %v6691, %v6714
  %v6731 = vadd.f32 %v6692, %v6715
  %v6732 = vadd.f32 %v6693, %v6716
  %v6733 = vadd.f32 %v6694, %v6717
  %v6734 = vadd.f32 %v6695, %v6718
  %v6735 = vadd.f32 %v6696, %v6719
  %v6736 = vadd.f32 %v6697, %v6720
  %v6737 = vmul.f32 %v6729, 0.5
  %v6738 = vmul.f32 %v6730, 0.5
  %v6739 = vtanh.pop %v6737
  %v6740 = vtanh.pop %v6738
  %v6741 = vadd.f32 %v6739, 1.0
  %v6742 = vadd.f32 %v6740, 1.0
  %v6743 = vmul.f32 %v6741, 0.5
  %v6744 = vmul.f32 %v6742, 0.5
  %v6745 = vmul.f32 %v6731, 0.5
  %v6746 = vmul.f32 %v6732, 0.5
  %v6747 = vtanh.pop %v6745
  %v6748 = vtanh.pop %v6746
  %v6749 = vadd.f32 %v6747, 1.0
  %v6750 = vadd.f32 %v6748, 1.0
  %v6751 = vmul.f32 %v6749, 0.5
  %v6752 = vmul.f32 %v6750, 0.5
  %v6753 = vtanh.pop %v6733
  %v6754 = vtanh.pop %v6734
  %v6755 = vmul.f32 %v6735, 0.5
  %v6756 = vmul.f32 %v6736, 0.5
  %v6757 = vtanh.pop %v6755
  %v6758 = vtanh.pop %v6756
  %v6759 = vadd.f32 %v6757, 1.0
  %v6760 = vadd.f32 %v6758, 1.0
  %v6761 = vmul.f32 %v6759, 0.5
  %v6762 = vmul.f32 %v6760, 0.5
  %v6763 = vmul.f32 %v6751, %v6044
  %v6764 = vmul.f32 %v6752, %v6045
  %v6765 = vmul.f32 %v6743, %v6753
  %v6766 = vmul.f32 %v6744, %v6754
  %v6767 = vadd.f32 %v6763, %v6765
  %v6768 = vadd.f32 %v6764, %v6766
  %v6769 = vtanh.pop %v6767
  %v6770 = vtanh.pop %v6768
  %v6771 = vmul.f32 %v6761, %v6769
  %v6772 = vmul.f32 %v6762, %v6770
  %6773 = vmatpush.msra.mxu0 %v2163
  %6774 = vmatpush.msra.mxu0 %v2147
  %6775 = vmatpush.msra.mxu0 %v2131
  %6776 = vmatpush.msra.mxu0 %v2115
  %6777 = vmatpush.msra.mxu0 %v2099
  %6778 = vmatpush.msra.mxu0 %v2083
  %6779 = vmatpush.msra.mxu0 %v2067
  %6780 = vmatpush.msra.mxu0 %v2051
  %6781 = vmatpush.msra.mxu0 %v2035
  %6782 = vmatpush.msra.mxu0 %v2019
  %6783 = vmatpush.msra.mxu0 %v2003
  %6784 = vmatpush.msra.mxu0 %v1987
  %6785 = vmatpush.msra.mxu0 %v1971
  %6786 = vmatpush.msra.mxu0 %v1955
  %6787 = vmatpush.msra.mxu0 %v1939
  %6788 = vmatpush.msra.mxu0 %v1923
  %6789 = vmatmul.f32.gmra.mxu0 %v6771
  %v6790 = vpop.f32.mrf.mxu0
  %v6791 = vadd.f32 0.0, %v6790
  %6792 = vdwg.mxu0
  %6793 = vmatpush.msra.mxu0 %v2419
  %6794 = vmatpush.msra.mxu0 %v2403
  %6795 = vmatpush.msra.mxu0 %v2387
  %6796 = vmatpush.msra.mxu0 %v2371
  %6797 = vmatpush.msra.mxu0 %v2355
  %6798 = vmatpush.msra.mxu0 %v2339
  %6799 = vmatpush.msra.mxu0 %v2323
  %6800 = vmatpush.msra.mxu0 %v2307
  %6801 = vmatpush.msra.mxu0 %v2291
  %6802 = vmatpush.msra.mxu0 %v2275
  %6803 = vmatpush.msra.mxu0 %v2259
  %6804 = vmatpush.msra.mxu0 %v2243
  %6805 = vmatpush.msra.mxu0 %v2227
  %6806 = vmatpush.msra.mxu0 %v2211
  %6807 = vmatpush.msra.mxu0 %v2195
  %6808 = vmatpush.msra.mxu0 %v2179
  %6809 = vmatmul.f32.gmra.mxu0 %v6772
  %v6810 = vpop.f32.mrf.mxu0
  %v6811 = vadd.f32 %v6791, %v6810
  %6812 = vdwg.mxu0
  %6813 = vmatpush.msra.mxu0 %v2164
  %6814 = vmatpush.msra.mxu0 %v2148
  %6815 = vmatpush.msra.mxu0 %v2132
  %6816 = vmatpush.msra.mxu0 %v2116
  %6817 = vmatpush.msra.mxu0 %v2100
  %6818 = vmatpush.msra.mxu0 %v2084
  %6819 = vmatpush.msra.mxu0 %v2068
  %6820 = vmatpush.msra.mxu0 %v2052
  %6821 = vmatpush.msra.mxu0 %v2036
  %6822 = vmatpush.msra.mxu0 %v2020
  %6823 = vmatpush.msra.mxu0 %v2004
  %6824 = vmatpush.msra.mxu0 %v1988
  %6825 = vmatpush.msra.mxu0 %v1972
  %6826 = vmatpush.msra.mxu0 %v1956
  %6827 = vmatpush.msra.mxu0 %v1940
  %6828 = vmatpush.msra.mxu0 %v1924
  %6829 = vmatmul.f32.gmra.mxu0 %v6771
  %v6830 = vpop.f32.mrf.mxu0
  %v6831 = vadd.f32 0.0, %v6830
  %6832 = vdwg.mxu0
  %6833 = vmatpush.msra.mxu0 %v2420
  %6834 = vmatpush.msra.mxu0 %v2404
  %6835 = vmatpush.msra.mxu0 %v2388
  %6836 = vmatpush.msra.mxu0 %v2372
  %6837 = vmatpush.msra.mxu0 %v2356
  %6838 = vmatpush.msra.mxu0 %v2340
  %6839 = vmatpush.msra.mxu0 %v2324
  %6840 = vmatpush.msra.mxu0 %v2308
  %6841 = vmatpush.msra.mxu0 %v2292
  %6842 = vmatpush.msra.mxu0 %v2276
  %6843 = vmatpush.msra.mxu0 %v2260
  %6844 = vmatpush.msra.mxu0 %v2244
  %6845 = vmatpush.msra.mxu0 %v2228
  %6846 = vmatpush.msra.mxu0 %v2212
  %6847 = vmatpush.msra.mxu0 %v2196
  %6848 = vmatpush.msra.mxu0 %v2180
  %6849 = vmatmul.f32.gmra.mxu0 %v6772
  %v6850 = vpop.f32.mrf.mxu0
  %v6851 = vadd.f32 %v6831, %v6850
  %6852 = vdwg.mxu0
  %6853 = vmatpush.msra.mxu0 %v2165
  %6854 = vmatpush.msra.mxu0 %v2149
  %6855 = vmatpush.msra.mxu0 %v2133
  %6856 = vmatpush.msra.mxu0 %v2117
  %6857 = vmatpush.msra.mxu0 %v2101
  %6858 = vmatpush.msra.mxu0 %v2085
  %6859 = vmatpush.msra.mxu0 %v2069
  %6860 = vmatpush.msra.mxu0 %v2053
  %6861 = vmatpush.msra.mxu0 %v2037
  %6862 = vmatpush.msra.mxu0 %v2021
  %6863 = vmatpush.msra.mxu0 %v2005
  %6864 = vmatpush.msra.mxu0 %v1989
  %6865 = vmatpush.msra.mxu0 %v1973
  %6866 = vmatpush.msra.mxu0 %v1957
  %6867 = vmatpush.msra.mxu0 %v1941
  %6868 = vmatpush.msra.mxu0 %v1925
  %6869 = vmatmul.f32.gmra.mxu0 %v6771
  %v6870 = vpop.f32.mrf.mxu0
  %v6871 = vadd.f32 0.0, %v6870
  %6872 = vdwg.mxu0
  %6873 = vmatpush.msra.mxu0 %v2421
  %6874 = vmatpush.msra.mxu0 %v2405
  %6875 = vmatpush.msra.mxu0 %v2389
  %6876 = vmatpush.msra.mxu0 %v2373
  %6877 = vmatpush.msra.mxu0 %v2357
  %6878 = vmatpush.msra.mxu0 %v2341
  %6879 = vmatpush.msra.mxu0 %v2325
  %6880 = vmatpush.msra.mxu0 %v2309
  %6881 = vmatpush.msra.mxu0 %v2293
  %6882 = vmatpush.msra.mxu0 %v2277
  %6883 = vmatpush.msra.mxu0 %v2261
  %6884 = vmatpush.msra.mxu0 %v2245
  %6885 = vmatpush.msra.mxu0 %v2229
  %6886 = vmatpush.msra.mxu0 %v2213
  %6887 = vmatpush.msra.mxu0 %v2197
  %6888 = vmatpush.msra.mxu0 %v2181
  %6889 = vmatmul.f32.gmra.mxu0 %v6772
  %v6890 = vpop.f32.mrf.mxu0
  %v6891 = vadd.f32 %v6871, %v6890
  %6892 = vdwg.mxu0
  %6893 = vmatpush.msra.mxu0 %v2166
  %6894 = vmatpush.msra.mxu0 %v2150
  %6895 = vmatpush.msra.mxu0 %v2134
  %6896 = vmatpush.msra.mxu0 %v2118
  %6897 = vmatpush.msra.mxu0 %v2102
  %6898 = vmatpush.msra.mxu0 %v2086
  %6899 = vmatpush.msra.mxu0 %v2070
  %6900 = vmatpush.msra.mxu0 %v2054
  %6901 = vmatpush.msra.mxu0 %v2038
  %6902 = vmatpush.msra.mxu0 %v2022
  %6903 = vmatpush.msra.mxu0 %v2006
  %6904 = vmatpush.msra.mxu0 %v1990
  %6905 = vmatpush.msra.mxu0 %v1974
  %6906 = vmatpush.msra.mxu0 %v1958
  %6907 = vmatpush.msra.mxu0 %v1942
  %6908 = vmatpush.msra.mxu0 %v1926
  %6909 = vmatmul.f32.gmra.mxu0 %v6771
  %v6910 = vpop.f32.mrf.mxu0
  %v6911 = vadd.f32 0.0, %v6910
  %6912 = vdwg.mxu0
  %6913 = vmatpush.msra.mxu0 %v2422
  %6914 = vmatpush.msra.mxu0 %v2406
  %6915 = vmatpush.msra.mxu0 %v2390
  %6916 = vmatpush.msra.mxu0 %v2374
  %6917 = vmatpush.msra.mxu0 %v2358
  %6918 = vmatpush.msra.mxu0 %v2342
  %6919 = vmatpush.msra.mxu0 %v2326
  %6920 = vmatpush.msra.mxu0 %v2310
  %6921 = vmatpush.msra.mxu0 %v2294
  %6922 = vmatpush.msra.mxu0 %v2278
  %6923 = vmatpush.msra.mxu0 %v2262
  %6924 = vmatpush.msra.mxu0 %v2246
  %6925 = vmatpush.msra.mxu0 %v2230
  %6926 = vmatpush.msra.mxu0 %v2214
  %6927 = vmatpush.msra.mxu0 %v2198
  %6928 = vmatpush.msra.mxu0 %v2182
  %6929 = vmatmul.f32.gmra.mxu0 %v6772
  %v6930 = vpop.f32.mrf.mxu0
  %v6931 = vadd.f32 %v6911, %v6930
  %6932 = vdwg.mxu0
  %6933 = vmatpush.msra.mxu0 %v2167
  %6934 = vmatpush.msra.mxu0 %v2151
  %6935 = vmatpush.msra.mxu0 %v2135
  %6936 = vmatpush.msra.mxu0 %v2119
  %6937 = vmatpush.msra.mxu0 %v2103
  %6938 = vmatpush.msra.mxu0 %v2087
  %6939 = vmatpush.msra.mxu0 %v2071
  %6940 = vmatpush.msra.mxu0 %v2055
  %6941 = vmatpush.msra.mxu0 %v2039
  %6942 = vmatpush.msra.mxu0 %v2023
  %6943 = vmatpush.msra.mxu0 %v2007
  %6944 = vmatpush.msra.mxu0 %v1991
  %6945 = vmatpush.msra.mxu0 %v1975
  %6946 = vmatpush.msra.mxu0 %v1959
  %6947 = vmatpush.msra.mxu0 %v1943
  %6948 = vmatpush.msra.mxu0 %v1927
  %6949 = vmatmul.f32.gmra.mxu0 %v6771
  %v6950 = vpop.f32.mrf.mxu0
  %v6951 = vadd.f32 0.0, %v6950
  %6952 = vdwg.mxu0
  %6953 = vmatpush.msra.mxu0 %v2423
  %6954 = vmatpush.msra.mxu0 %v2407
  %6955 = vmatpush.msra.mxu0 %v2391
  %6956 = vmatpush.msra.mxu0 %v2375
  %6957 = vmatpush.msra.mxu0 %v2359
  %6958 = vmatpush.msra.mxu0 %v2343
  %6959 = vmatpush.msra.mxu0 %v2327
  %6960 = vmatpush.msra.mxu0 %v2311
  %6961 = vmatpush.msra.mxu0 %v2295
  %6962 = vmatpush.msra.mxu0 %v2279
  %6963 = vmatpush.msra.mxu0 %v2263
  %6964 = vmatpush.msra.mxu0 %v2247
  %6965 = vmatpush.msra.mxu0 %v2231
  %6966 = vmatpush.msra.mxu0 %v2215
  %6967 = vmatpush.msra.mxu0 %v2199
  %6968 = vmatpush.msra.mxu0 %v2183
  %6969 = vmatmul.f32.gmra.mxu0 %v6772
  %v6970 = vpop.f32.mrf.mxu0
  %v6971 = vadd.f32 %v6951, %v6970
  %6972 = vdwg.mxu0
  %6973 = vmatpush.msra.mxu0 %v2168
  %6974 = vmatpush.msra.mxu0 %v2152
  %6975 = vmatpush.msra.mxu0 %v2136
  %6976 = vmatpush.msra.mxu0 %v2120
  %6977 = vmatpush.msra.mxu0 %v2104
  %6978 = vmatpush.msra.mxu0 %v2088
  %6979 = vmatpush.msra.mxu0 %v2072
  %6980 = vmatpush.msra.mxu0 %v2056
  %6981 = vmatpush.msra.mxu0 %v2040
  %6982 = vmatpush.msra.mxu0 %v2024
  %6983 = vmatpush.msra.mxu0 %v2008
  %6984 = vmatpush.msra.mxu0 %v1992
  %6985 = vmatpush.msra.mxu0 %v1976
  %6986 = vmatpush.msra.mxu0 %v1960
  %6987 = vmatpush.msra.mxu0 %v1944
  %6988 = vmatpush.msra.mxu0 %v1928
  %6989 = vmatmul.f32.gmra.mxu0 %v6771
  %v6990 = vpop.f32.mrf.mxu0
  %v6991 = vadd.f32 0.0, %v6990
  %6992 = vdwg.mxu0
  %6993 = vmatpush.msra.mxu0 %v2424
  %6994 = vmatpush.msra.mxu0 %v2408
  %6995 = vmatpush.msra.mxu0 %v2392
  %6996 = vmatpush.msra.mxu0 %v2376
  %6997 = vmatpush.msra.mxu0 %v2360
  %6998 = vmatpush.msra.mxu0 %v2344
  %6999 = vmatpush.msra.mxu0 %v2328
  %7000 = vmatpush.msra.mxu0 %v2312
  %7001 = vmatpush.msra.mxu0 %v2296
  %7002 = vmatpush.msra.mxu0 %v2280
  %7003 = vmatpush.msra.mxu0 %v2264
  %7004 = vmatpush.msra.mxu0 %v2248
  %7005 = vmatpush.msra.mxu0 %v2232
  %7006 = vmatpush.msra.mxu0 %v2216
  %7007 = vmatpush.msra.mxu0 %v2200
  %7008 = vmatpush.msra.mxu0 %v2184
  %7009 = vmatmul.f32.gmra.mxu0 %v6772
  %v7010 = vpop.f32.mrf.mxu0
  %v7011 = vadd.f32 %v6991, %v7010
  %7012 = vdwg.mxu0
  %7013 = vmatpush.msra.mxu0 %v2169
  %7014 = vmatpush.msra.mxu0 %v2153
  %7015 = vmatpush.msra.mxu0 %v2137
  %7016 = vmatpush.msra.mxu0 %v2121
  %7017 = vmatpush.msra.mxu0 %v2105
  %7018 = vmatpush.msra.mxu0 %v2089
  %7019 = vmatpush.msra.mxu0 %v2073
  %7020 = vmatpush.msra.mxu0 %v2057
  %7021 = vmatpush.msra.mxu0 %v2041
  %7022 = vmatpush.msra.mxu0 %v2025
  %7023 = vmatpush.msra.mxu0 %v2009
  %7024 = vmatpush.msra.mxu0 %v1993
  %7025 = vmatpush.msra.mxu0 %v1977
  %7026 = vmatpush.msra.mxu0 %v1961
  %7027 = vmatpush.msra.mxu0 %v1945
  %7028 = vmatpush.msra.mxu0 %v1929
  %7029 = vmatmul.f32.gmra.mxu0 %v6771
  %v7030 = vpop.f32.mrf.mxu0
  %v7031 = vadd.f32 0.0, %v7030
  %7032 = vdwg.mxu0
  %7033 = vmatpush.msra.mxu0 %v2425
  %7034 = vmatpush.msra.mxu0 %v2409
  %7035 = vmatpush.msra.mxu0 %v2393
  %7036 = vmatpush.msra.mxu0 %v2377
  %7037 = vmatpush.msra.mxu0 %v2361
  %7038 = vmatpush.msra.mxu0 %v2345
  %7039 = vmatpush.msra.mxu0 %v2329
  %7040 = vmatpush.msra.mxu0 %v2313
  %7041 = vmatpush.msra.mxu0 %v2297
  %7042 = vmatpush.msra.mxu0 %v2281
  %7043 = vmatpush.msra.mxu0 %v2265
  %7044 = vmatpush.msra.mxu0 %v2249
  %7045 = vmatpush.msra.mxu0 %v2233
  %7046 = vmatpush.msra.mxu0 %v2217
  %7047 = vmatpush.msra.mxu0 %v2201
  %7048 = vmatpush.msra.mxu0 %v2185
  %7049 = vmatmul.f32.gmra.mxu0 %v6772
  %v7050 = vpop.f32.mrf.mxu0
  %v7051 = vadd.f32 %v7031, %v7050
  %7052 = vdwg.mxu0
  %7053 = vmatpush.msra.mxu0 %v2170
  %7054 = vmatpush.msra.mxu0 %v2154
  %7055 = vmatpush.msra.mxu0 %v2138
  %7056 = vmatpush.msra.mxu0 %v2122
  %7057 = vmatpush.msra.mxu0 %v2106
  %7058 = vmatpush.msra.mxu0 %v2090
  %7059 = vmatpush.msra.mxu0 %v2074
  %7060 = vmatpush.msra.mxu0 %v2058
  %7061 = vmatpush.msra.mxu0 %v2042
  %7062 = vmatpush.msra.mxu0 %v2026
  %7063 = vmatpush.msra.mxu0 %v2010
  %7064 = vmatpush.msra.mxu0 %v1994
  %7065 = vmatpush.msra.mxu0 %v1978
  %7066 = vmatpush.msra.mxu0 %v1962
  %7067 = vmatpush.msra.mxu0 %v1946
  %7068 = vmatpush.msra.mxu0 %v1930
  %7069 = vmatmul.f32.gmra.mxu0 %v6771
  %v7070 = vpop.f32.mrf.mxu0
  %v7071 = vadd.f32 0.0, %v7070
  %7072 = vdwg.mxu0
  %7073 = vmatpush.msra.mxu0 %v2426
  %7074 = vmatpush.msra.mxu0 %v2410
  %7075 = vmatpush.msra.mxu0 %v2394
  %7076 = vmatpush.msra.mxu0 %v2378
  %7077 = vmatpush.msra.mxu0 %v2362
  %7078 = vmatpush.msra.mxu0 %v2346
  %7079 = vmatpush.msra.mxu0 %v2330
  %7080 = vmatpush.msra.mxu0 %v2314
  %7081 = vmatpush.msra.mxu0 %v2298
  %7082 = vmatpush.msra.mxu0 %v2282
  %7083 = vmatpush.msra.mxu0 %v2266
  %7084 = vmatpush.msra.mxu0 %v2250
  %7085 = vmatpush.msra.mxu0 %v2234
  %7086 = vmatpush.msra.mxu0 %v2218
  %7087 = vmatpush.msra.mxu0 %v2202
  %7088 = vmatpush.msra.mxu0 %v2186
  %7089 = vmatmul.f32.gmra.mxu0 %v6772
  %v7090 = vpop.f32.mrf.mxu0
  %v7091 = vadd.f32 %v7071, %v7090
  %7092 = vdwg.mxu0
  %7093 = vmatpush.msra.mxu0 %v2171
  %7094 = vmatpush.msra.mxu0 %v2155
  %7095 = vmatpush.msra.mxu0 %v2139
  %7096 = vmatpush.msra.mxu0 %v2123
  %7097 = vmatpush.msra.mxu0 %v2107
  %7098 = vmatpush.msra.mxu0 %v2091
  %7099 = vmatpush.msra.mxu0 %v2075
  %7100 = vmatpush.msra.mxu0 %v2059
  %7101 = vmatpush.msra.mxu0 %v2043
  %7102 = vmatpush.msra.mxu0 %v2027
  %7103 = vmatpush.msra.mxu0 %v2011
  %7104 = vmatpush.msra.mxu0 %v1995
  %7105 = vmatpush.msra.mxu0 %v1979
  %7106 = vmatpush.msra.mxu0 %v1963
  %7107 = vmatpush.msra.mxu0 %v1947
  %7108 = vmatpush.msra.mxu0 %v1931
  %7109 = vmatmul.f32.gmra.mxu0 %v6771
  %v7110 = vpop.f32.mrf.mxu0
  %v7111 = vadd.f32 0.0, %v7110
  %7112 = vdwg.mxu0
  %7113 = vmatpush.msra.mxu0 %v2427
  %7114 = vmatpush.msra.mxu0 %v2411
  %7115 = vmatpush.msra.mxu0 %v2395
  %7116 = vmatpush.msra.mxu0 %v2379
  %7117 = vmatpush.msra.mxu0 %v2363
  %7118 = vmatpush.msra.mxu0 %v2347
  %7119 = vmatpush.msra.mxu0 %v2331
  %7120 = vmatpush.msra.mxu0 %v2315
  %7121 = vmatpush.msra.mxu0 %v2299
  %7122 = vmatpush.msra.mxu0 %v2283
  %7123 = vmatpush.msra.mxu0 %v2267
  %7124 = vmatpush.msra.mxu0 %v2251
  %7125 = vmatpush.msra.mxu0 %v2235
  %7126 = vmatpush.msra.mxu0 %v2219
  %7127 = vmatpush.msra.mxu0 %v2203
  %7128 = vmatpush.msra.mxu0 %v2187
  %7129 = vmatmul.f32.gmra.mxu0 %v6772
  %v7130 = vpop.f32.mrf.mxu0
  %v7131 = vadd.f32 %v7111, %v7130
  %7132 = vdwg.mxu0
  %7133 = vmatpush.msra.mxu0 %v2172
  %7134 = vmatpush.msra.mxu0 %v2156
  %7135 = vmatpush.msra.mxu0 %v2140
  %7136 = vmatpush.msra.mxu0 %v2124
  %7137 = vmatpush.msra.mxu0 %v2108
  %7138 = vmatpush.msra.mxu0 %v2092
  %7139 = vmatpush.msra.mxu0 %v2076
  %7140 = vmatpush.msra.mxu0 %v2060
  %7141 = vmatpush.msra.mxu0 %v2044
  %7142 = vmatpush.msra.mxu0 %v2028
  %7143 = vmatpush.msra.mxu0 %v2012
  %7144 = vmatpush.msra.mxu0 %v1996
  %7145 = vmatpush.msra.mxu0 %v1980
  %7146 = vmatpush.msra.mxu0 %v1964
  %7147 = vmatpush.msra.mxu0 %v1948
  %7148 = vmatpush.msra.mxu0 %v1932
  %7149 = vmatmul.f32.gmra.mxu0 %v6771
  %v7150 = vpop.f32.mrf.mxu0
  %v7151 = vadd.f32 0.0, %v7150
  %7152 = vdwg.mxu0
  %7153 = vmatpush.msra.mxu0 %v2428
  %7154 = vmatpush.msra.mxu0 %v2412
  %7155 = vmatpush.msra.mxu0 %v2396
  %7156 = vmatpush.msra.mxu0 %v2380
  %7157 = vmatpush.msra.mxu0 %v2364
  %7158 = vmatpush.msra.mxu0 %v2348
  %7159 = vmatpush.msra.mxu0 %v2332
  %7160 = vmatpush.msra.mxu0 %v2316
  %7161 = vmatpush.msra.mxu0 %v2300
  %7162 = vmatpush.msra.mxu0 %v2284
  %7163 = vmatpush.msra.mxu0 %v2268
  %7164 = vmatpush.msra.mxu0 %v2252
  %7165 = vmatpush.msra.mxu0 %v2236
  %7166 = vmatpush.msra.mxu0 %v2220
  %7167 = vmatpush.msra.mxu0 %v2204
  %7168 = vmatpush.msra.mxu0 %v2188
  %7169 = vmatmul.f32.gmra.mxu0 %v6772
  %v7170 = vpop.f32.mrf.mxu0
  %v7171 = vadd.f32 %v7151, %v7170
  %7172 = vdwg.mxu0
  %7173 = vmatpush.msra.mxu0 %v2173
  %7174 = vmatpush.msra.mxu0 %v2157
  %7175 = vmatpush.msra.mxu0 %v2141
  %7176 = vmatpush.msra.mxu0 %v2125
  %7177 = vmatpush.msra.mxu0 %v2109
  %7178 = vmatpush.msra.mxu0 %v2093
  %7179 = vmatpush.msra.mxu0 %v2077
  %7180 = vmatpush.msra.mxu0 %v2061
  %7181 = vmatpush.msra.mxu0 %v2045
  %7182 = vmatpush.msra.mxu0 %v2029
  %7183 = vmatpush.msra.mxu0 %v2013
  %7184 = vmatpush.msra.mxu0 %v1997
  %7185 = vmatpush.msra.mxu0 %v1981
  %7186 = vmatpush.msra.mxu0 %v1965
  %7187 = vmatpush.msra.mxu0 %v1949
  %7188 = vmatpush.msra.mxu0 %v1933
  %7189 = vmatmul.f32.gmra.mxu0 %v6771
  %v7190 = vpop.f32.mrf.mxu0
  %v7191 = vadd.f32 0.0, %v7190
  %7192 = vdwg.mxu0
  %7193 = vmatpush.msra.mxu0 %v2429
  %7194 = vmatpush.msra.mxu0 %v2413
  %7195 = vmatpush.msra.mxu0 %v2397
  %7196 = vmatpush.msra.mxu0 %v2381
  %7197 = vmatpush.msra.mxu0 %v2365
  %7198 = vmatpush.msra.mxu0 %v2349
  %7199 = vmatpush.msra.mxu0 %v2333
  %7200 = vmatpush.msra.mxu0 %v2317
  %7201 = vmatpush.msra.mxu0 %v2301
  %7202 = vmatpush.msra.mxu0 %v2285
  %7203 = vmatpush.msra.mxu0 %v2269
  %7204 = vmatpush.msra.mxu0 %v2253
  %7205 = vmatpush.msra.mxu0 %v2237
  %7206 = vmatpush.msra.mxu0 %v2221
  %7207 = vmatpush.msra.mxu0 %v2205
  %7208 = vmatpush.msra.mxu0 %v2189
  %7209 = vmatmul.f32.gmra.mxu0 %v6772
  %v7210 = vpop.f32.mrf.mxu0
  %v7211 = vadd.f32 %v7191, %v7210
  %7212 = vdwg.mxu0
  %7213 = vmatpush.msra.mxu0 %v2174
  %7214 = vmatpush.msra.mxu0 %v2158
  %7215 = vmatpush.msra.mxu0 %v2142
  %7216 = vmatpush.msra.mxu0 %v2126
  %7217 = vmatpush.msra.mxu0 %v2110
  %7218 = vmatpush.msra.mxu0 %v2094
  %7219 = vmatpush.msra.mxu0 %v2078
  %7220 = vmatpush.msra.mxu0 %v2062
  %7221 = vmatpush.msra.mxu0 %v2046
  %7222 = vmatpush.msra.mxu0 %v2030
  %7223 = vmatpush.msra.mxu0 %v2014
  %7224 = vmatpush.msra.mxu0 %v1998
  %7225 = vmatpush.msra.mxu0 %v1982
  %7226 = vmatpush.msra.mxu0 %v1966
  %7227 = vmatpush.msra.mxu0 %v1950
  %7228 = vmatpush.msra.mxu0 %v1934
  %7229 = vmatmul.f32.gmra.mxu0 %v6771
  %v7230 = vpop.f32.mrf.mxu0
  %v7231 = vadd.f32 0.0, %v7230
  %7232 = vdwg.mxu0
  %7233 = vmatpush.msra.mxu0 %v2430
  %7234 = vmatpush.msra.mxu0 %v2414
  %7235 = vmatpush.msra.mxu0 %v2398
  %7236 = vmatpush.msra.mxu0 %v2382
  %7237 = vmatpush.msra.mxu0 %v2366
  %7238 = vmatpush.msra.mxu0 %v2350
  %7239 = vmatpush.msra.mxu0 %v2334
  %7240 = vmatpush.msra.mxu0 %v2318
  %7241 = vmatpush.msra.mxu0 %v2302
  %7242 = vmatpush.msra.mxu0 %v2286
  %7243 = vmatpush.msra.mxu0 %v2270
  %7244 = vmatpush.msra.mxu0 %v2254
  %7245 = vmatpush.msra.mxu0 %v2238
  %7246 = vmatpush.msra.mxu0 %v2222
  %7247 = vmatpush.msra.mxu0 %v2206
  %7248 = vmatpush.msra.mxu0 %v2190
  %7249 = vmatmul.f32.gmra.mxu0 %v6772
  %v7250 = vpop.f32.mrf.mxu0
  %v7251 = vadd.f32 %v7231, %v7250
  %7252 = vdwg.mxu0
  %7253 = vmatpush.msra.mxu0 %v2175
  %7254 = vmatpush.msra.mxu0 %v2159
  %7255 = vmatpush.msra.mxu0 %v2143
  %7256 = vmatpush.msra.mxu0 %v2127
  %7257 = vmatpush.msra.mxu0 %v2111
  %7258 = vmatpush.msra.mxu0 %v2095
  %7259 = vmatpush.msra.mxu0 %v2079
  %7260 = vmatpush.msra.mxu0 %v2063
  %7261 = vmatpush.msra.mxu0 %v2047
  %7262 = vmatpush.msra.mxu0 %v2031
  %7263 = vmatpush.msra.mxu0 %v2015
  %7264 = vmatpush.msra.mxu0 %v1999
  %7265 = vmatpush.msra.mxu0 %v1983
  %7266 = vmatpush.msra.mxu0 %v1967
  %7267 = vmatpush.msra.mxu0 %v1951
  %7268 = vmatpush.msra.mxu0 %v1935
  %7269 = vmatmul.f32.gmra.mxu0 %v6771
  %v7270 = vpop.f32.mrf.mxu0
  %v7271 = vadd.f32 0.0, %v7270
  %7272 = vdwg.mxu0
  %7273 = vmatpush.msra.mxu0 %v2431
  %7274 = vmatpush.msra.mxu0 %v2415
  %7275 = vmatpush.msra.mxu0 %v2399
  %7276 = vmatpush.msra.mxu0 %v2383
  %7277 = vmatpush.msra.mxu0 %v2367
  %7278 = vmatpush.msra.mxu0 %v2351
  %7279 = vmatpush.msra.mxu0 %v2335
  %7280 = vmatpush.msra.mxu0 %v2319
  %7281 = vmatpush.msra.mxu0 %v2303
  %7282 = vmatpush.msra.mxu0 %v2287
  %7283 = vmatpush.msra.mxu0 %v2271
  %7284 = vmatpush.msra.mxu0 %v2255
  %7285 = vmatpush.msra.mxu0 %v2239
  %7286 = vmatpush.msra.mxu0 %v2223
  %7287 = vmatpush.msra.mxu0 %v2207
  %7288 = vmatpush.msra.mxu0 %v2191
  %7289 = vmatmul.f32.gmra.mxu0 %v6772
  %v7290 = vpop.f32.mrf.mxu0
  %v7291 = vadd.f32 %v7271, %v7290
  %7292 = vdwg.mxu0
  %7293 = vmatpush.msra.mxu0 %v2176
  %7294 = vmatpush.msra.mxu0 %v2160
  %7295 = vmatpush.msra.mxu0 %v2144
  %7296 = vmatpush.msra.mxu0 %v2128
  %7297 = vmatpush.msra.mxu0 %v2112
  %7298 = vmatpush.msra.mxu0 %v2096
  %7299 = vmatpush.msra.mxu0 %v2080
  %7300 = vmatpush.msra.mxu0 %v2064
  %7301 = vmatpush.msra.mxu0 %v2048
  %7302 = vmatpush.msra.mxu0 %v2032
  %7303 = vmatpush.msra.mxu0 %v2016
  %7304 = vmatpush.msra.mxu0 %v2000
  %7305 = vmatpush.msra.mxu0 %v1984
  %7306 = vmatpush.msra.mxu0 %v1968
  %7307 = vmatpush.msra.mxu0 %v1952
  %7308 = vmatpush.msra.mxu0 %v1936
  %7309 = vmatmul.f32.gmra.mxu0 %v6771
  %v7310 = vpop.f32.mrf.mxu0
  %v7311 = vadd.f32 0.0, %v7310
  %7312 = vdwg.mxu0
  %7313 = vmatpush.msra.mxu0 %v2432
  %7314 = vmatpush.msra.mxu0 %v2416
  %7315 = vmatpush.msra.mxu0 %v2400
  %7316 = vmatpush.msra.mxu0 %v2384
  %7317 = vmatpush.msra.mxu0 %v2368
  %7318 = vmatpush.msra.mxu0 %v2352
  %7319 = vmatpush.msra.mxu0 %v2336
  %7320 = vmatpush.msra.mxu0 %v2320
  %7321 = vmatpush.msra.mxu0 %v2304
  %7322 = vmatpush.msra.mxu0 %v2288
  %7323 = vmatpush.msra.mxu0 %v2272
  %7324 = vmatpush.msra.mxu0 %v2256
  %7325 = vmatpush.msra.mxu0 %v2240
  %7326 = vmatpush.msra.mxu0 %v2224
  %7327 = vmatpush.msra.mxu0 %v2208
  %7328 = vmatpush.msra.mxu0 %v2192
  %7329 = vmatmul.f32.gmra.mxu0 %v6772
  %v7330 = vpop.f32.mrf.mxu0
  %v7331 = vadd.f32 %v7311, %v7330
  %7332 = vdwg.mxu0
  %7333 = vmatpush.msra.mxu0 %v2177
  %7334 = vmatpush.msra.mxu0 %v2161
  %7335 = vmatpush.msra.mxu0 %v2145
  %7336 = vmatpush.msra.mxu0 %v2129
  %7337 = vmatpush.msra.mxu0 %v2113
  %7338 = vmatpush.msra.mxu0 %v2097
  %7339 = vmatpush.msra.mxu0 %v2081
  %7340 = vmatpush.msra.mxu0 %v2065
  %7341 = vmatpush.msra.mxu0 %v2049
  %7342 = vmatpush.msra.mxu0 %v2033
  %7343 = vmatpush.msra.mxu0 %v2017
  %7344 = vmatpush.msra.mxu0 %v2001
  %7345 = vmatpush.msra.mxu0 %v1985
  %7346 = vmatpush.msra.mxu0 %v1969
  %7347 = vmatpush.msra.mxu0 %v1953
  %7348 = vmatpush.msra.mxu0 %v1937
  %7349 = vmatmul.f32.gmra.mxu0 %v6771
  %v7350 = vpop.f32.mrf.mxu0
  %v7351 = vadd.f32 0.0, %v7350
  %7352 = vdwg.mxu0
  %7353 = vmatpush.msra.mxu0 %v2433
  %7354 = vmatpush.msra.mxu0 %v2417
  %7355 = vmatpush.msra.mxu0 %v2401
  %7356 = vmatpush.msra.mxu0 %v2385
  %7357 = vmatpush.msra.mxu0 %v2369
  %7358 = vmatpush.msra.mxu0 %v2353
  %7359 = vmatpush.msra.mxu0 %v2337
  %7360 = vmatpush.msra.mxu0 %v2321
  %7361 = vmatpush.msra.mxu0 %v2305
  %7362 = vmatpush.msra.mxu0 %v2289
  %7363 = vmatpush.msra.mxu0 %v2273
  %7364 = vmatpush.msra.mxu0 %v2257
  %7365 = vmatpush.msra.mxu0 %v2241
  %7366 = vmatpush.msra.mxu0 %v2225
  %7367 = vmatpush.msra.mxu0 %v2209
  %7368 = vmatpush.msra.mxu0 %v2193
  %7369 = vmatmul.f32.gmra.mxu0 %v6772
  %v7370 = vpop.f32.mrf.mxu0
  %v7371 = vadd.f32 %v7351, %v7370
  %7372 = vdwg.mxu0
  %7373 = vmatpush.msra.mxu0 %v2178
  %7374 = vmatpush.msra.mxu0 %v2162
  %7375 = vmatpush.msra.mxu0 %v2146
  %7376 = vmatpush.msra.mxu0 %v2130
  %7377 = vmatpush.msra.mxu0 %v2114
  %7378 = vmatpush.msra.mxu0 %v2098
  %7379 = vmatpush.msra.mxu0 %v2082
  %7380 = vmatpush.msra.mxu0 %v2066
  %7381 = vmatpush.msra.mxu0 %v2050
  %7382 = vmatpush.msra.mxu0 %v2034
  %7383 = vmatpush.msra.mxu0 %v2018
  %7384 = vmatpush.msra.mxu0 %v2002
  %7385 = vmatpush.msra.mxu0 %v1986
  %7386 = vmatpush.msra.mxu0 %v1970
  %7387 = vmatpush.msra.mxu0 %v1954
  %7388 = vmatpush.msra.mxu0 %v1938
  %7389 = vmatmul.f32.gmra.mxu0 %v6771
  %v7390 = vpop.f32.mrf.mxu0
  %v7391 = vadd.f32 0.0, %v7390
  %7392 = vdwg.mxu0
  %7393 = vmatpush.msra.mxu0 %v2434
  %7394 = vmatpush.msra.mxu0 %v2418
  %7395 = vmatpush.msra.mxu0 %v2402
  %7396 = vmatpush.msra.mxu0 %v2386
  %7397 = vmatpush.msra.mxu0 %v2370
  %7398 = vmatpush.msra.mxu0 %v2354
  %7399 = vmatpush.msra.mxu0 %v2338
  %7400 = vmatpush.msra.mxu0 %v2322
  %7401 = vmatpush.msra.mxu0 %v2306
  %7402 = vmatpush.msra.mxu0 %v2290
  %7403 = vmatpush.msra.mxu0 %v2274
  %7404 = vmatpush.msra.mxu0 %v2258
  %7405 = vmatpush.msra.mxu0 %v2242
  %7406 = vmatpush.msra.mxu0 %v2226
  %7407 = vmatpush.msra.mxu0 %v2210
  %7408 = vmatpush.msra.mxu0 %v2194
  %7409 = vmatmul.f32.gmra.mxu0 %v6772
  %v7410 = vpop.f32.mrf.mxu0
  %v7411 = vadd.f32 %v7391, %v7410
  %7412 = vdwg.mxu0
  %v7413 = vsel %vm1076, %v6811, %v7131
  %v7414 = vsel %vm1076, %v6851, %v7171
  %v7415 = vsel %vm1076, %v6891, %v7211
  %v7416 = vsel %vm1076, %v6931, %v7251
  %v7417 = vsel %vm1076, %v6971, %v7291
  %v7418 = vsel %vm1076, %v7011, %v7331
  %v7419 = vsel %vm1076, %v7051, %v7371
  %v7420 = vsel %vm1076, %v7091, %v7411
  %v7421 = vld [vmem:[%s1889] sm:$0xff]
  %v7422 = vld [vmem:[%s1889 + $0x8] sm:$0xff]
  %v7423 = vld [vmem:[%s1889 + $0x10] sm:$0xff]
  %v7424 = vld [vmem:[%s1889 + $0x18] sm:$0xff]
  %7429 = vst [vmem:[#allocation1] ss:$2 sm:$0xff] %v7421
  %s7430 = scalar_lea.vmem [#allocation1], 16
  %7431 = vst [vmem:[%s7430] ss:$2 sm:$0xff] %v7422
  %s7432 = scalar_lea.vmem [#allocation1], 32
  %7433 = vst [vmem:[%s7432] ss:$2 sm:$0xff] %v7423
  %s7434 = scalar_lea.vmem [#allocation1], 48
  %7435 = vst [vmem:[%s7434] ss:$2 sm:$0xff] %v7424
  %v7436 = vld.sshfl [vmem:[#allocation1] sm:$0xff pattern:$0x75316420]
  %v7437 = vld.sshfl [vmem:[#allocation1 + $0x8] sm:$0xff pattern:$0x75316420]
  %v7438 = vld.sshfl [vmem:[#allocation1 + $0x10] sm:$0xff pattern:$0x75316420]
  %v7439 = vld.sshfl [vmem:[#allocation1 + $0x18] sm:$0xff pattern:$0x75316420]
  %v7440 = vld.sshfl [vmem:[#allocation1 + $0x20] sm:$0xff pattern:$0x75316420]
  %v7441 = vld.sshfl [vmem:[#allocation1 + $0x28] sm:$0xff pattern:$0x75316420]
  %v7442 = vld.sshfl [vmem:[#allocation1 + $0x30] sm:$0xff pattern:$0x75316420]
  %v7443 = vld.sshfl [vmem:[#allocation1 + $0x38] sm:$0xff pattern:$0x75316420]
  %v7452 = vadd.f32 %v7413, %v7436
  %v7453 = vadd.f32 %v7414, %v7437
  %v7454 = vadd.f32 %v7415, %v7438
  %v7455 = vadd.f32 %v7416, %v7439
  %v7456 = vadd.f32 %v7417, %v7440
  %v7457 = vadd.f32 %v7418, %v7441
  %v7458 = vadd.f32 %v7419, %v7442
  %v7459 = vadd.f32 %v7420, %v7443
  %v7460 = vmul.f32 %v7452, 0.5
  %v7461 = vmul.f32 %v7453, 0.5
  %v7462 = vtanh.pop %v7460
  %v7463 = vtanh.pop %v7461
  %v7464 = vadd.f32 %v7462, 1.0
  %v7465 = vadd.f32 %v7463, 1.0
  %v7466 = vmul.f32 %v7464, 0.5
  %v7467 = vmul.f32 %v7465, 0.5
  %v7468 = vmul.f32 %v7454, 0.5
  %v7469 = vmul.f32 %v7455, 0.5
  %v7470 = vtanh.pop %v7468
  %v7471 = vtanh.pop %v7469
  %v7472 = vadd.f32 %v7470, 1.0
  %v7473 = vadd.f32 %v7471, 1.0
  %v7474 = vmul.f32 %v7472, 0.5
  %v7475 = vmul.f32 %v7473, 0.5
  %v7476 = vtanh.pop %v7456
  %v7477 = vtanh.pop %v7457
  %v7478 = vmul.f32 %v7458, 0.5
  %v7479 = vmul.f32 %v7459, 0.5
  %v7480 = vtanh.pop %v7478
  %v7481 = vtanh.pop %v7479
  %v7482 = vadd.f32 %v7480, 1.0
  %v7483 = vadd.f32 %v7481, 1.0
  %v7484 = vmul.f32 %v7482, 0.5
  %v7485 = vmul.f32 %v7483, 0.5
  %v7486 = vmul.f32 %v7474, %v6767
  %v7487 = vmul.f32 %v7475, %v6768
  %v7488 = vmul.f32 %v7466, %v7476
  %v7489 = vmul.f32 %v7467, %v7477
  %v7490 = vadd.f32 %v7486, %v7488
  %v7491 = vadd.f32 %v7487, %v7489
  %v7492 = vtanh.pop %v7490
  %v7493 = vtanh.pop %v7491
  %v7494 = vmul.f32 %v7484, %v7492
  %v7495 = vmul.f32 %v7485, %v7493
  %7496 = vmatpush.msra.mxu0 %v2163
  %7497 = vmatpush.msra.mxu0 %v2147
  %7498 = vmatpush.msra.mxu0 %v2131
  %7499 = vmatpush.msra.mxu0 %v2115
  %7500 = vmatpush.msra.mxu0 %v2099
  %7501 = vmatpush.msra.mxu0 %v2083
  %7502 = vmatpush.msra.mxu0 %v2067
  %7503 = vmatpush.msra.mxu0 %v2051
  %7504 = vmatpush.msra.mxu0 %v2035
  %7505 = vmatpush.msra.mxu0 %v2019
  %7506 = vmatpush.msra.mxu0 %v2003
  %7507 = vmatpush.msra.mxu0 %v1987
  %7508 = vmatpush.msra.mxu0 %v1971
  %7509 = vmatpush.msra.mxu0 %v1955
  %7510 = vmatpush.msra.mxu0 %v1939
  %7511 = vmatpush.msra.mxu0 %v1923
  %7512 = vmatmul.f32.gmra.mxu0 %v7494
  %v7513 = vpop.f32.mrf.mxu0
  %v7514 = vadd.f32 0.0, %v7513
  %7515 = vdwg.mxu0
  %7516 = vmatpush.msra.mxu0 %v2419
  %7517 = vmatpush.msra.mxu0 %v2403
  %7518 = vmatpush.msra.mxu0 %v2387
  %7519 = vmatpush.msra.mxu0 %v2371
  %7520 = vmatpush.msra.mxu0 %v2355
  %7521 = vmatpush.msra.mxu0 %v2339
  %7522 = vmatpush.msra.mxu0 %v2323
  %7523 = vmatpush.msra.mxu0 %v2307
  %7524 = vmatpush.msra.mxu0 %v2291
  %7525 = vmatpush.msra.mxu0 %v2275
  %7526 = vmatpush.msra.mxu0 %v2259
  %7527 = vmatpush.msra.mxu0 %v2243
  %7528 = vmatpush.msra.mxu0 %v2227
  %7529 = vmatpush.msra.mxu0 %v2211
  %7530 = vmatpush.msra.mxu0 %v2195
  %7531 = vmatpush.msra.mxu0 %v2179
  %7532 = vmatmul.f32.gmra.mxu0 %v7495
  %v7533 = vpop.f32.mrf.mxu0
  %v7534 = vadd.f32 %v7514, %v7533
  %7535 = vdwg.mxu0
  %7536 = vmatpush.msra.mxu0 %v2164
  %7537 = vmatpush.msra.mxu0 %v2148
  %7538 = vmatpush.msra.mxu0 %v2132
  %7539 = vmatpush.msra.mxu0 %v2116
  %7540 = vmatpush.msra.mxu0 %v2100
  %7541 = vmatpush.msra.mxu0 %v2084
  %7542 = vmatpush.msra.mxu0 %v2068
  %7543 = vmatpush.msra.mxu0 %v2052
  %7544 = vmatpush.msra.mxu0 %v2036
  %7545 = vmatpush.msra.mxu0 %v2020
  %7546 = vmatpush.msra.mxu0 %v2004
  %7547 = vmatpush.msra.mxu0 %v1988
  %7548 = vmatpush.msra.mxu0 %v1972
  %7549 = vmatpush.msra.mxu0 %v1956
  %7550 = vmatpush.msra.mxu0 %v1940
  %7551 = vmatpush.msra.mxu0 %v1924
  %7552 = vmatmul.f32.gmra.mxu0 %v7494
  %v7553 = vpop.f32.mrf.mxu0
  %v7554 = vadd.f32 0.0, %v7553
  %7555 = vdwg.mxu0
  %7556 = vmatpush.msra.mxu0 %v2420
  %7557 = vmatpush.msra.mxu0 %v2404
  %7558 = vmatpush.msra.mxu0 %v2388
  %7559 = vmatpush.msra.mxu0 %v2372
  %7560 = vmatpush.msra.mxu0 %v2356
  %7561 = vmatpush.msra.mxu0 %v2340
  %7562 = vmatpush.msra.mxu0 %v2324
  %7563 = vmatpush.msra.mxu0 %v2308
  %7564 = vmatpush.msra.mxu0 %v2292
  %7565 = vmatpush.msra.mxu0 %v2276
  %7566 = vmatpush.msra.mxu0 %v2260
  %7567 = vmatpush.msra.mxu0 %v2244
  %7568 = vmatpush.msra.mxu0 %v2228
  %7569 = vmatpush.msra.mxu0 %v2212
  %7570 = vmatpush.msra.mxu0 %v2196
  %7571 = vmatpush.msra.mxu0 %v2180
  %7572 = vmatmul.f32.gmra.mxu0 %v7495
  %v7573 = vpop.f32.mrf.mxu0
  %v7574 = vadd.f32 %v7554, %v7573
  %7575 = vdwg.mxu0
  %7576 = vmatpush.msra.mxu0 %v2165
  %7577 = vmatpush.msra.mxu0 %v2149
  %7578 = vmatpush.msra.mxu0 %v2133
  %7579 = vmatpush.msra.mxu0 %v2117
  %7580 = vmatpush.msra.mxu0 %v2101
  %7581 = vmatpush.msra.mxu0 %v2085
  %7582 = vmatpush.msra.mxu0 %v2069
  %7583 = vmatpush.msra.mxu0 %v2053
  %7584 = vmatpush.msra.mxu0 %v2037
  %7585 = vmatpush.msra.mxu0 %v2021
  %7586 = vmatpush.msra.mxu0 %v2005
  %7587 = vmatpush.msra.mxu0 %v1989
  %7588 = vmatpush.msra.mxu0 %v1973
  %7589 = vmatpush.msra.mxu0 %v1957
  %7590 = vmatpush.msra.mxu0 %v1941
  %7591 = vmatpush.msra.mxu0 %v1925
  %7592 = vmatmul.f32.gmra.mxu0 %v7494
  %v7593 = vpop.f32.mrf.mxu0
  %v7594 = vadd.f32 0.0, %v7593
  %7595 = vdwg.mxu0
  %7596 = vmatpush.msra.mxu0 %v2421
  %7597 = vmatpush.msra.mxu0 %v2405
  %7598 = vmatpush.msra.mxu0 %v2389
  %7599 = vmatpush.msra.mxu0 %v2373
  %7600 = vmatpush.msra.mxu0 %v2357
  %7601 = vmatpush.msra.mxu0 %v2341
  %7602 = vmatpush.msra.mxu0 %v2325
  %7603 = vmatpush.msra.mxu0 %v2309
  %7604 = vmatpush.msra.mxu0 %v2293
  %7605 = vmatpush.msra.mxu0 %v2277
  %7606 = vmatpush.msra.mxu0 %v2261
  %7607 = vmatpush.msra.mxu0 %v2245
  %7608 = vmatpush.msra.mxu0 %v2229
  %7609 = vmatpush.msra.mxu0 %v2213
  %7610 = vmatpush.msra.mxu0 %v2197
  %7611 = vmatpush.msra.mxu0 %v2181
  %7612 = vmatmul.f32.gmra.mxu0 %v7495
  %v7613 = vpop.f32.mrf.mxu0
  %v7614 = vadd.f32 %v7594, %v7613
  %7615 = vdwg.mxu0
  %7616 = vmatpush.msra.mxu0 %v2166
  %7617 = vmatpush.msra.mxu0 %v2150
  %7618 = vmatpush.msra.mxu0 %v2134
  %7619 = vmatpush.msra.mxu0 %v2118
  %7620 = vmatpush.msra.mxu0 %v2102
  %7621 = vmatpush.msra.mxu0 %v2086
  %7622 = vmatpush.msra.mxu0 %v2070
  %7623 = vmatpush.msra.mxu0 %v2054
  %7624 = vmatpush.msra.mxu0 %v2038
  %7625 = vmatpush.msra.mxu0 %v2022
  %7626 = vmatpush.msra.mxu0 %v2006
  %7627 = vmatpush.msra.mxu0 %v1990
  %7628 = vmatpush.msra.mxu0 %v1974
  %7629 = vmatpush.msra.mxu0 %v1958
  %7630 = vmatpush.msra.mxu0 %v1942
  %7631 = vmatpush.msra.mxu0 %v1926
  %7632 = vmatmul.f32.gmra.mxu0 %v7494
  %v7633 = vpop.f32.mrf.mxu0
  %v7634 = vadd.f32 0.0, %v7633
  %7635 = vdwg.mxu0
  %7636 = vmatpush.msra.mxu0 %v2422
  %7637 = vmatpush.msra.mxu0 %v2406
  %7638 = vmatpush.msra.mxu0 %v2390
  %7639 = vmatpush.msra.mxu0 %v2374
  %7640 = vmatpush.msra.mxu0 %v2358
  %7641 = vmatpush.msra.mxu0 %v2342
  %7642 = vmatpush.msra.mxu0 %v2326
  %7643 = vmatpush.msra.mxu0 %v2310
  %7644 = vmatpush.msra.mxu0 %v2294
  %7645 = vmatpush.msra.mxu0 %v2278
  %7646 = vmatpush.msra.mxu0 %v2262
  %7647 = vmatpush.msra.mxu0 %v2246
  %7648 = vmatpush.msra.mxu0 %v2230
  %7649 = vmatpush.msra.mxu0 %v2214
  %7650 = vmatpush.msra.mxu0 %v2198
  %7651 = vmatpush.msra.mxu0 %v2182
  %7652 = vmatmul.f32.gmra.mxu0 %v7495
  %v7653 = vpop.f32.mrf.mxu0
  %v7654 = vadd.f32 %v7634, %v7653
  %7655 = vdwg.mxu0
  %7656 = vmatpush.msra.mxu0 %v2167
  %7657 = vmatpush.msra.mxu0 %v2151
  %7658 = vmatpush.msra.mxu0 %v2135
  %7659 = vmatpush.msra.mxu0 %v2119
  %7660 = vmatpush.msra.mxu0 %v2103
  %7661 = vmatpush.msra.mxu0 %v2087
  %7662 = vmatpush.msra.mxu0 %v2071
  %7663 = vmatpush.msra.mxu0 %v2055
  %7664 = vmatpush.msra.mxu0 %v2039
  %7665 = vmatpush.msra.mxu0 %v2023
  %7666 = vmatpush.msra.mxu0 %v2007
  %7667 = vmatpush.msra.mxu0 %v1991
  %7668 = vmatpush.msra.mxu0 %v1975
  %7669 = vmatpush.msra.mxu0 %v1959
  %7670 = vmatpush.msra.mxu0 %v1943
  %7671 = vmatpush.msra.mxu0 %v1927
  %7672 = vmatmul.f32.gmra.mxu0 %v7494
  %v7673 = vpop.f32.mrf.mxu0
  %v7674 = vadd.f32 0.0, %v7673
  %7675 = vdwg.mxu0
  %7676 = vmatpush.msra.mxu0 %v2423
  %7677 = vmatpush.msra.mxu0 %v2407
  %7678 = vmatpush.msra.mxu0 %v2391
  %7679 = vmatpush.msra.mxu0 %v2375
  %7680 = vmatpush.msra.mxu0 %v2359
  %7681 = vmatpush.msra.mxu0 %v2343
  %7682 = vmatpush.msra.mxu0 %v2327
  %7683 = vmatpush.msra.mxu0 %v2311
  %7684 = vmatpush.msra.mxu0 %v2295
  %7685 = vmatpush.msra.mxu0 %v2279
  %7686 = vmatpush.msra.mxu0 %v2263
  %7687 = vmatpush.msra.mxu0 %v2247
  %7688 = vmatpush.msra.mxu0 %v2231
  %7689 = vmatpush.msra.mxu0 %v2215
  %7690 = vmatpush.msra.mxu0 %v2199
  %7691 = vmatpush.msra.mxu0 %v2183
  %7692 = vmatmul.f32.gmra.mxu0 %v7495
  %v7693 = vpop.f32.mrf.mxu0
  %v7694 = vadd.f32 %v7674, %v7693
  %7695 = vdwg.mxu0
  %7696 = vmatpush.msra.mxu0 %v2168
  %7697 = vmatpush.msra.mxu0 %v2152
  %7698 = vmatpush.msra.mxu0 %v2136
  %7699 = vmatpush.msra.mxu0 %v2120
  %7700 = vmatpush.msra.mxu0 %v2104
  %7701 = vmatpush.msra.mxu0 %v2088
  %7702 = vmatpush.msra.mxu0 %v2072
  %7703 = vmatpush.msra.mxu0 %v2056
  %7704 = vmatpush.msra.mxu0 %v2040
  %7705 = vmatpush.msra.mxu0 %v2024
  %7706 = vmatpush.msra.mxu0 %v2008
  %7707 = vmatpush.msra.mxu0 %v1992
  %7708 = vmatpush.msra.mxu0 %v1976
  %7709 = vmatpush.msra.mxu0 %v1960
  %7710 = vmatpush.msra.mxu0 %v1944
  %7711 = vmatpush.msra.mxu0 %v1928
  %7712 = vmatmul.f32.gmra.mxu0 %v7494
  %v7713 = vpop.f32.mrf.mxu0
  %v7714 = vadd.f32 0.0, %v7713
  %7715 = vdwg.mxu0
  %7716 = vmatpush.msra.mxu0 %v2424
  %7717 = vmatpush.msra.mxu0 %v2408
  %7718 = vmatpush.msra.mxu0 %v2392
  %7719 = vmatpush.msra.mxu0 %v2376
  %7720 = vmatpush.msra.mxu0 %v2360
  %7721 = vmatpush.msra.mxu0 %v2344
  %7722 = vmatpush.msra.mxu0 %v2328
  %7723 = vmatpush.msra.mxu0 %v2312
  %7724 = vmatpush.msra.mxu0 %v2296
  %7725 = vmatpush.msra.mxu0 %v2280
  %7726 = vmatpush.msra.mxu0 %v2264
  %7727 = vmatpush.msra.mxu0 %v2248
  %7728 = vmatpush.msra.mxu0 %v2232
  %7729 = vmatpush.msra.mxu0 %v2216
  %7730 = vmatpush.msra.mxu0 %v2200
  %7731 = vmatpush.msra.mxu0 %v2184
  %7732 = vmatmul.f32.gmra.mxu0 %v7495
  %v7733 = vpop.f32.mrf.mxu0
  %v7734 = vadd.f32 %v7714, %v7733
  %7735 = vdwg.mxu0
  %7736 = vmatpush.msra.mxu0 %v2169
  %7737 = vmatpush.msra.mxu0 %v2153
  %7738 = vmatpush.msra.mxu0 %v2137
  %7739 = vmatpush.msra.mxu0 %v2121
  %7740 = vmatpush.msra.mxu0 %v2105
  %7741 = vmatpush.msra.mxu0 %v2089
  %7742 = vmatpush.msra.mxu0 %v2073
  %7743 = vmatpush.msra.mxu0 %v2057
  %7744 = vmatpush.msra.mxu0 %v2041
  %7745 = vmatpush.msra.mxu0 %v2025
  %7746 = vmatpush.msra.mxu0 %v2009
  %7747 = vmatpush.msra.mxu0 %v1993
  %7748 = vmatpush.msra.mxu0 %v1977
  %7749 = vmatpush.msra.mxu0 %v1961
  %7750 = vmatpush.msra.mxu0 %v1945
  %7751 = vmatpush.msra.mxu0 %v1929
  %7752 = vmatmul.f32.gmra.mxu0 %v7494
  %v7753 = vpop.f32.mrf.mxu0
  %v7754 = vadd.f32 0.0, %v7753
  %7755 = vdwg.mxu0
  %7756 = vmatpush.msra.mxu0 %v2425
  %7757 = vmatpush.msra.mxu0 %v2409
  %7758 = vmatpush.msra.mxu0 %v2393
  %7759 = vmatpush.msra.mxu0 %v2377
  %7760 = vmatpush.msra.mxu0 %v2361
  %7761 = vmatpush.msra.mxu0 %v2345
  %7762 = vmatpush.msra.mxu0 %v2329
  %7763 = vmatpush.msra.mxu0 %v2313
  %7764 = vmatpush.msra.mxu0 %v2297
  %7765 = vmatpush.msra.mxu0 %v2281
  %7766 = vmatpush.msra.mxu0 %v2265
  %7767 = vmatpush.msra.mxu0 %v2249
  %7768 = vmatpush.msra.mxu0 %v2233
  %7769 = vmatpush.msra.mxu0 %v2217
  %7770 = vmatpush.msra.mxu0 %v2201
  %7771 = vmatpush.msra.mxu0 %v2185
  %7772 = vmatmul.f32.gmra.mxu0 %v7495
  %v7773 = vpop.f32.mrf.mxu0
  %v7774 = vadd.f32 %v7754, %v7773
  %7775 = vdwg.mxu0
  %7776 = vmatpush.msra.mxu0 %v2170
  %7777 = vmatpush.msra.mxu0 %v2154
  %7778 = vmatpush.msra.mxu0 %v2138
  %7779 = vmatpush.msra.mxu0 %v2122
  %7780 = vmatpush.msra.mxu0 %v2106
  %7781 = vmatpush.msra.mxu0 %v2090
  %7782 = vmatpush.msra.mxu0 %v2074
  %7783 = vmatpush.msra.mxu0 %v2058
  %7784 = vmatpush.msra.mxu0 %v2042
  %7785 = vmatpush.msra.mxu0 %v2026
  %7786 = vmatpush.msra.mxu0 %v2010
  %7787 = vmatpush.msra.mxu0 %v1994
  %7788 = vmatpush.msra.mxu0 %v1978
  %7789 = vmatpush.msra.mxu0 %v1962
  %7790 = vmatpush.msra.mxu0 %v1946
  %7791 = vmatpush.msra.mxu0 %v1930
  %7792 = vmatmul.f32.gmra.mxu0 %v7494
  %v7793 = vpop.f32.mrf.mxu0
  %v7794 = vadd.f32 0.0, %v7793
  %7795 = vdwg.mxu0
  %7796 = vmatpush.msra.mxu0 %v2426
  %7797 = vmatpush.msra.mxu0 %v2410
  %7798 = vmatpush.msra.mxu0 %v2394
  %7799 = vmatpush.msra.mxu0 %v2378
  %7800 = vmatpush.msra.mxu0 %v2362
  %7801 = vmatpush.msra.mxu0 %v2346
  %7802 = vmatpush.msra.mxu0 %v2330
  %7803 = vmatpush.msra.mxu0 %v2314
  %7804 = vmatpush.msra.mxu0 %v2298
  %7805 = vmatpush.msra.mxu0 %v2282
  %7806 = vmatpush.msra.mxu0 %v2266
  %7807 = vmatpush.msra.mxu0 %v2250
  %7808 = vmatpush.msra.mxu0 %v2234
  %7809 = vmatpush.msra.mxu0 %v2218
  %7810 = vmatpush.msra.mxu0 %v2202
  %7811 = vmatpush.msra.mxu0 %v2186
  %7812 = vmatmul.f32.gmra.mxu0 %v7495
  %v7813 = vpop.f32.mrf.mxu0
  %v7814 = vadd.f32 %v7794, %v7813
  %7815 = vdwg.mxu0
  %7816 = vmatpush.msra.mxu0 %v2171
  %7817 = vmatpush.msra.mxu0 %v2155
  %7818 = vmatpush.msra.mxu0 %v2139
  %7819 = vmatpush.msra.mxu0 %v2123
  %7820 = vmatpush.msra.mxu0 %v2107
  %7821 = vmatpush.msra.mxu0 %v2091
  %7822 = vmatpush.msra.mxu0 %v2075
  %7823 = vmatpush.msra.mxu0 %v2059
  %7824 = vmatpush.msra.mxu0 %v2043
  %7825 = vmatpush.msra.mxu0 %v2027
  %7826 = vmatpush.msra.mxu0 %v2011
  %7827 = vmatpush.msra.mxu0 %v1995
  %7828 = vmatpush.msra.mxu0 %v1979
  %7829 = vmatpush.msra.mxu0 %v1963
  %7830 = vmatpush.msra.mxu0 %v1947
  %7831 = vmatpush.msra.mxu0 %v1931
  %7832 = vmatmul.f32.gmra.mxu0 %v7494
  %v7833 = vpop.f32.mrf.mxu0
  %v7834 = vadd.f32 0.0, %v7833
  %7835 = vdwg.mxu0
  %7836 = vmatpush.msra.mxu0 %v2427
  %7837 = vmatpush.msra.mxu0 %v2411
  %7838 = vmatpush.msra.mxu0 %v2395
  %7839 = vmatpush.msra.mxu0 %v2379
  %7840 = vmatpush.msra.mxu0 %v2363
  %7841 = vmatpush.msra.mxu0 %v2347
  %7842 = vmatpush.msra.mxu0 %v2331
  %7843 = vmatpush.msra.mxu0 %v2315
  %7844 = vmatpush.msra.mxu0 %v2299
  %7845 = vmatpush.msra.mxu0 %v2283
  %7846 = vmatpush.msra.mxu0 %v2267
  %7847 = vmatpush.msra.mxu0 %v2251
  %7848 = vmatpush.msra.mxu0 %v2235
  %7849 = vmatpush.msra.mxu0 %v2219
  %7850 = vmatpush.msra.mxu0 %v2203
  %7851 = vmatpush.msra.mxu0 %v2187
  %7852 = vmatmul.f32.gmra.mxu0 %v7495
  %v7853 = vpop.f32.mrf.mxu0
  %v7854 = vadd.f32 %v7834, %v7853
  %7855 = vdwg.mxu0
  %7856 = vmatpush.msra.mxu0 %v2172
  %7857 = vmatpush.msra.mxu0 %v2156
  %7858 = vmatpush.msra.mxu0 %v2140
  %7859 = vmatpush.msra.mxu0 %v2124
  %7860 = vmatpush.msra.mxu0 %v2108
  %7861 = vmatpush.msra.mxu0 %v2092
  %7862 = vmatpush.msra.mxu0 %v2076
  %7863 = vmatpush.msra.mxu0 %v2060
  %7864 = vmatpush.msra.mxu0 %v2044
  %7865 = vmatpush.msra.mxu0 %v2028
  %7866 = vmatpush.msra.mxu0 %v2012
  %7867 = vmatpush.msra.mxu0 %v1996
  %7868 = vmatpush.msra.mxu0 %v1980
  %7869 = vmatpush.msra.mxu0 %v1964
  %7870 = vmatpush.msra.mxu0 %v1948
  %7871 = vmatpush.msra.mxu0 %v1932
  %7872 = vmatmul.f32.gmra.mxu0 %v7494
  %v7873 = vpop.f32.mrf.mxu0
  %v7874 = vadd.f32 0.0, %v7873
  %7875 = vdwg.mxu0
  %7876 = vmatpush.msra.mxu0 %v2428
  %7877 = vmatpush.msra.mxu0 %v2412
  %7878 = vmatpush.msra.mxu0 %v2396
  %7879 = vmatpush.msra.mxu0 %v2380
  %7880 = vmatpush.msra.mxu0 %v2364
  %7881 = vmatpush.msra.mxu0 %v2348
  %7882 = vmatpush.msra.mxu0 %v2332
  %7883 = vmatpush.msra.mxu0 %v2316
  %7884 = vmatpush.msra.mxu0 %v2300
  %7885 = vmatpush.msra.mxu0 %v2284
  %7886 = vmatpush.msra.mxu0 %v2268
  %7887 = vmatpush.msra.mxu0 %v2252
  %7888 = vmatpush.msra.mxu0 %v2236
  %7889 = vmatpush.msra.mxu0 %v2220
  %7890 = vmatpush.msra.mxu0 %v2204
  %7891 = vmatpush.msra.mxu0 %v2188
  %7892 = vmatmul.f32.gmra.mxu0 %v7495
  %v7893 = vpop.f32.mrf.mxu0
  %v7894 = vadd.f32 %v7874, %v7893
  %7895 = vdwg.mxu0
  %7896 = vmatpush.msra.mxu0 %v2173
  %7897 = vmatpush.msra.mxu0 %v2157
  %7898 = vmatpush.msra.mxu0 %v2141
  %7899 = vmatpush.msra.mxu0 %v2125
  %7900 = vmatpush.msra.mxu0 %v2109
  %7901 = vmatpush.msra.mxu0 %v2093
  %7902 = vmatpush.msra.mxu0 %v2077
  %7903 = vmatpush.msra.mxu0 %v2061
  %7904 = vmatpush.msra.mxu0 %v2045
  %7905 = vmatpush.msra.mxu0 %v2029
  %7906 = vmatpush.msra.mxu0 %v2013
  %7907 = vmatpush.msra.mxu0 %v1997
  %7908 = vmatpush.msra.mxu0 %v1981
  %7909 = vmatpush.msra.mxu0 %v1965
  %7910 = vmatpush.msra.mxu0 %v1949
  %7911 = vmatpush.msra.mxu0 %v1933
  %7912 = vmatmul.f32.gmra.mxu0 %v7494
  %v7913 = vpop.f32.mrf.mxu0
  %v7914 = vadd.f32 0.0, %v7913
  %7915 = vdwg.mxu0
  %7916 = vmatpush.msra.mxu0 %v2429
  %7917 = vmatpush.msra.mxu0 %v2413
  %7918 = vmatpush.msra.mxu0 %v2397
  %7919 = vmatpush.msra.mxu0 %v2381
  %7920 = vmatpush.msra.mxu0 %v2365
  %7921 = vmatpush.msra.mxu0 %v2349
  %7922 = vmatpush.msra.mxu0 %v2333
  %7923 = vmatpush.msra.mxu0 %v2317
  %7924 = vmatpush.msra.mxu0 %v2301
  %7925 = vmatpush.msra.mxu0 %v2285
  %7926 = vmatpush.msra.mxu0 %v2269
  %7927 = vmatpush.msra.mxu0 %v2253
  %7928 = vmatpush.msra.mxu0 %v2237
  %7929 = vmatpush.msra.mxu0 %v2221
  %7930 = vmatpush.msra.mxu0 %v2205
  %7931 = vmatpush.msra.mxu0 %v2189
  %7932 = vmatmul.f32.gmra.mxu0 %v7495
  %v7933 = vpop.f32.mrf.mxu0
  %v7934 = vadd.f32 %v7914, %v7933
  %7935 = vdwg.mxu0
  %7936 = vmatpush.msra.mxu0 %v2174
  %7937 = vmatpush.msra.mxu0 %v2158
  %7938 = vmatpush.msra.mxu0 %v2142
  %7939 = vmatpush.msra.mxu0 %v2126
  %7940 = vmatpush.msra.mxu0 %v2110
  %7941 = vmatpush.msra.mxu0 %v2094
  %7942 = vmatpush.msra.mxu0 %v2078
  %7943 = vmatpush.msra.mxu0 %v2062
  %7944 = vmatpush.msra.mxu0 %v2046
  %7945 = vmatpush.msra.mxu0 %v2030
  %7946 = vmatpush.msra.mxu0 %v2014
  %7947 = vmatpush.msra.mxu0 %v1998
  %7948 = vmatpush.msra.mxu0 %v1982
  %7949 = vmatpush.msra.mxu0 %v1966
  %7950 = vmatpush.msra.mxu0 %v1950
  %7951 = vmatpush.msra.mxu0 %v1934
  %7952 = vmatmul.f32.gmra.mxu0 %v7494
  %v7953 = vpop.f32.mrf.mxu0
  %v7954 = vadd.f32 0.0, %v7953
  %7955 = vdwg.mxu0
  %7956 = vmatpush.msra.mxu0 %v2430
  %7957 = vmatpush.msra.mxu0 %v2414
  %7958 = vmatpush.msra.mxu0 %v2398
  %7959 = vmatpush.msra.mxu0 %v2382
  %7960 = vmatpush.msra.mxu0 %v2366
  %7961 = vmatpush.msra.mxu0 %v2350
  %7962 = vmatpush.msra.mxu0 %v2334
  %7963 = vmatpush.msra.mxu0 %v2318
  %7964 = vmatpush.msra.mxu0 %v2302
  %7965 = vmatpush.msra.mxu0 %v2286
  %7966 = vmatpush.msra.mxu0 %v2270
  %7967 = vmatpush.msra.mxu0 %v2254
  %7968 = vmatpush.msra.mxu0 %v2238
  %7969 = vmatpush.msra.mxu0 %v2222
  %7970 = vmatpush.msra.mxu0 %v2206
  %7971 = vmatpush.msra.mxu0 %v2190
  %7972 = vmatmul.f32.gmra.mxu0 %v7495
  %v7973 = vpop.f32.mrf.mxu0
  %v7974 = vadd.f32 %v7954, %v7973
  %7975 = vdwg.mxu0
  %7976 = vmatpush.msra.mxu0 %v2175
  %7977 = vmatpush.msra.mxu0 %v2159
  %7978 = vmatpush.msra.mxu0 %v2143
  %7979 = vmatpush.msra.mxu0 %v2127
  %7980 = vmatpush.msra.mxu0 %v2111
  %7981 = vmatpush.msra.mxu0 %v2095
  %7982 = vmatpush.msra.mxu0 %v2079
  %7983 = vmatpush.msra.mxu0 %v2063
  %7984 = vmatpush.msra.mxu0 %v2047
  %7985 = vmatpush.msra.mxu0 %v2031
  %7986 = vmatpush.msra.mxu0 %v2015
  %7987 = vmatpush.msra.mxu0 %v1999
  %7988 = vmatpush.msra.mxu0 %v1983
  %7989 = vmatpush.msra.mxu0 %v1967
  %7990 = vmatpush.msra.mxu0 %v1951
  %7991 = vmatpush.msra.mxu0 %v1935
  %7992 = vmatmul.f32.gmra.mxu0 %v7494
  %v7993 = vpop.f32.mrf.mxu0
  %v7994 = vadd.f32 0.0, %v7993
  %7995 = vdwg.mxu0
  %7996 = vmatpush.msra.mxu0 %v2431
  %7997 = vmatpush.msra.mxu0 %v2415
  %7998 = vmatpush.msra.mxu0 %v2399
  %7999 = vmatpush.msra.mxu0 %v2383
  %8000 = vmatpush.msra.mxu0 %v2367
  %8001 = vmatpush.msra.mxu0 %v2351
  %8002 = vmatpush.msra.mxu0 %v2335
  %8003 = vmatpush.msra.mxu0 %v2319
  %8004 = vmatpush.msra.mxu0 %v2303
  %8005 = vmatpush.msra.mxu0 %v2287
  %8006 = vmatpush.msra.mxu0 %v2271
  %8007 = vmatpush.msra.mxu0 %v2255
  %8008 = vmatpush.msra.mxu0 %v2239
  %8009 = vmatpush.msra.mxu0 %v2223
  %8010 = vmatpush.msra.mxu0 %v2207
  %8011 = vmatpush.msra.mxu0 %v2191
  %8012 = vmatmul.f32.gmra.mxu0 %v7495
  %v8013 = vpop.f32.mrf.mxu0
  %v8014 = vadd.f32 %v7994, %v8013
  %8015 = vdwg.mxu0
  %8016 = vmatpush.msra.mxu0 %v2176
  %8017 = vmatpush.msra.mxu0 %v2160
  %8018 = vmatpush.msra.mxu0 %v2144
  %8019 = vmatpush.msra.mxu0 %v2128
  %8020 = vmatpush.msra.mxu0 %v2112
  %8021 = vmatpush.msra.mxu0 %v2096
  %8022 = vmatpush.msra.mxu0 %v2080
  %8023 = vmatpush.msra.mxu0 %v2064
  %8024 = vmatpush.msra.mxu0 %v2048
  %8025 = vmatpush.msra.mxu0 %v2032
  %8026 = vmatpush.msra.mxu0 %v2016
  %8027 = vmatpush.msra.mxu0 %v2000
  %8028 = vmatpush.msra.mxu0 %v1984
  %8029 = vmatpush.msra.mxu0 %v1968
  %8030 = vmatpush.msra.mxu0 %v1952
  %8031 = vmatpush.msra.mxu0 %v1936
  %8032 = vmatmul.f32.gmra.mxu0 %v7494
  %v8033 = vpop.f32.mrf.mxu0
  %v8034 = vadd.f32 0.0, %v8033
  %8035 = vdwg.mxu0
  %8036 = vmatpush.msra.mxu0 %v2432
  %8037 = vmatpush.msra.mxu0 %v2416
  %8038 = vmatpush.msra.mxu0 %v2400
  %8039 = vmatpush.msra.mxu0 %v2384
  %8040 = vmatpush.msra.mxu0 %v2368
  %8041 = vmatpush.msra.mxu0 %v2352
  %8042 = vmatpush.msra.mxu0 %v2336
  %8043 = vmatpush.msra.mxu0 %v2320
  %8044 = vmatpush.msra.mxu0 %v2304
  %8045 = vmatpush.msra.mxu0 %v2288
  %8046 = vmatpush.msra.mxu0 %v2272
  %8047 = vmatpush.msra.mxu0 %v2256
  %8048 = vmatpush.msra.mxu0 %v2240
  %8049 = vmatpush.msra.mxu0 %v2224
  %8050 = vmatpush.msra.mxu0 %v2208
  %8051 = vmatpush.msra.mxu0 %v2192
  %8052 = vmatmul.f32.gmra.mxu0 %v7495
  %v8053 = vpop.f32.mrf.mxu0
  %v8054 = vadd.f32 %v8034, %v8053
  %8055 = vdwg.mxu0
  %8056 = vmatpush.msra.mxu0 %v2177
  %8057 = vmatpush.msra.mxu0 %v2161
  %8058 = vmatpush.msra.mxu0 %v2145
  %8059 = vmatpush.msra.mxu0 %v2129
  %8060 = vmatpush.msra.mxu0 %v2113
  %8061 = vmatpush.msra.mxu0 %v2097
  %8062 = vmatpush.msra.mxu0 %v2081
  %8063 = vmatpush.msra.mxu0 %v2065
  %8064 = vmatpush.msra.mxu0 %v2049
  %8065 = vmatpush.msra.mxu0 %v2033
  %8066 = vmatpush.msra.mxu0 %v2017
  %8067 = vmatpush.msra.mxu0 %v2001
  %8068 = vmatpush.msra.mxu0 %v1985
  %8069 = vmatpush.msra.mxu0 %v1969
  %8070 = vmatpush.msra.mxu0 %v1953
  %8071 = vmatpush.msra.mxu0 %v1937
  %8072 = vmatmul.f32.gmra.mxu0 %v7494
  %v8073 = vpop.f32.mrf.mxu0
  %v8074 = vadd.f32 0.0, %v8073
  %8075 = vdwg.mxu0
  %8076 = vmatpush.msra.mxu0 %v2433
  %8077 = vmatpush.msra.mxu0 %v2417
  %8078 = vmatpush.msra.mxu0 %v2401
  %8079 = vmatpush.msra.mxu0 %v2385
  %8080 = vmatpush.msra.mxu0 %v2369
  %8081 = vmatpush.msra.mxu0 %v2353
  %8082 = vmatpush.msra.mxu0 %v2337
  %8083 = vmatpush.msra.mxu0 %v2321
  %8084 = vmatpush.msra.mxu0 %v2305
  %8085 = vmatpush.msra.mxu0 %v2289
  %8086 = vmatpush.msra.mxu0 %v2273
  %8087 = vmatpush.msra.mxu0 %v2257
  %8088 = vmatpush.msra.mxu0 %v2241
  %8089 = vmatpush.msra.mxu0 %v2225
  %8090 = vmatpush.msra.mxu0 %v2209
  %8091 = vmatpush.msra.mxu0 %v2193
  %8092 = vmatmul.f32.gmra.mxu0 %v7495
  %v8093 = vpop.f32.mrf.mxu0
  %v8094 = vadd.f32 %v8074, %v8093
  %8095 = vdwg.mxu0
  %8096 = vmatpush.msra.mxu0 %v2178
  %8097 = vmatpush.msra.mxu0 %v2162
  %8098 = vmatpush.msra.mxu0 %v2146
  %8099 = vmatpush.msra.mxu0 %v2130
  %8100 = vmatpush.msra.mxu0 %v2114
  %8101 = vmatpush.msra.mxu0 %v2098
  %8102 = vmatpush.msra.mxu0 %v2082
  %8103 = vmatpush.msra.mxu0 %v2066
  %8104 = vmatpush.msra.mxu0 %v2050
  %8105 = vmatpush.msra.mxu0 %v2034
  %8106 = vmatpush.msra.mxu0 %v2018
  %8107 = vmatpush.msra.mxu0 %v2002
  %8108 = vmatpush.msra.mxu0 %v1986
  %8109 = vmatpush.msra.mxu0 %v1970
  %8110 = vmatpush.msra.mxu0 %v1954
  %8111 = vmatpush.msra.mxu0 %v1938
  %8112 = vmatmul.f32.gmra.mxu0 %v7494
  %v8113 = vpop.f32.mrf.mxu0
  %v8114 = vadd.f32 0.0, %v8113
  %8115 = vdwg.mxu0
  %8116 = vmatpush.msra.mxu0 %v2434
  %8117 = vmatpush.msra.mxu0 %v2418
  %8118 = vmatpush.msra.mxu0 %v2402
  %8119 = vmatpush.msra.mxu0 %v2386
  %8120 = vmatpush.msra.mxu0 %v2370
  %8121 = vmatpush.msra.mxu0 %v2354
  %8122 = vmatpush.msra.mxu0 %v2338
  %8123 = vmatpush.msra.mxu0 %v2322
  %8124 = vmatpush.msra.mxu0 %v2306
  %8125 = vmatpush.msra.mxu0 %v2290
  %8126 = vmatpush.msra.mxu0 %v2274
  %8127 = vmatpush.msra.mxu0 %v2258
  %8128 = vmatpush.msra.mxu0 %v2242
  %8129 = vmatpush.msra.mxu0 %v2226
  %8130 = vmatpush.msra.mxu0 %v2210
  %8131 = vmatpush.msra.mxu0 %v2194
  %8132 = vmatmul.f32.gmra.mxu0 %v7495
  %v8133 = vpop.f32.mrf.mxu0
  %v8134 = vadd.f32 %v8114, %v8133
  %8135 = vdwg.mxu0
  %v8136 = vsel %vm1076, %v7534, %v7854
  %v8137 = vsel %vm1076, %v7574, %v7894
  %v8138 = vsel %vm1076, %v7614, %v7934
  %v8139 = vsel %vm1076, %v7654, %v7974
  %v8140 = vsel %vm1076, %v7694, %v8014
  %v8141 = vsel %vm1076, %v7734, %v8054
  %v8142 = vsel %vm1076, %v7774, %v8094
  %v8143 = vsel %vm1076, %v7814, %v8134
  %v8144 = vld [vmem:[%s1914] sm:$0xff]
  %v8145 = vld [vmem:[%s1914 + $0x8] sm:$0xff]
  %v8146 = vld [vmem:[%s1914 + $0x10] sm:$0xff]
  %v8147 = vld [vmem:[%s1914 + $0x18] sm:$0xff]
  %8152 = vst [vmem:[#allocation1] ss:$2 sm:$0xff] %v8144
  %s8153 = scalar_lea.vmem [#allocation1], 16
  %8154 = vst [vmem:[%s8153] ss:$2 sm:$0xff] %v8145
  %s8155 = scalar_lea.vmem [#allocation1], 32
  %8156 = vst [vmem:[%s8155] ss:$2 sm:$0xff] %v8146
  %s8157 = scalar_lea.vmem [#allocation1], 48
  %8158 = vst [vmem:[%s8157] ss:$2 sm:$0xff] %v8147
  %v8159 = vld.sshfl [vmem:[#allocation1] sm:$0xff pattern:$0x75316420]
  %v8160 = vld.sshfl [vmem:[#allocation1 + $0x8] sm:$0xff pattern:$0x75316420]
  %v8161 = vld.sshfl [vmem:[#allocation1 + $0x10] sm:$0xff pattern:$0x75316420]
  %v8162 = vld.sshfl [vmem:[#allocation1 + $0x18] sm:$0xff pattern:$0x75316420]
  %v8163 = vld.sshfl [vmem:[#allocation1 + $0x20] sm:$0xff pattern:$0x75316420]
  %v8164 = vld.sshfl [vmem:[#allocation1 + $0x28] sm:$0xff pattern:$0x75316420]
  %v8165 = vld.sshfl [vmem:[#allocation1 + $0x30] sm:$0xff pattern:$0x75316420]
  %v8166 = vld.sshfl [vmem:[#allocation1 + $0x38] sm:$0xff pattern:$0x75316420]
  %v8175 = vadd.f32 %v8136, %v8159
  %v8176 = vadd.f32 %v8137, %v8160
  %v8177 = vadd.f32 %v8138, %v8161
  %v8178 = vadd.f32 %v8139, %v8162
  %v8179 = vadd.f32 %v8140, %v8163
  %v8180 = vadd.f32 %v8141, %v8164
  %v8181 = vadd.f32 %v8142, %v8165
  %v8182 = vadd.f32 %v8143, %v8166
  %v8183 = vmul.f32 %v8175, 0.5
  %v8184 = vmul.f32 %v8176, 0.5
  %v8185 = vtanh.pop %v8183
  %v8186 = vtanh.pop %v8184
  %v8187 = vadd.f32 %v8185, 1.0
  %v8188 = vadd.f32 %v8186, 1.0
  %v8189 = vmul.f32 %v8187, 0.5
  %v8190 = vmul.f32 %v8188, 0.5
  %v8191 = vmul.f32 %v8177, 0.5
  %v8192 = vmul.f32 %v8178, 0.5
  %v8193 = vtanh.pop %v8191
  %v8194 = vtanh.pop %v8192
  %v8195 = vadd.f32 %v8193, 1.0
  %v8196 = vadd.f32 %v8194, 1.0
  %v8197 = vmul.f32 %v8195, 0.5
  %v8198 = vmul.f32 %v8196, 0.5
  %v8199 = vtanh.pop %v8179
  %v8200 = vtanh.pop %v8180
  %v8201 = vmul.f32 %v8181, 0.5
  %v8202 = vmul.f32 %v8182, 0.5
  %v8203 = vtanh.pop %v8201
  %v8204 = vtanh.pop %v8202
  %v8205 = vadd.f32 %v8203, 1.0
  %v8206 = vadd.f32 %v8204, 1.0
  %v8207 = vmul.f32 %v8205, 0.5
  %v8208 = vmul.f32 %v8206, 0.5
  %v8209 = vmul.f32 %v8197, %v7490
  %v8210 = vmul.f32 %v8198, %v7491
  %v8211 = vmul.f32 %v8189, %v8199
  %v8212 = vmul.f32 %v8190, %v8200
  %v8213 = vadd.f32 %v8209, %v8211
  %v8214 = vadd.f32 %v8210, %v8212
  %v8215 = vtanh.pop %v8213
  %v8216 = vtanh.pop %v8214
  %v8217 = vmul.f32 %v8207, %v8215
  %v8218 = vmul.f32 %v8208, %v8216
  %v8219 = vld [vmem:[%s3] sm:$0xff]
  %v8220 = vld [vmem:[%s3 + $0x8] sm:$0xff]
  %v8221 = vld [vmem:[%s3 + $0x10] sm:$0xff]
  %v8222 = vld [vmem:[%s3 + $0x18] sm:$0xff]
  %v8223 = vld [vmem:[%s3 + $0x20] sm:$0xff]
  %v8224 = vld [vmem:[%s3 + $0x28] sm:$0xff]
  %v8225 = vld [vmem:[%s3 + $0x30] sm:$0xff]
  %v8226 = vld [vmem:[%s3 + $0x38] sm:$0xff]
  %v8227 = vld [vmem:[%s3 + $0x40] sm:$0xff]
  %v8228 = vld [vmem:[%s3 + $0x48] sm:$0xff]
  %v8229 = vld [vmem:[%s3 + $0x50] sm:$0xff]
  %v8230 = vld [vmem:[%s3 + $0x58] sm:$0xff]
  %v8231 = vld [vmem:[%s3 + $0x60] sm:$0xff]
  %v8232 = vld [vmem:[%s3 + $0x68] sm:$0xff]
  %v8233 = vld [vmem:[%s3 + $0x70] sm:$0xff]
  %v8234 = vld [vmem:[%s3 + $0x78] sm:$0xff]
  %v8235 = vld [vmem:[%s3 + $0x80] sm:$0xff]
  %v8236 = vld [vmem:[%s3 + $0x88] sm:$0xff]
  %v8237 = vld [vmem:[%s3 + $0x90] sm:$0xff]
  %v8238 = vld [vmem:[%s3 + $0x98] sm:$0xff]
  %v8239 = vld [vmem:[%s3 + $0xa0] sm:$0xff]
  %v8240 = vld [vmem:[%s3 + $0xa8] sm:$0xff]
  %v8241 = vld [vmem:[%s3 + $0xb0] sm:$0xff]
  %v8242 = vld [vmem:[%s3 + $0xb8] sm:$0xff]
  %v8243 = vld [vmem:[%s3 + $0xc0] sm:$0xff]
  %v8244 = vld [vmem:[%s3 + $0xc8] sm:$0xff]
  %v8245 = vld [vmem:[%s3 + $0xd0] sm:$0xff]
  %v8246 = vld [vmem:[%s3 + $0xd8] sm:$0xff]
  %v8247 = vld [vmem:[%s3 + $0xe0] sm:$0xff]
  %v8248 = vld [vmem:[%s3 + $0xe8] sm:$0xff]
  %v8249 = vld [vmem:[%s3 + $0xf0] sm:$0xff]
  %v8250 = vld [vmem:[%s3 + $0xf8] sm:$0xff]
  %v8251 = vld [vmem:[%s3 + $0x100] sm:$0xff]
  %v8252 = vld [vmem:[%s3 + $0x108] sm:$0xff]
  %v8253 = vld [vmem:[%s3 + $0x110] sm:$0xff]
  %v8254 = vld [vmem:[%s3 + $0x118] sm:$0xff]
  %v8255 = vld [vmem:[%s3 + $0x120] sm:$0xff]
  %v8256 = vld [vmem:[%s3 + $0x128] sm:$0xff]
  %v8257 = vld [vmem:[%s3 + $0x130] sm:$0xff]
  %v8258 = vld [vmem:[%s3 + $0x138] sm:$0xff]
  %v8259 = vld [vmem:[%s3 + $0x140] sm:$0xff]
  %v8260 = vld [vmem:[%s3 + $0x148] sm:$0xff]
  %v8261 = vld [vmem:[%s3 + $0x150] sm:$0xff]
  %v8262 = vld [vmem:[%s3 + $0x158] sm:$0xff]
  %v8263 = vld [vmem:[%s3 + $0x160] sm:$0xff]
  %v8264 = vld [vmem:[%s3 + $0x168] sm:$0xff]
  %v8265 = vld [vmem:[%s3 + $0x170] sm:$0xff]
  %v8266 = vld [vmem:[%s3 + $0x178] sm:$0xff]
  %v8267 = vld [vmem:[%s3 + $0x180] sm:$0xff]
  %v8268 = vld [vmem:[%s3 + $0x188] sm:$0xff]
  %v8269 = vld [vmem:[%s3 + $0x190] sm:$0xff]
  %v8270 = vld [vmem:[%s3 + $0x198] sm:$0xff]
  %v8271 = vld [vmem:[%s3 + $0x1a0] sm:$0xff]
  %v8272 = vld [vmem:[%s3 + $0x1a8] sm:$0xff]
  %v8273 = vld [vmem:[%s3 + $0x1b0] sm:$0xff]
  %v8274 = vld [vmem:[%s3 + $0x1b8] sm:$0xff]
  %v8275 = vld [vmem:[%s3 + $0x1c0] sm:$0xff]
  %v8276 = vld [vmem:[%s3 + $0x1c8] sm:$0xff]
  %v8277 = vld [vmem:[%s3 + $0x1d0] sm:$0xff]
  %v8278 = vld [vmem:[%s3 + $0x1d8] sm:$0xff]
  %v8279 = vld [vmem:[%s3 + $0x1e0] sm:$0xff]
  %v8280 = vld [vmem:[%s3 + $0x1e8] sm:$0xff]
  %v8281 = vld [vmem:[%s3 + $0x1f0] sm:$0xff]
  %v8282 = vld [vmem:[%s3 + $0x1f8] sm:$0xff]
  %v8283 = vld [vmem:[%s4] sm:$0x3]
  %v8285 = vperm.slane %v8283, 0
  %v8286 = vperm.slane %v8283, 1
  %8289 = vmatpush.msra.mxu0 %v8249
  %8290 = vmatpush.msra.mxu0 %v8247
  %8291 = vmatpush.msra.mxu0 %v8245
  %8292 = vmatpush.msra.mxu0 %v8243
  %8293 = vmatpush.msra.mxu0 %v8241
  %8294 = vmatpush.msra.mxu0 %v8239
  %8295 = vmatpush.msra.mxu0 %v8237
  %8296 = vmatpush.msra.mxu0 %v8235
  %8297 = vmatpush.msra.mxu0 %v8233
  %8298 = vmatpush.msra.mxu0 %v8231
  %8299 = vmatpush.msra.mxu0 %v8229
  %8300 = vmatpush.msra.mxu0 %v8227
  %8301 = vmatpush.msra.mxu0 %v8225
  %8302 = vmatpush.msra.mxu0 %v8223
  %8303 = vmatpush.msra.mxu0 %v8221
  %8304 = vmatpush.msra.mxu0 %v8219
  %8305 = vmatmul.f32.gmra.mxu0 %v8217
  %v8306 = vpop.f32.mrf.mxu0
  %v8307 = vadd.f32 %v8285, %v8306
  %8308 = vdwg.mxu0
  %8309 = vmatpush.msra.mxu0 %v8281
  %8310 = vmatpush.msra.mxu0 %v8279
  %8311 = vmatpush.msra.mxu0 %v8277
  %8312 = vmatpush.msra.mxu0 %v8275
  %8313 = vmatpush.msra.mxu0 %v8273
  %8314 = vmatpush.msra.mxu0 %v8271
  %8315 = vmatpush.msra.mxu0 %v8269
  %8316 = vmatpush.msra.mxu0 %v8267
  %8317 = vmatpush.msra.mxu0 %v8265
  %8318 = vmatpush.msra.mxu0 %v8263
  %8319 = vmatpush.msra.mxu0 %v8261
  %8320 = vmatpush.msra.mxu0 %v8259
  %8321 = vmatpush.msra.mxu0 %v8257
  %8322 = vmatpush.msra.mxu0 %v8255
  %8323 = vmatpush.msra.mxu0 %v8253
  %8324 = vmatpush.msra.mxu0 %v8251
  %8325 = vmatmul.f32.gmra.mxu0 %v8218
  %v8326 = vpop.f32.mrf.mxu0
  %v8327 = vadd.f32 %v8307, %v8326
  %8328 = vdwg.mxu0
  %8329 = vmatpush.msra.mxu0 %v8250
  %8330 = vmatpush.msra.mxu0 %v8248
  %8331 = vmatpush.msra.mxu0 %v8246
  %8332 = vmatpush.msra.mxu0 %v8244
  %8333 = vmatpush.msra.mxu0 %v8242
  %8334 = vmatpush.msra.mxu0 %v8240
  %8335 = vmatpush.msra.mxu0 %v8238
  %8336 = vmatpush.msra.mxu0 %v8236
  %8337 = vmatpush.msra.mxu0 %v8234
  %8338 = vmatpush.msra.mxu0 %v8232
  %8339 = vmatpush.msra.mxu0 %v8230
  %8340 = vmatpush.msra.mxu0 %v8228
  %8341 = vmatpush.msra.mxu0 %v8226
  %8342 = vmatpush.msra.mxu0 %v8224
  %8343 = vmatpush.msra.mxu0 %v8222
  %8344 = vmatpush.msra.mxu0 %v8220
  %8345 = vmatmul.f32.gmra.mxu0 %v8217
  %v8346 = vpop.f32.mrf.mxu0
  %v8347 = vadd.f32 %v8286, %v8346
  %8348 = vdwg.mxu0
  %8349 = vmatpush.msra.mxu0 %v8282
  %8350 = vmatpush.msra.mxu0 %v8280
  %8351 = vmatpush.msra.mxu0 %v8278
  %8352 = vmatpush.msra.mxu0 %v8276
  %8353 = vmatpush.msra.mxu0 %v8274
  %8354 = vmatpush.msra.mxu0 %v8272
  %8355 = vmatpush.msra.mxu0 %v8270
  %8356 = vmatpush.msra.mxu0 %v8268
  %8357 = vmatpush.msra.mxu0 %v8266
  %8358 = vmatpush.msra.mxu0 %v8264
  %8359 = vmatpush.msra.mxu0 %v8262
  %8360 = vmatpush.msra.mxu0 %v8260
  %8361 = vmatpush.msra.mxu0 %v8258
  %8362 = vmatpush.msra.mxu0 %v8256
  %8363 = vmatpush.msra.mxu0 %v8254
  %8364 = vmatpush.msra.mxu0 %v8252
  %8365 = vmatmul.f32.gmra.mxu0 %v8218
  %v8366 = vpop.f32.mrf.mxu0
  %v8367 = vadd.f32 %v8347, %v8366
  %8368 = vdwg.mxu0
  %v8369 = vsel %vm1076, %v8327, %v8367
  %v8370 = vmax.f32 %v8369, 0.0
  %v8371 = vld [vmem:[%s5] sm:$0xff]
  %v8372 = vld [vmem:[%s5 + $0x8] sm:$0xff]
  %v8373 = vld [vmem:[%s5 + $0x10] sm:$0xff]
  %v8374 = vld [vmem:[%s5 + $0x18] sm:$0xff]
  %v8375 = vld [vmem:[%s5 + $0x20] sm:$0xff]
  %v8376 = vld [vmem:[%s5 + $0x28] sm:$0xff]
  %v8377 = vld [vmem:[%s5 + $0x30] sm:$0xff]
  %v8378 = vld [vmem:[%s5 + $0x38] sm:$0xff]
  %v8379 = vld [vmem:[%s5 + $0x40] sm:$0xff]
  %v8380 = vld [vmem:[%s5 + $0x48] sm:$0xff]
  %v8381 = vld [vmem:[%s5 + $0x50] sm:$0xff]
  %v8382 = vld [vmem:[%s5 + $0x58] sm:$0xff]
  %v8383 = vld [vmem:[%s5 + $0x60] sm:$0xff]
  %v8384 = vld [vmem:[%s5 + $0x68] sm:$0xff]
  %v8385 = vld [vmem:[%s5 + $0x70] sm:$0xff]
  %v8386 = vld [vmem:[%s5 + $0x78] sm:$0xff]
  %v8387 = vld [vmem:[%s6] sm:$0x1]
  %v8389 = vperm.slane %v8387, 0
  %8391 = vmatpush.msra.mxu0 %v8386
  %8392 = vmatpush.msra.mxu0 %v8385
  %8393 = vmatpush.msra.mxu0 %v8384
  %8394 = vmatpush.msra.mxu0 %v8383
  %8395 = vmatpush.msra.mxu0 %v8382
  %8396 = vmatpush.msra.mxu0 %v8381
  %8397 = vmatpush.msra.mxu0 %v8380
  %8398 = vmatpush.msra.mxu0 %v8379
  %8399 = vmatpush.msra.mxu0 %v8378
  %8400 = vmatpush.msra.mxu0 %v8377
  %8401 = vmatpush.msra.mxu0 %v8376
  %8402 = vmatpush.msra.mxu0 %v8375
  %8403 = vmatpush.msra.mxu0 %v8374
  %8404 = vmatpush.msra.mxu0 %v8373
  %8405 = vmatpush.msra.mxu0 %v8372
  %8406 = vmatpush.msra.mxu0 %v8371
  %8407 = vmatmul.f32.gmra.mxu0 %v8370
  %v8408 = vpop.f32.mrf.mxu0
  %v8409 = vadd.f32 %v8389, %v8408
  %8410 = vdwg.mxu0
  %v8411 = vld [vmem:[%s7] sm:$0xf]
  %v8412 = vmul.f32 %v8409, %v8411
  %v8413 = vsel %vm1411, %v8412, 0.0
  %8414 = vadd.xlane.f32.xlu0 %v8413
  %v8415 = vpop.xlane.xlu0 %8414
  %v8417 = vrot.slane %v8415, 2
  %v8419 = vadd.f32 %v8415, %v8417
  %v8420 = vld [vmem:[#allocation5] sm:$0x1]
  %v8422 = vperm.slane %v8420, 0
  %v8424 = vadd.f32 %v8419, %v8422
  %8426 = vset.pattern.permute.xlu0 0
  %8427 = vperm.xlu0 %8426, %v8424
  %v8428 = vpop.permute.xlu0 %8427
  %8430 = vst [vmem:[%s9] sm:$0x3] %v8428
  // Predicated region
  $region53: #{two_tower_forward.1} parent=0 // pred_check
    _
  $region54: #{two_tower_forward.1} parent=0 // pred_check_branch
    %8432 = sbr.rel (0) target = $region56
  $region55: #{two_tower_forward.1} parent=0 // pred_region
    _
  $region56: #{two_tower_forward.1} parent=0 // pred_fallthru
    _
  // Predicated region
  $region57: #{two_tower_forward.1} parent=0 // pred_check
    _
  $region58: #{two_tower_forward.1} parent=0 // pred_check_branch
    %8434 = sbr.rel (0) target = $region60
  $region59: #{two_tower_forward.1} parent=0 // pred_region
    _
  $region60: #{two_tower_forward.1} parent=0 // pred_fallthru
    _
  %8435 = vsyncmov [#allocation4]
  %s8436 = vpop.sfrf %8435
  %p8437 = scmp.eq.s32.totalorder %s8436, 0
  %p8438 = pneg %p8437
  %8440 = shalt.err (%p8438)

</llo_original>
